<compile_context>
chip_gen: v7x
topology: tpu7x:2x2x1
jax: 0.10.0
libtpu: 0.0.40
codegen_flags: <defaults>
</compile_context>

<pallas_src>
import jax
import jax.numpy as jnp
from jax.experimental import pallas as pl
from jax.experimental.pallas import tpu as pltpu


def _round_up(x, m):
    return ((x + m - 1) // m) * m


# ----------------------------------------------------------------------------
# Kernel factory (static shape parameters captured by closure).
# ----------------------------------------------------------------------------
def _make_kernel(C8, Pq, Wp, Dt, L1, L2e, XW, F, STORE0, MIDLEN, tap_offsets):
    DtPq = Dt * Pq
    res_off = 2 * Pq + Wp + 1          # residual start inside the x window

    def kernel(x_main_ref, x_halo_ref, w1_ref, w2_ref, sb_ref, mask_ref,
               out_ref, xbuf, mid, acc):
        # ---- assemble the contiguous (Dt+4)-plane bf16 x window in VMEM -----
        xbuf[:, :DtPq] = x_main_ref[0]
        xbuf[:, DtPq:XW] = x_halo_ref[0]

        # ---- conv1: 27 per-tap MXU matmuls, f32 accumulation in VMEM --------
        for i, off in enumerate(tap_offsets):
            c = jnp.dot(w1_ref[i], xbuf[:, off:off + L1],
                        preferred_element_type=jnp.float32)
            if i == 0:
                acc[...] = c
            else:
                acc[...] += c

        # bn1 + relu (f32); the mask zeroes H/W seams, per-plane dead lanes and
        # out-of-range D planes, so the stored h1 doubles as conv2 zero padding.
        h1 = jnp.maximum(acc[...] * sb_ref[:, 0:1] + sb_ref[:, 1:2], 0.0)
        h1 = h1 * mask_ref[0]

        # ---- store masked h1 (bf16) into the padded mid volume --------------
        # 128-aligned store start; only small head/tail halo lanes need zeros.
        mid[:, :STORE0] = jnp.zeros((C8, STORE0), jnp.bfloat16)
        mid[:, STORE0:STORE0 + L1] = h1.astype(jnp.bfloat16)
        mid[:, STORE0 + L1:MIDLEN] = jnp.zeros((C8, MIDLEN - STORE0 - L1),
                                               jnp.bfloat16)

        # ---- conv2: 27 per-tap MXU matmuls -----------------------------------
        for i, off in enumerate(tap_offsets):
            c = jnp.dot(w2_ref[i], mid[:, F + off:F + off + L2e],
                        preferred_element_type=jnp.float32)
            if i == 0:
                acc[:, :L2e] = c
            else:
                acc[:, :L2e] += c

        # bn2 + residual + relu; full-width, lane-aligned output block store.
        # (residual comes from the bf16 x window; keep f32 if tighter parity
        #  with the fp32 PyTorch module is required)
        residual = xbuf[:, res_off:res_off + L2e].astype(jnp.float32)
        y = acc[:, :L2e] * sb_ref[:, 2:3] + sb_ref[:, 3:4] + residual
        out_ref[0] = jnp.maximum(y, 0.0)

    return kernel


# ----------------------------------------------------------------------------
# Wrapper: NCDHW in / NCDHW out (PyTorch convention).
# ----------------------------------------------------------------------------
def basic_block_forward(x_ncdhw, w1, w2, g1, be1, m1, v1, g2, be2, m2, v2,
                        eps=1e-5, d_tile=None):
    N, Cin, D, H, W = x_ncdhw.shape
    Cout = w1.shape[0]
    assert Cin == Cout, "downsample=None path requires inplanes == planes"
    C = Cin
    C8 = max(8, _round_up(C, 8))       # pad channels to a sublane multiple

    # ---- D-tile size (multiple of 4 so the 4-plane halo is a valid block) ---
    if d_tile is None:
        d_tile = 8 if D > 4 else 4     # larger (16-24) suits v5e/v6e's 128 MiB
    Dt = max(4, _round_up(d_tile, 4))
    T = -(-D // Dt)                    # number of D tiles
    D_up = T * Dt

    Hp, Wp = H + 2, W + 2
    P = Hp * Wp                        # one padded (H, W) plane
    Pq = _round_up(P, 128)             # lane-aligned plane stride
    XW = (Dt + 4) * Pq                 # x window lanes per tile
    base1 = Pq + Wp + 1                # first conv-output center in the window
    L1 = (Dt + 1) * Pq + (H - 1) * Wp + W   # conv1 compact length (Dt+2 planes)
    L2 = (Dt - 1) * Pq + (H - 1) * Wp + W   # conv2 compact length (Dt planes)
    L2e = _round_up(L2, 128)                # lane-aligned output block width
    F = (-(Wp + 1)) % 128              # mid front pad -> aligned h1 store
    STORE0 = F + Wp + 1
    MIDLEN = _round_up(F + (Dt + 2) * Pq + 128, 128)

    # ---- padded, channels-major, plane-flattened bf16 input ------------------
    xpad = jnp.pad(x_ncdhw.astype(jnp.bfloat16),
                   ((0, 0), (0, C8 - C), (2, 2 + (D_up - D)), (1, 1), (1, 1)))
    xpad = xpad.reshape(N, C8, D_up + 4, P)
    xpad = jnp.pad(xpad, ((0, 0), (0, 0), (0, 0), (0, Pq - P)))
    xp = xpad.reshape(N, C8, (D_up + 4) * Pq)

    # ---- conv weights: (Cout, Cin, 3,3,3) -> (27, C8, C8) bf16, tap-major ----
    def prep_w(w):
        wt = jnp.transpose(w, (2, 3, 4, 0, 1)).reshape(27, C, C)
        wt = jnp.pad(wt, ((0, 0), (0, C8 - C), (0, C8 - C)))
        return wt.astype(jnp.bfloat16)

    w1_t, w2_t = prep_w(w1), prep_w(w2)

    # ---- fold inference BN into scale/shift, packed as one (C8, 4) f32 ------
    def fold(g, be, m, v):
        s = (g / jnp.sqrt(v + eps)).astype(jnp.float32)
        return s, (be - m * s).astype(jnp.float32)

    s1, b1 = fold(g1, be1, m1, v1)
    s2, b2 = fold(g2, be2, m2, v2)
    sb = jnp.pad(jnp.stack([s1, b1, s2, b2], axis=1), ((0, C8 - C), (0, 0)))

    # ---- per-tile validity mask over the compact conv1 range ----------------
    f = jnp.arange(L1)
    q = base1 + f
    j = q // Pq                        # window plane index (1 .. Dt+2)
    m_in = q % Pq
    row, col = m_in // Wp, m_in % Wp
    hw_ok = (m_in < P) & (row >= 1) & (row <= H) & (col >= 1) & (col <= W)
    r = jnp.arange(T)[:, None] * Dt - 2 + j[None, :]   # real h1 plane index
    d_ok = (r >= 0) & (r < D)
    mask = (hw_ok[None, :] & d_ok).astype(jnp.float32).reshape(T, 1, L1)

    tap_offsets = tuple(kd * Pq + kh * Wp + kw
                        for kd in range(3) for kh in range(3) for kw in range(3))
    kernel = _make_kernel(C8, Pq, Wp, Dt, L1, L2e, XW, F, STORE0, MIDLEN,
                          tap_offsets)

    # generation-aware VMEM limit (leave headroom below physical capacity)
    try:
        vmem_cap = pltpu.get_tpu_info().vmem_capacity_bytes
    except Exception:
        vmem_cap = 64 * 1024 * 1024
    vmem_limit = int(vmem_cap * 0.85)

    flops = 2 * 27 * C8 * C8 * (L1 + L2e) * 2 * N * T
    bytes_accessed = int(xp.size * 2 * (1.0 + 4.0 / Dt)
                         + N * C8 * T * L2e * 4
                         + (w1_t.size + w2_t.size) * 2
                         + N * mask.size * 4)

    out_raw = pl.pallas_call(
        kernel,
        grid=(N, T),
        out_shape=jax.ShapeDtypeStruct((N, C8, T * L2e), jnp.float32),
        in_specs=[
            pl.BlockSpec((1, C8, Dt * Pq), lambda n, t: (n, 0, t)),
            pl.BlockSpec((1, C8, 4 * Pq),
                         lambda n, t: (n, 0, (t + 1) * (Dt // 4))),
            pl.BlockSpec((27, C8, C8), lambda n, t: (0, 0, 0)),
            pl.BlockSpec((27, C8, C8), lambda n, t: (0, 0, 0)),
            pl.BlockSpec((C8, 4), lambda n, t: (0, 0)),
            pl.BlockSpec((1, 1, L1), lambda n, t: (t, 0, 0)),
        ],
        out_specs=pl.BlockSpec((1, C8, L2e), lambda n, t: (n, 0, t)),
        scratch_shapes=[
            pltpu.VMEM((C8, XW), jnp.bfloat16),       # contiguous x window
            pltpu.VMEM((C8, MIDLEN), jnp.bfloat16),   # padded h1 (mid) volume
            pltpu.VMEM((C8, L1), jnp.float32),        # f32 matmul accumulator
        ],
        compiler_params=pltpu.CompilerParams(
            dimension_semantics=("parallel", "parallel"),
            vmem_limit_bytes=vmem_limit),
        cost_estimate=pl.CostEstimate(flops=flops, transcendentals=0,
                                      bytes_accessed=bytes_accessed),
    )(xp, xp, w1_t, w2_t, sb, mask)

    # ---- un-flatten the compact per-tile output back to NCDHW ---------------
    out_c = out_raw.reshape(N, C8, T, L2e)[..., :L2]
    out_p = jnp.pad(out_c, ((0, 0), (0, 0), (0, 0),
                            (Wp + 1, Dt * Pq - (Wp + 1) - L2)))
    out_p = out_p.reshape(N, C8, T * Dt, Pq)[:, :C, :D, :P]
    out = out_p.reshape(N, C, D, Hp, Wp)[:, :, :, 1:H + 1, 1:W + 1]
    return out


# ----------------------------------------------------------------------------
# Pure-JAX reference (same math, fp32) for validation.
# ----------------------------------------------------------------------------
def basic_block_reference(x_ncdhw, w1, w2, g1, be1, m1, v1, g2, be2, m2, v2,
                          eps=1e-5):
    x = jnp.transpose(x_ncdhw, (0, 2, 3, 4, 1))                 # NDHWC
    w1_l = jnp.transpose(w1, (2, 3, 4, 1, 0))                   # DHWIO
    w2_l = jnp.transpose(w2, (2, 3, 4, 1, 0))

    def conv(a, w):
        return jax.lax.conv_general_dilated(
            a, w, window_strides=(1, 1, 1),
            padding=((1, 1), (1, 1), (1, 1)),
            dimension_numbers=("NDHWC", "DHWIO", "NDHWC"))

    inv1 = g1 / jnp.sqrt(v1 + eps)
    inv2 = g2 / jnp.sqrt(v2 + eps)
    h = jnp.maximum(conv(x, w1_l) * inv1 + (be1 - m1 * inv1), 0.0)
    y = conv(h, w2_l) * inv2 + (be2 - m2 * inv2) + x
    y = jnp.maximum(y, 0.0)
    return jnp.transpose(y, (0, 4, 1, 2, 3))                    # NCDHW


if __name__ == "__main__":
    key = jax.random.PRNGKey(0)
    # Non-cubic spatial shape to exercise seam/halo handling; D=6 with
    # d_tile=4 exercises the multi-tile (T=2) halo-recompute path.
    N, C, D, H, W = 2, 4, 6, 5, 7

    ks = jax.random.split(key, 11)
    x = jax.random.normal(ks[0], (N, C, D, H, W), jnp.float32)
    w1 = 0.1 * jax.random.normal(ks[1], (C, C, 3, 3, 3), jnp.float32)
    w2 = 0.1 * jax.random.normal(ks[2], (C, C, 3, 3, 3), jnp.float32)
    g1 = 1.0 + 0.1 * jax.random.normal(ks[3], (C,), jnp.float32)
    be1 = 0.1 * jax.random.normal(ks[4], (C,), jnp.float32)
    m1 = 0.1 * jax.random.normal(ks[5], (C,), jnp.float32)
    v1 = jax.random.uniform(ks[6], (C,), jnp.float32, 0.5, 1.5)
    g2 = 1.0 + 0.1 * jax.random.normal(ks[7], (C,), jnp.float32)
    be2 = 0.1 * jax.random.normal(ks[8], (C,), jnp.float32)
    m2 = 0.1 * jax.random.normal(ks[9], (C,), jnp.float32)
    v2 = jax.random.uniform(ks[10], (C,), jnp.float32, 0.5, 1.5)

    ref = jax.block_until_ready(
        basic_block_reference(x, w1, w2, g1, be1, m1, v1, g2, be2, m2, v2))

    # (1) D-tiled path (T = 2): exercises halo recompute + edge masking.
    out_a = jax.block_until_ready(
        basic_block_forward(x, w1, w2, g1, be1, m1, v1, g2, be2, m2, v2,
                            d_tile=4))
    # (2) single-tile path (T = 1, default tile size).
    out_b = jax.block_until_ready(
        basic_block_forward(x, w1, w2, g1, be1, m1, v1, g2, be2, m2, v2))

    assert out_a.shape == (N, C, D, H, W)
    err_a = float(jnp.max(jnp.abs(out_a - ref)))
    err_b = float(jnp.max(jnp.abs(out_b - ref)))
    # Tolerance accounts for bf16 streaming of x / weights / h1 (fp32 reference);
    # observed errors are typically ~1e-2 or smaller.
    assert err_a < 1e-1, f"tiled path mismatch, max abs err = {err_a}"
    assert err_b < 1e-1, f"single-tile path mismatch, max abs err = {err_b}"
    print("KERNEL_OK")
</pallas_src>

<mosaic_0001>
module attributes {stable_mosaic.version = 11 : i64} {
  func.func @kernel(%arg0: i32, %arg1: i32, %arg2: memref<1x8x512xbf16, #tpu.memory_space<vmem>>, %arg3: memref<1x8x512xbf16, #tpu.memory_space<vmem>>, %arg4: memref<27x8x8xbf16, #tpu.memory_space<vmem>>, %arg5: memref<27x8x8xbf16, #tpu.memory_space<vmem>>, %arg6: memref<8x4xf32, #tpu.memory_space<vmem>>, %arg7: memref<1x1x683xf32, #tpu.memory_space<vmem>>, %arg8: memref<1x8x512xf32, #tpu.memory_space<vmem>>, %arg9: memref<8x1024xbf16, #tpu.memory_space<vmem>>, %arg10: memref<8x1024xbf16, #tpu.memory_space<vmem>>, %arg11: memref<8x683xf32, #tpu.memory_space<vmem>>) attributes {dimension_semantics = [#tpu.dimension_semantics<parallel>, #tpu.dimension_semantics<parallel>], iteration_bounds = array<i64: 2, 2>, scalar_prefetch = 0 : i64, scratch_operands = 3 : i64, tpu.core_type = #tpu.core_type<tc>, window_params = [{transform_indices = @transform_0, window_bounds = array<i64: 1, 8, 512>}, {transform_indices = @transform_1, window_bounds = array<i64: 1, 8, 512>}, {pipeline_mode = #tpu.pipeline_mode<synchronous>, transform_indices = @transform_2, window_bounds = array<i64: 27, 8, 8>}, {pipeline_mode = #tpu.pipeline_mode<synchronous>, transform_indices = @transform_3, window_bounds = array<i64: 27, 8, 8>}, {pipeline_mode = #tpu.pipeline_mode<synchronous>, transform_indices = @transform_4, window_bounds = array<i64: 8, 4>}, {transform_indices = @transform_5, window_bounds = array<i64: 1, 1, 683>}, {transform_indices = @transform_6, window_bounds = array<i64: 1, 8, 512>}]} {
    %c0 = arith.constant 0 : index
    %c0_0 = arith.constant 0 : index
    %c0_1 = arith.constant 0 : index
    %0 = vector.load %arg2[%c0, %c0_0, %c0_1] : memref<1x8x512xbf16, #tpu.memory_space<vmem>>, vector<1x8x512xbf16>
    %1 = vector.shape_cast %0 : vector<1x8x512xbf16> to vector<8x512xbf16>
    %c0_2 = arith.constant 0 : index
    %c0_3 = arith.constant 0 : index
    %2 = vector.load %arg9[%c0_2, %c0_3] : memref<8x1024xbf16, #tpu.memory_space<vmem>>, vector<8x512xbf16>
    tpu.vector_store %arg9[%c0_2, %c0_3], %1 {strides = array<i32>} : memref<8x1024xbf16, #tpu.memory_space<vmem>>, vector<8x512xbf16>,
    %c0_4 = arith.constant 0 : index
    %c0_5 = arith.constant 0 : index
    %c0_6 = arith.constant 0 : index
    %3 = vector.load %arg3[%c0_4, %c0_5, %c0_6] : memref<1x8x512xbf16, #tpu.memory_space<vmem>>, vector<1x8x512xbf16>
    %4 = vector.shape_cast %3 : vector<1x8x512xbf16> to vector<8x512xbf16>
    %c0_7 = arith.constant 0 : index
    %c512 = arith.constant 512 : index
    %5 = vector.load %arg9[%c0_7, %c512] : memref<8x1024xbf16, #tpu.memory_space<vmem>>, vector<8x512xbf16>
    tpu.vector_store %arg9[%c0_7, %c512], %4 {strides = array<i32>} : memref<8x1024xbf16, #tpu.memory_space<vmem>>, vector<8x512xbf16>,
    %c0_8 = arith.constant 0 : index
    %c0_9 = arith.constant 0 : index
    %c0_10 = arith.constant 0 : index
    %6 = vector.load %arg4[%c0_8, %c0_9, %c0_10] : memref<27x8x8xbf16, #tpu.memory_space<vmem>>, vector<1x8x8xbf16>
    %7 = vector.shape_cast %6 : vector<1x8x8xbf16> to vector<8x8xbf16>
    %c0_11 = arith.constant 0 : index
    %c0_12 = arith.constant 0 : index
    %8 = vector.load %arg9[%c0_11, %c0_12] : memref<8x1024xbf16, #tpu.memory_space<vmem>>, vector<8x683xbf16>
    %cst = arith.constant dense<0.000000e+00> : vector<8x683xf32>
    %9 = tpu.matmul %7, %8, %cst {dimension_numbers = #tpu.dot_dimension_numbers<[1], [0], [0], [1], [0, 0, 1, 1], [], []>} : vector<8x8xbf16>, vector<8x683xbf16>, vector<8x683xf32> -> vector<8x683xf32>
    %c0_13 = arith.constant 0 : index
    %c0_14 = arith.constant 0 : index
    %10 = vector.load %arg11[%c0_13, %c0_14] : memref<8x683xf32, #tpu.memory_space<vmem>>, vector<8x683xf32>
    tpu.vector_store %arg11[%c0_13, %c0_14], %9 {strides = array<i32>} : memref<8x683xf32, #tpu.memory_space<vmem>>, vector<8x683xf32>,
    %c1 = arith.constant 1 : index
    %c0_15 = arith.constant 0 : index
    %c0_16 = arith.constant 0 : index
    %11 = vector.load %arg4[%c1, %c0_15, %c0_16] : memref<27x8x8xbf16, #tpu.memory_space<vmem>>, vector<1x8x8xbf16>
    %12 = vector.shape_cast %11 : vector<1x8x8xbf16> to vector<8x8xbf16>
    %c0_17 = arith.constant 0 : index
    %c1_18 = arith.constant 1 : index
    %13 = vector.load %arg9[%c0_17, %c1_18] : memref<8x1024xbf16, #tpu.memory_space<vmem>>, vector<8x683xbf16>
    %cst_19 = arith.constant dense<0.000000e+00> : vector<8x683xf32>
    %14 = tpu.matmul %12, %13, %cst_19 {dimension_numbers = #tpu.dot_dimension_numbers<[1], [0], [0], [1], [0, 0, 1, 1], [], []>} : vector<8x8xbf16>, vector<8x683xbf16>, vector<8x683xf32> -> vector<8x683xf32>
    %c0_20 = arith.constant 0 : index
    %c0_21 = arith.constant 0 : index
    %15 = vector.load %arg11[%c0_20, %c0_21] : memref<8x683xf32, #tpu.memory_space<vmem>>, vector<8x683xf32>
    %16 = arith.addf %15, %14 : vector<8x683xf32>
    %c0_22 = arith.constant 0 : index
    %c0_23 = arith.constant 0 : index
    %17 = vector.load %arg11[%c0_22, %c0_23] : memref<8x683xf32, #tpu.memory_space<vmem>>, vector<8x683xf32>
    tpu.vector_store %arg11[%c0_22, %c0_23], %16 {strides = array<i32>} : memref<8x683xf32, #tpu.memory_space<vmem>>, vector<8x683xf32>,
    %c2 = arith.constant 2 : index
    %c0_24 = arith.constant 0 : index
    %c0_25 = arith.constant 0 : index
    %18 = vector.load %arg4[%c2, %c0_24, %c0_25] : memref<27x8x8xbf16, #tpu.memory_space<vmem>>, vector<1x8x8xbf16>
    %19 = vector.shape_cast %18 : vector<1x8x8xbf16> to vector<8x8xbf16>
    %c0_26 = arith.constant 0 : index
    %c2_27 = arith.constant 2 : index
    %20 = vector.load %arg9[%c0_26, %c2_27] : memref<8x1024xbf16, #tpu.memory_space<vmem>>, vector<8x683xbf16>
    %cst_28 = arith.constant dense<0.000000e+00> : vector<8x683xf32>
    %21 = tpu.matmul %19, %20, %cst_28 {dimension_numbers = #tpu.dot_dimension_numbers<[1], [0], [0], [1], [0, 0, 1, 1], [], []>} : vector<8x8xbf16>, vector<8x683xbf16>, vector<8x683xf32> -> vector<8x683xf32>
    %c0_29 = arith.constant 0 : index
    %c0_30 = arith.constant 0 : index
    %22 = vector.load %arg11[%c0_29, %c0_30] : memref<8x683xf32, #tpu.memory_space<vmem>>, vector<8x683xf32>
    %23 = arith.addf %22, %21 : vector<8x683xf32>
    %c0_31 = arith.constant 0 : index
    %c0_32 = arith.constant 0 : index
    %24 = vector.load %arg11[%c0_31, %c0_32] : memref<8x683xf32, #tpu.memory_space<vmem>>, vector<8x683xf32>
    tpu.vector_store %arg11[%c0_31, %c0_32], %23 {strides = array<i32>} : memref<8x683xf32, #tpu.memory_space<vmem>>, vector<8x683xf32>,
    %c3 = arith.constant 3 : index
    %c0_33 = arith.constant 0 : index
    %c0_34 = arith.constant 0 : index
    %25 = vector.load %arg4[%c3, %c0_33, %c0_34] : memref<27x8x8xbf16, #tpu.memory_space<vmem>>, vector<1x8x8xbf16>
    %26 = vector.shape_cast %25 : vector<1x8x8xbf16> to vector<8x8xbf16>
    %c0_35 = arith.constant 0 : index
    %c9 = arith.constant 9 : index
    %27 = vector.load %arg9[%c0_35, %c9] : memref<8x1024xbf16, #tpu.memory_space<vmem>>, vector<8x683xbf16>
    %cst_36 = arith.constant dense<0.000000e+00> : vector<8x683xf32>
    %28 = tpu.matmul %26, %27, %cst_36 {dimension_numbers = #tpu.dot_dimension_numbers<[1], [0], [0], [1], [0, 0, 1, 1], [], []>} : vector<8x8xbf16>, vector<8x683xbf16>, vector<8x683xf32> -> vector<8x683xf32>
    %c0_37 = arith.constant 0 : index
    %c0_38 = arith.constant 0 : index
    %29 = vector.load %arg11[%c0_37, %c0_38] : memref<8x683xf32, #tpu.memory_space<vmem>>, vector<8x683xf32>
    %30 = arith.addf %29, %28 : vector<8x683xf32>
    %c0_39 = arith.constant 0 : index
    %c0_40 = arith.constant 0 : index
    %31 = vector.load %arg11[%c0_39, %c0_40] : memref<8x683xf32, #tpu.memory_space<vmem>>, vector<8x683xf32>
    tpu.vector_store %arg11[%c0_39, %c0_40], %30 {strides = array<i32>} : memref<8x683xf32, #tpu.memory_space<vmem>>, vector<8x683xf32>,
    %c4 = arith.constant 4 : index
    %c0_41 = arith.constant 0 : index
    %c0_42 = arith.constant 0 : index
    %32 = vector.load %arg4[%c4, %c0_41, %c0_42] : memref<27x8x8xbf16, #tpu.memory_space<vmem>>, vector<1x8x8xbf16>
    %33 = vector.shape_cast %32 : vector<1x8x8xbf16> to vector<8x8xbf16>
    %c0_43 = arith.constant 0 : index
    %c10 = arith.constant 10 : index
    %34 = vector.load %arg9[%c0_43, %c10] : memref<8x1024xbf16, #tpu.memory_space<vmem>>, vector<8x683xbf16>
    %cst_44 = arith.constant dense<0.000000e+00> : vector<8x683xf32>
    %35 = tpu.matmul %33, %34, %cst_44 {dimension_numbers = #tpu.dot_dimension_numbers<[1], [0], [0], [1], [0, 0, 1, 1], [], []>} : vector<8x8xbf16>, vector<8x683xbf16>, vector<8x683xf32> -> vector<8x683xf32>
    %c0_45 = arith.constant 0 : index
    %c0_46 = arith.constant 0 : index
    %36 = vector.load %arg11[%c0_45, %c0_46] : memref<8x683xf32, #tpu.memory_space<vmem>>, vector<8x683xf32>
    %37 = arith.addf %36, %35 : vector<8x683xf32>
    %c0_47 = arith.constant 0 : index
    %c0_48 = arith.constant 0 : index
    %38 = vector.load %arg11[%c0_47, %c0_48] : memref<8x683xf32, #tpu.memory_space<vmem>>, vector<8x683xf32>
    tpu.vector_store %arg11[%c0_47, %c0_48], %37 {strides = array<i32>} : memref<8x683xf32, #tpu.memory_space<vmem>>, vector<8x683xf32>,
    %c5 = arith.constant 5 : index
    %c0_49 = arith.constant 0 : index
    %c0_50 = arith.constant 0 : index
    %39 = vector.load %arg4[%c5, %c0_49, %c0_50] : memref<27x8x8xbf16, #tpu.memory_space<vmem>>, vector<1x8x8xbf16>
    %40 = vector.shape_cast %39 : vector<1x8x8xbf16> to vector<8x8xbf16>
    %c0_51 = arith.constant 0 : index
    %c11 = arith.constant 11 : index
    %41 = vector.load %arg9[%c0_51, %c11] : memref<8x1024xbf16, #tpu.memory_space<vmem>>, vector<8x683xbf16>
    %cst_52 = arith.constant dense<0.000000e+00> : vector<8x683xf32>
    %42 = tpu.matmul %40, %41, %cst_52 {dimension_numbers = #tpu.dot_dimension_numbers<[1], [0], [0], [1], [0, 0, 1, 1], [], []>} : vector<8x8xbf16>, vector<8x683xbf16>, vector<8x683xf32> -> vector<8x683xf32>
    %c0_53 = arith.constant 0 : index
    %c0_54 = arith.constant 0 : index
    %43 = vector.load %arg11[%c0_53, %c0_54] : memref<8x683xf32, #tpu.memory_space<vmem>>, vector<8x683xf32>
    %44 = arith.addf %43, %42 : vector<8x683xf32>
    %c0_55 = arith.constant 0 : index
    %c0_56 = arith.constant 0 : index
    %45 = vector.load %arg11[%c0_55, %c0_56] : memref<8x683xf32, #tpu.memory_space<vmem>>, vector<8x683xf32>
    tpu.vector_store %arg11[%c0_55, %c0_56], %44 {strides = array<i32>} : memref<8x683xf32, #tpu.memory_space<vmem>>, vector<8x683xf32>,
    %c6 = arith.constant 6 : index
    %c0_57 = arith.constant 0 : index
    %c0_58 = arith.constant 0 : index
    %46 = vector.load %arg4[%c6, %c0_57, %c0_58] : memref<27x8x8xbf16, #tpu.memory_space<vmem>>, vector<1x8x8xbf16>
    %47 = vector.shape_cast %46 : vector<1x8x8xbf16> to vector<8x8xbf16>
    %c0_59 = arith.constant 0 : index
    %c18 = arith.constant 18 : index
    %48 = vector.load %arg9[%c0_59, %c18] : memref<8x1024xbf16, #tpu.memory_space<vmem>>, vector<8x683xbf16>
    %cst_60 = arith.constant dense<0.000000e+00> : vector<8x683xf32>
    %49 = tpu.matmul %47, %48, %cst_60 {dimension_numbers = #tpu.dot_dimension_numbers<[1], [0], [0], [1], [0, 0, 1, 1], [], []>} : vector<8x8xbf16>, vector<8x683xbf16>, vector<8x683xf32> -> vector<8x683xf32>
    %c0_61 = arith.constant 0 : index
    %c0_62 = arith.constant 0 : index
    %50 = vector.load %arg11[%c0_61, %c0_62] : memref<8x683xf32, #tpu.memory_space<vmem>>, vector<8x683xf32>
    %51 = arith.addf %50, %49 : vector<8x683xf32>
    %c0_63 = arith.constant 0 : index
    %c0_64 = arith.constant 0 : index
    %52 = vector.load %arg11[%c0_63, %c0_64] : memref<8x683xf32, #tpu.memory_space<vmem>>, vector<8x683xf32>
    tpu.vector_store %arg11[%c0_63, %c0_64], %51 {strides = array<i32>} : memref<8x683xf32, #tpu.memory_space<vmem>>, vector<8x683xf32>,
    %c7 = arith.constant 7 : index
    %c0_65 = arith.constant 0 : index
    %c0_66 = arith.constant 0 : index
    %53 = vector.load %arg4[%c7, %c0_65, %c0_66] : memref<27x8x8xbf16, #tpu.memory_space<vmem>>, vector<1x8x8xbf16>
    %54 = vector.shape_cast %53 : vector<1x8x8xbf16> to vector<8x8xbf16>
    %c0_67 = arith.constant 0 : index
    %c19 = arith.constant 19 : index
    %55 = vector.load %arg9[%c0_67, %c19] : memref<8x1024xbf16, #tpu.memory_space<vmem>>, vector<8x683xbf16>
    %cst_68 = arith.constant dense<0.000000e+00> : vector<8x683xf32>
    %56 = tpu.matmul %54, %55, %cst_68 {dimension_numbers = #tpu.dot_dimension_numbers<[1], [0], [0], [1], [0, 0, 1, 1], [], []>} : vector<8x8xbf16>, vector<8x683xbf16>, vector<8x683xf32> -> vector<8x683xf32>
    %c0_69 = arith.constant 0 : index
    %c0_70 = arith.constant 0 : index
    %57 = vector.load %arg11[%c0_69, %c0_70] : memref<8x683xf32, #tpu.memory_space<vmem>>, vector<8x683xf32>
    %58 = arith.addf %57, %56 : vector<8x683xf32>
    %c0_71 = arith.constant 0 : index
    %c0_72 = arith.constant 0 : index
    %59 = vector.load %arg11[%c0_71, %c0_72] : memref<8x683xf32, #tpu.memory_space<vmem>>, vector<8x683xf32>
    tpu.vector_store %arg11[%c0_71, %c0_72], %58 {strides = array<i32>} : memref<8x683xf32, #tpu.memory_space<vmem>>, vector<8x683xf32>,
    %c8 = arith.constant 8 : index
    %c0_73 = arith.constant 0 : index
    %c0_74 = arith.constant 0 : index
    %60 = vector.load %arg4[%c8, %c0_73, %c0_74] : memref<27x8x8xbf16, #tpu.memory_space<vmem>>, vector<1x8x8xbf16>
    %61 = vector.shape_cast %60 : vector<1x8x8xbf16> to vector<8x8xbf16>
    %c0_75 = arith.constant 0 : index
    %c20 = arith.constant 20 : index
    %62 = vector.load %arg9[%c0_75, %c20] : memref<8x1024xbf16, #tpu.memory_space<vmem>>, vector<8x683xbf16>
    %cst_76 = arith.constant dense<0.000000e+00> : vector<8x683xf32>
    %63 = tpu.matmul %61, %62, %cst_76 {dimension_numbers = #tpu.dot_dimension_numbers<[1], [0], [0], [1], [0, 0, 1, 1], [], []>} : vector<8x8xbf16>, vector<8x683xbf16>, vector<8x683xf32> -> vector<8x683xf32>
    %c0_77 = arith.constant 0 : index
    %c0_78 = arith.constant 0 : index
    %64 = vector.load %arg11[%c0_77, %c0_78] : memref<8x683xf32, #tpu.memory_space<vmem>>, vector<8x683xf32>
    %65 = arith.addf %64, %63 : vector<8x683xf32>
    %c0_79 = arith.constant 0 : index
    %c0_80 = arith.constant 0 : index
    %66 = vector.load %arg11[%c0_79, %c0_80] : memref<8x683xf32, #tpu.memory_space<vmem>>, vector<8x683xf32>
    tpu.vector_store %arg11[%c0_79, %c0_80], %65 {strides = array<i32>} : memref<8x683xf32, #tpu.memory_space<vmem>>, vector<8x683xf32>,
    %c9_81 = arith.constant 9 : index
    %c0_82 = arith.constant 0 : index
    %c0_83 = arith.constant 0 : index
    %67 = vector.load %arg4[%c9_81, %c0_82, %c0_83] : memref<27x8x8xbf16, #tpu.memory_space<vmem>>, vector<1x8x8xbf16>
    %68 = vector.shape_cast %67 : vector<1x8x8xbf16> to vector<8x8xbf16>
    %c0_84 = arith.constant 0 : index
    %c128 = arith.constant 128 : index
    %69 = vector.load %arg9[%c0_84, %c128] : memref<8x1024xbf16, #tpu.memory_space<vmem>>, vector<8x683xbf16>
    %cst_85 = arith.constant dense<0.000000e+00> : vector<8x683xf32>
    %70 = tpu.matmul %68, %69, %cst_85 {dimension_numbers = #tpu.dot_dimension_numbers<[1], [0], [0], [1], [0, 0, 1, 1], [], []>} : vector<8x8xbf16>, vector<8x683xbf16>, vector<8x683xf32> -> vector<8x683xf32>
    %c0_86 = arith.constant 0 : index
    %c0_87 = arith.constant 0 : index
    %71 = vector.load %arg11[%c0_86, %c0_87] : memref<8x683xf32, #tpu.memory_space<vmem>>, vector<8x683xf32>
    %72 = arith.addf %71, %70 : vector<8x683xf32>
    %c0_88 = arith.constant 0 : index
    %c0_89 = arith.constant 0 : index
    %73 = vector.load %arg11[%c0_88, %c0_89] : memref<8x683xf32, #tpu.memory_space<vmem>>, vector<8x683xf32>
    tpu.vector_store %arg11[%c0_88, %c0_89], %72 {strides = array<i32>} : memref<8x683xf32, #tpu.memory_space<vmem>>, vector<8x683xf32>,
    %c10_90 = arith.constant 10 : index
    %c0_91 = arith.constant 0 : index
    %c0_92 = arith.constant 0 : index
    %74 = vector.load %arg4[%c10_90, %c0_91, %c0_92] : memref<27x8x8xbf16, #tpu.memory_space<vmem>>, vector<1x8x8xbf16>
    %75 = vector.shape_cast %74 : vector<1x8x8xbf16> to vector<8x8xbf16>
    %c0_93 = arith.constant 0 : index
    %c129 = arith.constant 129 : index
    %76 = vector.load %arg9[%c0_93, %c129] : memref<8x1024xbf16, #tpu.memory_space<vmem>>, vector<8x683xbf16>
    %cst_94 = arith.constant dense<0.000000e+00> : vector<8x683xf32>
    %77 = tpu.matmul %75, %76, %cst_94 {dimension_numbers = #tpu.dot_dimension_numbers<[1], [0], [0], [1], [0, 0, 1, 1], [], []>} : vector<8x8xbf16>, vector<8x683xbf16>, vector<8x683xf32> -> vector<8x683xf32>
    %c0_95 = arith.constant 0 : index
    %c0_96 = arith.constant 0 : index
    %78 = vector.load %arg11[%c0_95, %c0_96] : memref<8x683xf32, #tpu.memory_space<vmem>>, vector<8x683xf32>
    %79 = arith.addf %78, %77 : vector<8x683xf32>
    %c0_97 = arith.constant 0 : index
    %c0_98 = arith.constant 0 : index
    %80 = vector.load %arg11[%c0_97, %c0_98] : memref<8x683xf32, #tpu.memory_space<vmem>>, vector<8x683xf32>
    tpu.vector_store %arg11[%c0_97, %c0_98], %79 {strides = array<i32>} : memref<8x683xf32, #tpu.memory_space<vmem>>, vector<8x683xf32>,
    %c11_99 = arith.constant 11 : index
    %c0_100 = arith.constant 0 : index
    %c0_101 = arith.constant 0 : index
    %81 = vector.load %arg4[%c11_99, %c0_100, %c0_101] : memref<27x8x8xbf16, #tpu.memory_space<vmem>>, vector<1x8x8xbf16>
    %82 = vector.shape_cast %81 : vector<1x8x8xbf16> to vector<8x8xbf16>
    %c0_102 = arith.constant 0 : index
    %c130 = arith.constant 130 : index
    %83 = vector.load %arg9[%c0_102, %c130] : memref<8x1024xbf16, #tpu.memory_space<vmem>>, vector<8x683xbf16>
    %cst_103 = arith.constant dense<0.000000e+00> : vector<8x683xf32>
    %84 = tpu.matmul %82, %83, %cst_103 {dimension_numbers = #tpu.dot_dimension_numbers<[1], [0], [0], [1], [0, 0, 1, 1], [], []>} : vector<8x8xbf16>, vector<8x683xbf16>, vector<8x683xf32> -> vector<8x683xf32>
    %c0_104 = arith.constant 0 : index
    %c0_105 = arith.constant 0 : index
    %85 = vector.load %arg11[%c0_104, %c0_105] : memref<8x683xf32, #tpu.memory_space<vmem>>, vector<8x683xf32>
    %86 = arith.addf %85, %84 : vector<8x683xf32>
    %c0_106 = arith.constant 0 : index
    %c0_107 = arith.constant 0 : index
    %87 = vector.load %arg11[%c0_106, %c0_107] : memref<8x683xf32, #tpu.memory_space<vmem>>, vector<8x683xf32>
    tpu.vector_store %arg11[%c0_106, %c0_107], %86 {strides = array<i32>} : memref<8x683xf32, #tpu.memory_space<vmem>>, vector<8x683xf32>,
    %c12 = arith.constant 12 : index
    %c0_108 = arith.constant 0 : index
    %c0_109 = arith.constant 0 : index
    %88 = vector.load %arg4[%c12, %c0_108, %c0_109] : memref<27x8x8xbf16, #tpu.memory_space<vmem>>, vector<1x8x8xbf16>
    %89 = vector.shape_cast %88 : vector<1x8x8xbf16> to vector<8x8xbf16>
    %c0_110 = arith.constant 0 : index
    %c137 = arith.constant 137 : index
    %90 = vector.load %arg9[%c0_110, %c137] : memref<8x1024xbf16, #tpu.memory_space<vmem>>, vector<8x683xbf16>
    %cst_111 = arith.constant dense<0.000000e+00> : vector<8x683xf32>
    %91 = tpu.matmul %89, %90, %cst_111 {dimension_numbers = #tpu.dot_dimension_numbers<[1], [0], [0], [1], [0, 0, 1, 1], [], []>} : vector<8x8xbf16>, vector<8x683xbf16>, vector<8x683xf32> -> vector<8x683xf32>
    %c0_112 = arith.constant 0 : index
    %c0_113 = arith.constant 0 : index
    %92 = vector.load %arg11[%c0_112, %c0_113] : memref<8x683xf32, #tpu.memory_space<vmem>>, vector<8x683xf32>
    %93 = arith.addf %92, %91 : vector<8x683xf32>
    %c0_114 = arith.constant 0 : index
    %c0_115 = arith.constant 0 : index
    %94 = vector.load %arg11[%c0_114, %c0_115] : memref<8x683xf32, #tpu.memory_space<vmem>>, vector<8x683xf32>
    tpu.vector_store %arg11[%c0_114, %c0_115], %93 {strides = array<i32>} : memref<8x683xf32, #tpu.memory_space<vmem>>, vector<8x683xf32>,
    %c13 = arith.constant 13 : index
    %c0_116 = arith.constant 0 : index
    %c0_117 = arith.constant 0 : index
    %95 = vector.load %arg4[%c13, %c0_116, %c0_117] : memref<27x8x8xbf16, #tpu.memory_space<vmem>>, vector<1x8x8xbf16>
    %96 = vector.shape_cast %95 : vector<1x8x8xbf16> to vector<8x8xbf16>
    %c0_118 = arith.constant 0 : index
    %c138 = arith.constant 138 : index
    %97 = vector.load %arg9[%c0_118, %c138] : memref<8x1024xbf16, #tpu.memory_space<vmem>>, vector<8x683xbf16>
    %cst_119 = arith.constant dense<0.000000e+00> : vector<8x683xf32>
    %98 = tpu.matmul %96, %97, %cst_119 {dimension_numbers = #tpu.dot_dimension_numbers<[1], [0], [0], [1], [0, 0, 1, 1], [], []>} : vector<8x8xbf16>, vector<8x683xbf16>, vector<8x683xf32> -> vector<8x683xf32>
    %c0_120 = arith.constant 0 : index
    %c0_121 = arith.constant 0 : index
    %99 = vector.load %arg11[%c0_120, %c0_121] : memref<8x683xf32, #tpu.memory_space<vmem>>, vector<8x683xf32>
    %100 = arith.addf %99, %98 : vector<8x683xf32>
    %c0_122 = arith.constant 0 : index
    %c0_123 = arith.constant 0 : index
    %101 = vector.load %arg11[%c0_122, %c0_123] : memref<8x683xf32, #tpu.memory_space<vmem>>, vector<8x683xf32>
    tpu.vector_store %arg11[%c0_122, %c0_123], %100 {strides = array<i32>} : memref<8x683xf32, #tpu.memory_space<vmem>>, vector<8x683xf32>,
    %c14 = arith.constant 14 : index
    %c0_124 = arith.constant 0 : index
    %c0_125 = arith.constant 0 : index
    %102 = vector.load %arg4[%c14, %c0_124, %c0_125] : memref<27x8x8xbf16, #tpu.memory_space<vmem>>, vector<1x8x8xbf16>
    %103 = vector.shape_cast %102 : vector<1x8x8xbf16> to vector<8x8xbf16>
    %c0_126 = arith.constant 0 : index
    %c139 = arith.constant 139 : index
    %104 = vector.load %arg9[%c0_126, %c139] : memref<8x1024xbf16, #tpu.memory_space<vmem>>, vector<8x683xbf16>
    %cst_127 = arith.constant dense<0.000000e+00> : vector<8x683xf32>
    %105 = tpu.matmul %103, %104, %cst_127 {dimension_numbers = #tpu.dot_dimension_numbers<[1], [0], [0], [1], [0, 0, 1, 1], [], []>} : vector<8x8xbf16>, vector<8x683xbf16>, vector<8x683xf32> -> vector<8x683xf32>
    %c0_128 = arith.constant 0 : index
    %c0_129 = arith.constant 0 : index
    %106 = vector.load %arg11[%c0_128, %c0_129] : memref<8x683xf32, #tpu.memory_space<vmem>>, vector<8x683xf32>
    %107 = arith.addf %106, %105 : vector<8x683xf32>
    %c0_130 = arith.constant 0 : index
    %c0_131 = arith.constant 0 : index
    %108 = vector.load %arg11[%c0_130, %c0_131] : memref<8x683xf32, #tpu.memory_space<vmem>>, vector<8x683xf32>
    tpu.vector_store %arg11[%c0_130, %c0_131], %107 {strides = array<i32>} : memref<8x683xf32, #tpu.memory_space<vmem>>, vector<8x683xf32>,
    %c15 = arith.constant 15 : index
    %c0_132 = arith.constant 0 : index
    %c0_133 = arith.constant 0 : index
    %109 = vector.load %arg4[%c15, %c0_132, %c0_133] : memref<27x8x8xbf16, #tpu.memory_space<vmem>>, vector<1x8x8xbf16>
    %110 = vector.shape_cast %109 : vector<1x8x8xbf16> to vector<8x8xbf16>
    %c0_134 = arith.constant 0 : index
    %c146 = arith.constant 146 : index
    %111 = vector.load %arg9[%c0_134, %c146] : memref<8x1024xbf16, #tpu.memory_space<vmem>>, vector<8x683xbf16>
    %cst_135 = arith.constant dense<0.000000e+00> : vector<8x683xf32>
    %112 = tpu.matmul %110, %111, %cst_135 {dimension_numbers = #tpu.dot_dimension_numbers<[1], [0], [0], [1], [0, 0, 1, 1], [], []>} : vector<8x8xbf16>, vector<8x683xbf16>, vector<8x683xf32> -> vector<8x683xf32>
    %c0_136 = arith.constant 0 : index
    %c0_137 = arith.constant 0 : index
    %113 = vector.load %arg11[%c0_136, %c0_137] : memref<8x683xf32, #tpu.memory_space<vmem>>, vector<8x683xf32>
    %114 = arith.addf %113, %112 : vector<8x683xf32>
    %c0_138 = arith.constant 0 : index
    %c0_139 = arith.constant 0 : index
    %115 = vector.load %arg11[%c0_138, %c0_139] : memref<8x683xf32, #tpu.memory_space<vmem>>, vector<8x683xf32>
    tpu.vector_store %arg11[%c0_138, %c0_139], %114 {strides = array<i32>} : memref<8x683xf32, #tpu.memory_space<vmem>>, vector<8x683xf32>,
    %c16 = arith.constant 16 : index
    %c0_140 = arith.constant 0 : index
    %c0_141 = arith.constant 0 : index
    %116 = vector.load %arg4[%c16, %c0_140, %c0_141] : memref<27x8x8xbf16, #tpu.memory_space<vmem>>, vector<1x8x8xbf16>
    %117 = vector.shape_cast %116 : vector<1x8x8xbf16> to vector<8x8xbf16>
    %c0_142 = arith.constant 0 : index
    %c147 = arith.constant 147 : index
    %118 = vector.load %arg9[%c0_142, %c147] : memref<8x1024xbf16, #tpu.memory_space<vmem>>, vector<8x683xbf16>
    %cst_143 = arith.constant dense<0.000000e+00> : vector<8x683xf32>
    %119 = tpu.matmul %117, %118, %cst_143 {dimension_numbers = #tpu.dot_dimension_numbers<[1], [0], [0], [1], [0, 0, 1, 1], [], []>} : vector<8x8xbf16>, vector<8x683xbf16>, vector<8x683xf32> -> vector<8x683xf32>
    %c0_144 = arith.constant 0 : index
    %c0_145 = arith.constant 0 : index
    %120 = vector.load %arg11[%c0_144, %c0_145] : memref<8x683xf32, #tpu.memory_space<vmem>>, vector<8x683xf32>
    %121 = arith.addf %120, %119 : vector<8x683xf32>
    %c0_146 = arith.constant 0 : index
    %c0_147 = arith.constant 0 : index
    %122 = vector.load %arg11[%c0_146, %c0_147] : memref<8x683xf32, #tpu.memory_space<vmem>>, vector<8x683xf32>
    tpu.vector_store %arg11[%c0_146, %c0_147], %121 {strides = array<i32>} : memref<8x683xf32, #tpu.memory_space<vmem>>, vector<8x683xf32>,
    %c17 = arith.constant 17 : index
    %c0_148 = arith.constant 0 : index
    %c0_149 = arith.constant 0 : index
    %123 = vector.load %arg4[%c17, %c0_148, %c0_149] : memref<27x8x8xbf16, #tpu.memory_space<vmem>>, vector<1x8x8xbf16>
    %124 = vector.shape_cast %123 : vector<1x8x8xbf16> to vector<8x8xbf16>
    %c0_150 = arith.constant 0 : index
    %c148 = arith.constant 148 : index
    %125 = vector.load %arg9[%c0_150, %c148] : memref<8x1024xbf16, #tpu.memory_space<vmem>>, vector<8x683xbf16>
    %cst_151 = arith.constant dense<0.000000e+00> : vector<8x683xf32>
    %126 = tpu.matmul %124, %125, %cst_151 {dimension_numbers = #tpu.dot_dimension_numbers<[1], [0], [0], [1], [0, 0, 1, 1], [], []>} : vector<8x8xbf16>, vector<8x683xbf16>, vector<8x683xf32> -> vector<8x683xf32>
    %c0_152 = arith.constant 0 : index
    %c0_153 = arith.constant 0 : index
    %127 = vector.load %arg11[%c0_152, %c0_153] : memref<8x683xf32, #tpu.memory_space<vmem>>, vector<8x683xf32>
    %128 = arith.addf %127, %126 : vector<8x683xf32>
    %c0_154 = arith.constant 0 : index
    %c0_155 = arith.constant 0 : index
    %129 = vector.load %arg11[%c0_154, %c0_155] : memref<8x683xf32, #tpu.memory_space<vmem>>, vector<8x683xf32>
    tpu.vector_store %arg11[%c0_154, %c0_155], %128 {strides = array<i32>} : memref<8x683xf32, #tpu.memory_space<vmem>>, vector<8x683xf32>,
    %c18_156 = arith.constant 18 : index
    %c0_157 = arith.constant 0 : index
    %c0_158 = arith.constant 0 : index
    %130 = vector.load %arg4[%c18_156, %c0_157, %c0_158] : memref<27x8x8xbf16, #tpu.memory_space<vmem>>, vector<1x8x8xbf16>
    %131 = vector.shape_cast %130 : vector<1x8x8xbf16> to vector<8x8xbf16>
    %c0_159 = arith.constant 0 : index
    %c256 = arith.constant 256 : index
    %132 = vector.load %arg9[%c0_159, %c256] : memref<8x1024xbf16, #tpu.memory_space<vmem>>, vector<8x683xbf16>
    %cst_160 = arith.constant dense<0.000000e+00> : vector<8x683xf32>
    %133 = tpu.matmul %131, %132, %cst_160 {dimension_numbers = #tpu.dot_dimension_numbers<[1], [0], [0], [1], [0, 0, 1, 1], [], []>} : vector<8x8xbf16>, vector<8x683xbf16>, vector<8x683xf32> -> vector<8x683xf32>
    %c0_161 = arith.constant 0 : index
    %c0_162 = arith.constant 0 : index
    %134 = vector.load %arg11[%c0_161, %c0_162] : memref<8x683xf32, #tpu.memory_space<vmem>>, vector<8x683xf32>
    %135 = arith.addf %134, %133 : vector<8x683xf32>
    %c0_163 = arith.constant 0 : index
    %c0_164 = arith.constant 0 : index
    %136 = vector.load %arg11[%c0_163, %c0_164] : memref<8x683xf32, #tpu.memory_space<vmem>>, vector<8x683xf32>
    tpu.vector_store %arg11[%c0_163, %c0_164], %135 {strides = array<i32>} : memref<8x683xf32, #tpu.memory_space<vmem>>, vector<8x683xf32>,
    %c19_165 = arith.constant 19 : index
    %c0_166 = arith.constant 0 : index
    %c0_167 = arith.constant 0 : index
    %137 = vector.load %arg4[%c19_165, %c0_166, %c0_167] : memref<27x8x8xbf16, #tpu.memory_space<vmem>>, vector<1x8x8xbf16>
    %138 = vector.shape_cast %137 : vector<1x8x8xbf16> to vector<8x8xbf16>
    %c0_168 = arith.constant 0 : index
    %c257 = arith.constant 257 : index
    %139 = vector.load %arg9[%c0_168, %c257] : memref<8x1024xbf16, #tpu.memory_space<vmem>>, vector<8x683xbf16>
    %cst_169 = arith.constant dense<0.000000e+00> : vector<8x683xf32>
    %140 = tpu.matmul %138, %139, %cst_169 {dimension_numbers = #tpu.dot_dimension_numbers<[1], [0], [0], [1], [0, 0, 1, 1], [], []>} : vector<8x8xbf16>, vector<8x683xbf16>, vector<8x683xf32> -> vector<8x683xf32>
    %c0_170 = arith.constant 0 : index
    %c0_171 = arith.constant 0 : index
    %141 = vector.load %arg11[%c0_170, %c0_171] : memref<8x683xf32, #tpu.memory_space<vmem>>, vector<8x683xf32>
    %142 = arith.addf %141, %140 : vector<8x683xf32>
    %c0_172 = arith.constant 0 : index
    %c0_173 = arith.constant 0 : index
    %143 = vector.load %arg11[%c0_172, %c0_173] : memref<8x683xf32, #tpu.memory_space<vmem>>, vector<8x683xf32>
    tpu.vector_store %arg11[%c0_172, %c0_173], %142 {strides = array<i32>} : memref<8x683xf32, #tpu.memory_space<vmem>>, vector<8x683xf32>,
    %c20_174 = arith.constant 20 : index
    %c0_175 = arith.constant 0 : index
    %c0_176 = arith.constant 0 : index
    %144 = vector.load %arg4[%c20_174, %c0_175, %c0_176] : memref<27x8x8xbf16, #tpu.memory_space<vmem>>, vector<1x8x8xbf16>
    %145 = vector.shape_cast %144 : vector<1x8x8xbf16> to vector<8x8xbf16>
    %c0_177 = arith.constant 0 : index
    %c258 = arith.constant 258 : index
    %146 = vector.load %arg9[%c0_177, %c258] : memref<8x1024xbf16, #tpu.memory_space<vmem>>, vector<8x683xbf16>
    %cst_178 = arith.constant dense<0.000000e+00> : vector<8x683xf32>
    %147 = tpu.matmul %145, %146, %cst_178 {dimension_numbers = #tpu.dot_dimension_numbers<[1], [0], [0], [1], [0, 0, 1, 1], [], []>} : vector<8x8xbf16>, vector<8x683xbf16>, vector<8x683xf32> -> vector<8x683xf32>
    %c0_179 = arith.constant 0 : index
    %c0_180 = arith.constant 0 : index
    %148 = vector.load %arg11[%c0_179, %c0_180] : memref<8x683xf32, #tpu.memory_space<vmem>>, vector<8x683xf32>
    %149 = arith.addf %148, %147 : vector<8x683xf32>
    %c0_181 = arith.constant 0 : index
    %c0_182 = arith.constant 0 : index
    %150 = vector.load %arg11[%c0_181, %c0_182] : memref<8x683xf32, #tpu.memory_space<vmem>>, vector<8x683xf32>
    tpu.vector_store %arg11[%c0_181, %c0_182], %149 {strides = array<i32>} : memref<8x683xf32, #tpu.memory_space<vmem>>, vector<8x683xf32>,
    %c21 = arith.constant 21 : index
    %c0_183 = arith.constant 0 : index
    %c0_184 = arith.constant 0 : index
    %151 = vector.load %arg4[%c21, %c0_183, %c0_184] : memref<27x8x8xbf16, #tpu.memory_space<vmem>>, vector<1x8x8xbf16>
    %152 = vector.shape_cast %151 : vector<1x8x8xbf16> to vector<8x8xbf16>
    %c0_185 = arith.constant 0 : index
    %c265 = arith.constant 265 : index
    %153 = vector.load %arg9[%c0_185, %c265] : memref<8x1024xbf16, #tpu.memory_space<vmem>>, vector<8x683xbf16>
    %cst_186 = arith.constant dense<0.000000e+00> : vector<8x683xf32>
    %154 = tpu.matmul %152, %153, %cst_186 {dimension_numbers = #tpu.dot_dimension_numbers<[1], [0], [0], [1], [0, 0, 1, 1], [], []>} : vector<8x8xbf16>, vector<8x683xbf16>, vector<8x683xf32> -> vector<8x683xf32>
    %c0_187 = arith.constant 0 : index
    %c0_188 = arith.constant 0 : index
    %155 = vector.load %arg11[%c0_187, %c0_188] : memref<8x683xf32, #tpu.memory_space<vmem>>, vector<8x683xf32>
    %156 = arith.addf %155, %154 : vector<8x683xf32>
    %c0_189 = arith.constant 0 : index
    %c0_190 = arith.constant 0 : index
    %157 = vector.load %arg11[%c0_189, %c0_190] : memref<8x683xf32, #tpu.memory_space<vmem>>, vector<8x683xf32>
    tpu.vector_store %arg11[%c0_189, %c0_190], %156 {strides = array<i32>} : memref<8x683xf32, #tpu.memory_space<vmem>>, vector<8x683xf32>,
    %c22 = arith.constant 22 : index
    %c0_191 = arith.constant 0 : index
    %c0_192 = arith.constant 0 : index
    %158 = vector.load %arg4[%c22, %c0_191, %c0_192] : memref<27x8x8xbf16, #tpu.memory_space<vmem>>, vector<1x8x8xbf16>
    %159 = vector.shape_cast %158 : vector<1x8x8xbf16> to vector<8x8xbf16>
    %c0_193 = arith.constant 0 : index
    %c266 = arith.constant 266 : index
    %160 = vector.load %arg9[%c0_193, %c266] : memref<8x1024xbf16, #tpu.memory_space<vmem>>, vector<8x683xbf16>
    %cst_194 = arith.constant dense<0.000000e+00> : vector<8x683xf32>
    %161 = tpu.matmul %159, %160, %cst_194 {dimension_numbers = #tpu.dot_dimension_numbers<[1], [0], [0], [1], [0, 0, 1, 1], [], []>} : vector<8x8xbf16>, vector<8x683xbf16>, vector<8x683xf32> -> vector<8x683xf32>
    %c0_195 = arith.constant 0 : index
    %c0_196 = arith.constant 0 : index
    %162 = vector.load %arg11[%c0_195, %c0_196] : memref<8x683xf32, #tpu.memory_space<vmem>>, vector<8x683xf32>
    %163 = arith.addf %162, %161 : vector<8x683xf32>
    %c0_197 = arith.constant 0 : index
    %c0_198 = arith.constant 0 : index
    %164 = vector.load %arg11[%c0_197, %c0_198] : memref<8x683xf32, #tpu.memory_space<vmem>>, vector<8x683xf32>
    tpu.vector_store %arg11[%c0_197, %c0_198], %163 {strides = array<i32>} : memref<8x683xf32, #tpu.memory_space<vmem>>, vector<8x683xf32>,
    %c23 = arith.constant 23 : index
    %c0_199 = arith.constant 0 : index
    %c0_200 = arith.constant 0 : index
    %165 = vector.load %arg4[%c23, %c0_199, %c0_200] : memref<27x8x8xbf16, #tpu.memory_space<vmem>>, vector<1x8x8xbf16>
    %166 = vector.shape_cast %165 : vector<1x8x8xbf16> to vector<8x8xbf16>
    %c0_201 = arith.constant 0 : index
    %c267 = arith.constant 267 : index
    %167 = vector.load %arg9[%c0_201, %c267] : memref<8x1024xbf16, #tpu.memory_space<vmem>>, vector<8x683xbf16>
    %cst_202 = arith.constant dense<0.000000e+00> : vector<8x683xf32>
    %168 = tpu.matmul %166, %167, %cst_202 {dimension_numbers = #tpu.dot_dimension_numbers<[1], [0], [0], [1], [0, 0, 1, 1], [], []>} : vector<8x8xbf16>, vector<8x683xbf16>, vector<8x683xf32> -> vector<8x683xf32>
    %c0_203 = arith.constant 0 : index
    %c0_204 = arith.constant 0 : index
    %169 = vector.load %arg11[%c0_203, %c0_204] : memref<8x683xf32, #tpu.memory_space<vmem>>, vector<8x683xf32>
    %170 = arith.addf %169, %168 : vector<8x683xf32>
    %c0_205 = arith.constant 0 : index
    %c0_206 = arith.constant 0 : index
    %171 = vector.load %arg11[%c0_205, %c0_206] : memref<8x683xf32, #tpu.memory_space<vmem>>, vector<8x683xf32>
    tpu.vector_store %arg11[%c0_205, %c0_206], %170 {strides = array<i32>} : memref<8x683xf32, #tpu.memory_space<vmem>>, vector<8x683xf32>,
    %c24 = arith.constant 24 : index
    %c0_207 = arith.constant 0 : index
    %c0_208 = arith.constant 0 : index
    %172 = vector.load %arg4[%c24, %c0_207, %c0_208] : memref<27x8x8xbf16, #tpu.memory_space<vmem>>, vector<1x8x8xbf16>
    %173 = vector.shape_cast %172 : vector<1x8x8xbf16> to vector<8x8xbf16>
    %c0_209 = arith.constant 0 : index
    %c274 = arith.constant 274 : index
    %174 = vector.load %arg9[%c0_209, %c274] : memref<8x1024xbf16, #tpu.memory_space<vmem>>, vector<8x683xbf16>
    %cst_210 = arith.constant dense<0.000000e+00> : vector<8x683xf32>
    %175 = tpu.matmul %173, %174, %cst_210 {dimension_numbers = #tpu.dot_dimension_numbers<[1], [0], [0], [1], [0, 0, 1, 1], [], []>} : vector<8x8xbf16>, vector<8x683xbf16>, vector<8x683xf32> -> vector<8x683xf32>
    %c0_211 = arith.constant 0 : index
    %c0_212 = arith.constant 0 : index
    %176 = vector.load %arg11[%c0_211, %c0_212] : memref<8x683xf32, #tpu.memory_space<vmem>>, vector<8x683xf32>
    %177 = arith.addf %176, %175 : vector<8x683xf32>
    %c0_213 = arith.constant 0 : index
    %c0_214 = arith.constant 0 : index
    %178 = vector.load %arg11[%c0_213, %c0_214] : memref<8x683xf32, #tpu.memory_space<vmem>>, vector<8x683xf32>
    tpu.vector_store %arg11[%c0_213, %c0_214], %177 {strides = array<i32>} : memref<8x683xf32, #tpu.memory_space<vmem>>, vector<8x683xf32>,
    %c25 = arith.constant 25 : index
    %c0_215 = arith.constant 0 : index
    %c0_216 = arith.constant 0 : index
    %179 = vector.load %arg4[%c25, %c0_215, %c0_216] : memref<27x8x8xbf16, #tpu.memory_space<vmem>>, vector<1x8x8xbf16>
    %180 = vector.shape_cast %179 : vector<1x8x8xbf16> to vector<8x8xbf16>
    %c0_217 = arith.constant 0 : index
    %c275 = arith.constant 275 : index
    %181 = vector.load %arg9[%c0_217, %c275] : memref<8x1024xbf16, #tpu.memory_space<vmem>>, vector<8x683xbf16>
    %cst_218 = arith.constant dense<0.000000e+00> : vector<8x683xf32>
    %182 = tpu.matmul %180, %181, %cst_218 {dimension_numbers = #tpu.dot_dimension_numbers<[1], [0], [0], [1], [0, 0, 1, 1], [], []>} : vector<8x8xbf16>, vector<8x683xbf16>, vector<8x683xf32> -> vector<8x683xf32>
    %c0_219 = arith.constant 0 : index
    %c0_220 = arith.constant 0 : index
    %183 = vector.load %arg11[%c0_219, %c0_220] : memref<8x683xf32, #tpu.memory_space<vmem>>, vector<8x683xf32>
    %184 = arith.addf %183, %182 : vector<8x683xf32>
    %c0_221 = arith.constant 0 : index
    %c0_222 = arith.constant 0 : index
    %185 = vector.load %arg11[%c0_221, %c0_222] : memref<8x683xf32, #tpu.memory_space<vmem>>, vector<8x683xf32>
    tpu.vector_store %arg11[%c0_221, %c0_222], %184 {strides = array<i32>} : memref<8x683xf32, #tpu.memory_space<vmem>>, vector<8x683xf32>,
    %c26 = arith.constant 26 : index
    %c0_223 = arith.constant 0 : index
    %c0_224 = arith.constant 0 : index
    %186 = vector.load %arg4[%c26, %c0_223, %c0_224] : memref<27x8x8xbf16, #tpu.memory_space<vmem>>, vector<1x8x8xbf16>
    %187 = vector.shape_cast %186 : vector<1x8x8xbf16> to vector<8x8xbf16>
    %c0_225 = arith.constant 0 : index
    %c276 = arith.constant 276 : index
    %188 = vector.load %arg9[%c0_225, %c276] : memref<8x1024xbf16, #tpu.memory_space<vmem>>, vector<8x683xbf16>
    %cst_226 = arith.constant dense<0.000000e+00> : vector<8x683xf32>
    %189 = tpu.matmul %187, %188, %cst_226 {dimension_numbers = #tpu.dot_dimension_numbers<[1], [0], [0], [1], [0, 0, 1, 1], [], []>} : vector<8x8xbf16>, vector<8x683xbf16>, vector<8x683xf32> -> vector<8x683xf32>
    %c0_227 = arith.constant 0 : index
    %c0_228 = arith.constant 0 : index
    %190 = vector.load %arg11[%c0_227, %c0_228] : memref<8x683xf32, #tpu.memory_space<vmem>>, vector<8x683xf32>
    %191 = arith.addf %190, %189 : vector<8x683xf32>
    %c0_229 = arith.constant 0 : index
    %c0_230 = arith.constant 0 : index
    %192 = vector.load %arg11[%c0_229, %c0_230] : memref<8x683xf32, #tpu.memory_space<vmem>>, vector<8x683xf32>
    tpu.vector_store %arg11[%c0_229, %c0_230], %191 {strides = array<i32>} : memref<8x683xf32, #tpu.memory_space<vmem>>, vector<8x683xf32>,
    %c0_231 = arith.constant 0 : index
    %c0_232 = arith.constant 0 : index
    %193 = vector.load %arg11[%c0_231, %c0_232] : memref<8x683xf32, #tpu.memory_space<vmem>>, vector<8x683xf32>
    %c0_233 = arith.constant 0 : index
    %c0_234 = arith.constant 0 : index
    %194 = vector.load %arg6[%c0_233, %c0_234] : memref<8x4xf32, #tpu.memory_space<vmem>>, vector<8x1xf32>
    %195 = vector.broadcast %194 : vector<8x1xf32> to vector<8x683xf32>
    %196 = arith.mulf %193, %195 : vector<8x683xf32>
    %c0_235 = arith.constant 0 : index
    %c1_236 = arith.constant 1 : index
    %197 = vector.load %arg6[%c0_235, %c1_236] : memref<8x4xf32, #tpu.memory_space<vmem>>, vector<8x1xf32>
    %198 = vector.broadcast %197 : vector<8x1xf32> to vector<8x683xf32>
    %199 = arith.addf %196, %198 : vector<8x683xf32>
    %cst_237 = arith.constant 0.000000e+00 : f32
    %200 = vector.broadcast %cst_237 : f32 to vector<8x683xf32>
    %201 = arith.maximumf %199, %200 : vector<8x683xf32>
    %c0_238 = arith.constant 0 : index
    %c0_239 = arith.constant 0 : index
    %c0_240 = arith.constant 0 : index
    %202 = vector.load %arg7[%c0_238, %c0_239, %c0_240] : memref<1x1x683xf32, #tpu.memory_space<vmem>>, vector<1x1x683xf32>
    %203 = vector.shape_cast %202 : vector<1x1x683xf32> to vector<1x683xf32>
    %204 = vector.broadcast %203 : vector<1x683xf32> to vector<8x683xf32>
    %205 = arith.mulf %201, %204 : vector<8x683xf32>
    %cst_241 = arith.constant 0.000000e+00 : bf16
    %206 = vector.broadcast %cst_241 : bf16 to vector<8x128xbf16>
    %c0_242 = arith.constant 0 : index
    %c0_243 = arith.constant 0 : index
    %207 = vector.load %arg10[%c0_242, %c0_243] : memref<8x1024xbf16, #tpu.memory_space<vmem>>, vector<8x128xbf16>
    tpu.vector_store %arg10[%c0_242, %c0_243], %206 {strides = array<i32>} : memref<8x1024xbf16, #tpu.memory_space<vmem>>, vector<8x128xbf16>,
    %208 = arith.truncf %205 : vector<8x683xf32> to vector<8x683xbf16>
    %c0_244 = arith.constant 0 : index
    %c128_245 = arith.constant 128 : index
    %209 = vector.load %arg10[%c0_244, %c128_245] : memref<8x1024xbf16, #tpu.memory_space<vmem>>, vector<8x683xbf16>
    tpu.vector_store %arg10[%c0_244, %c128_245], %208 {strides = array<i32>} : memref<8x1024xbf16, #tpu.memory_space<vmem>>, vector<8x683xbf16>,
    %cst_246 = arith.constant 0.000000e+00 : bf16
    %210 = vector.broadcast %cst_246 : bf16 to vector<8x213xbf16>
    %c0_247 = arith.constant 0 : index
    %c811 = arith.constant 811 : index
    %211 = vector.load %arg10[%c0_247, %c811] : memref<8x1024xbf16, #tpu.memory_space<vmem>>, vector<8x213xbf16>
    tpu.vector_store %arg10[%c0_247, %c811], %210 {strides = array<i32>} : memref<8x1024xbf16, #tpu.memory_space<vmem>>, vector<8x213xbf16>,
    %c0_248 = arith.constant 0 : index
    %c0_249 = arith.constant 0 : index
    %c0_250 = arith.constant 0 : index
    %212 = vector.load %arg5[%c0_248, %c0_249, %c0_250] : memref<27x8x8xbf16, #tpu.memory_space<vmem>>, vector<1x8x8xbf16>
    %213 = vector.shape_cast %212 : vector<1x8x8xbf16> to vector<8x8xbf16>
    %c0_251 = arith.constant 0 : index
    %c118 = arith.constant 118 : index
    %214 = vector.load %arg10[%c0_251, %c118] : memref<8x1024xbf16, #tpu.memory_space<vmem>>, vector<8x512xbf16>
    %cst_252 = arith.constant dense<0.000000e+00> : vector<8x512xf32>
    %215 = tpu.matmul %213, %214, %cst_252 {dimension_numbers = #tpu.dot_dimension_numbers<[1], [0], [0], [1], [0, 0, 1, 1], [], []>} : vector<8x8xbf16>, vector<8x512xbf16>, vector<8x512xf32> -> vector<8x512xf32>
    %c0_253 = arith.constant 0 : index
    %c0_254 = arith.constant 0 : index
    %216 = vector.load %arg11[%c0_253, %c0_254] : memref<8x683xf32, #tpu.memory_space<vmem>>, vector<8x512xf32>
    tpu.vector_store %arg11[%c0_253, %c0_254], %215 {strides = array<i32>} : memref<8x683xf32, #tpu.memory_space<vmem>>, vector<8x512xf32>,
    %c1_255 = arith.constant 1 : index
    %c0_256 = arith.constant 0 : index
    %c0_257 = arith.constant 0 : index
    %217 = vector.load %arg5[%c1_255, %c0_256, %c0_257] : memref<27x8x8xbf16, #tpu.memory_space<vmem>>, vector<1x8x8xbf16>
    %218 = vector.shape_cast %217 : vector<1x8x8xbf16> to vector<8x8xbf16>
    %c0_258 = arith.constant 0 : index
    %c119 = arith.constant 119 : index
    %219 = vector.load %arg10[%c0_258, %c119] : memref<8x1024xbf16, #tpu.memory_space<vmem>>, vector<8x512xbf16>
    %cst_259 = arith.constant dense<0.000000e+00> : vector<8x512xf32>
    %220 = tpu.matmul %218, %219, %cst_259 {dimension_numbers = #tpu.dot_dimension_numbers<[1], [0], [0], [1], [0, 0, 1, 1], [], []>} : vector<8x8xbf16>, vector<8x512xbf16>, vector<8x512xf32> -> vector<8x512xf32>
    %c0_260 = arith.constant 0 : index
    %c0_261 = arith.constant 0 : index
    %221 = vector.load %arg11[%c0_260, %c0_261] : memref<8x683xf32, #tpu.memory_space<vmem>>, vector<8x512xf32>
    %222 = arith.addf %221, %220 : vector<8x512xf32>
    %c0_262 = arith.constant 0 : index
    %c0_263 = arith.constant 0 : index
    %223 = vector.load %arg11[%c0_262, %c0_263] : memref<8x683xf32, #tpu.memory_space<vmem>>, vector<8x512xf32>
    tpu.vector_store %arg11[%c0_262, %c0_263], %222 {strides = array<i32>} : memref<8x683xf32, #tpu.memory_space<vmem>>, vector<8x512xf32>,
    %c2_264 = arith.constant 2 : index
    %c0_265 = arith.constant 0 : index
    %c0_266 = arith.constant 0 : index
    %224 = vector.load %arg5[%c2_264, %c0_265, %c0_266] : memref<27x8x8xbf16, #tpu.memory_space<vmem>>, vector<1x8x8xbf16>
    %225 = vector.shape_cast %224 : vector<1x8x8xbf16> to vector<8x8xbf16>
    %c0_267 = arith.constant 0 : index
    %c120 = arith.constant 120 : index
    %226 = vector.load %arg10[%c0_267, %c120] : memref<8x1024xbf16, #tpu.memory_space<vmem>>, vector<8x512xbf16>
    %cst_268 = arith.constant dense<0.000000e+00> : vector<8x512xf32>
    %227 = tpu.matmul %225, %226, %cst_268 {dimension_numbers = #tpu.dot_dimension_numbers<[1], [0], [0], [1], [0, 0, 1, 1], [], []>} : vector<8x8xbf16>, vector<8x512xbf16>, vector<8x512xf32> -> vector<8x512xf32>
    %c0_269 = arith.constant 0 : index
    %c0_270 = arith.constant 0 : index
    %228 = vector.load %arg11[%c0_269, %c0_270] : memref<8x683xf32, #tpu.memory_space<vmem>>, vector<8x512xf32>
    %229 = arith.addf %228, %227 : vector<8x512xf32>
    %c0_271 = arith.constant 0 : index
    %c0_272 = arith.constant 0 : index
    %230 = vector.load %arg11[%c0_271, %c0_272] : memref<8x683xf32, #tpu.memory_space<vmem>>, vector<8x512xf32>
    tpu.vector_store %arg11[%c0_271, %c0_272], %229 {strides = array<i32>} : memref<8x683xf32, #tpu.memory_space<vmem>>, vector<8x512xf32>,
    %c3_273 = arith.constant 3 : index
    %c0_274 = arith.constant 0 : index
    %c0_275 = arith.constant 0 : index
    %231 = vector.load %arg5[%c3_273, %c0_274, %c0_275] : memref<27x8x8xbf16, #tpu.memory_space<vmem>>, vector<1x8x8xbf16>
    %232 = vector.shape_cast %231 : vector<1x8x8xbf16> to vector<8x8xbf16>
    %c0_276 = arith.constant 0 : index
    %c127 = arith.constant 127 : index
    %233 = vector.load %arg10[%c0_276, %c127] : memref<8x1024xbf16, #tpu.memory_space<vmem>>, vector<8x512xbf16>
    %cst_277 = arith.constant dense<0.000000e+00> : vector<8x512xf32>
    %234 = tpu.matmul %232, %233, %cst_277 {dimension_numbers = #tpu.dot_dimension_numbers<[1], [0], [0], [1], [0, 0, 1, 1], [], []>} : vector<8x8xbf16>, vector<8x512xbf16>, vector<8x512xf32> -> vector<8x512xf32>
    %c0_278 = arith.constant 0 : index
    %c0_279 = arith.constant 0 : index
    %235 = vector.load %arg11[%c0_278, %c0_279] : memref<8x683xf32, #tpu.memory_space<vmem>>, vector<8x512xf32>
    %236 = arith.addf %235, %234 : vector<8x512xf32>
    %c0_280 = arith.constant 0 : index
    %c0_281 = arith.constant 0 : index
    %237 = vector.load %arg11[%c0_280, %c0_281] : memref<8x683xf32, #tpu.memory_space<vmem>>, vector<8x512xf32>
    tpu.vector_store %arg11[%c0_280, %c0_281], %236 {strides = array<i32>} : memref<8x683xf32, #tpu.memory_space<vmem>>, vector<8x512xf32>,
    %c4_282 = arith.constant 4 : index
    %c0_283 = arith.constant 0 : index
    %c0_284 = arith.constant 0 : index
    %238 = vector.load %arg5[%c4_282, %c0_283, %c0_284] : memref<27x8x8xbf16, #tpu.memory_space<vmem>>, vector<1x8x8xbf16>
    %239 = vector.shape_cast %238 : vector<1x8x8xbf16> to vector<8x8xbf16>
    %c0_285 = arith.constant 0 : index
    %c128_286 = arith.constant 128 : index
    %240 = vector.load %arg10[%c0_285, %c128_286] : memref<8x1024xbf16, #tpu.memory_space<vmem>>, vector<8x512xbf16>
    %cst_287 = arith.constant dense<0.000000e+00> : vector<8x512xf32>
    %241 = tpu.matmul %239, %240, %cst_287 {dimension_numbers = #tpu.dot_dimension_numbers<[1], [0], [0], [1], [0, 0, 1, 1], [], []>} : vector<8x8xbf16>, vector<8x512xbf16>, vector<8x512xf32> -> vector<8x512xf32>
    %c0_288 = arith.constant 0 : index
    %c0_289 = arith.constant 0 : index
    %242 = vector.load %arg11[%c0_288, %c0_289] : memref<8x683xf32, #tpu.memory_space<vmem>>, vector<8x512xf32>
    %243 = arith.addf %242, %241 : vector<8x512xf32>
    %c0_290 = arith.constant 0 : index
    %c0_291 = arith.constant 0 : index
    %244 = vector.load %arg11[%c0_290, %c0_291] : memref<8x683xf32, #tpu.memory_space<vmem>>, vector<8x512xf32>
    tpu.vector_store %arg11[%c0_290, %c0_291], %243 {strides = array<i32>} : memref<8x683xf32, #tpu.memory_space<vmem>>, vector<8x512xf32>,
    %c5_292 = arith.constant 5 : index
    %c0_293 = arith.constant 0 : index
    %c0_294 = arith.constant 0 : index
    %245 = vector.load %arg5[%c5_292, %c0_293, %c0_294] : memref<27x8x8xbf16, #tpu.memory_space<vmem>>, vector<1x8x8xbf16>
    %246 = vector.shape_cast %245 : vector<1x8x8xbf16> to vector<8x8xbf16>
    %c0_295 = arith.constant 0 : index
    %c129_296 = arith.constant 129 : index
    %247 = vector.load %arg10[%c0_295, %c129_296] : memref<8x1024xbf16, #tpu.memory_space<vmem>>, vector<8x512xbf16>
    %cst_297 = arith.constant dense<0.000000e+00> : vector<8x512xf32>
    %248 = tpu.matmul %246, %247, %cst_297 {dimension_numbers = #tpu.dot_dimension_numbers<[1], [0], [0], [1], [0, 0, 1, 1], [], []>} : vector<8x8xbf16>, vector<8x512xbf16>, vector<8x512xf32> -> vector<8x512xf32>
    %c0_298 = arith.constant 0 : index
    %c0_299 = arith.constant 0 : index
    %249 = vector.load %arg11[%c0_298, %c0_299] : memref<8x683xf32, #tpu.memory_space<vmem>>, vector<8x512xf32>
    %250 = arith.addf %249, %248 : vector<8x512xf32>
    %c0_300 = arith.constant 0 : index
    %c0_301 = arith.constant 0 : index
    %251 = vector.load %arg11[%c0_300, %c0_301] : memref<8x683xf32, #tpu.memory_space<vmem>>, vector<8x512xf32>
    tpu.vector_store %arg11[%c0_300, %c0_301], %250 {strides = array<i32>} : memref<8x683xf32, #tpu.memory_space<vmem>>, vector<8x512xf32>,
    %c6_302 = arith.constant 6 : index
    %c0_303 = arith.constant 0 : index
    %c0_304 = arith.constant 0 : index
    %252 = vector.load %arg5[%c6_302, %c0_303, %c0_304] : memref<27x8x8xbf16, #tpu.memory_space<vmem>>, vector<1x8x8xbf16>
    %253 = vector.shape_cast %252 : vector<1x8x8xbf16> to vector<8x8xbf16>
    %c0_305 = arith.constant 0 : index
    %c136 = arith.constant 136 : index
    %254 = vector.load %arg10[%c0_305, %c136] : memref<8x1024xbf16, #tpu.memory_space<vmem>>, vector<8x512xbf16>
    %cst_306 = arith.constant dense<0.000000e+00> : vector<8x512xf32>
    %255 = tpu.matmul %253, %254, %cst_306 {dimension_numbers = #tpu.dot_dimension_numbers<[1], [0], [0], [1], [0, 0, 1, 1], [], []>} : vector<8x8xbf16>, vector<8x512xbf16>, vector<8x512xf32> -> vector<8x512xf32>
    %c0_307 = arith.constant 0 : index
    %c0_308 = arith.constant 0 : index
    %256 = vector.load %arg11[%c0_307, %c0_308] : memref<8x683xf32, #tpu.memory_space<vmem>>, vector<8x512xf32>
    %257 = arith.addf %256, %255 : vector<8x512xf32>
    %c0_309 = arith.constant 0 : index
    %c0_310 = arith.constant 0 : index
    %258 = vector.load %arg11[%c0_309, %c0_310] : memref<8x683xf32, #tpu.memory_space<vmem>>, vector<8x512xf32>
    tpu.vector_store %arg11[%c0_309, %c0_310], %257 {strides = array<i32>} : memref<8x683xf32, #tpu.memory_space<vmem>>, vector<8x512xf32>,
    %c7_311 = arith.constant 7 : index
    %c0_312 = arith.constant 0 : index
    %c0_313 = arith.constant 0 : index
    %259 = vector.load %arg5[%c7_311, %c0_312, %c0_313] : memref<27x8x8xbf16, #tpu.memory_space<vmem>>, vector<1x8x8xbf16>
    %260 = vector.shape_cast %259 : vector<1x8x8xbf16> to vector<8x8xbf16>
    %c0_314 = arith.constant 0 : index
    %c137_315 = arith.constant 137 : index
    %261 = vector.load %arg10[%c0_314, %c137_315] : memref<8x1024xbf16, #tpu.memory_space<vmem>>, vector<8x512xbf16>
    %cst_316 = arith.constant dense<0.000000e+00> : vector<8x512xf32>
    %262 = tpu.matmul %260, %261, %cst_316 {dimension_numbers = #tpu.dot_dimension_numbers<[1], [0], [0], [1], [0, 0, 1, 1], [], []>} : vector<8x8xbf16>, vector<8x512xbf16>, vector<8x512xf32> -> vector<8x512xf32>
    %c0_317 = arith.constant 0 : index
    %c0_318 = arith.constant 0 : index
    %263 = vector.load %arg11[%c0_317, %c0_318] : memref<8x683xf32, #tpu.memory_space<vmem>>, vector<8x512xf32>
    %264 = arith.addf %263, %262 : vector<8x512xf32>
    %c0_319 = arith.constant 0 : index
    %c0_320 = arith.constant 0 : index
    %265 = vector.load %arg11[%c0_319, %c0_320] : memref<8x683xf32, #tpu.memory_space<vmem>>, vector<8x512xf32>
    tpu.vector_store %arg11[%c0_319, %c0_320], %264 {strides = array<i32>} : memref<8x683xf32, #tpu.memory_space<vmem>>, vector<8x512xf32>,
    %c8_321 = arith.constant 8 : index
    %c0_322 = arith.constant 0 : index
    %c0_323 = arith.constant 0 : index
    %266 = vector.load %arg5[%c8_321, %c0_322, %c0_323] : memref<27x8x8xbf16, #tpu.memory_space<vmem>>, vector<1x8x8xbf16>
    %267 = vector.shape_cast %266 : vector<1x8x8xbf16> to vector<8x8xbf16>
    %c0_324 = arith.constant 0 : index
    %c138_325 = arith.constant 138 : index
    %268 = vector.load %arg10[%c0_324, %c138_325] : memref<8x1024xbf16, #tpu.memory_space<vmem>>, vector<8x512xbf16>
    %cst_326 = arith.constant dense<0.000000e+00> : vector<8x512xf32>
    %269 = tpu.matmul %267, %268, %cst_326 {dimension_numbers = #tpu.dot_dimension_numbers<[1], [0], [0], [1], [0, 0, 1, 1], [], []>} : vector<8x8xbf16>, vector<8x512xbf16>, vector<8x512xf32> -> vector<8x512xf32>
    %c0_327 = arith.constant 0 : index
    %c0_328 = arith.constant 0 : index
    %270 = vector.load %arg11[%c0_327, %c0_328] : memref<8x683xf32, #tpu.memory_space<vmem>>, vector<8x512xf32>
    %271 = arith.addf %270, %269 : vector<8x512xf32>
    %c0_329 = arith.constant 0 : index
    %c0_330 = arith.constant 0 : index
    %272 = vector.load %arg11[%c0_329, %c0_330] : memref<8x683xf32, #tpu.memory_space<vmem>>, vector<8x512xf32>
    tpu.vector_store %arg11[%c0_329, %c0_330], %271 {strides = array<i32>} : memref<8x683xf32, #tpu.memory_space<vmem>>, vector<8x512xf32>,
    %c9_331 = arith.constant 9 : index
    %c0_332 = arith.constant 0 : index
    %c0_333 = arith.constant 0 : index
    %273 = vector.load %arg5[%c9_331, %c0_332, %c0_333] : memref<27x8x8xbf16, #tpu.memory_space<vmem>>, vector<1x8x8xbf16>
    %274 = vector.shape_cast %273 : vector<1x8x8xbf16> to vector<8x8xbf16>
    %c0_334 = arith.constant 0 : index
    %c246 = arith.constant 246 : index
    %275 = vector.load %arg10[%c0_334, %c246] : memref<8x1024xbf16, #tpu.memory_space<vmem>>, vector<8x512xbf16>
    %cst_335 = arith.constant dense<0.000000e+00> : vector<8x512xf32>
    %276 = tpu.matmul %274, %275, %cst_335 {dimension_numbers = #tpu.dot_dimension_numbers<[1], [0], [0], [1], [0, 0, 1, 1], [], []>} : vector<8x8xbf16>, vector<8x512xbf16>, vector<8x512xf32> -> vector<8x512xf32>
    %c0_336 = arith.constant 0 : index
    %c0_337 = arith.constant 0 : index
    %277 = vector.load %arg11[%c0_336, %c0_337] : memref<8x683xf32, #tpu.memory_space<vmem>>, vector<8x512xf32>
    %278 = arith.addf %277, %276 : vector<8x512xf32>
    %c0_338 = arith.constant 0 : index
    %c0_339 = arith.constant 0 : index
    %279 = vector.load %arg11[%c0_338, %c0_339] : memref<8x683xf32, #tpu.memory_space<vmem>>, vector<8x512xf32>
    tpu.vector_store %arg11[%c0_338, %c0_339], %278 {strides = array<i32>} : memref<8x683xf32, #tpu.memory_space<vmem>>, vector<8x512xf32>,
    %c10_340 = arith.constant 10 : index
    %c0_341 = arith.constant 0 : index
    %c0_342 = arith.constant 0 : index
    %280 = vector.load %arg5[%c10_340, %c0_341, %c0_342] : memref<27x8x8xbf16, #tpu.memory_space<vmem>>, vector<1x8x8xbf16>
    %281 = vector.shape_cast %280 : vector<1x8x8xbf16> to vector<8x8xbf16>
    %c0_343 = arith.constant 0 : index
    %c247 = arith.constant 247 : index
    %282 = vector.load %arg10[%c0_343, %c247] : memref<8x1024xbf16, #tpu.memory_space<vmem>>, vector<8x512xbf16>
    %cst_344 = arith.constant dense<0.000000e+00> : vector<8x512xf32>
    %283 = tpu.matmul %281, %282, %cst_344 {dimension_numbers = #tpu.dot_dimension_numbers<[1], [0], [0], [1], [0, 0, 1, 1], [], []>} : vector<8x8xbf16>, vector<8x512xbf16>, vector<8x512xf32> -> vector<8x512xf32>
    %c0_345 = arith.constant 0 : index
    %c0_346 = arith.constant 0 : index
    %284 = vector.load %arg11[%c0_345, %c0_346] : memref<8x683xf32, #tpu.memory_space<vmem>>, vector<8x512xf32>
    %285 = arith.addf %284, %283 : vector<8x512xf32>
    %c0_347 = arith.constant 0 : index
    %c0_348 = arith.constant 0 : index
    %286 = vector.load %arg11[%c0_347, %c0_348] : memref<8x683xf32, #tpu.memory_space<vmem>>, vector<8x512xf32>
    tpu.vector_store %arg11[%c0_347, %c0_348], %285 {strides = array<i32>} : memref<8x683xf32, #tpu.memory_space<vmem>>, vector<8x512xf32>,
    %c11_349 = arith.constant 11 : index
    %c0_350 = arith.constant 0 : index
    %c0_351 = arith.constant 0 : index
    %287 = vector.load %arg5[%c11_349, %c0_350, %c0_351] : memref<27x8x8xbf16, #tpu.memory_space<vmem>>, vector<1x8x8xbf16>
    %288 = vector.shape_cast %287 : vector<1x8x8xbf16> to vector<8x8xbf16>
    %c0_352 = arith.constant 0 : index
    %c248 = arith.constant 248 : index
    %289 = vector.load %arg10[%c0_352, %c248] : memref<8x1024xbf16, #tpu.memory_space<vmem>>, vector<8x512xbf16>
    %cst_353 = arith.constant dense<0.000000e+00> : vector<8x512xf32>
    %290 = tpu.matmul %288, %289, %cst_353 {dimension_numbers = #tpu.dot_dimension_numbers<[1], [0], [0], [1], [0, 0, 1, 1], [], []>} : vector<8x8xbf16>, vector<8x512xbf16>, vector<8x512xf32> -> vector<8x512xf32>
    %c0_354 = arith.constant 0 : index
    %c0_355 = arith.constant 0 : index
    %291 = vector.load %arg11[%c0_354, %c0_355] : memref<8x683xf32, #tpu.memory_space<vmem>>, vector<8x512xf32>
    %292 = arith.addf %291, %290 : vector<8x512xf32>
    %c0_356 = arith.constant 0 : index
    %c0_357 = arith.constant 0 : index
    %293 = vector.load %arg11[%c0_356, %c0_357] : memref<8x683xf32, #tpu.memory_space<vmem>>, vector<8x512xf32>
    tpu.vector_store %arg11[%c0_356, %c0_357], %292 {strides = array<i32>} : memref<8x683xf32, #tpu.memory_space<vmem>>, vector<8x512xf32>,
    %c12_358 = arith.constant 12 : index
    %c0_359 = arith.constant 0 : index
    %c0_360 = arith.constant 0 : index
    %294 = vector.load %arg5[%c12_358, %c0_359, %c0_360] : memref<27x8x8xbf16, #tpu.memory_space<vmem>>, vector<1x8x8xbf16>
    %295 = vector.shape_cast %294 : vector<1x8x8xbf16> to vector<8x8xbf16>
    %c0_361 = arith.constant 0 : index
    %c255 = arith.constant 255 : index
    %296 = vector.load %arg10[%c0_361, %c255] : memref<8x1024xbf16, #tpu.memory_space<vmem>>, vector<8x512xbf16>
    %cst_362 = arith.constant dense<0.000000e+00> : vector<8x512xf32>
    %297 = tpu.matmul %295, %296, %cst_362 {dimension_numbers = #tpu.dot_dimension_numbers<[1], [0], [0], [1], [0, 0, 1, 1], [], []>} : vector<8x8xbf16>, vector<8x512xbf16>, vector<8x512xf32> -> vector<8x512xf32>
    %c0_363 = arith.constant 0 : index
    %c0_364 = arith.constant 0 : index
    %298 = vector.load %arg11[%c0_363, %c0_364] : memref<8x683xf32, #tpu.memory_space<vmem>>, vector<8x512xf32>
    %299 = arith.addf %298, %297 : vector<8x512xf32>
    %c0_365 = arith.constant 0 : index
    %c0_366 = arith.constant 0 : index
    %300 = vector.load %arg11[%c0_365, %c0_366] : memref<8x683xf32, #tpu.memory_space<vmem>>, vector<8x512xf32>
    tpu.vector_store %arg11[%c0_365, %c0_366], %299 {strides = array<i32>} : memref<8x683xf32, #tpu.memory_space<vmem>>, vector<8x512xf32>,
    %c13_367 = arith.constant 13 : index
    %c0_368 = arith.constant 0 : index
    %c0_369 = arith.constant 0 : index
    %301 = vector.load %arg5[%c13_367, %c0_368, %c0_369] : memref<27x8x8xbf16, #tpu.memory_space<vmem>>, vector<1x8x8xbf16>
    %302 = vector.shape_cast %301 : vector<1x8x8xbf16> to vector<8x8xbf16>
    %c0_370 = arith.constant 0 : index
    %c256_371 = arith.constant 256 : index
    %303 = vector.load %arg10[%c0_370, %c256_371] : memref<8x1024xbf16, #tpu.memory_space<vmem>>, vector<8x512xbf16>
    %cst_372 = arith.constant dense<0.000000e+00> : vector<8x512xf32>
    %304 = tpu.matmul %302, %303, %cst_372 {dimension_numbers = #tpu.dot_dimension_numbers<[1], [0], [0], [1], [0, 0, 1, 1], [], []>} : vector<8x8xbf16>, vector<8x512xbf16>, vector<8x512xf32> -> vector<8x512xf32>
    %c0_373 = arith.constant 0 : index
    %c0_374 = arith.constant 0 : index
    %305 = vector.load %arg11[%c0_373, %c0_374] : memref<8x683xf32, #tpu.memory_space<vmem>>, vector<8x512xf32>
    %306 = arith.addf %305, %304 : vector<8x512xf32>
    %c0_375 = arith.constant 0 : index
    %c0_376 = arith.constant 0 : index
    %307 = vector.load %arg11[%c0_375, %c0_376] : memref<8x683xf32, #tpu.memory_space<vmem>>, vector<8x512xf32>
    tpu.vector_store %arg11[%c0_375, %c0_376], %306 {strides = array<i32>} : memref<8x683xf32, #tpu.memory_space<vmem>>, vector<8x512xf32>,
    %c14_377 = arith.constant 14 : index
    %c0_378 = arith.constant 0 : index
    %c0_379 = arith.constant 0 : index
    %308 = vector.load %arg5[%c14_377, %c0_378, %c0_379] : memref<27x8x8xbf16, #tpu.memory_space<vmem>>, vector<1x8x8xbf16>
    %309 = vector.shape_cast %308 : vector<1x8x8xbf16> to vector<8x8xbf16>
    %c0_380 = arith.constant 0 : index
    %c257_381 = arith.constant 257 : index
    %310 = vector.load %arg10[%c0_380, %c257_381] : memref<8x1024xbf16, #tpu.memory_space<vmem>>, vector<8x512xbf16>
    %cst_382 = arith.constant dense<0.000000e+00> : vector<8x512xf32>
    %311 = tpu.matmul %309, %310, %cst_382 {dimension_numbers = #tpu.dot_dimension_numbers<[1], [0], [0], [1], [0, 0, 1, 1], [], []>} : vector<8x8xbf16>, vector<8x512xbf16>, vector<8x512xf32> -> vector<8x512xf32>
    %c0_383 = arith.constant 0 : index
    %c0_384 = arith.constant 0 : index
    %312 = vector.load %arg11[%c0_383, %c0_384] : memref<8x683xf32, #tpu.memory_space<vmem>>, vector<8x512xf32>
    %313 = arith.addf %312, %311 : vector<8x512xf32>
    %c0_385 = arith.constant 0 : index
    %c0_386 = arith.constant 0 : index
    %314 = vector.load %arg11[%c0_385, %c0_386] : memref<8x683xf32, #tpu.memory_space<vmem>>, vector<8x512xf32>
    tpu.vector_store %arg11[%c0_385, %c0_386], %313 {strides = array<i32>} : memref<8x683xf32, #tpu.memory_space<vmem>>, vector<8x512xf32>,
    %c15_387 = arith.constant 15 : index
    %c0_388 = arith.constant 0 : index
    %c0_389 = arith.constant 0 : index
    %315 = vector.load %arg5[%c15_387, %c0_388, %c0_389] : memref<27x8x8xbf16, #tpu.memory_space<vmem>>, vector<1x8x8xbf16>
    %316 = vector.shape_cast %315 : vector<1x8x8xbf16> to vector<8x8xbf16>
    %c0_390 = arith.constant 0 : index
    %c264 = arith.constant 264 : index
    %317 = vector.load %arg10[%c0_390, %c264] : memref<8x1024xbf16, #tpu.memory_space<vmem>>, vector<8x512xbf16>
    %cst_391 = arith.constant dense<0.000000e+00> : vector<8x512xf32>
    %318 = tpu.matmul %316, %317, %cst_391 {dimension_numbers = #tpu.dot_dimension_numbers<[1], [0], [0], [1], [0, 0, 1, 1], [], []>} : vector<8x8xbf16>, vector<8x512xbf16>, vector<8x512xf32> -> vector<8x512xf32>
    %c0_392 = arith.constant 0 : index
    %c0_393 = arith.constant 0 : index
    %319 = vector.load %arg11[%c0_392, %c0_393] : memref<8x683xf32, #tpu.memory_space<vmem>>, vector<8x512xf32>
    %320 = arith.addf %319, %318 : vector<8x512xf32>
    %c0_394 = arith.constant 0 : index
    %c0_395 = arith.constant 0 : index
    %321 = vector.load %arg11[%c0_394, %c0_395] : memref<8x683xf32, #tpu.memory_space<vmem>>, vector<8x512xf32>
    tpu.vector_store %arg11[%c0_394, %c0_395], %320 {strides = array<i32>} : memref<8x683xf32, #tpu.memory_space<vmem>>, vector<8x512xf32>,
    %c16_396 = arith.constant 16 : index
    %c0_397 = arith.constant 0 : index
    %c0_398 = arith.constant 0 : index
    %322 = vector.load %arg5[%c16_396, %c0_397, %c0_398] : memref<27x8x8xbf16, #tpu.memory_space<vmem>>, vector<1x8x8xbf16>
    %323 = vector.shape_cast %322 : vector<1x8x8xbf16> to vector<8x8xbf16>
    %c0_399 = arith.constant 0 : index
    %c265_400 = arith.constant 265 : index
    %324 = vector.load %arg10[%c0_399, %c265_400] : memref<8x1024xbf16, #tpu.memory_space<vmem>>, vector<8x512xbf16>
    %cst_401 = arith.constant dense<0.000000e+00> : vector<8x512xf32>
    %325 = tpu.matmul %323, %324, %cst_401 {dimension_numbers = #tpu.dot_dimension_numbers<[1], [0], [0], [1], [0, 0, 1, 1], [], []>} : vector<8x8xbf16>, vector<8x512xbf16>, vector<8x512xf32> -> vector<8x512xf32>
    %c0_402 = arith.constant 0 : index
    %c0_403 = arith.constant 0 : index
    %326 = vector.load %arg11[%c0_402, %c0_403] : memref<8x683xf32, #tpu.memory_space<vmem>>, vector<8x512xf32>
    %327 = arith.addf %326, %325 : vector<8x512xf32>
    %c0_404 = arith.constant 0 : index
    %c0_405 = arith.constant 0 : index
    %328 = vector.load %arg11[%c0_404, %c0_405] : memref<8x683xf32, #tpu.memory_space<vmem>>, vector<8x512xf32>
    tpu.vector_store %arg11[%c0_404, %c0_405], %327 {strides = array<i32>} : memref<8x683xf32, #tpu.memory_space<vmem>>, vector<8x512xf32>,
    %c17_406 = arith.constant 17 : index
    %c0_407 = arith.constant 0 : index
    %c0_408 = arith.constant 0 : index
    %329 = vector.load %arg5[%c17_406, %c0_407, %c0_408] : memref<27x8x8xbf16, #tpu.memory_space<vmem>>, vector<1x8x8xbf16>
    %330 = vector.shape_cast %329 : vector<1x8x8xbf16> to vector<8x8xbf16>
    %c0_409 = arith.constant 0 : index
    %c266_410 = arith.constant 266 : index
    %331 = vector.load %arg10[%c0_409, %c266_410] : memref<8x1024xbf16, #tpu.memory_space<vmem>>, vector<8x512xbf16>
    %cst_411 = arith.constant dense<0.000000e+00> : vector<8x512xf32>
    %332 = tpu.matmul %330, %331, %cst_411 {dimension_numbers = #tpu.dot_dimension_numbers<[1], [0], [0], [1], [0, 0, 1, 1], [], []>} : vector<8x8xbf16>, vector<8x512xbf16>, vector<8x512xf32> -> vector<8x512xf32>
    %c0_412 = arith.constant 0 : index
    %c0_413 = arith.constant 0 : index
    %333 = vector.load %arg11[%c0_412, %c0_413] : memref<8x683xf32, #tpu.memory_space<vmem>>, vector<8x512xf32>
    %334 = arith.addf %333, %332 : vector<8x512xf32>
    %c0_414 = arith.constant 0 : index
    %c0_415 = arith.constant 0 : index
    %335 = vector.load %arg11[%c0_414, %c0_415] : memref<8x683xf32, #tpu.memory_space<vmem>>, vector<8x512xf32>
    tpu.vector_store %arg11[%c0_414, %c0_415], %334 {strides = array<i32>} : memref<8x683xf32, #tpu.memory_space<vmem>>, vector<8x512xf32>,
    %c18_416 = arith.constant 18 : index
    %c0_417 = arith.constant 0 : index
    %c0_418 = arith.constant 0 : index
    %336 = vector.load %arg5[%c18_416, %c0_417, %c0_418] : memref<27x8x8xbf16, #tpu.memory_space<vmem>>, vector<1x8x8xbf16>
    %337 = vector.shape_cast %336 : vector<1x8x8xbf16> to vector<8x8xbf16>
    %c0_419 = arith.constant 0 : index
    %c374 = arith.constant 374 : index
    %338 = vector.load %arg10[%c0_419, %c374] : memref<8x1024xbf16, #tpu.memory_space<vmem>>, vector<8x512xbf16>
    %cst_420 = arith.constant dense<0.000000e+00> : vector<8x512xf32>
    %339 = tpu.matmul %337, %338, %cst_420 {dimension_numbers = #tpu.dot_dimension_numbers<[1], [0], [0], [1], [0, 0, 1, 1], [], []>} : vector<8x8xbf16>, vector<8x512xbf16>, vector<8x512xf32> -> vector<8x512xf32>
    %c0_421 = arith.constant 0 : index
    %c0_422 = arith.constant 0 : index
    %340 = vector.load %arg11[%c0_421, %c0_422] : memref<8x683xf32, #tpu.memory_space<vmem>>, vector<8x512xf32>
    %341 = arith.addf %340, %339 : vector<8x512xf32>
    %c0_423 = arith.constant 0 : index
    %c0_424 = arith.constant 0 : index
    %342 = vector.load %arg11[%c0_423, %c0_424] : memref<8x683xf32, #tpu.memory_space<vmem>>, vector<8x512xf32>
    tpu.vector_store %arg11[%c0_423, %c0_424], %341 {strides = array<i32>} : memref<8x683xf32, #tpu.memory_space<vmem>>, vector<8x512xf32>,
    %c19_425 = arith.constant 19 : index
    %c0_426 = arith.constant 0 : index
    %c0_427 = arith.constant 0 : index
    %343 = vector.load %arg5[%c19_425, %c0_426, %c0_427] : memref<27x8x8xbf16, #tpu.memory_space<vmem>>, vector<1x8x8xbf16>
    %344 = vector.shape_cast %343 : vector<1x8x8xbf16> to vector<8x8xbf16>
    %c0_428 = arith.constant 0 : index
    %c375 = arith.constant 375 : index
    %345 = vector.load %arg10[%c0_428, %c375] : memref<8x1024xbf16, #tpu.memory_space<vmem>>, vector<8x512xbf16>
    %cst_429 = arith.constant dense<0.000000e+00> : vector<8x512xf32>
    %346 = tpu.matmul %344, %345, %cst_429 {dimension_numbers = #tpu.dot_dimension_numbers<[1], [0], [0], [1], [0, 0, 1, 1], [], []>} : vector<8x8xbf16>, vector<8x512xbf16>, vector<8x512xf32> -> vector<8x512xf32>
    %c0_430 = arith.constant 0 : index
    %c0_431 = arith.constant 0 : index
    %347 = vector.load %arg11[%c0_430, %c0_431] : memref<8x683xf32, #tpu.memory_space<vmem>>, vector<8x512xf32>
    %348 = arith.addf %347, %346 : vector<8x512xf32>
    %c0_432 = arith.constant 0 : index
    %c0_433 = arith.constant 0 : index
    %349 = vector.load %arg11[%c0_432, %c0_433] : memref<8x683xf32, #tpu.memory_space<vmem>>, vector<8x512xf32>
    tpu.vector_store %arg11[%c0_432, %c0_433], %348 {strides = array<i32>} : memref<8x683xf32, #tpu.memory_space<vmem>>, vector<8x512xf32>,
    %c20_434 = arith.constant 20 : index
    %c0_435 = arith.constant 0 : index
    %c0_436 = arith.constant 0 : index
    %350 = vector.load %arg5[%c20_434, %c0_435, %c0_436] : memref<27x8x8xbf16, #tpu.memory_space<vmem>>, vector<1x8x8xbf16>
    %351 = vector.shape_cast %350 : vector<1x8x8xbf16> to vector<8x8xbf16>
    %c0_437 = arith.constant 0 : index
    %c376 = arith.constant 376 : index
    %352 = vector.load %arg10[%c0_437, %c376] : memref<8x1024xbf16, #tpu.memory_space<vmem>>, vector<8x512xbf16>
    %cst_438 = arith.constant dense<0.000000e+00> : vector<8x512xf32>
    %353 = tpu.matmul %351, %352, %cst_438 {dimension_numbers = #tpu.dot_dimension_numbers<[1], [0], [0], [1], [0, 0, 1, 1], [], []>} : vector<8x8xbf16>, vector<8x512xbf16>, vector<8x512xf32> -> vector<8x512xf32>
    %c0_439 = arith.constant 0 : index
    %c0_440 = arith.constant 0 : index
    %354 = vector.load %arg11[%c0_439, %c0_440] : memref<8x683xf32, #tpu.memory_space<vmem>>, vector<8x512xf32>
    %355 = arith.addf %354, %353 : vector<8x512xf32>
    %c0_441 = arith.constant 0 : index
    %c0_442 = arith.constant 0 : index
    %356 = vector.load %arg11[%c0_441, %c0_442] : memref<8x683xf32, #tpu.memory_space<vmem>>, vector<8x512xf32>
    tpu.vector_store %arg11[%c0_441, %c0_442], %355 {strides = array<i32>} : memref<8x683xf32, #tpu.memory_space<vmem>>, vector<8x512xf32>,
    %c21_443 = arith.constant 21 : index
    %c0_444 = arith.constant 0 : index
    %c0_445 = arith.constant 0 : index
    %357 = vector.load %arg5[%c21_443, %c0_444, %c0_445] : memref<27x8x8xbf16, #tpu.memory_space<vmem>>, vector<1x8x8xbf16>
    %358 = vector.shape_cast %357 : vector<1x8x8xbf16> to vector<8x8xbf16>
    %c0_446 = arith.constant 0 : index
    %c383 = arith.constant 383 : index
    %359 = vector.load %arg10[%c0_446, %c383] : memref<8x1024xbf16, #tpu.memory_space<vmem>>, vector<8x512xbf16>
    %cst_447 = arith.constant dense<0.000000e+00> : vector<8x512xf32>
    %360 = tpu.matmul %358, %359, %cst_447 {dimension_numbers = #tpu.dot_dimension_numbers<[1], [0], [0], [1], [0, 0, 1, 1], [], []>} : vector<8x8xbf16>, vector<8x512xbf16>, vector<8x512xf32> -> vector<8x512xf32>
    %c0_448 = arith.constant 0 : index
    %c0_449 = arith.constant 0 : index
    %361 = vector.load %arg11[%c0_448, %c0_449] : memref<8x683xf32, #tpu.memory_space<vmem>>, vector<8x512xf32>
    %362 = arith.addf %361, %360 : vector<8x512xf32>
    %c0_450 = arith.constant 0 : index
    %c0_451 = arith.constant 0 : index
    %363 = vector.load %arg11[%c0_450, %c0_451] : memref<8x683xf32, #tpu.memory_space<vmem>>, vector<8x512xf32>
    tpu.vector_store %arg11[%c0_450, %c0_451], %362 {strides = array<i32>} : memref<8x683xf32, #tpu.memory_space<vmem>>, vector<8x512xf32>,
    %c22_452 = arith.constant 22 : index
    %c0_453 = arith.constant 0 : index
    %c0_454 = arith.constant 0 : index
    %364 = vector.load %arg5[%c22_452, %c0_453, %c0_454] : memref<27x8x8xbf16, #tpu.memory_space<vmem>>, vector<1x8x8xbf16>
    %365 = vector.shape_cast %364 : vector<1x8x8xbf16> to vector<8x8xbf16>
    %c0_455 = arith.constant 0 : index
    %c384 = arith.constant 384 : index
    %366 = vector.load %arg10[%c0_455, %c384] : memref<8x1024xbf16, #tpu.memory_space<vmem>>, vector<8x512xbf16>
    %cst_456 = arith.constant dense<0.000000e+00> : vector<8x512xf32>
    %367 = tpu.matmul %365, %366, %cst_456 {dimension_numbers = #tpu.dot_dimension_numbers<[1], [0], [0], [1], [0, 0, 1, 1], [], []>} : vector<8x8xbf16>, vector<8x512xbf16>, vector<8x512xf32> -> vector<8x512xf32>
    %c0_457 = arith.constant 0 : index
    %c0_458 = arith.constant 0 : index
    %368 = vector.load %arg11[%c0_457, %c0_458] : memref<8x683xf32, #tpu.memory_space<vmem>>, vector<8x512xf32>
    %369 = arith.addf %368, %367 : vector<8x512xf32>
    %c0_459 = arith.constant 0 : index
    %c0_460 = arith.constant 0 : index
    %370 = vector.load %arg11[%c0_459, %c0_460] : memref<8x683xf32, #tpu.memory_space<vmem>>, vector<8x512xf32>
    tpu.vector_store %arg11[%c0_459, %c0_460], %369 {strides = array<i32>} : memref<8x683xf32, #tpu.memory_space<vmem>>, vector<8x512xf32>,
    %c23_461 = arith.constant 23 : index
    %c0_462 = arith.constant 0 : index
    %c0_463 = arith.constant 0 : index
    %371 = vector.load %arg5[%c23_461, %c0_462, %c0_463] : memref<27x8x8xbf16, #tpu.memory_space<vmem>>, vector<1x8x8xbf16>
    %372 = vector.shape_cast %371 : vector<1x8x8xbf16> to vector<8x8xbf16>
    %c0_464 = arith.constant 0 : index
    %c385 = arith.constant 385 : index
    %373 = vector.load %arg10[%c0_464, %c385] : memref<8x1024xbf16, #tpu.memory_space<vmem>>, vector<8x512xbf16>
    %cst_465 = arith.constant dense<0.000000e+00> : vector<8x512xf32>
    %374 = tpu.matmul %372, %373, %cst_465 {dimension_numbers = #tpu.dot_dimension_numbers<[1], [0], [0], [1], [0, 0, 1, 1], [], []>} : vector<8x8xbf16>, vector<8x512xbf16>, vector<8x512xf32> -> vector<8x512xf32>
    %c0_466 = arith.constant 0 : index
    %c0_467 = arith.constant 0 : index
    %375 = vector.load %arg11[%c0_466, %c0_467] : memref<8x683xf32, #tpu.memory_space<vmem>>, vector<8x512xf32>
    %376 = arith.addf %375, %374 : vector<8x512xf32>
    %c0_468 = arith.constant 0 : index
    %c0_469 = arith.constant 0 : index
    %377 = vector.load %arg11[%c0_468, %c0_469] : memref<8x683xf32, #tpu.memory_space<vmem>>, vector<8x512xf32>
    tpu.vector_store %arg11[%c0_468, %c0_469], %376 {strides = array<i32>} : memref<8x683xf32, #tpu.memory_space<vmem>>, vector<8x512xf32>,
    %c24_470 = arith.constant 24 : index
    %c0_471 = arith.constant 0 : index
    %c0_472 = arith.constant 0 : index
    %378 = vector.load %arg5[%c24_470, %c0_471, %c0_472] : memref<27x8x8xbf16, #tpu.memory_space<vmem>>, vector<1x8x8xbf16>
    %379 = vector.shape_cast %378 : vector<1x8x8xbf16> to vector<8x8xbf16>
    %c0_473 = arith.constant 0 : index
    %c392 = arith.constant 392 : index
    %380 = vector.load %arg10[%c0_473, %c392] : memref<8x1024xbf16, #tpu.memory_space<vmem>>, vector<8x512xbf16>
    %cst_474 = arith.constant dense<0.000000e+00> : vector<8x512xf32>
    %381 = tpu.matmul %379, %380, %cst_474 {dimension_numbers = #tpu.dot_dimension_numbers<[1], [0], [0], [1], [0, 0, 1, 1], [], []>} : vector<8x8xbf16>, vector<8x512xbf16>, vector<8x512xf32> -> vector<8x512xf32>
    %c0_475 = arith.constant 0 : index
    %c0_476 = arith.constant 0 : index
    %382 = vector.load %arg11[%c0_475, %c0_476] : memref<8x683xf32, #tpu.memory_space<vmem>>, vector<8x512xf32>
    %383 = arith.addf %382, %381 : vector<8x512xf32>
    %c0_477 = arith.constant 0 : index
    %c0_478 = arith.constant 0 : index
    %384 = vector.load %arg11[%c0_477, %c0_478] : memref<8x683xf32, #tpu.memory_space<vmem>>, vector<8x512xf32>
    tpu.vector_store %arg11[%c0_477, %c0_478], %383 {strides = array<i32>} : memref<8x683xf32, #tpu.memory_space<vmem>>, vector<8x512xf32>,
    %c25_479 = arith.constant 25 : index
    %c0_480 = arith.constant 0 : index
    %c0_481 = arith.constant 0 : index
    %385 = vector.load %arg5[%c25_479, %c0_480, %c0_481] : memref<27x8x8xbf16, #tpu.memory_space<vmem>>, vector<1x8x8xbf16>
    %386 = vector.shape_cast %385 : vector<1x8x8xbf16> to vector<8x8xbf16>
    %c0_482 = arith.constant 0 : index
    %c393 = arith.constant 393 : index
    %387 = vector.load %arg10[%c0_482, %c393] : memref<8x1024xbf16, #tpu.memory_space<vmem>>, vector<8x512xbf16>
    %cst_483 = arith.constant dense<0.000000e+00> : vector<8x512xf32>
    %388 = tpu.matmul %386, %387, %cst_483 {dimension_numbers = #tpu.dot_dimension_numbers<[1], [0], [0], [1], [0, 0, 1, 1], [], []>} : vector<8x8xbf16>, vector<8x512xbf16>, vector<8x512xf32> -> vector<8x512xf32>
    %c0_484 = arith.constant 0 : index
    %c0_485 = arith.constant 0 : index
    %389 = vector.load %arg11[%c0_484, %c0_485] : memref<8x683xf32, #tpu.memory_space<vmem>>, vector<8x512xf32>
    %390 = arith.addf %389, %388 : vector<8x512xf32>
    %c0_486 = arith.constant 0 : index
    %c0_487 = arith.constant 0 : index
    %391 = vector.load %arg11[%c0_486, %c0_487] : memref<8x683xf32, #tpu.memory_space<vmem>>, vector<8x512xf32>
    tpu.vector_store %arg11[%c0_486, %c0_487], %390 {strides = array<i32>} : memref<8x683xf32, #tpu.memory_space<vmem>>, vector<8x512xf32>,
    %c26_488 = arith.constant 26 : index
    %c0_489 = arith.constant 0 : index
    %c0_490 = arith.constant 0 : index
    %392 = vector.load %arg5[%c26_488, %c0_489, %c0_490] : memref<27x8x8xbf16, #tpu.memory_space<vmem>>, vector<1x8x8xbf16>
    %393 = vector.shape_cast %392 : vector<1x8x8xbf16> to vector<8x8xbf16>
    %c0_491 = arith.constant 0 : index
    %c394 = arith.constant 394 : index
    %394 = vector.load %arg10[%c0_491, %c394] : memref<8x1024xbf16, #tpu.memory_space<vmem>>, vector<8x512xbf16>
    %cst_492 = arith.constant dense<0.000000e+00> : vector<8x512xf32>
    %395 = tpu.matmul %393, %394, %cst_492 {dimension_numbers = #tpu.dot_dimension_numbers<[1], [0], [0], [1], [0, 0, 1, 1], [], []>} : vector<8x8xbf16>, vector<8x512xbf16>, vector<8x512xf32> -> vector<8x512xf32>
    %c0_493 = arith.constant 0 : index
    %c0_494 = arith.constant 0 : index
    %396 = vector.load %arg11[%c0_493, %c0_494] : memref<8x683xf32, #tpu.memory_space<vmem>>, vector<8x512xf32>
    %397 = arith.addf %396, %395 : vector<8x512xf32>
    %c0_495 = arith.constant 0 : index
    %c0_496 = arith.constant 0 : index
    %398 = vector.load %arg11[%c0_495, %c0_496] : memref<8x683xf32, #tpu.memory_space<vmem>>, vector<8x512xf32>
    tpu.vector_store %arg11[%c0_495, %c0_496], %397 {strides = array<i32>} : memref<8x683xf32, #tpu.memory_space<vmem>>, vector<8x512xf32>,
    %c0_497 = arith.constant 0 : index
    %c266_498 = arith.constant 266 : index
    %399 = vector.load %arg9[%c0_497, %c266_498] : memref<8x1024xbf16, #tpu.memory_space<vmem>>, vector<8x512xbf16>
    %400 = arith.extf %399 : vector<8x512xbf16> to vector<8x512xf32>
    %c0_499 = arith.constant 0 : index
    %c0_500 = arith.constant 0 : index
    %401 = vector.load %arg11[%c0_499, %c0_500] : memref<8x683xf32, #tpu.memory_space<vmem>>, vector<8x512xf32>
    %c0_501 = arith.constant 0 : index
    %c2_502 = arith.constant 2 : index
    %402 = vector.load %arg6[%c0_501, %c2_502] : memref<8x4xf32, #tpu.memory_space<vmem>>, vector<8x1xf32>
    %403 = vector.broadcast %402 : vector<8x1xf32> to vector<8x512xf32>
    %404 = arith.mulf %401, %403 : vector<8x512xf32>
    %c0_503 = arith.constant 0 : index
    %c3_504 = arith.constant 3 : index
    %405 = vector.load %arg6[%c0_503, %c3_504] : memref<8x4xf32, #tpu.memory_space<vmem>>, vector<8x1xf32>
    %406 = vector.broadcast %405 : vector<8x1xf32> to vector<8x512xf32>
    %407 = arith.addf %404, %406 : vector<8x512xf32>
    %408 = arith.addf %407, %400 : vector<8x512xf32>
    %cst_505 = arith.constant 0.000000e+00 : f32
    %409 = vector.broadcast %cst_505 : f32 to vector<8x512xf32>
    %410 = arith.maximumf %408, %409 : vector<8x512xf32>
    %c0_506 = arith.constant 0 : index
    %c0_507 = arith.constant 0 : index
    %c0_508 = arith.constant 0 : index
    %411 = vector.load %arg8[%c0_506, %c0_507, %c0_508] : memref<1x8x512xf32, #tpu.memory_space<vmem>>, vector<1x8x512xf32>
    %412 = vector.shape_cast %411 : vector<1x8x512xf32> to vector<8x512xf32>
    %413 = vector.shape_cast %410 : vector<8x512xf32> to vector<1x8x512xf32>
    tpu.vector_store %arg8[%c0_506, %c0_507, %c0_508], %413 {strides = array<i32>} : memref<1x8x512xf32, #tpu.memory_space<vmem>>, vector<1x8x512xf32>,
    return
  }
  func.func @transform_0(%arg0: i32, %arg1: i32) -> (i32, i32, i32) {
    %c0_i32 = arith.constant 0 : i32
    %c0_i32_0 = arith.constant 0 : i32
    return %arg0, %c0_i32, %arg1 : i32, i32, i32
  }
  func.func @transform_1(%arg0: i32, %arg1: i32) -> (i32, i32, i32) {
    %c1_i32 = arith.constant 1 : i32
    %0 = arith.addi %arg1, %c1_i32 : i32
    %c1_i32_0 = arith.constant 1 : i32
    %1 = arith.muli %0, %c1_i32_0 : i32
    %c0_i32 = arith.constant 0 : i32
    %c0_i32_1 = arith.constant 0 : i32
    return %arg0, %c0_i32, %1 : i32, i32, i32
  }
  func.func @transform_2(%arg0: i32, %arg1: i32) -> (i32, i32, i32) {
    %c0_i32 = arith.constant 0 : i32
    %c0_i32_0 = arith.constant 0 : i32
    %c0_i32_1 = arith.constant 0 : i32
    %c0_i32_2 = arith.constant 0 : i32
    return %c0_i32, %c0_i32_0, %c0_i32_1 : i32, i32, i32
  }
  func.func @transform_3(%arg0: i32, %arg1: i32) -> (i32, i32, i32) {
    %c0_i32 = arith.constant 0 : i32
    %c0_i32_0 = arith.constant 0 : i32
    %c0_i32_1 = arith.constant 0 : i32
    %c0_i32_2 = arith.constant 0 : i32
    return %c0_i32, %c0_i32_0, %c0_i32_1 : i32, i32, i32
  }
  func.func @transform_4(%arg0: i32, %arg1: i32) -> (i32, i32) {
    %c0_i32 = arith.constant 0 : i32
    %c0_i32_0 = arith.constant 0 : i32
    %c0_i32_1 = arith.constant 0 : i32
    return %c0_i32, %c0_i32_0 : i32, i32
  }
  func.func @transform_5(%arg0: i32, %arg1: i32) -> (i32, i32, i32) {
    %c0_i32 = arith.constant 0 : i32
    %c0_i32_0 = arith.constant 0 : i32
    %c0_i32_1 = arith.constant 0 : i32
    return %arg1, %c0_i32, %c0_i32_0 : i32, i32, i32
  }
  func.func @transform_6(%arg0: i32, %arg1: i32) -> (i32, i32, i32) {
    %c0_i32 = arith.constant 0 : i32
    %c0_i32_0 = arith.constant 0 : i32
    return %arg0, %c0_i32, %arg1 : i32, i32, i32
  }
}

</mosaic_0001>

<llo_original>
// kernel: tpu_custom_call.1
$region0: #{tpu_custom_call.1}
  #allocation0 [shape = 'u32[]', space=smem, size = 0x4, offset = 0x4, fixed_abs, tag = 'smem constant byte address 0x4 - core index']
  #allocation1 [shape = 'u32[144,128]{1,0:T(1,128)}', space=vmem, size = 0x12000, scoped, tag = 'internal scratch']
  #allocation2 [shape = 'bf16[8,1024]{1,0:T(8,128)(2,1)}', space=vmem, size = 0x4000, scoped, tag = 'scratch operand']
  #allocation3 [shape = 'bf16[8,1024]{1,0:T(8,128)(2,1)}', space=vmem, size = 0x4000, scoped, tag = 'scratch operand']
  #allocation4 [shape = 'f32[8,683]{1,0:T(8,128)}', space=vmem, size = 0x6000, scoped, tag = 'scratch operand']
  %s0 = inlined_call_operand.vmem [shape: bf16[2,8,1536], index: 0, kind: input, shape index: {}]
  %s1 = inlined_call_operand.vmem [shape: bf16[2,8,1536], index: 1, kind: input, shape index: {}]
  %s2 = inlined_call_operand.vmem [shape: bf16[27,8,8], index: 2, kind: input, shape index: {}]
  %s3 = inlined_call_operand.vmem [shape: bf16[27,8,8], index: 3, kind: input, shape index: {}]
  %s4 = inlined_call_operand.vmem [shape: f32[8,4], index: 4, kind: input, shape index: {}]
  %s5 = inlined_call_operand.vmem [shape: f32[2,1,683], index: 5, kind: input, shape index: {}]
  %s6 = inlined_call_operand.hbm [shape: f32[2,8,1024], index: 6, kind: output, shape index: {}]
  %s7 = sld [smem:[#allocation0]]
  $region57: #{tpu_custom_call.1} parent=0
    _
  %s9 = ssub.s32 1, %s7
  %s10 = scalar_select 0, %s9, %s7
  $region1: #{tpu_custom_call.1} parent=0
    #allocation5 [shape = 'u8[32768]{0}', space=vmem, size = 0x8000, scoped, tag = 'output window, operand 0']
    #allocation6 [shape = 's32[2]{0}', space=sflag, size = 0x8, scoped, tag = 'scoped memory for tpu_custom_call.1']
    %11 = vsyncpa [#allocation6], 0
    %s12 = scalar_lea.sflag [#allocation6], 1
    %13 = vsyncpa %s12, 0
    loop: start=0, step=1, limit=6
    $region2: #{tpu_custom_call.1} parent=1 // loop_pre_header
      _
    $region3: #{tpu_custom_call.1} parent=1 // loop_header
      %s15 = sphi 0, %s19
      %p16 = scmp.ge.s32.totalorder %s15, 6
      %s22 = sphi 0, %s34
      %s23 = sphi 0, %s30
      %s24 = sphi 0, %s22
      %s25 = sphi 0, %s23
      %s26 = sphi 0, %s24
      %s27 = sphi 0, %s25
      %s39 = sphi 0, %s41
      %s42 = sphi 0, %s39
      %s43 = sphi 0, %s42
      %s59 = sphi 0, %s43
      %s69 = sphi 0, %s71
      %s72 = sphi 0, %s69
      %s73 = sphi 0, %s72
      %s89 = sphi 0, %s73
      %s93 = sphi 0, %s93
      %s95 = sphi 0, %s93
      %s96 = sphi 0, %s95
      %s110 = sphi 0, %s96
      %s114 = sphi 0, %s114
      %s116 = sphi 0, %s114
      %s117 = sphi 0, %s116
      %s131 = sphi 0, %s117
      %s135 = sphi 0, %s135
      %s137 = sphi 0, %s135
      %s138 = sphi 0, %s137
      %s152 = sphi 0, %s138
      %s158 = sphi 0, %s160
      %s161 = sphi 0, %s158
      %s162 = sphi 0, %s161
      %s178 = sphi 0, %s162
      %s186 = sphi 0, %s188
      %s189 = sphi 0, %s186
      %s190 = sphi 0, %s189
      %s206 = sphi 0, %s190
    $region4: #{tpu_custom_call.1} parent=1 // loop_header_branch
      %18 = sbr.rel (%p16) target = $region8
    $region5: #{tpu_custom_call.1} parent=1 // loop_body
      %s20 = ssub.s32 %s15, 1
      %s21 = ssub.s32 %s15, 2
      %s28 = sadd.s32 1, %s23
      %p29 = scmp.ge.s32.totalorder %s28, 2
      %s30 = scalar_select %p29, 0, %s28
      %s31 = sadd.s32 1, %s22
      %s32 = scalar_select %p29, %s31, %s22
      %p33 = scmp.ge.s32.totalorder %s32, 2
      %s34 = scalar_select %p33, 0, %s32
      %s35 = ssub.s32 %s22, %s34
      %s36 = ssub.s32 %s23, %s30
      %s37 = sor.u32 %s35, %s36
      %p38 = scmp.eq.s32.totalorder %s37, 0
      %s40 = sadd.s32 %s39, 1
      %s41 = scalar_select %p38, %s39, %s40
      %p44 = pneg %p38
      %p45 = scmp.eq.s32.totalorder %s15, 3
      %p46 = por %p44, %p45
      %p47 = scmp.ne.s32.totalorder %s39, %s42
      %p48 = scmp.eq.s32.totalorder %s15, 0
      %p49 = por %p47, %p48
      %p50 = scmp.ne.s32.totalorder %s39, %s42
      %p51 = scmp.eq.s32.totalorder %s20, 3
      %p52 = por %p50, %p51
      %p53 = scmp.ne.s32.totalorder %s42, %s43
      %p54 = scmp.eq.s32.totalorder %s20, 0
      %p55 = por %p53, %p54
      %p56 = scmp.ne.s32.totalorder %s42, %s43
      %p57 = scmp.eq.s32.totalorder %s21, 3
      %p58 = por %p56, %p57
      %p60 = scmp.ne.s32.totalorder %s43, %s59
      %p61 = scmp.eq.s32.totalorder %s21, 0
      %p62 = por %p60, %p61
      %s63 = sadd.s32 %s23, 1
      %s64 = sadd.s32 %s30, 1
      %s65 = ssub.s32 %s22, %s34
      %s66 = ssub.s32 %s63, %s64
      %s67 = sor.u32 %s65, %s66
      %p68 = scmp.eq.s32.totalorder %s67, 0
      %s70 = sadd.s32 %s69, 1
      %s71 = scalar_select %p68, %s69, %s70
      %p74 = pneg %p68
      %p75 = scmp.eq.s32.totalorder %s15, 3
      %p76 = por %p74, %p75
      %p77 = scmp.ne.s32.totalorder %s69, %s72
      %p78 = scmp.eq.s32.totalorder %s15, 0
      %p79 = por %p77, %p78
      %p80 = scmp.ne.s32.totalorder %s69, %s72
      %p81 = scmp.eq.s32.totalorder %s20, 3
      %p82 = por %p80, %p81
      %p83 = scmp.ne.s32.totalorder %s72, %s73
      %p84 = scmp.eq.s32.totalorder %s20, 0
      %p85 = por %p83, %p84
      %p86 = scmp.ne.s32.totalorder %s72, %s73
      %p87 = scmp.eq.s32.totalorder %s21, 3
      %p88 = por %p86, %p87
      %p90 = scmp.ne.s32.totalorder %s73, %s89
      %p91 = scmp.eq.s32.totalorder %s21, 0
      %p92 = por %p90, %p91
      %s94 = sadd.s32 %s93, 1
      %p97 = scmp.eq.s32.totalorder %s15, 3
      %p98 = scmp.ne.s32.totalorder %s93, %s95
      %p99 = scmp.eq.s32.totalorder %s15, 0
      %p100 = por %p98, %p99
      %p101 = scmp.ne.s32.totalorder %s93, %s95
      %p102 = scmp.eq.s32.totalorder %s20, 3
      %p103 = por %p101, %p102
      %p104 = scmp.ne.s32.totalorder %s95, %s96
      %p105 = scmp.eq.s32.totalorder %s20, 0
      %p106 = por %p104, %p105
      %p107 = scmp.ne.s32.totalorder %s95, %s96
      %p108 = scmp.eq.s32.totalorder %s21, 3
      %p109 = por %p107, %p108
      %p111 = scmp.ne.s32.totalorder %s96, %s110
      %p112 = scmp.eq.s32.totalorder %s21, 0
      %p113 = por %p111, %p112
      %s115 = sadd.s32 %s114, 1
      %p118 = scmp.eq.s32.totalorder %s15, 3
      %p119 = scmp.ne.s32.totalorder %s114, %s116
      %p120 = scmp.eq.s32.totalorder %s15, 0
      %p121 = por %p119, %p120
      %p122 = scmp.ne.s32.totalorder %s114, %s116
      %p123 = scmp.eq.s32.totalorder %s20, 3
      %p124 = por %p122, %p123
      %p125 = scmp.ne.s32.totalorder %s116, %s117
      %p126 = scmp.eq.s32.totalorder %s20, 0
      %p127 = por %p125, %p126
      %p128 = scmp.ne.s32.totalorder %s116, %s117
      %p129 = scmp.eq.s32.totalorder %s21, 3
      %p130 = por %p128, %p129
      %p132 = scmp.ne.s32.totalorder %s117, %s131
      %p133 = scmp.eq.s32.totalorder %s21, 0
      %p134 = por %p132, %p133
      %s136 = sadd.s32 %s135, 1
      %p139 = scmp.eq.s32.totalorder %s15, 3
      %p140 = scmp.ne.s32.totalorder %s135, %s137
      %p141 = scmp.eq.s32.totalorder %s15, 0
      %p142 = por %p140, %p141
      %p143 = scmp.ne.s32.totalorder %s135, %s137
      %p144 = scmp.eq.s32.totalorder %s20, 3
      %p145 = por %p143, %p144
      %p146 = scmp.ne.s32.totalorder %s137, %s138
      %p147 = scmp.eq.s32.totalorder %s20, 0
      %p148 = por %p146, %p147
      %p149 = scmp.ne.s32.totalorder %s137, %s138
      %p150 = scmp.eq.s32.totalorder %s21, 3
      %p151 = por %p149, %p150
      %p153 = scmp.ne.s32.totalorder %s138, %s152
      %p154 = scmp.eq.s32.totalorder %s21, 0
      %p155 = por %p153, %p154
      %s156 = ssub.s32 %s23, %s30
      %p157 = scmp.eq.s32.totalorder %s156, 0
      %s159 = sadd.s32 %s158, 1
      %s160 = scalar_select %p157, %s158, %s159
      %p163 = pneg %p157
      %p164 = scmp.eq.s32.totalorder %s15, 3
      %p165 = por %p163, %p164
      %p166 = scmp.ne.s32.totalorder %s158, %s161
      %p167 = scmp.eq.s32.totalorder %s15, 0
      %p168 = por %p166, %p167
      %p169 = scmp.ne.s32.totalorder %s158, %s161
      %p170 = scmp.eq.s32.totalorder %s20, 3
      %p171 = por %p169, %p170
      %p172 = scmp.ne.s32.totalorder %s161, %s162
      %p173 = scmp.eq.s32.totalorder %s20, 0
      %p174 = por %p172, %p173
      %p175 = scmp.ne.s32.totalorder %s161, %s162
      %p176 = scmp.eq.s32.totalorder %s21, 3
      %p177 = por %p175, %p176
      %p179 = scmp.ne.s32.totalorder %s162, %s178
      %p180 = scmp.eq.s32.totalorder %s21, 0
      %p181 = por %p179, %p180
      %s182 = ssub.s32 %s22, %s34
      %s183 = ssub.s32 %s23, %s30
      %s184 = sor.u32 %s182, %s183
      %p185 = scmp.eq.s32.totalorder %s184, 0
      %s187 = sadd.s32 %s186, 1
      %s188 = scalar_select %p185, %s186, %s187
      %p191 = pneg %p185
      %p192 = scmp.eq.s32.totalorder %s15, 3
      %p193 = por %p191, %p192
      %p194 = scmp.ne.s32.totalorder %s186, %s189
      %p195 = scmp.eq.s32.totalorder %s15, 0
      %p196 = por %p194, %p195
      %p197 = scmp.ne.s32.totalorder %s186, %s189
      %p198 = scmp.eq.s32.totalorder %s20, 3
      %p199 = por %p197, %p198
      %p200 = scmp.ne.s32.totalorder %s189, %s190
      %p201 = scmp.eq.s32.totalorder %s20, 0
      %p202 = por %p200, %p201
      %p203 = scmp.ne.s32.totalorder %s189, %s190
      %p204 = scmp.eq.s32.totalorder %s21, 3
      %p205 = por %p203, %p204
      %p207 = scmp.ne.s32.totalorder %s190, %s206
      %p208 = scmp.eq.s32.totalorder %s21, 0
      %p209 = por %p207, %p208
      %p210 = scmp.le.s32.totalorder 1, %s15
      %p211 = scmp.lt.s32.totalorder %s15, 5
      %p212 = pnand %p210, %p211
      %p213 = pneg %p212
      // Predicated region
      $region9: #{tpu_custom_call.1} parent=5 // pred_check
        _
      $region10: #{tpu_custom_call.1} parent=5 // pred_check_branch
        %215 = sbr.rel (%p212) target = $region12
      $region11: #{tpu_custom_call.1} parent=5 // pred_region
        %s216 = ssub.s32 %s15, 1
        // Predicated region
        $region13: #{tpu_custom_call.1} parent=11 // pred_check
          %p217 = pneg %p106
        $region14: #{tpu_custom_call.1} parent=11 // pred_check_branch
          %219 = sbr.rel (%p217) target = $region16
        $region15: #{tpu_custom_call.1} parent=11 // pred_region
          _
        $region16: #{tpu_custom_call.1} parent=11 // pred_fallthru
          _
        // Predicated region
        $region17: #{tpu_custom_call.1} parent=11 // pred_check
          %p220 = pneg %p127
        $region18: #{tpu_custom_call.1} parent=11 // pred_check_branch
          %222 = sbr.rel (%p220) target = $region20
        $region19: #{tpu_custom_call.1} parent=11 // pred_region
          _
        $region20: #{tpu_custom_call.1} parent=11 // pred_fallthru
          _
        // Predicated region
        $region21: #{tpu_custom_call.1} parent=11 // pred_check
          %p223 = pneg %p148
        $region22: #{tpu_custom_call.1} parent=11 // pred_check_branch
          %225 = sbr.rel (%p223) target = $region24
        $region23: #{tpu_custom_call.1} parent=11 // pred_region
          _
        $region24: #{tpu_custom_call.1} parent=11 // pred_fallthru
          _
      $region12: #{tpu_custom_call.1} parent=5 // pred_fallthru
        _
      %p226 = scmp.lt.s32.totalorder %s15, 4
      // Predicated region
      $region25: #{tpu_custom_call.1} parent=5 // pred_check
        %p227 = pneg %p226
      $region26: #{tpu_custom_call.1} parent=5 // pred_check_branch
        %229 = sbr.rel (%p227) target = $region28
      $region27: #{tpu_custom_call.1} parent=5 // pred_region
        // Predicated region
        $region29: #{tpu_custom_call.1} parent=27 // pred_check
          %p230 = pneg %p49
        $region30: #{tpu_custom_call.1} parent=27 // pred_check_branch
          %232 = sbr.rel (%p230) target = $region32
        $region31: #{tpu_custom_call.1} parent=27 // pred_region
          %s233 = smul.u32 4, %s23
          %p234 = scmp.lt.s32.totalorder %s22, 1
          %s235 = scalar_select %p234, %s22, 1
          %p236 = scmp.lt.s32.totalorder %s233, 11
          %s237 = scalar_select %p236, %s233, 11
          %s238 = smul.addr %s235, 12
          %s239 = sadd.s32 %s237, %s238
          %s240 = smul.addr %s239, 4
          %s241 = scalar_lea.vmem %s0, %s240
          %s242 = smul.u32 4, %s23
        $region32: #{tpu_custom_call.1} parent=27 // pred_fallthru
          _
        // Predicated region
        $region33: #{tpu_custom_call.1} parent=27 // pred_check
          %p243 = pneg %p79
        $region34: #{tpu_custom_call.1} parent=27 // pred_check_branch
          %245 = sbr.rel (%p243) target = $region36
        $region35: #{tpu_custom_call.1} parent=27 // pred_region
          %s246 = sadd.s32 %s23, 1
          %s247 = smul.u32 4, %s246
          %p248 = scmp.lt.s32.totalorder %s22, 1
          %s249 = scalar_select %p248, %s22, 1
          %p250 = scmp.lt.s32.totalorder %s247, 11
          %s251 = scalar_select %p250, %s247, 11
          %s252 = smul.addr %s249, 12
          %s253 = sadd.s32 %s251, %s252
          %s254 = smul.addr %s253, 4
          %s255 = scalar_lea.vmem %s1, %s254
          %s256 = sadd.s32 %s23, 1
          %s257 = smul.u32 4, %s256
        $region36: #{tpu_custom_call.1} parent=27 // pred_fallthru
          _
        // Predicated region
        $region37: #{tpu_custom_call.1} parent=27 // pred_check
          %p258 = pneg %p168
        $region38: #{tpu_custom_call.1} parent=27 // pred_check_branch
          %260 = sbr.rel (%p258) target = $region40
        $region39: #{tpu_custom_call.1} parent=27 // pred_region
          %p261 = scmp.lt.s32.totalorder %s23, 1
          %s262 = scalar_select %p261, %s23, 1
          %s263 = smul.addr %s262, 6
          %s264 = scalar_lea.vmem %s5, %s263
        $region40: #{tpu_custom_call.1} parent=27 // pred_fallthru
          _
      $region28: #{tpu_custom_call.1} parent=5 // pred_fallthru
        _
      %p265 = scmp.le.s32.totalorder 1, %s15
      %p266 = scmp.lt.s32.totalorder %s15, 5
      %p267 = pnand %p265, %p266
      %p268 = pneg %p267
      // Predicated region
      $region41: #{tpu_custom_call.1} parent=5 // pred_check
        _
      $region42: #{tpu_custom_call.1} parent=5 // pred_check_branch
        %270 = sbr.rel (%p267) target = $region44
      $region43: #{tpu_custom_call.1} parent=5 // pred_region
        %s271 = ssub.s32 %s15, 1
        %s272 = smul.u32 4, %s25
        %p273 = scmp.lt.s32.totalorder %s24, 1
        %s274 = scalar_select %p273, %s24, 1
        %p275 = scmp.lt.s32.totalorder %s272, 11
        %s276 = scalar_select %p275, %s272, 11
        %s277 = smul.addr %s274, 12
        %s278 = sadd.s32 %s276, %s277
        %s279 = smul.addr %s278, 4
        %s280 = scalar_lea.vmem %s0, %s279
        %p281 = pneg %p55
        %p282 = pneg %p52
        %s283 = sadd.s32 %s25, 1
        %s284 = smul.u32 4, %s283
        %p285 = scmp.lt.s32.totalorder %s24, 1
        %s286 = scalar_select %p285, %s24, 1
        %p287 = scmp.lt.s32.totalorder %s284, 11
        %s288 = scalar_select %p287, %s284, 11
        %s289 = smul.addr %s286, 12
        %s290 = sadd.s32 %s288, %s289
        %s291 = smul.addr %s290, 4
        %s292 = scalar_lea.vmem %s1, %s291
        %p293 = pneg %p85
        %p294 = pneg %p82
        %p295 = pneg %p106
        %p296 = pneg %p103
        %p297 = pneg %p127
        %p298 = pneg %p124
        %p299 = pneg %p148
        %p300 = pneg %p145
        %p301 = scmp.lt.s32.totalorder %s25, 1
        %s302 = scalar_select %p301, %s25, 1
        %s303 = smul.addr %s302, 6
        %s304 = scalar_lea.vmem %s5, %s303
        %p305 = pneg %p174
        %p306 = pneg %p171
        %p307 = pneg %p202
        %p308 = pneg %p199
        %s309 = sand.u32 %s189, 1
        %s310 = scalar_lea.sflag [#allocation6], %s309
        %s311 = sand.u32 %s189, 1
        %s312 = smul.addr %s311, 32
        %s313 = scalar_lea.vmem [#allocation5], %s312
        %s314 = smul.u32 4, %s25
        %p315 = scmp.lt.s32.totalorder %s24, 1
        %s316 = scalar_select %p315, %s24, 1
        %p317 = scmp.lt.s32.totalorder %s314, 11
        %s318 = scalar_select %p317, %s314, 11
        %s319 = smul.addr %s316, 12
        %s320 = sadd.s32 %s318, %s319
        %s321 = smul.addr %s320, 4
        %s322 = scalar_lea.vmem %s0, %s321
        %s323 = smul.u32 4, %s25
        %s324 = sadd.s32 %s25, 1
        %s325 = smul.u32 4, %s324
        %p326 = scmp.lt.s32.totalorder %s24, 1
        %s327 = scalar_select %p326, %s24, 1
        %p328 = scmp.lt.s32.totalorder %s325, 11
        %s329 = scalar_select %p328, %s325, 11
        %s330 = smul.addr %s327, 12
        %s331 = sadd.s32 %s329, %s330
        %s332 = smul.addr %s331, 4
        %s333 = scalar_lea.vmem %s1, %s332
        %s334 = sadd.s32 %s25, 1
        %s335 = smul.u32 4, %s334
        %p336 = scmp.lt.s32.totalorder %s25, 1
        %s337 = scalar_select %p336, %s25, 1
        %s338 = smul.addr %s337, 6
        %s339 = scalar_lea.vmem %s5, %s338
        %s340 = smul.u32 4, %s25
        %v342 = vld [vmem:[%s322] sm:$0xff]
        %v343 = vld [vmem:[%s322 + $0x8] sm:$0xff]
        %344 = vst [vmem:[#allocation2] sm:$0xff] %v342
        %345 = vst [vmem:[#allocation2 + $0x8] sm:$0xff] %v343
        %v346 = vld [vmem:[%s333] sm:$0xff]
        %v347 = vld [vmem:[%s333 + $0x8] sm:$0xff]
        %348 = vst [vmem:[#allocation2 + $0x10] sm:$0xff] %v346
        %349 = vst [vmem:[#allocation2 + $0x18] sm:$0xff] %v347
        %v350 = vld [vmem:[%s2] sm:$0xf]
        %v351 = vld [vmem:[#allocation2] sm:$0xff]
        %v352 = vld [vmem:[#allocation2 + $0x8] sm:$0xff]
        %v353 = vld [vmem:[#allocation2 + $0x10] sm:$0xff]
        %v357 = vunpack.c.l.b16 %v351
        %v358 = vunpack.c.h.b16 %v351
        %v359 = vunpack.c.l.b16 %v352
        %v360 = vunpack.c.h.b16 %v352
        %v361 = vunpack.c.l.b16 %v353
        %v362 = vunpack.c.h.b16 %v353
        %v363 = vpack.c.b16 %v357, %v357
        %v364 = vpack.c.b16 %v358, %v358
        %v365 = vpack.c.b16 %v359, %v359
        %v366 = vpack.c.b16 %v360, %v360
        %v367 = vpack.c.b16 %v361, %v361
        %v368 = vpack.c.b16 %v362, %v362
        %vm369 = vcmask 64512
        %v371 = vsel %vm369, %v350, 0
        %vm373 = vcmask 1043456
        %v375 = vsel %vm373, %v363, 0
        %v378 = vsel %vm373, %v364, 0
        %v381 = vsel %vm373, %v365, 0
        %v384 = vsel %vm373, %v366, 0
        %v387 = vsel %vm373, %v367, 0
        %v390 = vsel %vm373, %v368, 0
        %392 = vmatprep.subr.bf16.mxu0 %v378
        %393 = vmatpush1.bf16.msra.mxu0 %v375
        %394 = vmatprep.subr.bf16.mxu0 0
        %395 = vmatpush1.bf16.msra.mxu0 0
        %396 = vmatprep.subr.bf16.mxu0 0
        %397 = vmatpush1.bf16.msra.mxu0 0
        %398 = vmatprep.subr.bf16.mxu0 0
        %399 = vmatpush1.bf16.msra.mxu0 0
        %400 = vmatprep.subr.bf16.mxu0 0
        %401 = vmatpush1.bf16.msra.mxu0 0
        %402 = vmatprep.subr.bf16.mxu0 0
        %403 = vmatpush1.bf16.msra.mxu0 0
        %404 = vmatprep.subr.bf16.mxu0 0
        %405 = vmatpush1.bf16.msra.mxu0 0
        %406 = vmatprep.subr.bf16.mxu0 0
        %407 = vmatpush1.bf16.msra.mxu0 0
        %408 = vmatprep.subr.bf16.mxu0 0
        %409 = vmatpush1.bf16.msra.mxu0 0
        %410 = vmatprep.subr.bf16.mxu0 0
        %411 = vmatpush1.bf16.msra.mxu0 0
        %412 = vmatprep.subr.bf16.mxu0 0
        %413 = vmatpush1.bf16.msra.mxu0 0
        %414 = vmatprep.subr.bf16.mxu0 0
        %415 = vmatpush1.bf16.msra.mxu0 0
        %416 = vmatprep.subr.bf16.mxu0 0
        %417 = vmatpush1.bf16.msra.mxu0 0
        %418 = vmatprep.subr.bf16.mxu0 0
        %419 = vmatpush1.bf16.msra.mxu0 0
        %420 = vmatprep.subr.bf16.mxu0 0
        %421 = vmatpush1.bf16.msra.mxu0 0
        %422 = vmatprep.subr.bf16.mxu0 0
        %423 = vmatpush1.bf16.msra.mxu0 0
        %424 = vmatprep.mubr.bf16.mxu0 0
        %425 = vmatmul.mubr.bf16.gmra.mrb[0].mxu0 %v371
        %v426 = vpop.f32.mrb[0].mxu0
        %v427 = vadd.f32 0.0, %v426
        %v428 = vpop.f32.mrb[0].mxu0
        %v429 = vadd.f32 0.0, %v428
        %v430 = vpop.f32.mrb[0].mxu0
        %v431 = vpop.f32.mrb[0].mxu0
        %432 = vdwg.mxu0
        %433 = vmatprep.subr.bf16.mxu0 %v384
        %434 = vmatpush1.bf16.msra.mxu0 %v381
        %435 = vmatprep.subr.bf16.mxu0 0
        %436 = vmatpush1.bf16.msra.mxu0 0
        %437 = vmatprep.subr.bf16.mxu0 0
        %438 = vmatpush1.bf16.msra.mxu0 0
        %439 = vmatprep.subr.bf16.mxu0 0
        %440 = vmatpush1.bf16.msra.mxu0 0
        %441 = vmatprep.subr.bf16.mxu0 0
        %442 = vmatpush1.bf16.msra.mxu0 0
        %443 = vmatprep.subr.bf16.mxu0 0
        %444 = vmatpush1.bf16.msra.mxu0 0
        %445 = vmatprep.subr.bf16.mxu0 0
        %446 = vmatpush1.bf16.msra.mxu0 0
        %447 = vmatprep.subr.bf16.mxu0 0
        %448 = vmatpush1.bf16.msra.mxu0 0
        %449 = vmatprep.subr.bf16.mxu0 0
        %450 = vmatpush1.bf16.msra.mxu0 0
        %451 = vmatprep.subr.bf16.mxu0 0
        %452 = vmatpush1.bf16.msra.mxu0 0
        %453 = vmatprep.subr.bf16.mxu0 0
        %454 = vmatpush1.bf16.msra.mxu0 0
        %455 = vmatprep.subr.bf16.mxu0 0
        %456 = vmatpush1.bf16.msra.mxu0 0
        %457 = vmatprep.subr.bf16.mxu0 0
        %458 = vmatpush1.bf16.msra.mxu0 0
        %459 = vmatprep.subr.bf16.mxu0 0
        %460 = vmatpush1.bf16.msra.mxu0 0
        %461 = vmatprep.subr.bf16.mxu0 0
        %462 = vmatpush1.bf16.msra.mxu0 0
        %463 = vmatprep.subr.bf16.mxu0 0
        %464 = vmatpush1.bf16.msra.mxu0 0
        %465 = vmatprep.mubr.bf16.mxu0 0
        %466 = vmatmul.mubr.bf16.gmra.mrb[0].mxu0 %v371
        %v467 = vpop.f32.mrb[0].mxu0
        %v468 = vadd.f32 0.0, %v467
        %v469 = vpop.f32.mrb[0].mxu0
        %v470 = vadd.f32 0.0, %v469
        %v471 = vpop.f32.mrb[0].mxu0
        %v472 = vpop.f32.mrb[0].mxu0
        %473 = vdwg.mxu0
        %474 = vmatprep.subr.bf16.mxu0 %v390
        %475 = vmatpush1.bf16.msra.mxu0 %v387
        %476 = vmatprep.subr.bf16.mxu0 0
        %477 = vmatpush1.bf16.msra.mxu0 0
        %478 = vmatprep.subr.bf16.mxu0 0
        %479 = vmatpush1.bf16.msra.mxu0 0
        %480 = vmatprep.subr.bf16.mxu0 0
        %481 = vmatpush1.bf16.msra.mxu0 0
        %482 = vmatprep.subr.bf16.mxu0 0
        %483 = vmatpush1.bf16.msra.mxu0 0
        %484 = vmatprep.subr.bf16.mxu0 0
        %485 = vmatpush1.bf16.msra.mxu0 0
        %486 = vmatprep.subr.bf16.mxu0 0
        %487 = vmatpush1.bf16.msra.mxu0 0
        %488 = vmatprep.subr.bf16.mxu0 0
        %489 = vmatpush1.bf16.msra.mxu0 0
        %490 = vmatprep.subr.bf16.mxu0 0
        %491 = vmatpush1.bf16.msra.mxu0 0
        %492 = vmatprep.subr.bf16.mxu0 0
        %493 = vmatpush1.bf16.msra.mxu0 0
        %494 = vmatprep.subr.bf16.mxu0 0
        %495 = vmatpush1.bf16.msra.mxu0 0
        %496 = vmatprep.subr.bf16.mxu0 0
        %497 = vmatpush1.bf16.msra.mxu0 0
        %498 = vmatprep.subr.bf16.mxu0 0
        %499 = vmatpush1.bf16.msra.mxu0 0
        %500 = vmatprep.subr.bf16.mxu0 0
        %501 = vmatpush1.bf16.msra.mxu0 0
        %502 = vmatprep.subr.bf16.mxu0 0
        %503 = vmatpush1.bf16.msra.mxu0 0
        %504 = vmatprep.subr.bf16.mxu0 0
        %505 = vmatpush1.bf16.msra.mxu0 0
        %506 = vmatprep.mubr.bf16.mxu0 0
        %507 = vmatmul.mubr.bf16.gmra.mrb[0].mxu0 %v371
        %v508 = vpop.f32.mrb[0].mxu0
        %v509 = vadd.f32 0.0, %v508
        %v510 = vpop.f32.mrb[0].mxu0
        %v511 = vadd.f32 0.0, %v510
        %v512 = vpop.f32.mrb[0].mxu0
        %v513 = vpop.f32.mrb[0].mxu0
        %514 = vdwg.mxu0
        %515 = vst [vmem:[#allocation4] sm:$0xff] %v427
        %516 = vst [vmem:[#allocation4 + $0x8] sm:$0xff] %v429
        %517 = vst [vmem:[#allocation4 + $0x10] sm:$0xff] %v468
        %518 = vst [vmem:[#allocation4 + $0x18] sm:$0xff] %v470
        %519 = vst [vmem:[#allocation4 + $0x20] sm:$0xff] %v509
        %vm520 = vcmask 351232
        %521 = vst.msk [vmem:[#allocation4 + $0x28] sm:$0xff] %vm520, %v511
        %s522 = scalar_lea.vmem %s2, 4
        %v523 = vld [vmem:[%s522] sm:$0xf]
        %v524 = vld [vmem:[#allocation2] sm:$0xff]
        %v525 = vld [vmem:[#allocation2 + $0x8] sm:$0xff]
        %v526 = vld [vmem:[#allocation2 + $0x10] sm:$0xff]
        %v530 = vunpack.c.l.b16 %v524
        %v531 = vunpack.c.h.b16 %v524
        %v532 = vunpack.c.l.b16 %v525
        %v533 = vunpack.c.h.b16 %v525
        %v534 = vunpack.c.l.b16 %v526
        %v535 = vunpack.c.h.b16 %v526
        %v536 = vpack.c.b16 %v530, %v530
        %v537 = vpack.c.b16 %v531, %v531
        %v538 = vpack.c.b16 %v532, %v532
        %v539 = vpack.c.b16 %v533, %v533
        %v540 = vpack.c.b16 %v534, %v534
        %v541 = vpack.c.b16 %v535, %v535
        %542 = vrot.lane.b32.xlu0 %v536, 127
        %v543 = vpop.permute.xlu0 %542
        %544 = vrot.lane.b32.xlu0 %v537, 127
        %v545 = vpop.permute.xlu0 %544
        %546 = vrot.lane.b32.xlu0 %v538, 127
        %v547 = vpop.permute.xlu0 %546
        %548 = vrot.lane.b32.xlu0 %v539, 127
        %v549 = vpop.permute.xlu0 %548
        %550 = vrot.lane.b32.xlu0 %v540, 127
        %v551 = vpop.permute.xlu0 %550
        %552 = vrot.lane.b32.xlu0 %v541, 127
        %v553 = vpop.permute.xlu0 %552
        %vm554 = vcmask 1039360
        %v555 = vsel %vm554, %v543, %v545
        %v556 = vsel %vm554, %v545, %v547
        %v557 = vsel %vm554, %v547, %v549
        %v558 = vsel %vm554, %v549, %v551
        %v559 = vsel %vm554, %v551, %v553
        %v561 = vsel %vm369, %v523, 0
        %v564 = vsel %vm373, %v555, 0
        %v567 = vsel %vm373, %v556, 0
        %v570 = vsel %vm373, %v557, 0
        %v573 = vsel %vm373, %v558, 0
        %v576 = vsel %vm373, %v559, 0
        %v579 = vsel %vm373, %v553, 0
        %581 = vmatprep.subr.bf16.mxu0 %v567
        %582 = vmatpush1.bf16.msra.mxu0 %v564
        %583 = vmatprep.subr.bf16.mxu0 0
        %584 = vmatpush1.bf16.msra.mxu0 0
        %585 = vmatprep.subr.bf16.mxu0 0
        %586 = vmatpush1.bf16.msra.mxu0 0
        %587 = vmatprep.subr.bf16.mxu0 0
        %588 = vmatpush1.bf16.msra.mxu0 0
        %589 = vmatprep.subr.bf16.mxu0 0
        %590 = vmatpush1.bf16.msra.mxu0 0
        %591 = vmatprep.subr.bf16.mxu0 0
        %592 = vmatpush1.bf16.msra.mxu0 0
        %593 = vmatprep.subr.bf16.mxu0 0
        %594 = vmatpush1.bf16.msra.mxu0 0
        %595 = vmatprep.subr.bf16.mxu0 0
        %596 = vmatpush1.bf16.msra.mxu0 0
        %597 = vmatprep.subr.bf16.mxu0 0
        %598 = vmatpush1.bf16.msra.mxu0 0
        %599 = vmatprep.subr.bf16.mxu0 0
        %600 = vmatpush1.bf16.msra.mxu0 0
        %601 = vmatprep.subr.bf16.mxu0 0
        %602 = vmatpush1.bf16.msra.mxu0 0
        %603 = vmatprep.subr.bf16.mxu0 0
        %604 = vmatpush1.bf16.msra.mxu0 0
        %605 = vmatprep.subr.bf16.mxu0 0
        %606 = vmatpush1.bf16.msra.mxu0 0
        %607 = vmatprep.subr.bf16.mxu0 0
        %608 = vmatpush1.bf16.msra.mxu0 0
        %609 = vmatprep.subr.bf16.mxu0 0
        %610 = vmatpush1.bf16.msra.mxu0 0
        %611 = vmatprep.subr.bf16.mxu0 0
        %612 = vmatpush1.bf16.msra.mxu0 0
        %613 = vmatprep.mubr.bf16.mxu0 0
        %614 = vmatmul.mubr.bf16.gmra.mrb[0].mxu0 %v561
        %v615 = vpop.f32.mrb[0].mxu0
        %v616 = vadd.f32 0.0, %v615
        %v617 = vpop.f32.mrb[0].mxu0
        %v618 = vadd.f32 0.0, %v617
        %v619 = vpop.f32.mrb[0].mxu0
        %v620 = vpop.f32.mrb[0].mxu0
        %621 = vdwg.mxu0
        %622 = vmatprep.subr.bf16.mxu0 %v573
        %623 = vmatpush1.bf16.msra.mxu0 %v570
        %624 = vmatprep.subr.bf16.mxu0 0
        %625 = vmatpush1.bf16.msra.mxu0 0
        %626 = vmatprep.subr.bf16.mxu0 0
        %627 = vmatpush1.bf16.msra.mxu0 0
        %628 = vmatprep.subr.bf16.mxu0 0
        %629 = vmatpush1.bf16.msra.mxu0 0
        %630 = vmatprep.subr.bf16.mxu0 0
        %631 = vmatpush1.bf16.msra.mxu0 0
        %632 = vmatprep.subr.bf16.mxu0 0
        %633 = vmatpush1.bf16.msra.mxu0 0
        %634 = vmatprep.subr.bf16.mxu0 0
        %635 = vmatpush1.bf16.msra.mxu0 0
        %636 = vmatprep.subr.bf16.mxu0 0
        %637 = vmatpush1.bf16.msra.mxu0 0
        %638 = vmatprep.subr.bf16.mxu0 0
        %639 = vmatpush1.bf16.msra.mxu0 0
        %640 = vmatprep.subr.bf16.mxu0 0
        %641 = vmatpush1.bf16.msra.mxu0 0
        %642 = vmatprep.subr.bf16.mxu0 0
        %643 = vmatpush1.bf16.msra.mxu0 0
        %644 = vmatprep.subr.bf16.mxu0 0
        %645 = vmatpush1.bf16.msra.mxu0 0
        %646 = vmatprep.subr.bf16.mxu0 0
        %647 = vmatpush1.bf16.msra.mxu0 0
        %648 = vmatprep.subr.bf16.mxu0 0
        %649 = vmatpush1.bf16.msra.mxu0 0
        %650 = vmatprep.subr.bf16.mxu0 0
        %651 = vmatpush1.bf16.msra.mxu0 0
        %652 = vmatprep.subr.bf16.mxu0 0
        %653 = vmatpush1.bf16.msra.mxu0 0
        %654 = vmatprep.mubr.bf16.mxu0 0
        %655 = vmatmul.mubr.bf16.gmra.mrb[0].mxu0 %v561
        %v656 = vpop.f32.mrb[0].mxu0
        %v657 = vadd.f32 0.0, %v656
        %v658 = vpop.f32.mrb[0].mxu0
        %v659 = vadd.f32 0.0, %v658
        %v660 = vpop.f32.mrb[0].mxu0
        %v661 = vpop.f32.mrb[0].mxu0
        %662 = vdwg.mxu0
        %663 = vmatprep.subr.bf16.mxu0 %v579
        %664 = vmatpush1.bf16.msra.mxu0 %v576
        %665 = vmatprep.subr.bf16.mxu0 0
        %666 = vmatpush1.bf16.msra.mxu0 0
        %667 = vmatprep.subr.bf16.mxu0 0
        %668 = vmatpush1.bf16.msra.mxu0 0
        %669 = vmatprep.subr.bf16.mxu0 0
        %670 = vmatpush1.bf16.msra.mxu0 0
        %671 = vmatprep.subr.bf16.mxu0 0
        %672 = vmatpush1.bf16.msra.mxu0 0
        %673 = vmatprep.subr.bf16.mxu0 0
        %674 = vmatpush1.bf16.msra.mxu0 0
        %675 = vmatprep.subr.bf16.mxu0 0
        %676 = vmatpush1.bf16.msra.mxu0 0
        %677 = vmatprep.subr.bf16.mxu0 0
        %678 = vmatpush1.bf16.msra.mxu0 0
        %679 = vmatprep.subr.bf16.mxu0 0
        %680 = vmatpush1.bf16.msra.mxu0 0
        %681 = vmatprep.subr.bf16.mxu0 0
        %682 = vmatpush1.bf16.msra.mxu0 0
        %683 = vmatprep.subr.bf16.mxu0 0
        %684 = vmatpush1.bf16.msra.mxu0 0
        %685 = vmatprep.subr.bf16.mxu0 0
        %686 = vmatpush1.bf16.msra.mxu0 0
        %687 = vmatprep.subr.bf16.mxu0 0
        %688 = vmatpush1.bf16.msra.mxu0 0
        %689 = vmatprep.subr.bf16.mxu0 0
        %690 = vmatpush1.bf16.msra.mxu0 0
        %691 = vmatprep.subr.bf16.mxu0 0
        %692 = vmatpush1.bf16.msra.mxu0 0
        %693 = vmatprep.subr.bf16.mxu0 0
        %694 = vmatpush1.bf16.msra.mxu0 0
        %695 = vmatprep.mubr.bf16.mxu0 0
        %696 = vmatmul.mubr.bf16.gmra.mrb[0].mxu0 %v561
        %v697 = vpop.f32.mrb[0].mxu0
        %v698 = vadd.f32 0.0, %v697
        %v699 = vpop.f32.mrb[0].mxu0
        %v700 = vadd.f32 0.0, %v699
        %v701 = vpop.f32.mrb[0].mxu0
        %v702 = vpop.f32.mrb[0].mxu0
        %703 = vdwg.mxu0
        %v704 = vld [vmem:[#allocation4] sm:$0xff]
        %v705 = vld [vmem:[#allocation4 + $0x8] sm:$0xff]
        %v706 = vld [vmem:[#allocation4 + $0x10] sm:$0xff]
        %v707 = vld [vmem:[#allocation4 + $0x18] sm:$0xff]
        %v708 = vld [vmem:[#allocation4 + $0x20] sm:$0xff]
        %v709 = vld [vmem:[#allocation4 + $0x28] sm:$0xff]
        %v710 = vadd.f32 %v704, %v616
        %v711 = vadd.f32 %v705, %v618
        %v712 = vadd.f32 %v706, %v657
        %v713 = vadd.f32 %v707, %v659
        %v714 = vadd.f32 %v708, %v698
        %v715 = vadd.f32 %v709, %v700
        %716 = vst [vmem:[#allocation4] sm:$0xff] %v710
        %717 = vst [vmem:[#allocation4 + $0x8] sm:$0xff] %v711
        %718 = vst [vmem:[#allocation4 + $0x10] sm:$0xff] %v712
        %719 = vst [vmem:[#allocation4 + $0x18] sm:$0xff] %v713
        %720 = vst [vmem:[#allocation4 + $0x20] sm:$0xff] %v714
        %721 = vst.msk [vmem:[#allocation4 + $0x28] sm:$0xff] %vm520, %v715
        %s722 = scalar_lea.vmem %s2, 8
        %v723 = vld [vmem:[%s722] sm:$0xf]
        %v724 = vld [vmem:[#allocation2] sm:$0xff]
        %v725 = vld [vmem:[#allocation2 + $0x8] sm:$0xff]
        %v726 = vld [vmem:[#allocation2 + $0x10] sm:$0xff]
        %v730 = vunpack.c.l.b16 %v724
        %v731 = vunpack.c.h.b16 %v724
        %v732 = vunpack.c.l.b16 %v725
        %v733 = vunpack.c.h.b16 %v725
        %v734 = vunpack.c.l.b16 %v726
        %v735 = vunpack.c.h.b16 %v726
        %v736 = vpack.c.b16 %v730, %v730
        %v737 = vpack.c.b16 %v731, %v731
        %v738 = vpack.c.b16 %v732, %v732
        %v739 = vpack.c.b16 %v733, %v733
        %v740 = vpack.c.b16 %v734, %v734
        %v741 = vpack.c.b16 %v735, %v735
        %742 = vrot.lane.b32.xlu0 %v736, 126
        %v743 = vpop.permute.xlu0 %742
        %744 = vrot.lane.b32.xlu0 %v737, 126
        %v745 = vpop.permute.xlu0 %744
        %746 = vrot.lane.b32.xlu0 %v738, 126
        %v747 = vpop.permute.xlu0 %746
        %748 = vrot.lane.b32.xlu0 %v739, 126
        %v749 = vpop.permute.xlu0 %748
        %750 = vrot.lane.b32.xlu0 %v740, 126
        %v751 = vpop.permute.xlu0 %750
        %752 = vrot.lane.b32.xlu0 %v741, 126
        %v753 = vpop.permute.xlu0 %752
        %vm754 = vcmask 1031168
        %v755 = vsel %vm754, %v743, %v745
        %v756 = vsel %vm754, %v745, %v747
        %v757 = vsel %vm754, %v747, %v749
        %v758 = vsel %vm754, %v749, %v751
        %v759 = vsel %vm754, %v751, %v753
        %v761 = vsel %vm369, %v723, 0
        %v764 = vsel %vm373, %v755, 0
        %v767 = vsel %vm373, %v756, 0
        %v770 = vsel %vm373, %v757, 0
        %v773 = vsel %vm373, %v758, 0
        %v776 = vsel %vm373, %v759, 0
        %v779 = vsel %vm373, %v753, 0
        %781 = vmatprep.subr.bf16.mxu0 %v767
        %782 = vmatpush1.bf16.msra.mxu0 %v764
        %783 = vmatprep.subr.bf16.mxu0 0
        %784 = vmatpush1.bf16.msra.mxu0 0
        %785 = vmatprep.subr.bf16.mxu0 0
        %786 = vmatpush1.bf16.msra.mxu0 0
        %787 = vmatprep.subr.bf16.mxu0 0
        %788 = vmatpush1.bf16.msra.mxu0 0
        %789 = vmatprep.subr.bf16.mxu0 0
        %790 = vmatpush1.bf16.msra.mxu0 0
        %791 = vmatprep.subr.bf16.mxu0 0
        %792 = vmatpush1.bf16.msra.mxu0 0
        %793 = vmatprep.subr.bf16.mxu0 0
        %794 = vmatpush1.bf16.msra.mxu0 0
        %795 = vmatprep.subr.bf16.mxu0 0
        %796 = vmatpush1.bf16.msra.mxu0 0
        %797 = vmatprep.subr.bf16.mxu0 0
        %798 = vmatpush1.bf16.msra.mxu0 0
        %799 = vmatprep.subr.bf16.mxu0 0
        %800 = vmatpush1.bf16.msra.mxu0 0
        %801 = vmatprep.subr.bf16.mxu0 0
        %802 = vmatpush1.bf16.msra.mxu0 0
        %803 = vmatprep.subr.bf16.mxu0 0
        %804 = vmatpush1.bf16.msra.mxu0 0
        %805 = vmatprep.subr.bf16.mxu0 0
        %806 = vmatpush1.bf16.msra.mxu0 0
        %807 = vmatprep.subr.bf16.mxu0 0
        %808 = vmatpush1.bf16.msra.mxu0 0
        %809 = vmatprep.subr.bf16.mxu0 0
        %810 = vmatpush1.bf16.msra.mxu0 0
        %811 = vmatprep.subr.bf16.mxu0 0
        %812 = vmatpush1.bf16.msra.mxu0 0
        %813 = vmatprep.mubr.bf16.mxu0 0
        %814 = vmatmul.mubr.bf16.gmra.mrb[0].mxu0 %v761
        %v815 = vpop.f32.mrb[0].mxu0
        %v816 = vadd.f32 0.0, %v815
        %v817 = vpop.f32.mrb[0].mxu0
        %v818 = vadd.f32 0.0, %v817
        %v819 = vpop.f32.mrb[0].mxu0
        %v820 = vpop.f32.mrb[0].mxu0
        %821 = vdwg.mxu0
        %822 = vmatprep.subr.bf16.mxu0 %v773
        %823 = vmatpush1.bf16.msra.mxu0 %v770
        %824 = vmatprep.subr.bf16.mxu0 0
        %825 = vmatpush1.bf16.msra.mxu0 0
        %826 = vmatprep.subr.bf16.mxu0 0
        %827 = vmatpush1.bf16.msra.mxu0 0
        %828 = vmatprep.subr.bf16.mxu0 0
        %829 = vmatpush1.bf16.msra.mxu0 0
        %830 = vmatprep.subr.bf16.mxu0 0
        %831 = vmatpush1.bf16.msra.mxu0 0
        %832 = vmatprep.subr.bf16.mxu0 0
        %833 = vmatpush1.bf16.msra.mxu0 0
        %834 = vmatprep.subr.bf16.mxu0 0
        %835 = vmatpush1.bf16.msra.mxu0 0
        %836 = vmatprep.subr.bf16.mxu0 0
        %837 = vmatpush1.bf16.msra.mxu0 0
        %838 = vmatprep.subr.bf16.mxu0 0
        %839 = vmatpush1.bf16.msra.mxu0 0
        %840 = vmatprep.subr.bf16.mxu0 0
        %841 = vmatpush1.bf16.msra.mxu0 0
        %842 = vmatprep.subr.bf16.mxu0 0
        %843 = vmatpush1.bf16.msra.mxu0 0
        %844 = vmatprep.subr.bf16.mxu0 0
        %845 = vmatpush1.bf16.msra.mxu0 0
        %846 = vmatprep.subr.bf16.mxu0 0
        %847 = vmatpush1.bf16.msra.mxu0 0
        %848 = vmatprep.subr.bf16.mxu0 0
        %849 = vmatpush1.bf16.msra.mxu0 0
        %850 = vmatprep.subr.bf16.mxu0 0
        %851 = vmatpush1.bf16.msra.mxu0 0
        %852 = vmatprep.subr.bf16.mxu0 0
        %853 = vmatpush1.bf16.msra.mxu0 0
        %854 = vmatprep.mubr.bf16.mxu0 0
        %855 = vmatmul.mubr.bf16.gmra.mrb[0].mxu0 %v761
        %v856 = vpop.f32.mrb[0].mxu0
        %v857 = vadd.f32 0.0, %v856
        %v858 = vpop.f32.mrb[0].mxu0
        %v859 = vadd.f32 0.0, %v858
        %v860 = vpop.f32.mrb[0].mxu0
        %v861 = vpop.f32.mrb[0].mxu0
        %862 = vdwg.mxu0
        %863 = vmatprep.subr.bf16.mxu0 %v779
        %864 = vmatpush1.bf16.msra.mxu0 %v776
        %865 = vmatprep.subr.bf16.mxu0 0
        %866 = vmatpush1.bf16.msra.mxu0 0
        %867 = vmatprep.subr.bf16.mxu0 0
        %868 = vmatpush1.bf16.msra.mxu0 0
        %869 = vmatprep.subr.bf16.mxu0 0
        %870 = vmatpush1.bf16.msra.mxu0 0
        %871 = vmatprep.subr.bf16.mxu0 0
        %872 = vmatpush1.bf16.msra.mxu0 0
        %873 = vmatprep.subr.bf16.mxu0 0
        %874 = vmatpush1.bf16.msra.mxu0 0
        %875 = vmatprep.subr.bf16.mxu0 0
        %876 = vmatpush1.bf16.msra.mxu0 0
        %877 = vmatprep.subr.bf16.mxu0 0
        %878 = vmatpush1.bf16.msra.mxu0 0
        %879 = vmatprep.subr.bf16.mxu0 0
        %880 = vmatpush1.bf16.msra.mxu0 0
        %881 = vmatprep.subr.bf16.mxu0 0
        %882 = vmatpush1.bf16.msra.mxu0 0
        %883 = vmatprep.subr.bf16.mxu0 0
        %884 = vmatpush1.bf16.msra.mxu0 0
        %885 = vmatprep.subr.bf16.mxu0 0
        %886 = vmatpush1.bf16.msra.mxu0 0
        %887 = vmatprep.subr.bf16.mxu0 0
        %888 = vmatpush1.bf16.msra.mxu0 0
        %889 = vmatprep.subr.bf16.mxu0 0
        %890 = vmatpush1.bf16.msra.mxu0 0
        %891 = vmatprep.subr.bf16.mxu0 0
        %892 = vmatpush1.bf16.msra.mxu0 0
        %893 = vmatprep.subr.bf16.mxu0 0
        %894 = vmatpush1.bf16.msra.mxu0 0
        %895 = vmatprep.mubr.bf16.mxu0 0
        %896 = vmatmul.mubr.bf16.gmra.mrb[0].mxu0 %v761
        %v897 = vpop.f32.mrb[0].mxu0
        %v898 = vadd.f32 0.0, %v897
        %v899 = vpop.f32.mrb[0].mxu0
        %v900 = vadd.f32 0.0, %v899
        %v901 = vpop.f32.mrb[0].mxu0
        %v902 = vpop.f32.mrb[0].mxu0
        %903 = vdwg.mxu0
        %v904 = vld [vmem:[#allocation4] sm:$0xff]
        %v905 = vld [vmem:[#allocation4 + $0x8] sm:$0xff]
        %v906 = vld [vmem:[#allocation4 + $0x10] sm:$0xff]
        %v907 = vld [vmem:[#allocation4 + $0x18] sm:$0xff]
        %v908 = vld [vmem:[#allocation4 + $0x20] sm:$0xff]
        %v909 = vld [vmem:[#allocation4 + $0x28] sm:$0xff]
        %v910 = vadd.f32 %v904, %v816
        %v911 = vadd.f32 %v905, %v818
        %v912 = vadd.f32 %v906, %v857
        %v913 = vadd.f32 %v907, %v859
        %v914 = vadd.f32 %v908, %v898
        %v915 = vadd.f32 %v909, %v900
        %916 = vst [vmem:[#allocation4] sm:$0xff] %v910
        %917 = vst [vmem:[#allocation4 + $0x8] sm:$0xff] %v911
        %918 = vst [vmem:[#allocation4 + $0x10] sm:$0xff] %v912
        %919 = vst [vmem:[#allocation4 + $0x18] sm:$0xff] %v913
        %920 = vst [vmem:[#allocation4 + $0x20] sm:$0xff] %v914
        %921 = vst.msk [vmem:[#allocation4 + $0x28] sm:$0xff] %vm520, %v915
        %s922 = scalar_lea.vmem %s2, 12
        %v923 = vld [vmem:[%s922] sm:$0xf]
        %v924 = vld [vmem:[#allocation2] sm:$0xff]
        %v925 = vld [vmem:[#allocation2 + $0x8] sm:$0xff]
        %v926 = vld [vmem:[#allocation2 + $0x10] sm:$0xff]
        %v930 = vunpack.c.l.b16 %v924
        %v931 = vunpack.c.h.b16 %v924
        %v932 = vunpack.c.l.b16 %v925
        %v933 = vunpack.c.h.b16 %v925
        %v934 = vunpack.c.l.b16 %v926
        %v935 = vunpack.c.h.b16 %v926
        %v936 = vpack.c.b16 %v930, %v930
        %v937 = vpack.c.b16 %v931, %v931
        %v938 = vpack.c.b16 %v932, %v932
        %v939 = vpack.c.b16 %v933, %v933
        %v940 = vpack.c.b16 %v934, %v934
        %v941 = vpack.c.b16 %v935, %v935
        %942 = vrot.lane.b32.xlu0 %v936, 119
        %v943 = vpop.permute.xlu0 %942
        %944 = vrot.lane.b32.xlu0 %v937, 119
        %v945 = vpop.permute.xlu0 %944
        %946 = vrot.lane.b32.xlu0 %v938, 119
        %v947 = vpop.permute.xlu0 %946
        %948 = vrot.lane.b32.xlu0 %v939, 119
        %v949 = vpop.permute.xlu0 %948
        %950 = vrot.lane.b32.xlu0 %v940, 119
        %v951 = vpop.permute.xlu0 %950
        %952 = vrot.lane.b32.xlu0 %v941, 119
        %v953 = vpop.permute.xlu0 %952
        %vm954 = vcmask 973824
        %v955 = vsel %vm954, %v943, %v945
        %v956 = vsel %vm954, %v945, %v947
        %v957 = vsel %vm954, %v947, %v949
        %v958 = vsel %vm954, %v949, %v951
        %v959 = vsel %vm954, %v951, %v953
        %v961 = vsel %vm369, %v923, 0
        %v964 = vsel %vm373, %v955, 0
        %v967 = vsel %vm373, %v956, 0
        %v970 = vsel %vm373, %v957, 0
        %v973 = vsel %vm373, %v958, 0
        %v976 = vsel %vm373, %v959, 0
        %v979 = vsel %vm373, %v953, 0
        %981 = vmatprep.subr.bf16.mxu0 %v967
        %982 = vmatpush1.bf16.msra.mxu0 %v964
        %983 = vmatprep.subr.bf16.mxu0 0
        %984 = vmatpush1.bf16.msra.mxu0 0
        %985 = vmatprep.subr.bf16.mxu0 0
        %986 = vmatpush1.bf16.msra.mxu0 0
        %987 = vmatprep.subr.bf16.mxu0 0
        %988 = vmatpush1.bf16.msra.mxu0 0
        %989 = vmatprep.subr.bf16.mxu0 0
        %990 = vmatpush1.bf16.msra.mxu0 0
        %991 = vmatprep.subr.bf16.mxu0 0
        %992 = vmatpush1.bf16.msra.mxu0 0
        %993 = vmatprep.subr.bf16.mxu0 0
        %994 = vmatpush1.bf16.msra.mxu0 0
        %995 = vmatprep.subr.bf16.mxu0 0
        %996 = vmatpush1.bf16.msra.mxu0 0
        %997 = vmatprep.subr.bf16.mxu0 0
        %998 = vmatpush1.bf16.msra.mxu0 0
        %999 = vmatprep.subr.bf16.mxu0 0
        %1000 = vmatpush1.bf16.msra.mxu0 0
        %1001 = vmatprep.subr.bf16.mxu0 0
        %1002 = vmatpush1.bf16.msra.mxu0 0
        %1003 = vmatprep.subr.bf16.mxu0 0
        %1004 = vmatpush1.bf16.msra.mxu0 0
        %1005 = vmatprep.subr.bf16.mxu0 0
        %1006 = vmatpush1.bf16.msra.mxu0 0
        %1007 = vmatprep.subr.bf16.mxu0 0
        %1008 = vmatpush1.bf16.msra.mxu0 0
        %1009 = vmatprep.subr.bf16.mxu0 0
        %1010 = vmatpush1.bf16.msra.mxu0 0
        %1011 = vmatprep.subr.bf16.mxu0 0
        %1012 = vmatpush1.bf16.msra.mxu0 0
        %1013 = vmatprep.mubr.bf16.mxu0 0
        %1014 = vmatmul.mubr.bf16.gmra.mrb[0].mxu0 %v961
        %v1015 = vpop.f32.mrb[0].mxu0
        %v1016 = vadd.f32 0.0, %v1015
        %v1017 = vpop.f32.mrb[0].mxu0
        %v1018 = vadd.f32 0.0, %v1017
        %v1019 = vpop.f32.mrb[0].mxu0
        %v1020 = vpop.f32.mrb[0].mxu0
        %1021 = vdwg.mxu0
        %1022 = vmatprep.subr.bf16.mxu0 %v973
        %1023 = vmatpush1.bf16.msra.mxu0 %v970
        %1024 = vmatprep.subr.bf16.mxu0 0
        %1025 = vmatpush1.bf16.msra.mxu0 0
        %1026 = vmatprep.subr.bf16.mxu0 0
        %1027 = vmatpush1.bf16.msra.mxu0 0
        %1028 = vmatprep.subr.bf16.mxu0 0
        %1029 = vmatpush1.bf16.msra.mxu0 0
        %1030 = vmatprep.subr.bf16.mxu0 0
        %1031 = vmatpush1.bf16.msra.mxu0 0
        %1032 = vmatprep.subr.bf16.mxu0 0
        %1033 = vmatpush1.bf16.msra.mxu0 0
        %1034 = vmatprep.subr.bf16.mxu0 0
        %1035 = vmatpush1.bf16.msra.mxu0 0
        %1036 = vmatprep.subr.bf16.mxu0 0
        %1037 = vmatpush1.bf16.msra.mxu0 0
        %1038 = vmatprep.subr.bf16.mxu0 0
        %1039 = vmatpush1.bf16.msra.mxu0 0
        %1040 = vmatprep.subr.bf16.mxu0 0
        %1041 = vmatpush1.bf16.msra.mxu0 0
        %1042 = vmatprep.subr.bf16.mxu0 0
        %1043 = vmatpush1.bf16.msra.mxu0 0
        %1044 = vmatprep.subr.bf16.mxu0 0
        %1045 = vmatpush1.bf16.msra.mxu0 0
        %1046 = vmatprep.subr.bf16.mxu0 0
        %1047 = vmatpush1.bf16.msra.mxu0 0
        %1048 = vmatprep.subr.bf16.mxu0 0
        %1049 = vmatpush1.bf16.msra.mxu0 0
        %1050 = vmatprep.subr.bf16.mxu0 0
        %1051 = vmatpush1.bf16.msra.mxu0 0
        %1052 = vmatprep.subr.bf16.mxu0 0
        %1053 = vmatpush1.bf16.msra.mxu0 0
        %1054 = vmatprep.mubr.bf16.mxu0 0
        %1055 = vmatmul.mubr.bf16.gmra.mrb[0].mxu0 %v961
        %v1056 = vpop.f32.mrb[0].mxu0
        %v1057 = vadd.f32 0.0, %v1056
        %v1058 = vpop.f32.mrb[0].mxu0
        %v1059 = vadd.f32 0.0, %v1058
        %v1060 = vpop.f32.mrb[0].mxu0
        %v1061 = vpop.f32.mrb[0].mxu0
        %1062 = vdwg.mxu0
        %1063 = vmatprep.subr.bf16.mxu0 %v979
        %1064 = vmatpush1.bf16.msra.mxu0 %v976
        %1065 = vmatprep.subr.bf16.mxu0 0
        %1066 = vmatpush1.bf16.msra.mxu0 0
        %1067 = vmatprep.subr.bf16.mxu0 0
        %1068 = vmatpush1.bf16.msra.mxu0 0
        %1069 = vmatprep.subr.bf16.mxu0 0
        %1070 = vmatpush1.bf16.msra.mxu0 0
        %1071 = vmatprep.subr.bf16.mxu0 0
        %1072 = vmatpush1.bf16.msra.mxu0 0
        %1073 = vmatprep.subr.bf16.mxu0 0
        %1074 = vmatpush1.bf16.msra.mxu0 0
        %1075 = vmatprep.subr.bf16.mxu0 0
        %1076 = vmatpush1.bf16.msra.mxu0 0
        %1077 = vmatprep.subr.bf16.mxu0 0
        %1078 = vmatpush1.bf16.msra.mxu0 0
        %1079 = vmatprep.subr.bf16.mxu0 0
        %1080 = vmatpush1.bf16.msra.mxu0 0
        %1081 = vmatprep.subr.bf16.mxu0 0
        %1082 = vmatpush1.bf16.msra.mxu0 0
        %1083 = vmatprep.subr.bf16.mxu0 0
        %1084 = vmatpush1.bf16.msra.mxu0 0
        %1085 = vmatprep.subr.bf16.mxu0 0
        %1086 = vmatpush1.bf16.msra.mxu0 0
        %1087 = vmatprep.subr.bf16.mxu0 0
        %1088 = vmatpush1.bf16.msra.mxu0 0
        %1089 = vmatprep.subr.bf16.mxu0 0
        %1090 = vmatpush1.bf16.msra.mxu0 0
        %1091 = vmatprep.subr.bf16.mxu0 0
        %1092 = vmatpush1.bf16.msra.mxu0 0
        %1093 = vmatprep.subr.bf16.mxu0 0
        %1094 = vmatpush1.bf16.msra.mxu0 0
        %1095 = vmatprep.mubr.bf16.mxu0 0
        %1096 = vmatmul.mubr.bf16.gmra.mrb[0].mxu0 %v961
        %v1097 = vpop.f32.mrb[0].mxu0
        %v1098 = vadd.f32 0.0, %v1097
        %v1099 = vpop.f32.mrb[0].mxu0
        %v1100 = vadd.f32 0.0, %v1099
        %v1101 = vpop.f32.mrb[0].mxu0
        %v1102 = vpop.f32.mrb[0].mxu0
        %1103 = vdwg.mxu0
        %v1104 = vld [vmem:[#allocation4] sm:$0xff]
        %v1105 = vld [vmem:[#allocation4 + $0x8] sm:$0xff]
        %v1106 = vld [vmem:[#allocation4 + $0x10] sm:$0xff]
        %v1107 = vld [vmem:[#allocation4 + $0x18] sm:$0xff]
        %v1108 = vld [vmem:[#allocation4 + $0x20] sm:$0xff]
        %v1109 = vld [vmem:[#allocation4 + $0x28] sm:$0xff]
        %v1110 = vadd.f32 %v1104, %v1016
        %v1111 = vadd.f32 %v1105, %v1018
        %v1112 = vadd.f32 %v1106, %v1057
        %v1113 = vadd.f32 %v1107, %v1059
        %v1114 = vadd.f32 %v1108, %v1098
        %v1115 = vadd.f32 %v1109, %v1100
        %1116 = vst [vmem:[#allocation4] sm:$0xff] %v1110
        %1117 = vst [vmem:[#allocation4 + $0x8] sm:$0xff] %v1111
        %1118 = vst [vmem:[#allocation4 + $0x10] sm:$0xff] %v1112
        %1119 = vst [vmem:[#allocation4 + $0x18] sm:$0xff] %v1113
        %1120 = vst [vmem:[#allocation4 + $0x20] sm:$0xff] %v1114
        %1121 = vst.msk [vmem:[#allocation4 + $0x28] sm:$0xff] %vm520, %v1115
        %s1122 = scalar_lea.vmem %s2, 16
        %v1123 = vld [vmem:[%s1122] sm:$0xf]
        %v1124 = vld [vmem:[#allocation2] sm:$0xff]
        %v1125 = vld [vmem:[#allocation2 + $0x8] sm:$0xff]
        %v1126 = vld [vmem:[#allocation2 + $0x10] sm:$0xff]
        %v1130 = vunpack.c.l.b16 %v1124
        %v1131 = vunpack.c.h.b16 %v1124
        %v1132 = vunpack.c.l.b16 %v1125
        %v1133 = vunpack.c.h.b16 %v1125
        %v1134 = vunpack.c.l.b16 %v1126
        %v1135 = vunpack.c.h.b16 %v1126
        %v1136 = vpack.c.b16 %v1130, %v1130
        %v1137 = vpack.c.b16 %v1131, %v1131
        %v1138 = vpack.c.b16 %v1132, %v1132
        %v1139 = vpack.c.b16 %v1133, %v1133
        %v1140 = vpack.c.b16 %v1134, %v1134
        %v1141 = vpack.c.b16 %v1135, %v1135
        %1142 = vrot.lane.b32.xlu0 %v1136, 118
        %v1143 = vpop.permute.xlu0 %1142
        %1144 = vrot.lane.b32.xlu0 %v1137, 118
        %v1145 = vpop.permute.xlu0 %1144
        %1146 = vrot.lane.b32.xlu0 %v1138, 118
        %v1147 = vpop.permute.xlu0 %1146
        %1148 = vrot.lane.b32.xlu0 %v1139, 118
        %v1149 = vpop.permute.xlu0 %1148
        %1150 = vrot.lane.b32.xlu0 %v1140, 118
        %v1151 = vpop.permute.xlu0 %1150
        %1152 = vrot.lane.b32.xlu0 %v1141, 118
        %v1153 = vpop.permute.xlu0 %1152
        %vm1154 = vcmask 965632
        %v1155 = vsel %vm1154, %v1143, %v1145
        %v1156 = vsel %vm1154, %v1145, %v1147
        %v1157 = vsel %vm1154, %v1147, %v1149
        %v1158 = vsel %vm1154, %v1149, %v1151
        %v1159 = vsel %vm1154, %v1151, %v1153
        %v1161 = vsel %vm369, %v1123, 0
        %v1164 = vsel %vm373, %v1155, 0
        %v1167 = vsel %vm373, %v1156, 0
        %v1170 = vsel %vm373, %v1157, 0
        %v1173 = vsel %vm373, %v1158, 0
        %v1176 = vsel %vm373, %v1159, 0
        %v1179 = vsel %vm373, %v1153, 0
        %1181 = vmatprep.subr.bf16.mxu0 %v1167
        %1182 = vmatpush1.bf16.msra.mxu0 %v1164
        %1183 = vmatprep.subr.bf16.mxu0 0
        %1184 = vmatpush1.bf16.msra.mxu0 0
        %1185 = vmatprep.subr.bf16.mxu0 0
        %1186 = vmatpush1.bf16.msra.mxu0 0
        %1187 = vmatprep.subr.bf16.mxu0 0
        %1188 = vmatpush1.bf16.msra.mxu0 0
        %1189 = vmatprep.subr.bf16.mxu0 0
        %1190 = vmatpush1.bf16.msra.mxu0 0
        %1191 = vmatprep.subr.bf16.mxu0 0
        %1192 = vmatpush1.bf16.msra.mxu0 0
        %1193 = vmatprep.subr.bf16.mxu0 0
        %1194 = vmatpush1.bf16.msra.mxu0 0
        %1195 = vmatprep.subr.bf16.mxu0 0
        %1196 = vmatpush1.bf16.msra.mxu0 0
        %1197 = vmatprep.subr.bf16.mxu0 0
        %1198 = vmatpush1.bf16.msra.mxu0 0
        %1199 = vmatprep.subr.bf16.mxu0 0
        %1200 = vmatpush1.bf16.msra.mxu0 0
        %1201 = vmatprep.subr.bf16.mxu0 0
        %1202 = vmatpush1.bf16.msra.mxu0 0
        %1203 = vmatprep.subr.bf16.mxu0 0
        %1204 = vmatpush1.bf16.msra.mxu0 0
        %1205 = vmatprep.subr.bf16.mxu0 0
        %1206 = vmatpush1.bf16.msra.mxu0 0
        %1207 = vmatprep.subr.bf16.mxu0 0
        %1208 = vmatpush1.bf16.msra.mxu0 0
        %1209 = vmatprep.subr.bf16.mxu0 0
        %1210 = vmatpush1.bf16.msra.mxu0 0
        %1211 = vmatprep.subr.bf16.mxu0 0
        %1212 = vmatpush1.bf16.msra.mxu0 0
        %1213 = vmatprep.mubr.bf16.mxu0 0
        %1214 = vmatmul.mubr.bf16.gmra.mrb[0].mxu0 %v1161
        %v1215 = vpop.f32.mrb[0].mxu0
        %v1216 = vadd.f32 0.0, %v1215
        %v1217 = vpop.f32.mrb[0].mxu0
        %v1218 = vadd.f32 0.0, %v1217
        %v1219 = vpop.f32.mrb[0].mxu0
        %v1220 = vpop.f32.mrb[0].mxu0
        %1221 = vdwg.mxu0
        %1222 = vmatprep.subr.bf16.mxu0 %v1173
        %1223 = vmatpush1.bf16.msra.mxu0 %v1170
        %1224 = vmatprep.subr.bf16.mxu0 0
        %1225 = vmatpush1.bf16.msra.mxu0 0
        %1226 = vmatprep.subr.bf16.mxu0 0
        %1227 = vmatpush1.bf16.msra.mxu0 0
        %1228 = vmatprep.subr.bf16.mxu0 0
        %1229 = vmatpush1.bf16.msra.mxu0 0
        %1230 = vmatprep.subr.bf16.mxu0 0
        %1231 = vmatpush1.bf16.msra.mxu0 0
        %1232 = vmatprep.subr.bf16.mxu0 0
        %1233 = vmatpush1.bf16.msra.mxu0 0
        %1234 = vmatprep.subr.bf16.mxu0 0
        %1235 = vmatpush1.bf16.msra.mxu0 0
        %1236 = vmatprep.subr.bf16.mxu0 0
        %1237 = vmatpush1.bf16.msra.mxu0 0
        %1238 = vmatprep.subr.bf16.mxu0 0
        %1239 = vmatpush1.bf16.msra.mxu0 0
        %1240 = vmatprep.subr.bf16.mxu0 0
        %1241 = vmatpush1.bf16.msra.mxu0 0
        %1242 = vmatprep.subr.bf16.mxu0 0
        %1243 = vmatpush1.bf16.msra.mxu0 0
        %1244 = vmatprep.subr.bf16.mxu0 0
        %1245 = vmatpush1.bf16.msra.mxu0 0
        %1246 = vmatprep.subr.bf16.mxu0 0
        %1247 = vmatpush1.bf16.msra.mxu0 0
        %1248 = vmatprep.subr.bf16.mxu0 0
        %1249 = vmatpush1.bf16.msra.mxu0 0
        %1250 = vmatprep.subr.bf16.mxu0 0
        %1251 = vmatpush1.bf16.msra.mxu0 0
        %1252 = vmatprep.subr.bf16.mxu0 0
        %1253 = vmatpush1.bf16.msra.mxu0 0
        %1254 = vmatprep.mubr.bf16.mxu0 0
        %1255 = vmatmul.mubr.bf16.gmra.mrb[0].mxu0 %v1161
        %v1256 = vpop.f32.mrb[0].mxu0
        %v1257 = vadd.f32 0.0, %v1256
        %v1258 = vpop.f32.mrb[0].mxu0
        %v1259 = vadd.f32 0.0, %v1258
        %v1260 = vpop.f32.mrb[0].mxu0
        %v1261 = vpop.f32.mrb[0].mxu0
        %1262 = vdwg.mxu0
        %1263 = vmatprep.subr.bf16.mxu0 %v1179
        %1264 = vmatpush1.bf16.msra.mxu0 %v1176
        %1265 = vmatprep.subr.bf16.mxu0 0
        %1266 = vmatpush1.bf16.msra.mxu0 0
        %1267 = vmatprep.subr.bf16.mxu0 0
        %1268 = vmatpush1.bf16.msra.mxu0 0
        %1269 = vmatprep.subr.bf16.mxu0 0
        %1270 = vmatpush1.bf16.msra.mxu0 0
        %1271 = vmatprep.subr.bf16.mxu0 0
        %1272 = vmatpush1.bf16.msra.mxu0 0
        %1273 = vmatprep.subr.bf16.mxu0 0
        %1274 = vmatpush1.bf16.msra.mxu0 0
        %1275 = vmatprep.subr.bf16.mxu0 0
        %1276 = vmatpush1.bf16.msra.mxu0 0
        %1277 = vmatprep.subr.bf16.mxu0 0
        %1278 = vmatpush1.bf16.msra.mxu0 0
        %1279 = vmatprep.subr.bf16.mxu0 0
        %1280 = vmatpush1.bf16.msra.mxu0 0
        %1281 = vmatprep.subr.bf16.mxu0 0
        %1282 = vmatpush1.bf16.msra.mxu0 0
        %1283 = vmatprep.subr.bf16.mxu0 0
        %1284 = vmatpush1.bf16.msra.mxu0 0
        %1285 = vmatprep.subr.bf16.mxu0 0
        %1286 = vmatpush1.bf16.msra.mxu0 0
        %1287 = vmatprep.subr.bf16.mxu0 0
        %1288 = vmatpush1.bf16.msra.mxu0 0
        %1289 = vmatprep.subr.bf16.mxu0 0
        %1290 = vmatpush1.bf16.msra.mxu0 0
        %1291 = vmatprep.subr.bf16.mxu0 0
        %1292 = vmatpush1.bf16.msra.mxu0 0
        %1293 = vmatprep.subr.bf16.mxu0 0
        %1294 = vmatpush1.bf16.msra.mxu0 0
        %1295 = vmatprep.mubr.bf16.mxu0 0
        %1296 = vmatmul.mubr.bf16.gmra.mrb[0].mxu0 %v1161
        %v1297 = vpop.f32.mrb[0].mxu0
        %v1298 = vadd.f32 0.0, %v1297
        %v1299 = vpop.f32.mrb[0].mxu0
        %v1300 = vadd.f32 0.0, %v1299
        %v1301 = vpop.f32.mrb[0].mxu0
        %v1302 = vpop.f32.mrb[0].mxu0
        %1303 = vdwg.mxu0
        %v1304 = vld [vmem:[#allocation4] sm:$0xff]
        %v1305 = vld [vmem:[#allocation4 + $0x8] sm:$0xff]
        %v1306 = vld [vmem:[#allocation4 + $0x10] sm:$0xff]
        %v1307 = vld [vmem:[#allocation4 + $0x18] sm:$0xff]
        %v1308 = vld [vmem:[#allocation4 + $0x20] sm:$0xff]
        %v1309 = vld [vmem:[#allocation4 + $0x28] sm:$0xff]
        %v1310 = vadd.f32 %v1304, %v1216
        %v1311 = vadd.f32 %v1305, %v1218
        %v1312 = vadd.f32 %v1306, %v1257
        %v1313 = vadd.f32 %v1307, %v1259
        %v1314 = vadd.f32 %v1308, %v1298
        %v1315 = vadd.f32 %v1309, %v1300
        %1316 = vst [vmem:[#allocation4] sm:$0xff] %v1310
        %1317 = vst [vmem:[#allocation4 + $0x8] sm:$0xff] %v1311
        %1318 = vst [vmem:[#allocation4 + $0x10] sm:$0xff] %v1312
        %1319 = vst [vmem:[#allocation4 + $0x18] sm:$0xff] %v1313
        %1320 = vst [vmem:[#allocation4 + $0x20] sm:$0xff] %v1314
        %1321 = vst.msk [vmem:[#allocation4 + $0x28] sm:$0xff] %vm520, %v1315
        %s1322 = scalar_lea.vmem %s2, 20
        %v1323 = vld [vmem:[%s1322] sm:$0xf]
        %v1324 = vld [vmem:[#allocation2] sm:$0xff]
        %v1325 = vld [vmem:[#allocation2 + $0x8] sm:$0xff]
        %v1326 = vld [vmem:[#allocation2 + $0x10] sm:$0xff]
        %v1330 = vunpack.c.l.b16 %v1324
        %v1331 = vunpack.c.h.b16 %v1324
        %v1332 = vunpack.c.l.b16 %v1325
        %v1333 = vunpack.c.h.b16 %v1325
        %v1334 = vunpack.c.l.b16 %v1326
        %v1335 = vunpack.c.h.b16 %v1326
        %v1336 = vpack.c.b16 %v1330, %v1330
        %v1337 = vpack.c.b16 %v1331, %v1331
        %v1338 = vpack.c.b16 %v1332, %v1332
        %v1339 = vpack.c.b16 %v1333, %v1333
        %v1340 = vpack.c.b16 %v1334, %v1334
        %v1341 = vpack.c.b16 %v1335, %v1335
        %1342 = vrot.lane.b32.xlu0 %v1336, 117
        %v1343 = vpop.permute.xlu0 %1342
        %1344 = vrot.lane.b32.xlu0 %v1337, 117
        %v1345 = vpop.permute.xlu0 %1344
        %1346 = vrot.lane.b32.xlu0 %v1338, 117
        %v1347 = vpop.permute.xlu0 %1346
        %1348 = vrot.lane.b32.xlu0 %v1339, 117
        %v1349 = vpop.permute.xlu0 %1348
        %1350 = vrot.lane.b32.xlu0 %v1340, 117
        %v1351 = vpop.permute.xlu0 %1350
        %1352 = vrot.lane.b32.xlu0 %v1341, 117
        %v1353 = vpop.permute.xlu0 %1352
        %vm1354 = vcmask 957440
        %v1355 = vsel %vm1354, %v1343, %v1345
        %v1356 = vsel %vm1354, %v1345, %v1347
        %v1357 = vsel %vm1354, %v1347, %v1349
        %v1358 = vsel %vm1354, %v1349, %v1351
        %v1359 = vsel %vm1354, %v1351, %v1353
        %v1361 = vsel %vm369, %v1323, 0
        %v1364 = vsel %vm373, %v1355, 0
        %v1367 = vsel %vm373, %v1356, 0
        %v1370 = vsel %vm373, %v1357, 0
        %v1373 = vsel %vm373, %v1358, 0
        %v1376 = vsel %vm373, %v1359, 0
        %v1379 = vsel %vm373, %v1353, 0
        %1381 = vmatprep.subr.bf16.mxu0 %v1367
        %1382 = vmatpush1.bf16.msra.mxu0 %v1364
        %1383 = vmatprep.subr.bf16.mxu0 0
        %1384 = vmatpush1.bf16.msra.mxu0 0
        %1385 = vmatprep.subr.bf16.mxu0 0
        %1386 = vmatpush1.bf16.msra.mxu0 0
        %1387 = vmatprep.subr.bf16.mxu0 0
        %1388 = vmatpush1.bf16.msra.mxu0 0
        %1389 = vmatprep.subr.bf16.mxu0 0
        %1390 = vmatpush1.bf16.msra.mxu0 0
        %1391 = vmatprep.subr.bf16.mxu0 0
        %1392 = vmatpush1.bf16.msra.mxu0 0
        %1393 = vmatprep.subr.bf16.mxu0 0
        %1394 = vmatpush1.bf16.msra.mxu0 0
        %1395 = vmatprep.subr.bf16.mxu0 0
        %1396 = vmatpush1.bf16.msra.mxu0 0
        %1397 = vmatprep.subr.bf16.mxu0 0
        %1398 = vmatpush1.bf16.msra.mxu0 0
        %1399 = vmatprep.subr.bf16.mxu0 0
        %1400 = vmatpush1.bf16.msra.mxu0 0
        %1401 = vmatprep.subr.bf16.mxu0 0
        %1402 = vmatpush1.bf16.msra.mxu0 0
        %1403 = vmatprep.subr.bf16.mxu0 0
        %1404 = vmatpush1.bf16.msra.mxu0 0
        %1405 = vmatprep.subr.bf16.mxu0 0
        %1406 = vmatpush1.bf16.msra.mxu0 0
        %1407 = vmatprep.subr.bf16.mxu0 0
        %1408 = vmatpush1.bf16.msra.mxu0 0
        %1409 = vmatprep.subr.bf16.mxu0 0
        %1410 = vmatpush1.bf16.msra.mxu0 0
        %1411 = vmatprep.subr.bf16.mxu0 0
        %1412 = vmatpush1.bf16.msra.mxu0 0
        %1413 = vmatprep.mubr.bf16.mxu0 0
        %1414 = vmatmul.mubr.bf16.gmra.mrb[0].mxu0 %v1361
        %v1415 = vpop.f32.mrb[0].mxu0
        %v1416 = vadd.f32 0.0, %v1415
        %v1417 = vpop.f32.mrb[0].mxu0
        %v1418 = vadd.f32 0.0, %v1417
        %v1419 = vpop.f32.mrb[0].mxu0
        %v1420 = vpop.f32.mrb[0].mxu0
        %1421 = vdwg.mxu0
        %1422 = vmatprep.subr.bf16.mxu0 %v1373
        %1423 = vmatpush1.bf16.msra.mxu0 %v1370
        %1424 = vmatprep.subr.bf16.mxu0 0
        %1425 = vmatpush1.bf16.msra.mxu0 0
        %1426 = vmatprep.subr.bf16.mxu0 0
        %1427 = vmatpush1.bf16.msra.mxu0 0
        %1428 = vmatprep.subr.bf16.mxu0 0
        %1429 = vmatpush1.bf16.msra.mxu0 0
        %1430 = vmatprep.subr.bf16.mxu0 0
        %1431 = vmatpush1.bf16.msra.mxu0 0
        %1432 = vmatprep.subr.bf16.mxu0 0
        %1433 = vmatpush1.bf16.msra.mxu0 0
        %1434 = vmatprep.subr.bf16.mxu0 0
        %1435 = vmatpush1.bf16.msra.mxu0 0
        %1436 = vmatprep.subr.bf16.mxu0 0
        %1437 = vmatpush1.bf16.msra.mxu0 0
        %1438 = vmatprep.subr.bf16.mxu0 0
        %1439 = vmatpush1.bf16.msra.mxu0 0
        %1440 = vmatprep.subr.bf16.mxu0 0
        %1441 = vmatpush1.bf16.msra.mxu0 0
        %1442 = vmatprep.subr.bf16.mxu0 0
        %1443 = vmatpush1.bf16.msra.mxu0 0
        %1444 = vmatprep.subr.bf16.mxu0 0
        %1445 = vmatpush1.bf16.msra.mxu0 0
        %1446 = vmatprep.subr.bf16.mxu0 0
        %1447 = vmatpush1.bf16.msra.mxu0 0
        %1448 = vmatprep.subr.bf16.mxu0 0
        %1449 = vmatpush1.bf16.msra.mxu0 0
        %1450 = vmatprep.subr.bf16.mxu0 0
        %1451 = vmatpush1.bf16.msra.mxu0 0
        %1452 = vmatprep.subr.bf16.mxu0 0
        %1453 = vmatpush1.bf16.msra.mxu0 0
        %1454 = vmatprep.mubr.bf16.mxu0 0
        %1455 = vmatmul.mubr.bf16.gmra.mrb[0].mxu0 %v1361
        %v1456 = vpop.f32.mrb[0].mxu0
        %v1457 = vadd.f32 0.0, %v1456
        %v1458 = vpop.f32.mrb[0].mxu0
        %v1459 = vadd.f32 0.0, %v1458
        %v1460 = vpop.f32.mrb[0].mxu0
        %v1461 = vpop.f32.mrb[0].mxu0
        %1462 = vdwg.mxu0
        %1463 = vmatprep.subr.bf16.mxu0 %v1379
        %1464 = vmatpush1.bf16.msra.mxu0 %v1376
        %1465 = vmatprep.subr.bf16.mxu0 0
        %1466 = vmatpush1.bf16.msra.mxu0 0
        %1467 = vmatprep.subr.bf16.mxu0 0
        %1468 = vmatpush1.bf16.msra.mxu0 0
        %1469 = vmatprep.subr.bf16.mxu0 0
        %1470 = vmatpush1.bf16.msra.mxu0 0
        %1471 = vmatprep.subr.bf16.mxu0 0
        %1472 = vmatpush1.bf16.msra.mxu0 0
        %1473 = vmatprep.subr.bf16.mxu0 0
        %1474 = vmatpush1.bf16.msra.mxu0 0
        %1475 = vmatprep.subr.bf16.mxu0 0
        %1476 = vmatpush1.bf16.msra.mxu0 0
        %1477 = vmatprep.subr.bf16.mxu0 0
        %1478 = vmatpush1.bf16.msra.mxu0 0
        %1479 = vmatprep.subr.bf16.mxu0 0
        %1480 = vmatpush1.bf16.msra.mxu0 0
        %1481 = vmatprep.subr.bf16.mxu0 0
        %1482 = vmatpush1.bf16.msra.mxu0 0
        %1483 = vmatprep.subr.bf16.mxu0 0
        %1484 = vmatpush1.bf16.msra.mxu0 0
        %1485 = vmatprep.subr.bf16.mxu0 0
        %1486 = vmatpush1.bf16.msra.mxu0 0
        %1487 = vmatprep.subr.bf16.mxu0 0
        %1488 = vmatpush1.bf16.msra.mxu0 0
        %1489 = vmatprep.subr.bf16.mxu0 0
        %1490 = vmatpush1.bf16.msra.mxu0 0
        %1491 = vmatprep.subr.bf16.mxu0 0
        %1492 = vmatpush1.bf16.msra.mxu0 0
        %1493 = vmatprep.subr.bf16.mxu0 0
        %1494 = vmatpush1.bf16.msra.mxu0 0
        %1495 = vmatprep.mubr.bf16.mxu0 0
        %1496 = vmatmul.mubr.bf16.gmra.mrb[0].mxu0 %v1361
        %v1497 = vpop.f32.mrb[0].mxu0
        %v1498 = vadd.f32 0.0, %v1497
        %v1499 = vpop.f32.mrb[0].mxu0
        %v1500 = vadd.f32 0.0, %v1499
        %v1501 = vpop.f32.mrb[0].mxu0
        %v1502 = vpop.f32.mrb[0].mxu0
        %1503 = vdwg.mxu0
        %v1504 = vld [vmem:[#allocation4] sm:$0xff]
        %v1505 = vld [vmem:[#allocation4 + $0x8] sm:$0xff]
        %v1506 = vld [vmem:[#allocation4 + $0x10] sm:$0xff]
        %v1507 = vld [vmem:[#allocation4 + $0x18] sm:$0xff]
        %v1508 = vld [vmem:[#allocation4 + $0x20] sm:$0xff]
        %v1509 = vld [vmem:[#allocation4 + $0x28] sm:$0xff]
        %v1510 = vadd.f32 %v1504, %v1416
        %v1511 = vadd.f32 %v1505, %v1418
        %v1512 = vadd.f32 %v1506, %v1457
        %v1513 = vadd.f32 %v1507, %v1459
        %v1514 = vadd.f32 %v1508, %v1498
        %v1515 = vadd.f32 %v1509, %v1500
        %1516 = vst [vmem:[#allocation4] sm:$0xff] %v1510
        %1517 = vst [vmem:[#allocation4 + $0x8] sm:$0xff] %v1511
        %1518 = vst [vmem:[#allocation4 + $0x10] sm:$0xff] %v1512
        %1519 = vst [vmem:[#allocation4 + $0x18] sm:$0xff] %v1513
        %1520 = vst [vmem:[#allocation4 + $0x20] sm:$0xff] %v1514
        %1521 = vst.msk [vmem:[#allocation4 + $0x28] sm:$0xff] %vm520, %v1515
        %s1522 = scalar_lea.vmem %s2, 24
        %v1523 = vld [vmem:[%s1522] sm:$0xf]
        %v1524 = vld [vmem:[#allocation2] sm:$0xff]
        %v1525 = vld [vmem:[#allocation2 + $0x8] sm:$0xff]
        %v1526 = vld [vmem:[#allocation2 + $0x10] sm:$0xff]
        %v1530 = vunpack.c.l.b16 %v1524
        %v1531 = vunpack.c.h.b16 %v1524
        %v1532 = vunpack.c.l.b16 %v1525
        %v1533 = vunpack.c.h.b16 %v1525
        %v1534 = vunpack.c.l.b16 %v1526
        %v1535 = vunpack.c.h.b16 %v1526
        %v1536 = vpack.c.b16 %v1530, %v1530
        %v1537 = vpack.c.b16 %v1531, %v1531
        %v1538 = vpack.c.b16 %v1532, %v1532
        %v1539 = vpack.c.b16 %v1533, %v1533
        %v1540 = vpack.c.b16 %v1534, %v1534
        %v1541 = vpack.c.b16 %v1535, %v1535
        %1542 = vrot.lane.b32.xlu0 %v1536, 110
        %v1543 = vpop.permute.xlu0 %1542
        %1544 = vrot.lane.b32.xlu0 %v1537, 110
        %v1545 = vpop.permute.xlu0 %1544
        %1546 = vrot.lane.b32.xlu0 %v1538, 110
        %v1547 = vpop.permute.xlu0 %1546
        %1548 = vrot.lane.b32.xlu0 %v1539, 110
        %v1549 = vpop.permute.xlu0 %1548
        %1550 = vrot.lane.b32.xlu0 %v1540, 110
        %v1551 = vpop.permute.xlu0 %1550
        %1552 = vrot.lane.b32.xlu0 %v1541, 110
        %v1553 = vpop.permute.xlu0 %1552
        %vm1554 = vcmask 900096
        %v1555 = vsel %vm1554, %v1543, %v1545
        %v1556 = vsel %vm1554, %v1545, %v1547
        %v1557 = vsel %vm1554, %v1547, %v1549
        %v1558 = vsel %vm1554, %v1549, %v1551
        %v1559 = vsel %vm1554, %v1551, %v1553
        %v1561 = vsel %vm369, %v1523, 0
        %v1564 = vsel %vm373, %v1555, 0
        %v1567 = vsel %vm373, %v1556, 0
        %v1570 = vsel %vm373, %v1557, 0
        %v1573 = vsel %vm373, %v1558, 0
        %v1576 = vsel %vm373, %v1559, 0
        %v1579 = vsel %vm373, %v1553, 0
        %1581 = vmatprep.subr.bf16.mxu0 %v1567
        %1582 = vmatpush1.bf16.msra.mxu0 %v1564
        %1583 = vmatprep.subr.bf16.mxu0 0
        %1584 = vmatpush1.bf16.msra.mxu0 0
        %1585 = vmatprep.subr.bf16.mxu0 0
        %1586 = vmatpush1.bf16.msra.mxu0 0
        %1587 = vmatprep.subr.bf16.mxu0 0
        %1588 = vmatpush1.bf16.msra.mxu0 0
        %1589 = vmatprep.subr.bf16.mxu0 0
        %1590 = vmatpush1.bf16.msra.mxu0 0
        %1591 = vmatprep.subr.bf16.mxu0 0
        %1592 = vmatpush1.bf16.msra.mxu0 0
        %1593 = vmatprep.subr.bf16.mxu0 0
        %1594 = vmatpush1.bf16.msra.mxu0 0
        %1595 = vmatprep.subr.bf16.mxu0 0
        %1596 = vmatpush1.bf16.msra.mxu0 0
        %1597 = vmatprep.subr.bf16.mxu0 0
        %1598 = vmatpush1.bf16.msra.mxu0 0
        %1599 = vmatprep.subr.bf16.mxu0 0
        %1600 = vmatpush1.bf16.msra.mxu0 0
        %1601 = vmatprep.subr.bf16.mxu0 0
        %1602 = vmatpush1.bf16.msra.mxu0 0
        %1603 = vmatprep.subr.bf16.mxu0 0
        %1604 = vmatpush1.bf16.msra.mxu0 0
        %1605 = vmatprep.subr.bf16.mxu0 0
        %1606 = vmatpush1.bf16.msra.mxu0 0
        %1607 = vmatprep.subr.bf16.mxu0 0
        %1608 = vmatpush1.bf16.msra.mxu0 0
        %1609 = vmatprep.subr.bf16.mxu0 0
        %1610 = vmatpush1.bf16.msra.mxu0 0
        %1611 = vmatprep.subr.bf16.mxu0 0
        %1612 = vmatpush1.bf16.msra.mxu0 0
        %1613 = vmatprep.mubr.bf16.mxu0 0
        %1614 = vmatmul.mubr.bf16.gmra.mrb[0].mxu0 %v1561
        %v1615 = vpop.f32.mrb[0].mxu0
        %v1616 = vadd.f32 0.0, %v1615
        %v1617 = vpop.f32.mrb[0].mxu0
        %v1618 = vadd.f32 0.0, %v1617
        %v1619 = vpop.f32.mrb[0].mxu0
        %v1620 = vpop.f32.mrb[0].mxu0
        %1621 = vdwg.mxu0
        %1622 = vmatprep.subr.bf16.mxu0 %v1573
        %1623 = vmatpush1.bf16.msra.mxu0 %v1570
        %1624 = vmatprep.subr.bf16.mxu0 0
        %1625 = vmatpush1.bf16.msra.mxu0 0
        %1626 = vmatprep.subr.bf16.mxu0 0
        %1627 = vmatpush1.bf16.msra.mxu0 0
        %1628 = vmatprep.subr.bf16.mxu0 0
        %1629 = vmatpush1.bf16.msra.mxu0 0
        %1630 = vmatprep.subr.bf16.mxu0 0
        %1631 = vmatpush1.bf16.msra.mxu0 0
        %1632 = vmatprep.subr.bf16.mxu0 0
        %1633 = vmatpush1.bf16.msra.mxu0 0
        %1634 = vmatprep.subr.bf16.mxu0 0
        %1635 = vmatpush1.bf16.msra.mxu0 0
        %1636 = vmatprep.subr.bf16.mxu0 0
        %1637 = vmatpush1.bf16.msra.mxu0 0
        %1638 = vmatprep.subr.bf16.mxu0 0
        %1639 = vmatpush1.bf16.msra.mxu0 0
        %1640 = vmatprep.subr.bf16.mxu0 0
        %1641 = vmatpush1.bf16.msra.mxu0 0
        %1642 = vmatprep.subr.bf16.mxu0 0
        %1643 = vmatpush1.bf16.msra.mxu0 0
        %1644 = vmatprep.subr.bf16.mxu0 0
        %1645 = vmatpush1.bf16.msra.mxu0 0
        %1646 = vmatprep.subr.bf16.mxu0 0
        %1647 = vmatpush1.bf16.msra.mxu0 0
        %1648 = vmatprep.subr.bf16.mxu0 0
        %1649 = vmatpush1.bf16.msra.mxu0 0
        %1650 = vmatprep.subr.bf16.mxu0 0
        %1651 = vmatpush1.bf16.msra.mxu0 0
        %1652 = vmatprep.subr.bf16.mxu0 0
        %1653 = vmatpush1.bf16.msra.mxu0 0
        %1654 = vmatprep.mubr.bf16.mxu0 0
        %1655 = vmatmul.mubr.bf16.gmra.mrb[0].mxu0 %v1561
        %v1656 = vpop.f32.mrb[0].mxu0
        %v1657 = vadd.f32 0.0, %v1656
        %v1658 = vpop.f32.mrb[0].mxu0
        %v1659 = vadd.f32 0.0, %v1658
        %v1660 = vpop.f32.mrb[0].mxu0
        %v1661 = vpop.f32.mrb[0].mxu0
        %1662 = vdwg.mxu0
        %1663 = vmatprep.subr.bf16.mxu0 %v1579
        %1664 = vmatpush1.bf16.msra.mxu0 %v1576
        %1665 = vmatprep.subr.bf16.mxu0 0
        %1666 = vmatpush1.bf16.msra.mxu0 0
        %1667 = vmatprep.subr.bf16.mxu0 0
        %1668 = vmatpush1.bf16.msra.mxu0 0
        %1669 = vmatprep.subr.bf16.mxu0 0
        %1670 = vmatpush1.bf16.msra.mxu0 0
        %1671 = vmatprep.subr.bf16.mxu0 0
        %1672 = vmatpush1.bf16.msra.mxu0 0
        %1673 = vmatprep.subr.bf16.mxu0 0
        %1674 = vmatpush1.bf16.msra.mxu0 0
        %1675 = vmatprep.subr.bf16.mxu0 0
        %1676 = vmatpush1.bf16.msra.mxu0 0
        %1677 = vmatprep.subr.bf16.mxu0 0
        %1678 = vmatpush1.bf16.msra.mxu0 0
        %1679 = vmatprep.subr.bf16.mxu0 0
        %1680 = vmatpush1.bf16.msra.mxu0 0
        %1681 = vmatprep.subr.bf16.mxu0 0
        %1682 = vmatpush1.bf16.msra.mxu0 0
        %1683 = vmatprep.subr.bf16.mxu0 0
        %1684 = vmatpush1.bf16.msra.mxu0 0
        %1685 = vmatprep.subr.bf16.mxu0 0
        %1686 = vmatpush1.bf16.msra.mxu0 0
        %1687 = vmatprep.subr.bf16.mxu0 0
        %1688 = vmatpush1.bf16.msra.mxu0 0
        %1689 = vmatprep.subr.bf16.mxu0 0
        %1690 = vmatpush1.bf16.msra.mxu0 0
        %1691 = vmatprep.subr.bf16.mxu0 0
        %1692 = vmatpush1.bf16.msra.mxu0 0
        %1693 = vmatprep.subr.bf16.mxu0 0
        %1694 = vmatpush1.bf16.msra.mxu0 0
        %1695 = vmatprep.mubr.bf16.mxu0 0
        %1696 = vmatmul.mubr.bf16.gmra.mrb[0].mxu0 %v1561
        %v1697 = vpop.f32.mrb[0].mxu0
        %v1698 = vadd.f32 0.0, %v1697
        %v1699 = vpop.f32.mrb[0].mxu0
        %v1700 = vadd.f32 0.0, %v1699
        %v1701 = vpop.f32.mrb[0].mxu0
        %v1702 = vpop.f32.mrb[0].mxu0
        %1703 = vdwg.mxu0
        %v1704 = vld [vmem:[#allocation4] sm:$0xff]
        %v1705 = vld [vmem:[#allocation4 + $0x8] sm:$0xff]
        %v1706 = vld [vmem:[#allocation4 + $0x10] sm:$0xff]
        %v1707 = vld [vmem:[#allocation4 + $0x18] sm:$0xff]
        %v1708 = vld [vmem:[#allocation4 + $0x20] sm:$0xff]
        %v1709 = vld [vmem:[#allocation4 + $0x28] sm:$0xff]
        %v1710 = vadd.f32 %v1704, %v1616
        %v1711 = vadd.f32 %v1705, %v1618
        %v1712 = vadd.f32 %v1706, %v1657
        %v1713 = vadd.f32 %v1707, %v1659
        %v1714 = vadd.f32 %v1708, %v1698
        %v1715 = vadd.f32 %v1709, %v1700
        %1716 = vst [vmem:[#allocation4] sm:$0xff] %v1710
        %1717 = vst [vmem:[#allocation4 + $0x8] sm:$0xff] %v1711
        %1718 = vst [vmem:[#allocation4 + $0x10] sm:$0xff] %v1712
        %1719 = vst [vmem:[#allocation4 + $0x18] sm:$0xff] %v1713
        %1720 = vst [vmem:[#allocation4 + $0x20] sm:$0xff] %v1714
        %1721 = vst.msk [vmem:[#allocation4 + $0x28] sm:$0xff] %vm520, %v1715
        %s1722 = scalar_lea.vmem %s2, 28
        %v1723 = vld [vmem:[%s1722] sm:$0xf]
        %v1724 = vld [vmem:[#allocation2] sm:$0xff]
        %v1725 = vld [vmem:[#allocation2 + $0x8] sm:$0xff]
        %v1726 = vld [vmem:[#allocation2 + $0x10] sm:$0xff]
        %v1730 = vunpack.c.l.b16 %v1724
        %v1731 = vunpack.c.h.b16 %v1724
        %v1732 = vunpack.c.l.b16 %v1725
        %v1733 = vunpack.c.h.b16 %v1725
        %v1734 = vunpack.c.l.b16 %v1726
        %v1735 = vunpack.c.h.b16 %v1726
        %v1736 = vpack.c.b16 %v1730, %v1730
        %v1737 = vpack.c.b16 %v1731, %v1731
        %v1738 = vpack.c.b16 %v1732, %v1732
        %v1739 = vpack.c.b16 %v1733, %v1733
        %v1740 = vpack.c.b16 %v1734, %v1734
        %v1741 = vpack.c.b16 %v1735, %v1735
        %1742 = vrot.lane.b32.xlu0 %v1736, 109
        %v1743 = vpop.permute.xlu0 %1742
        %1744 = vrot.lane.b32.xlu0 %v1737, 109
        %v1745 = vpop.permute.xlu0 %1744
        %1746 = vrot.lane.b32.xlu0 %v1738, 109
        %v1747 = vpop.permute.xlu0 %1746
        %1748 = vrot.lane.b32.xlu0 %v1739, 109
        %v1749 = vpop.permute.xlu0 %1748
        %1750 = vrot.lane.b32.xlu0 %v1740, 109
        %v1751 = vpop.permute.xlu0 %1750
        %1752 = vrot.lane.b32.xlu0 %v1741, 109
        %v1753 = vpop.permute.xlu0 %1752
        %vm1754 = vcmask 891904
        %v1755 = vsel %vm1754, %v1743, %v1745
        %v1756 = vsel %vm1754, %v1745, %v1747
        %v1757 = vsel %vm1754, %v1747, %v1749
        %v1758 = vsel %vm1754, %v1749, %v1751
        %v1759 = vsel %vm1754, %v1751, %v1753
        %v1761 = vsel %vm369, %v1723, 0
        %v1764 = vsel %vm373, %v1755, 0
        %v1767 = vsel %vm373, %v1756, 0
        %v1770 = vsel %vm373, %v1757, 0
        %v1773 = vsel %vm373, %v1758, 0
        %v1776 = vsel %vm373, %v1759, 0
        %v1779 = vsel %vm373, %v1753, 0
        %1781 = vmatprep.subr.bf16.mxu0 %v1767
        %1782 = vmatpush1.bf16.msra.mxu0 %v1764
        %1783 = vmatprep.subr.bf16.mxu0 0
        %1784 = vmatpush1.bf16.msra.mxu0 0
        %1785 = vmatprep.subr.bf16.mxu0 0
        %1786 = vmatpush1.bf16.msra.mxu0 0
        %1787 = vmatprep.subr.bf16.mxu0 0
        %1788 = vmatpush1.bf16.msra.mxu0 0
        %1789 = vmatprep.subr.bf16.mxu0 0
        %1790 = vmatpush1.bf16.msra.mxu0 0
        %1791 = vmatprep.subr.bf16.mxu0 0
        %1792 = vmatpush1.bf16.msra.mxu0 0
        %1793 = vmatprep.subr.bf16.mxu0 0
        %1794 = vmatpush1.bf16.msra.mxu0 0
        %1795 = vmatprep.subr.bf16.mxu0 0
        %1796 = vmatpush1.bf16.msra.mxu0 0
        %1797 = vmatprep.subr.bf16.mxu0 0
        %1798 = vmatpush1.bf16.msra.mxu0 0
        %1799 = vmatprep.subr.bf16.mxu0 0
        %1800 = vmatpush1.bf16.msra.mxu0 0
        %1801 = vmatprep.subr.bf16.mxu0 0
        %1802 = vmatpush1.bf16.msra.mxu0 0
        %1803 = vmatprep.subr.bf16.mxu0 0
        %1804 = vmatpush1.bf16.msra.mxu0 0
        %1805 = vmatprep.subr.bf16.mxu0 0
        %1806 = vmatpush1.bf16.msra.mxu0 0
        %1807 = vmatprep.subr.bf16.mxu0 0
        %1808 = vmatpush1.bf16.msra.mxu0 0
        %1809 = vmatprep.subr.bf16.mxu0 0
        %1810 = vmatpush1.bf16.msra.mxu0 0
        %1811 = vmatprep.subr.bf16.mxu0 0
        %1812 = vmatpush1.bf16.msra.mxu0 0
        %1813 = vmatprep.mubr.bf16.mxu0 0
        %1814 = vmatmul.mubr.bf16.gmra.mrb[0].mxu0 %v1761
        %v1815 = vpop.f32.mrb[0].mxu0
        %v1816 = vadd.f32 0.0, %v1815
        %v1817 = vpop.f32.mrb[0].mxu0
        %v1818 = vadd.f32 0.0, %v1817
        %v1819 = vpop.f32.mrb[0].mxu0
        %v1820 = vpop.f32.mrb[0].mxu0
        %1821 = vdwg.mxu0
        %1822 = vmatprep.subr.bf16.mxu0 %v1773
        %1823 = vmatpush1.bf16.msra.mxu0 %v1770
        %1824 = vmatprep.subr.bf16.mxu0 0
        %1825 = vmatpush1.bf16.msra.mxu0 0
        %1826 = vmatprep.subr.bf16.mxu0 0
        %1827 = vmatpush1.bf16.msra.mxu0 0
        %1828 = vmatprep.subr.bf16.mxu0 0
        %1829 = vmatpush1.bf16.msra.mxu0 0
        %1830 = vmatprep.subr.bf16.mxu0 0
        %1831 = vmatpush1.bf16.msra.mxu0 0
        %1832 = vmatprep.subr.bf16.mxu0 0
        %1833 = vmatpush1.bf16.msra.mxu0 0
        %1834 = vmatprep.subr.bf16.mxu0 0
        %1835 = vmatpush1.bf16.msra.mxu0 0
        %1836 = vmatprep.subr.bf16.mxu0 0
        %1837 = vmatpush1.bf16.msra.mxu0 0
        %1838 = vmatprep.subr.bf16.mxu0 0
        %1839 = vmatpush1.bf16.msra.mxu0 0
        %1840 = vmatprep.subr.bf16.mxu0 0
        %1841 = vmatpush1.bf16.msra.mxu0 0
        %1842 = vmatprep.subr.bf16.mxu0 0
        %1843 = vmatpush1.bf16.msra.mxu0 0
        %1844 = vmatprep.subr.bf16.mxu0 0
        %1845 = vmatpush1.bf16.msra.mxu0 0
        %1846 = vmatprep.subr.bf16.mxu0 0
        %1847 = vmatpush1.bf16.msra.mxu0 0
        %1848 = vmatprep.subr.bf16.mxu0 0
        %1849 = vmatpush1.bf16.msra.mxu0 0
        %1850 = vmatprep.subr.bf16.mxu0 0
        %1851 = vmatpush1.bf16.msra.mxu0 0
        %1852 = vmatprep.subr.bf16.mxu0 0
        %1853 = vmatpush1.bf16.msra.mxu0 0
        %1854 = vmatprep.mubr.bf16.mxu0 0
        %1855 = vmatmul.mubr.bf16.gmra.mrb[0].mxu0 %v1761
        %v1856 = vpop.f32.mrb[0].mxu0
        %v1857 = vadd.f32 0.0, %v1856
        %v1858 = vpop.f32.mrb[0].mxu0
        %v1859 = vadd.f32 0.0, %v1858
        %v1860 = vpop.f32.mrb[0].mxu0
        %v1861 = vpop.f32.mrb[0].mxu0
        %1862 = vdwg.mxu0
        %1863 = vmatprep.subr.bf16.mxu0 %v1779
        %1864 = vmatpush1.bf16.msra.mxu0 %v1776
        %1865 = vmatprep.subr.bf16.mxu0 0
        %1866 = vmatpush1.bf16.msra.mxu0 0
        %1867 = vmatprep.subr.bf16.mxu0 0
        %1868 = vmatpush1.bf16.msra.mxu0 0
        %1869 = vmatprep.subr.bf16.mxu0 0
        %1870 = vmatpush1.bf16.msra.mxu0 0
        %1871 = vmatprep.subr.bf16.mxu0 0
        %1872 = vmatpush1.bf16.msra.mxu0 0
        %1873 = vmatprep.subr.bf16.mxu0 0
        %1874 = vmatpush1.bf16.msra.mxu0 0
        %1875 = vmatprep.subr.bf16.mxu0 0
        %1876 = vmatpush1.bf16.msra.mxu0 0
        %1877 = vmatprep.subr.bf16.mxu0 0
        %1878 = vmatpush1.bf16.msra.mxu0 0
        %1879 = vmatprep.subr.bf16.mxu0 0
        %1880 = vmatpush1.bf16.msra.mxu0 0
        %1881 = vmatprep.subr.bf16.mxu0 0
        %1882 = vmatpush1.bf16.msra.mxu0 0
        %1883 = vmatprep.subr.bf16.mxu0 0
        %1884 = vmatpush1.bf16.msra.mxu0 0
        %1885 = vmatprep.subr.bf16.mxu0 0
        %1886 = vmatpush1.bf16.msra.mxu0 0
        %1887 = vmatprep.subr.bf16.mxu0 0
        %1888 = vmatpush1.bf16.msra.mxu0 0
        %1889 = vmatprep.subr.bf16.mxu0 0
        %1890 = vmatpush1.bf16.msra.mxu0 0
        %1891 = vmatprep.subr.bf16.mxu0 0
        %1892 = vmatpush1.bf16.msra.mxu0 0
        %1893 = vmatprep.subr.bf16.mxu0 0
        %1894 = vmatpush1.bf16.msra.mxu0 0
        %1895 = vmatprep.mubr.bf16.mxu0 0
        %1896 = vmatmul.mubr.bf16.gmra.mrb[0].mxu0 %v1761
        %v1897 = vpop.f32.mrb[0].mxu0
        %v1898 = vadd.f32 0.0, %v1897
        %v1899 = vpop.f32.mrb[0].mxu0
        %v1900 = vadd.f32 0.0, %v1899
        %v1901 = vpop.f32.mrb[0].mxu0
        %v1902 = vpop.f32.mrb[0].mxu0
        %1903 = vdwg.mxu0
        %v1904 = vld [vmem:[#allocation4] sm:$0xff]
        %v1905 = vld [vmem:[#allocation4 + $0x8] sm:$0xff]
        %v1906 = vld [vmem:[#allocation4 + $0x10] sm:$0xff]
        %v1907 = vld [vmem:[#allocation4 + $0x18] sm:$0xff]
        %v1908 = vld [vmem:[#allocation4 + $0x20] sm:$0xff]
        %v1909 = vld [vmem:[#allocation4 + $0x28] sm:$0xff]
        %v1910 = vadd.f32 %v1904, %v1816
        %v1911 = vadd.f32 %v1905, %v1818
        %v1912 = vadd.f32 %v1906, %v1857
        %v1913 = vadd.f32 %v1907, %v1859
        %v1914 = vadd.f32 %v1908, %v1898
        %v1915 = vadd.f32 %v1909, %v1900
        %1916 = vst [vmem:[#allocation4] sm:$0xff] %v1910
        %1917 = vst [vmem:[#allocation4 + $0x8] sm:$0xff] %v1911
        %1918 = vst [vmem:[#allocation4 + $0x10] sm:$0xff] %v1912
        %1919 = vst [vmem:[#allocation4 + $0x18] sm:$0xff] %v1913
        %1920 = vst [vmem:[#allocation4 + $0x20] sm:$0xff] %v1914
        %1921 = vst.msk [vmem:[#allocation4 + $0x28] sm:$0xff] %vm520, %v1915
        %s1922 = scalar_lea.vmem %s2, 32
        %v1923 = vld [vmem:[%s1922] sm:$0xf]
        %v1924 = vld [vmem:[#allocation2] sm:$0xff]
        %v1925 = vld [vmem:[#allocation2 + $0x8] sm:$0xff]
        %v1926 = vld [vmem:[#allocation2 + $0x10] sm:$0xff]
        %v1930 = vunpack.c.l.b16 %v1924
        %v1931 = vunpack.c.h.b16 %v1924
        %v1932 = vunpack.c.l.b16 %v1925
        %v1933 = vunpack.c.h.b16 %v1925
        %v1934 = vunpack.c.l.b16 %v1926
        %v1935 = vunpack.c.h.b16 %v1926
        %v1936 = vpack.c.b16 %v1930, %v1930
        %v1937 = vpack.c.b16 %v1931, %v1931
        %v1938 = vpack.c.b16 %v1932, %v1932
        %v1939 = vpack.c.b16 %v1933, %v1933
        %v1940 = vpack.c.b16 %v1934, %v1934
        %v1941 = vpack.c.b16 %v1935, %v1935
        %1942 = vrot.lane.b32.xlu0 %v1936, 108
        %v1943 = vpop.permute.xlu0 %1942
        %1944 = vrot.lane.b32.xlu0 %v1937, 108
        %v1945 = vpop.permute.xlu0 %1944
        %1946 = vrot.lane.b32.xlu0 %v1938, 108
        %v1947 = vpop.permute.xlu0 %1946
        %1948 = vrot.lane.b32.xlu0 %v1939, 108
        %v1949 = vpop.permute.xlu0 %1948
        %1950 = vrot.lane.b32.xlu0 %v1940, 108
        %v1951 = vpop.permute.xlu0 %1950
        %1952 = vrot.lane.b32.xlu0 %v1941, 108
        %v1953 = vpop.permute.xlu0 %1952
        %vm1954 = vcmask 883712
        %v1955 = vsel %vm1954, %v1943, %v1945
        %v1956 = vsel %vm1954, %v1945, %v1947
        %v1957 = vsel %vm1954, %v1947, %v1949
        %v1958 = vsel %vm1954, %v1949, %v1951
        %v1959 = vsel %vm1954, %v1951, %v1953
        %v1961 = vsel %vm369, %v1923, 0
        %v1964 = vsel %vm373, %v1955, 0
        %v1967 = vsel %vm373, %v1956, 0
        %v1970 = vsel %vm373, %v1957, 0
        %v1973 = vsel %vm373, %v1958, 0
        %v1976 = vsel %vm373, %v1959, 0
        %v1979 = vsel %vm373, %v1953, 0
        %1981 = vmatprep.subr.bf16.mxu0 %v1967
        %1982 = vmatpush1.bf16.msra.mxu0 %v1964
        %1983 = vmatprep.subr.bf16.mxu0 0
        %1984 = vmatpush1.bf16.msra.mxu0 0
        %1985 = vmatprep.subr.bf16.mxu0 0
        %1986 = vmatpush1.bf16.msra.mxu0 0
        %1987 = vmatprep.subr.bf16.mxu0 0
        %1988 = vmatpush1.bf16.msra.mxu0 0
        %1989 = vmatprep.subr.bf16.mxu0 0
        %1990 = vmatpush1.bf16.msra.mxu0 0
        %1991 = vmatprep.subr.bf16.mxu0 0
        %1992 = vmatpush1.bf16.msra.mxu0 0
        %1993 = vmatprep.subr.bf16.mxu0 0
        %1994 = vmatpush1.bf16.msra.mxu0 0
        %1995 = vmatprep.subr.bf16.mxu0 0
        %1996 = vmatpush1.bf16.msra.mxu0 0
        %1997 = vmatprep.subr.bf16.mxu0 0
        %1998 = vmatpush1.bf16.msra.mxu0 0
        %1999 = vmatprep.subr.bf16.mxu0 0
        %2000 = vmatpush1.bf16.msra.mxu0 0
        %2001 = vmatprep.subr.bf16.mxu0 0
        %2002 = vmatpush1.bf16.msra.mxu0 0
        %2003 = vmatprep.subr.bf16.mxu0 0
        %2004 = vmatpush1.bf16.msra.mxu0 0
        %2005 = vmatprep.subr.bf16.mxu0 0
        %2006 = vmatpush1.bf16.msra.mxu0 0
        %2007 = vmatprep.subr.bf16.mxu0 0
        %2008 = vmatpush1.bf16.msra.mxu0 0
        %2009 = vmatprep.subr.bf16.mxu0 0
        %2010 = vmatpush1.bf16.msra.mxu0 0
        %2011 = vmatprep.subr.bf16.mxu0 0
        %2012 = vmatpush1.bf16.msra.mxu0 0
        %2013 = vmatprep.mubr.bf16.mxu0 0
        %2014 = vmatmul.mubr.bf16.gmra.mrb[0].mxu0 %v1961
        %v2015 = vpop.f32.mrb[0].mxu0
        %v2016 = vadd.f32 0.0, %v2015
        %v2017 = vpop.f32.mrb[0].mxu0
        %v2018 = vadd.f32 0.0, %v2017
        %v2019 = vpop.f32.mrb[0].mxu0
        %v2020 = vpop.f32.mrb[0].mxu0
        %2021 = vdwg.mxu0
        %2022 = vmatprep.subr.bf16.mxu0 %v1973
        %2023 = vmatpush1.bf16.msra.mxu0 %v1970
        %2024 = vmatprep.subr.bf16.mxu0 0
        %2025 = vmatpush1.bf16.msra.mxu0 0
        %2026 = vmatprep.subr.bf16.mxu0 0
        %2027 = vmatpush1.bf16.msra.mxu0 0
        %2028 = vmatprep.subr.bf16.mxu0 0
        %2029 = vmatpush1.bf16.msra.mxu0 0
        %2030 = vmatprep.subr.bf16.mxu0 0
        %2031 = vmatpush1.bf16.msra.mxu0 0
        %2032 = vmatprep.subr.bf16.mxu0 0
        %2033 = vmatpush1.bf16.msra.mxu0 0
        %2034 = vmatprep.subr.bf16.mxu0 0
        %2035 = vmatpush1.bf16.msra.mxu0 0
        %2036 = vmatprep.subr.bf16.mxu0 0
        %2037 = vmatpush1.bf16.msra.mxu0 0
        %2038 = vmatprep.subr.bf16.mxu0 0
        %2039 = vmatpush1.bf16.msra.mxu0 0
        %2040 = vmatprep.subr.bf16.mxu0 0
        %2041 = vmatpush1.bf16.msra.mxu0 0
        %2042 = vmatprep.subr.bf16.mxu0 0
        %2043 = vmatpush1.bf16.msra.mxu0 0
        %2044 = vmatprep.subr.bf16.mxu0 0
        %2045 = vmatpush1.bf16.msra.mxu0 0
        %2046 = vmatprep.subr.bf16.mxu0 0
        %2047 = vmatpush1.bf16.msra.mxu0 0
        %2048 = vmatprep.subr.bf16.mxu0 0
        %2049 = vmatpush1.bf16.msra.mxu0 0
        %2050 = vmatprep.subr.bf16.mxu0 0
        %2051 = vmatpush1.bf16.msra.mxu0 0
        %2052 = vmatprep.subr.bf16.mxu0 0
        %2053 = vmatpush1.bf16.msra.mxu0 0
        %2054 = vmatprep.mubr.bf16.mxu0 0
        %2055 = vmatmul.mubr.bf16.gmra.mrb[0].mxu0 %v1961
        %v2056 = vpop.f32.mrb[0].mxu0
        %v2057 = vadd.f32 0.0, %v2056
        %v2058 = vpop.f32.mrb[0].mxu0
        %v2059 = vadd.f32 0.0, %v2058
        %v2060 = vpop.f32.mrb[0].mxu0
        %v2061 = vpop.f32.mrb[0].mxu0
        %2062 = vdwg.mxu0
        %2063 = vmatprep.subr.bf16.mxu0 %v1979
        %2064 = vmatpush1.bf16.msra.mxu0 %v1976
        %2065 = vmatprep.subr.bf16.mxu0 0
        %2066 = vmatpush1.bf16.msra.mxu0 0
        %2067 = vmatprep.subr.bf16.mxu0 0
        %2068 = vmatpush1.bf16.msra.mxu0 0
        %2069 = vmatprep.subr.bf16.mxu0 0
        %2070 = vmatpush1.bf16.msra.mxu0 0
        %2071 = vmatprep.subr.bf16.mxu0 0
        %2072 = vmatpush1.bf16.msra.mxu0 0
        %2073 = vmatprep.subr.bf16.mxu0 0
        %2074 = vmatpush1.bf16.msra.mxu0 0
        %2075 = vmatprep.subr.bf16.mxu0 0
        %2076 = vmatpush1.bf16.msra.mxu0 0
        %2077 = vmatprep.subr.bf16.mxu0 0
        %2078 = vmatpush1.bf16.msra.mxu0 0
        %2079 = vmatprep.subr.bf16.mxu0 0
        %2080 = vmatpush1.bf16.msra.mxu0 0
        %2081 = vmatprep.subr.bf16.mxu0 0
        %2082 = vmatpush1.bf16.msra.mxu0 0
        %2083 = vmatprep.subr.bf16.mxu0 0
        %2084 = vmatpush1.bf16.msra.mxu0 0
        %2085 = vmatprep.subr.bf16.mxu0 0
        %2086 = vmatpush1.bf16.msra.mxu0 0
        %2087 = vmatprep.subr.bf16.mxu0 0
        %2088 = vmatpush1.bf16.msra.mxu0 0
        %2089 = vmatprep.subr.bf16.mxu0 0
        %2090 = vmatpush1.bf16.msra.mxu0 0
        %2091 = vmatprep.subr.bf16.mxu0 0
        %2092 = vmatpush1.bf16.msra.mxu0 0
        %2093 = vmatprep.subr.bf16.mxu0 0
        %2094 = vmatpush1.bf16.msra.mxu0 0
        %2095 = vmatprep.mubr.bf16.mxu0 0
        %2096 = vmatmul.mubr.bf16.gmra.mrb[0].mxu0 %v1961
        %v2097 = vpop.f32.mrb[0].mxu0
        %v2098 = vadd.f32 0.0, %v2097
        %v2099 = vpop.f32.mrb[0].mxu0
        %v2100 = vadd.f32 0.0, %v2099
        %v2101 = vpop.f32.mrb[0].mxu0
        %v2102 = vpop.f32.mrb[0].mxu0
        %2103 = vdwg.mxu0
        %v2104 = vld [vmem:[#allocation4] sm:$0xff]
        %v2105 = vld [vmem:[#allocation4 + $0x8] sm:$0xff]
        %v2106 = vld [vmem:[#allocation4 + $0x10] sm:$0xff]
        %v2107 = vld [vmem:[#allocation4 + $0x18] sm:$0xff]
        %v2108 = vld [vmem:[#allocation4 + $0x20] sm:$0xff]
        %v2109 = vld [vmem:[#allocation4 + $0x28] sm:$0xff]
        %v2110 = vadd.f32 %v2104, %v2016
        %v2111 = vadd.f32 %v2105, %v2018
        %v2112 = vadd.f32 %v2106, %v2057
        %v2113 = vadd.f32 %v2107, %v2059
        %v2114 = vadd.f32 %v2108, %v2098
        %v2115 = vadd.f32 %v2109, %v2100
        %2116 = vst [vmem:[#allocation4] sm:$0xff] %v2110
        %2117 = vst [vmem:[#allocation4 + $0x8] sm:$0xff] %v2111
        %2118 = vst [vmem:[#allocation4 + $0x10] sm:$0xff] %v2112
        %2119 = vst [vmem:[#allocation4 + $0x18] sm:$0xff] %v2113
        %2120 = vst [vmem:[#allocation4 + $0x20] sm:$0xff] %v2114
        %2121 = vst.msk [vmem:[#allocation4 + $0x28] sm:$0xff] %vm520, %v2115
        %s2122 = scalar_lea.vmem %s2, 36
        %v2123 = vld [vmem:[%s2122] sm:$0xf]
        %v2124 = vld [vmem:[#allocation2 + $0x4] sm:$0xff]
        %v2125 = vld [vmem:[#allocation2 + $0xc] sm:$0xff]
        %v2126 = vld [vmem:[#allocation2 + $0x14] sm:$0xff]
        %v2130 = vunpack.c.l.b16 %v2124
        %v2131 = vunpack.c.h.b16 %v2124
        %v2132 = vunpack.c.l.b16 %v2125
        %v2133 = vunpack.c.h.b16 %v2125
        %v2134 = vunpack.c.l.b16 %v2126
        %v2135 = vunpack.c.h.b16 %v2126
        %v2136 = vpack.c.b16 %v2130, %v2130
        %v2137 = vpack.c.b16 %v2131, %v2131
        %v2138 = vpack.c.b16 %v2132, %v2132
        %v2139 = vpack.c.b16 %v2133, %v2133
        %v2140 = vpack.c.b16 %v2134, %v2134
        %v2141 = vpack.c.b16 %v2135, %v2135
        %v2143 = vsel %vm369, %v2123, 0
        %v2146 = vsel %vm373, %v2136, 0
        %v2149 = vsel %vm373, %v2137, 0
        %v2152 = vsel %vm373, %v2138, 0
        %v2155 = vsel %vm373, %v2139, 0
        %v2158 = vsel %vm373, %v2140, 0
        %v2161 = vsel %vm373, %v2141, 0
        %2163 = vmatprep.subr.bf16.mxu0 %v2149
        %2164 = vmatpush1.bf16.msra.mxu0 %v2146
        %2165 = vmatprep.subr.bf16.mxu0 0
        %2166 = vmatpush1.bf16.msra.mxu0 0
        %2167 = vmatprep.subr.bf16.mxu0 0
        %2168 = vmatpush1.bf16.msra.mxu0 0
        %2169 = vmatprep.subr.bf16.mxu0 0
        %2170 = vmatpush1.bf16.msra.mxu0 0
        %2171 = vmatprep.subr.bf16.mxu0 0
        %2172 = vmatpush1.bf16.msra.mxu0 0
        %2173 = vmatprep.subr.bf16.mxu0 0
        %2174 = vmatpush1.bf16.msra.mxu0 0
        %2175 = vmatprep.subr.bf16.mxu0 0
        %2176 = vmatpush1.bf16.msra.mxu0 0
        %2177 = vmatprep.subr.bf16.mxu0 0
        %2178 = vmatpush1.bf16.msra.mxu0 0
        %2179 = vmatprep.subr.bf16.mxu0 0
        %2180 = vmatpush1.bf16.msra.mxu0 0
        %2181 = vmatprep.subr.bf16.mxu0 0
        %2182 = vmatpush1.bf16.msra.mxu0 0
        %2183 = vmatprep.subr.bf16.mxu0 0
        %2184 = vmatpush1.bf16.msra.mxu0 0
        %2185 = vmatprep.subr.bf16.mxu0 0
        %2186 = vmatpush1.bf16.msra.mxu0 0
        %2187 = vmatprep.subr.bf16.mxu0 0
        %2188 = vmatpush1.bf16.msra.mxu0 0
        %2189 = vmatprep.subr.bf16.mxu0 0
        %2190 = vmatpush1.bf16.msra.mxu0 0
        %2191 = vmatprep.subr.bf16.mxu0 0
        %2192 = vmatpush1.bf16.msra.mxu0 0
        %2193 = vmatprep.subr.bf16.mxu0 0
        %2194 = vmatpush1.bf16.msra.mxu0 0
        %2195 = vmatprep.mubr.bf16.mxu0 0
        %2196 = vmatmul.mubr.bf16.gmra.mrb[0].mxu0 %v2143
        %v2197 = vpop.f32.mrb[0].mxu0
        %v2198 = vadd.f32 0.0, %v2197
        %v2199 = vpop.f32.mrb[0].mxu0
        %v2200 = vadd.f32 0.0, %v2199
        %v2201 = vpop.f32.mrb[0].mxu0
        %v2202 = vpop.f32.mrb[0].mxu0
        %2203 = vdwg.mxu0
        %2204 = vmatprep.subr.bf16.mxu0 %v2155
        %2205 = vmatpush1.bf16.msra.mxu0 %v2152
        %2206 = vmatprep.subr.bf16.mxu0 0
        %2207 = vmatpush1.bf16.msra.mxu0 0
        %2208 = vmatprep.subr.bf16.mxu0 0
        %2209 = vmatpush1.bf16.msra.mxu0 0
        %2210 = vmatprep.subr.bf16.mxu0 0
        %2211 = vmatpush1.bf16.msra.mxu0 0
        %2212 = vmatprep.subr.bf16.mxu0 0
        %2213 = vmatpush1.bf16.msra.mxu0 0
        %2214 = vmatprep.subr.bf16.mxu0 0
        %2215 = vmatpush1.bf16.msra.mxu0 0
        %2216 = vmatprep.subr.bf16.mxu0 0
        %2217 = vmatpush1.bf16.msra.mxu0 0
        %2218 = vmatprep.subr.bf16.mxu0 0
        %2219 = vmatpush1.bf16.msra.mxu0 0
        %2220 = vmatprep.subr.bf16.mxu0 0
        %2221 = vmatpush1.bf16.msra.mxu0 0
        %2222 = vmatprep.subr.bf16.mxu0 0
        %2223 = vmatpush1.bf16.msra.mxu0 0
        %2224 = vmatprep.subr.bf16.mxu0 0
        %2225 = vmatpush1.bf16.msra.mxu0 0
        %2226 = vmatprep.subr.bf16.mxu0 0
        %2227 = vmatpush1.bf16.msra.mxu0 0
        %2228 = vmatprep.subr.bf16.mxu0 0
        %2229 = vmatpush1.bf16.msra.mxu0 0
        %2230 = vmatprep.subr.bf16.mxu0 0
        %2231 = vmatpush1.bf16.msra.mxu0 0
        %2232 = vmatprep.subr.bf16.mxu0 0
        %2233 = vmatpush1.bf16.msra.mxu0 0
        %2234 = vmatprep.subr.bf16.mxu0 0
        %2235 = vmatpush1.bf16.msra.mxu0 0
        %2236 = vmatprep.mubr.bf16.mxu0 0
        %2237 = vmatmul.mubr.bf16.gmra.mrb[0].mxu0 %v2143
        %v2238 = vpop.f32.mrb[0].mxu0
        %v2239 = vadd.f32 0.0, %v2238
        %v2240 = vpop.f32.mrb[0].mxu0
        %v2241 = vadd.f32 0.0, %v2240
        %v2242 = vpop.f32.mrb[0].mxu0
        %v2243 = vpop.f32.mrb[0].mxu0
        %2244 = vdwg.mxu0
        %2245 = vmatprep.subr.bf16.mxu0 %v2161
        %2246 = vmatpush1.bf16.msra.mxu0 %v2158
        %2247 = vmatprep.subr.bf16.mxu0 0
        %2248 = vmatpush1.bf16.msra.mxu0 0
        %2249 = vmatprep.subr.bf16.mxu0 0
        %2250 = vmatpush1.bf16.msra.mxu0 0
        %2251 = vmatprep.subr.bf16.mxu0 0
        %2252 = vmatpush1.bf16.msra.mxu0 0
        %2253 = vmatprep.subr.bf16.mxu0 0
        %2254 = vmatpush1.bf16.msra.mxu0 0
        %2255 = vmatprep.subr.bf16.mxu0 0
        %2256 = vmatpush1.bf16.msra.mxu0 0
        %2257 = vmatprep.subr.bf16.mxu0 0
        %2258 = vmatpush1.bf16.msra.mxu0 0
        %2259 = vmatprep.subr.bf16.mxu0 0
        %2260 = vmatpush1.bf16.msra.mxu0 0
        %2261 = vmatprep.subr.bf16.mxu0 0
        %2262 = vmatpush1.bf16.msra.mxu0 0
        %2263 = vmatprep.subr.bf16.mxu0 0
        %2264 = vmatpush1.bf16.msra.mxu0 0
        %2265 = vmatprep.subr.bf16.mxu0 0
        %2266 = vmatpush1.bf16.msra.mxu0 0
        %2267 = vmatprep.subr.bf16.mxu0 0
        %2268 = vmatpush1.bf16.msra.mxu0 0
        %2269 = vmatprep.subr.bf16.mxu0 0
        %2270 = vmatpush1.bf16.msra.mxu0 0
        %2271 = vmatprep.subr.bf16.mxu0 0
        %2272 = vmatpush1.bf16.msra.mxu0 0
        %2273 = vmatprep.subr.bf16.mxu0 0
        %2274 = vmatpush1.bf16.msra.mxu0 0
        %2275 = vmatprep.subr.bf16.mxu0 0
        %2276 = vmatpush1.bf16.msra.mxu0 0
        %2277 = vmatprep.mubr.bf16.mxu0 0
        %2278 = vmatmul.mubr.bf16.gmra.mrb[0].mxu0 %v2143
        %v2279 = vpop.f32.mrb[0].mxu0
        %v2280 = vadd.f32 0.0, %v2279
        %v2281 = vpop.f32.mrb[0].mxu0
        %v2282 = vadd.f32 0.0, %v2281
        %v2283 = vpop.f32.mrb[0].mxu0
        %v2284 = vpop.f32.mrb[0].mxu0
        %2285 = vdwg.mxu0
        %v2286 = vld [vmem:[#allocation4] sm:$0xff]
        %v2287 = vld [vmem:[#allocation4 + $0x8] sm:$0xff]
        %v2288 = vld [vmem:[#allocation4 + $0x10] sm:$0xff]
        %v2289 = vld [vmem:[#allocation4 + $0x18] sm:$0xff]
        %v2290 = vld [vmem:[#allocation4 + $0x20] sm:$0xff]
        %v2291 = vld [vmem:[#allocation4 + $0x28] sm:$0xff]
        %v2292 = vadd.f32 %v2286, %v2198
        %v2293 = vadd.f32 %v2287, %v2200
        %v2294 = vadd.f32 %v2288, %v2239
        %v2295 = vadd.f32 %v2289, %v2241
        %v2296 = vadd.f32 %v2290, %v2280
        %v2297 = vadd.f32 %v2291, %v2282
        %2298 = vst [vmem:[#allocation4] sm:$0xff] %v2292
        %2299 = vst [vmem:[#allocation4 + $0x8] sm:$0xff] %v2293
        %2300 = vst [vmem:[#allocation4 + $0x10] sm:$0xff] %v2294
        %2301 = vst [vmem:[#allocation4 + $0x18] sm:$0xff] %v2295
        %2302 = vst [vmem:[#allocation4 + $0x20] sm:$0xff] %v2296
        %2303 = vst.msk [vmem:[#allocation4 + $0x28] sm:$0xff] %vm520, %v2297
        %s2304 = scalar_lea.vmem %s2, 40
        %v2305 = vld [vmem:[%s2304] sm:$0xf]
        %v2306 = vld [vmem:[#allocation2 + $0x4] sm:$0xff]
        %v2307 = vld [vmem:[#allocation2 + $0xc] sm:$0xff]
        %v2308 = vld [vmem:[#allocation2 + $0x14] sm:$0xff]
        %v2312 = vunpack.c.l.b16 %v2306
        %v2313 = vunpack.c.h.b16 %v2306
        %v2314 = vunpack.c.l.b16 %v2307
        %v2315 = vunpack.c.h.b16 %v2307
        %v2316 = vunpack.c.l.b16 %v2308
        %v2317 = vunpack.c.h.b16 %v2308
        %v2318 = vpack.c.b16 %v2312, %v2312
        %v2319 = vpack.c.b16 %v2313, %v2313
        %v2320 = vpack.c.b16 %v2314, %v2314
        %v2321 = vpack.c.b16 %v2315, %v2315
        %v2322 = vpack.c.b16 %v2316, %v2316
        %v2323 = vpack.c.b16 %v2317, %v2317
        %2324 = vrot.lane.b32.xlu0 %v2318, 127
        %v2325 = vpop.permute.xlu0 %2324
        %2326 = vrot.lane.b32.xlu0 %v2319, 127
        %v2327 = vpop.permute.xlu0 %2326
        %2328 = vrot.lane.b32.xlu0 %v2320, 127
        %v2329 = vpop.permute.xlu0 %2328
        %2330 = vrot.lane.b32.xlu0 %v2321, 127
        %v2331 = vpop.permute.xlu0 %2330
        %2332 = vrot.lane.b32.xlu0 %v2322, 127
        %v2333 = vpop.permute.xlu0 %2332
        %2334 = vrot.lane.b32.xlu0 %v2323, 127
        %v2335 = vpop.permute.xlu0 %2334
        %v2336 = vsel %vm554, %v2325, %v2327
        %v2337 = vsel %vm554, %v2327, %v2329
        %v2338 = vsel %vm554, %v2329, %v2331
        %v2339 = vsel %vm554, %v2331, %v2333
        %v2340 = vsel %vm554, %v2333, %v2335
        %v2342 = vsel %vm369, %v2305, 0
        %v2345 = vsel %vm373, %v2336, 0
        %v2348 = vsel %vm373, %v2337, 0
        %v2351 = vsel %vm373, %v2338, 0
        %v2354 = vsel %vm373, %v2339, 0
        %v2357 = vsel %vm373, %v2340, 0
        %v2360 = vsel %vm373, %v2335, 0
        %2362 = vmatprep.subr.bf16.mxu0 %v2348
        %2363 = vmatpush1.bf16.msra.mxu0 %v2345
        %2364 = vmatprep.subr.bf16.mxu0 0
        %2365 = vmatpush1.bf16.msra.mxu0 0
        %2366 = vmatprep.subr.bf16.mxu0 0
        %2367 = vmatpush1.bf16.msra.mxu0 0
        %2368 = vmatprep.subr.bf16.mxu0 0
        %2369 = vmatpush1.bf16.msra.mxu0 0
        %2370 = vmatprep.subr.bf16.mxu0 0
        %2371 = vmatpush1.bf16.msra.mxu0 0
        %2372 = vmatprep.subr.bf16.mxu0 0
        %2373 = vmatpush1.bf16.msra.mxu0 0
        %2374 = vmatprep.subr.bf16.mxu0 0
        %2375 = vmatpush1.bf16.msra.mxu0 0
        %2376 = vmatprep.subr.bf16.mxu0 0
        %2377 = vmatpush1.bf16.msra.mxu0 0
        %2378 = vmatprep.subr.bf16.mxu0 0
        %2379 = vmatpush1.bf16.msra.mxu0 0
        %2380 = vmatprep.subr.bf16.mxu0 0
        %2381 = vmatpush1.bf16.msra.mxu0 0
        %2382 = vmatprep.subr.bf16.mxu0 0
        %2383 = vmatpush1.bf16.msra.mxu0 0
        %2384 = vmatprep.subr.bf16.mxu0 0
        %2385 = vmatpush1.bf16.msra.mxu0 0
        %2386 = vmatprep.subr.bf16.mxu0 0
        %2387 = vmatpush1.bf16.msra.mxu0 0
        %2388 = vmatprep.subr.bf16.mxu0 0
        %2389 = vmatpush1.bf16.msra.mxu0 0
        %2390 = vmatprep.subr.bf16.mxu0 0
        %2391 = vmatpush1.bf16.msra.mxu0 0
        %2392 = vmatprep.subr.bf16.mxu0 0
        %2393 = vmatpush1.bf16.msra.mxu0 0
        %2394 = vmatprep.mubr.bf16.mxu0 0
        %2395 = vmatmul.mubr.bf16.gmra.mrb[0].mxu0 %v2342
        %v2396 = vpop.f32.mrb[0].mxu0
        %v2397 = vadd.f32 0.0, %v2396
        %v2398 = vpop.f32.mrb[0].mxu0
        %v2399 = vadd.f32 0.0, %v2398
        %v2400 = vpop.f32.mrb[0].mxu0
        %v2401 = vpop.f32.mrb[0].mxu0
        %2402 = vdwg.mxu0
        %2403 = vmatprep.subr.bf16.mxu0 %v2354
        %2404 = vmatpush1.bf16.msra.mxu0 %v2351
        %2405 = vmatprep.subr.bf16.mxu0 0
        %2406 = vmatpush1.bf16.msra.mxu0 0
        %2407 = vmatprep.subr.bf16.mxu0 0
        %2408 = vmatpush1.bf16.msra.mxu0 0
        %2409 = vmatprep.subr.bf16.mxu0 0
        %2410 = vmatpush1.bf16.msra.mxu0 0
        %2411 = vmatprep.subr.bf16.mxu0 0
        %2412 = vmatpush1.bf16.msra.mxu0 0
        %2413 = vmatprep.subr.bf16.mxu0 0
        %2414 = vmatpush1.bf16.msra.mxu0 0
        %2415 = vmatprep.subr.bf16.mxu0 0
        %2416 = vmatpush1.bf16.msra.mxu0 0
        %2417 = vmatprep.subr.bf16.mxu0 0
        %2418 = vmatpush1.bf16.msra.mxu0 0
        %2419 = vmatprep.subr.bf16.mxu0 0
        %2420 = vmatpush1.bf16.msra.mxu0 0
        %2421 = vmatprep.subr.bf16.mxu0 0
        %2422 = vmatpush1.bf16.msra.mxu0 0
        %2423 = vmatprep.subr.bf16.mxu0 0
        %2424 = vmatpush1.bf16.msra.mxu0 0
        %2425 = vmatprep.subr.bf16.mxu0 0
        %2426 = vmatpush1.bf16.msra.mxu0 0
        %2427 = vmatprep.subr.bf16.mxu0 0
        %2428 = vmatpush1.bf16.msra.mxu0 0
        %2429 = vmatprep.subr.bf16.mxu0 0
        %2430 = vmatpush1.bf16.msra.mxu0 0
        %2431 = vmatprep.subr.bf16.mxu0 0
        %2432 = vmatpush1.bf16.msra.mxu0 0
        %2433 = vmatprep.subr.bf16.mxu0 0
        %2434 = vmatpush1.bf16.msra.mxu0 0
        %2435 = vmatprep.mubr.bf16.mxu0 0
        %2436 = vmatmul.mubr.bf16.gmra.mrb[0].mxu0 %v2342
        %v2437 = vpop.f32.mrb[0].mxu0
        %v2438 = vadd.f32 0.0, %v2437
        %v2439 = vpop.f32.mrb[0].mxu0
        %v2440 = vadd.f32 0.0, %v2439
        %v2441 = vpop.f32.mrb[0].mxu0
        %v2442 = vpop.f32.mrb[0].mxu0
        %2443 = vdwg.mxu0
        %2444 = vmatprep.subr.bf16.mxu0 %v2360
        %2445 = vmatpush1.bf16.msra.mxu0 %v2357
        %2446 = vmatprep.subr.bf16.mxu0 0
        %2447 = vmatpush1.bf16.msra.mxu0 0
        %2448 = vmatprep.subr.bf16.mxu0 0
        %2449 = vmatpush1.bf16.msra.mxu0 0
        %2450 = vmatprep.subr.bf16.mxu0 0
        %2451 = vmatpush1.bf16.msra.mxu0 0
        %2452 = vmatprep.subr.bf16.mxu0 0
        %2453 = vmatpush1.bf16.msra.mxu0 0
        %2454 = vmatprep.subr.bf16.mxu0 0
        %2455 = vmatpush1.bf16.msra.mxu0 0
        %2456 = vmatprep.subr.bf16.mxu0 0
        %2457 = vmatpush1.bf16.msra.mxu0 0
        %2458 = vmatprep.subr.bf16.mxu0 0
        %2459 = vmatpush1.bf16.msra.mxu0 0
        %2460 = vmatprep.subr.bf16.mxu0 0
        %2461 = vmatpush1.bf16.msra.mxu0 0
        %2462 = vmatprep.subr.bf16.mxu0 0
        %2463 = vmatpush1.bf16.msra.mxu0 0
        %2464 = vmatprep.subr.bf16.mxu0 0
        %2465 = vmatpush1.bf16.msra.mxu0 0
        %2466 = vmatprep.subr.bf16.mxu0 0
        %2467 = vmatpush1.bf16.msra.mxu0 0
        %2468 = vmatprep.subr.bf16.mxu0 0
        %2469 = vmatpush1.bf16.msra.mxu0 0
        %2470 = vmatprep.subr.bf16.mxu0 0
        %2471 = vmatpush1.bf16.msra.mxu0 0
        %2472 = vmatprep.subr.bf16.mxu0 0
        %2473 = vmatpush1.bf16.msra.mxu0 0
        %2474 = vmatprep.subr.bf16.mxu0 0
        %2475 = vmatpush1.bf16.msra.mxu0 0
        %2476 = vmatprep.mubr.bf16.mxu0 0
        %2477 = vmatmul.mubr.bf16.gmra.mrb[0].mxu0 %v2342
        %v2478 = vpop.f32.mrb[0].mxu0
        %v2479 = vadd.f32 0.0, %v2478
        %v2480 = vpop.f32.mrb[0].mxu0
        %v2481 = vadd.f32 0.0, %v2480
        %v2482 = vpop.f32.mrb[0].mxu0
        %v2483 = vpop.f32.mrb[0].mxu0
        %2484 = vdwg.mxu0
        %v2485 = vld [vmem:[#allocation4] sm:$0xff]
        %v2486 = vld [vmem:[#allocation4 + $0x8] sm:$0xff]
        %v2487 = vld [vmem:[#allocation4 + $0x10] sm:$0xff]
        %v2488 = vld [vmem:[#allocation4 + $0x18] sm:$0xff]
        %v2489 = vld [vmem:[#allocation4 + $0x20] sm:$0xff]
        %v2490 = vld [vmem:[#allocation4 + $0x28] sm:$0xff]
        %v2491 = vadd.f32 %v2485, %v2397
        %v2492 = vadd.f32 %v2486, %v2399
        %v2493 = vadd.f32 %v2487, %v2438
        %v2494 = vadd.f32 %v2488, %v2440
        %v2495 = vadd.f32 %v2489, %v2479
        %v2496 = vadd.f32 %v2490, %v2481
        %2497 = vst [vmem:[#allocation4] sm:$0xff] %v2491
        %2498 = vst [vmem:[#allocation4 + $0x8] sm:$0xff] %v2492
        %2499 = vst [vmem:[#allocation4 + $0x10] sm:$0xff] %v2493
        %2500 = vst [vmem:[#allocation4 + $0x18] sm:$0xff] %v2494
        %2501 = vst [vmem:[#allocation4 + $0x20] sm:$0xff] %v2495
        %2502 = vst.msk [vmem:[#allocation4 + $0x28] sm:$0xff] %vm520, %v2496
        %s2503 = scalar_lea.vmem %s2, 44
        %v2504 = vld [vmem:[%s2503] sm:$0xf]
        %v2505 = vld [vmem:[#allocation2 + $0x4] sm:$0xff]
        %v2506 = vld [vmem:[#allocation2 + $0xc] sm:$0xff]
        %v2507 = vld [vmem:[#allocation2 + $0x14] sm:$0xff]
        %v2511 = vunpack.c.l.b16 %v2505
        %v2512 = vunpack.c.h.b16 %v2505
        %v2513 = vunpack.c.l.b16 %v2506
        %v2514 = vunpack.c.h.b16 %v2506
        %v2515 = vunpack.c.l.b16 %v2507
        %v2516 = vunpack.c.h.b16 %v2507
        %v2517 = vpack.c.b16 %v2511, %v2511
        %v2518 = vpack.c.b16 %v2512, %v2512
        %v2519 = vpack.c.b16 %v2513, %v2513
        %v2520 = vpack.c.b16 %v2514, %v2514
        %v2521 = vpack.c.b16 %v2515, %v2515
        %v2522 = vpack.c.b16 %v2516, %v2516
        %2523 = vrot.lane.b32.xlu0 %v2517, 126
        %v2524 = vpop.permute.xlu0 %2523
        %2525 = vrot.lane.b32.xlu0 %v2518, 126
        %v2526 = vpop.permute.xlu0 %2525
        %2527 = vrot.lane.b32.xlu0 %v2519, 126
        %v2528 = vpop.permute.xlu0 %2527
        %2529 = vrot.lane.b32.xlu0 %v2520, 126
        %v2530 = vpop.permute.xlu0 %2529
        %2531 = vrot.lane.b32.xlu0 %v2521, 126
        %v2532 = vpop.permute.xlu0 %2531
        %2533 = vrot.lane.b32.xlu0 %v2522, 126
        %v2534 = vpop.permute.xlu0 %2533
        %v2535 = vsel %vm754, %v2524, %v2526
        %v2536 = vsel %vm754, %v2526, %v2528
        %v2537 = vsel %vm754, %v2528, %v2530
        %v2538 = vsel %vm754, %v2530, %v2532
        %v2539 = vsel %vm754, %v2532, %v2534
        %v2541 = vsel %vm369, %v2504, 0
        %v2544 = vsel %vm373, %v2535, 0
        %v2547 = vsel %vm373, %v2536, 0
        %v2550 = vsel %vm373, %v2537, 0
        %v2553 = vsel %vm373, %v2538, 0
        %v2556 = vsel %vm373, %v2539, 0
        %v2559 = vsel %vm373, %v2534, 0
        %2561 = vmatprep.subr.bf16.mxu0 %v2547
        %2562 = vmatpush1.bf16.msra.mxu0 %v2544
        %2563 = vmatprep.subr.bf16.mxu0 0
        %2564 = vmatpush1.bf16.msra.mxu0 0
        %2565 = vmatprep.subr.bf16.mxu0 0
        %2566 = vmatpush1.bf16.msra.mxu0 0
        %2567 = vmatprep.subr.bf16.mxu0 0
        %2568 = vmatpush1.bf16.msra.mxu0 0
        %2569 = vmatprep.subr.bf16.mxu0 0
        %2570 = vmatpush1.bf16.msra.mxu0 0
        %2571 = vmatprep.subr.bf16.mxu0 0
        %2572 = vmatpush1.bf16.msra.mxu0 0
        %2573 = vmatprep.subr.bf16.mxu0 0
        %2574 = vmatpush1.bf16.msra.mxu0 0
        %2575 = vmatprep.subr.bf16.mxu0 0
        %2576 = vmatpush1.bf16.msra.mxu0 0
        %2577 = vmatprep.subr.bf16.mxu0 0
        %2578 = vmatpush1.bf16.msra.mxu0 0
        %2579 = vmatprep.subr.bf16.mxu0 0
        %2580 = vmatpush1.bf16.msra.mxu0 0
        %2581 = vmatprep.subr.bf16.mxu0 0
        %2582 = vmatpush1.bf16.msra.mxu0 0
        %2583 = vmatprep.subr.bf16.mxu0 0
        %2584 = vmatpush1.bf16.msra.mxu0 0
        %2585 = vmatprep.subr.bf16.mxu0 0
        %2586 = vmatpush1.bf16.msra.mxu0 0
        %2587 = vmatprep.subr.bf16.mxu0 0
        %2588 = vmatpush1.bf16.msra.mxu0 0
        %2589 = vmatprep.subr.bf16.mxu0 0
        %2590 = vmatpush1.bf16.msra.mxu0 0
        %2591 = vmatprep.subr.bf16.mxu0 0
        %2592 = vmatpush1.bf16.msra.mxu0 0
        %2593 = vmatprep.mubr.bf16.mxu0 0
        %2594 = vmatmul.mubr.bf16.gmra.mrb[0].mxu0 %v2541
        %v2595 = vpop.f32.mrb[0].mxu0
        %v2596 = vadd.f32 0.0, %v2595
        %v2597 = vpop.f32.mrb[0].mxu0
        %v2598 = vadd.f32 0.0, %v2597
        %v2599 = vpop.f32.mrb[0].mxu0
        %v2600 = vpop.f32.mrb[0].mxu0
        %2601 = vdwg.mxu0
        %2602 = vmatprep.subr.bf16.mxu0 %v2553
        %2603 = vmatpush1.bf16.msra.mxu0 %v2550
        %2604 = vmatprep.subr.bf16.mxu0 0
        %2605 = vmatpush1.bf16.msra.mxu0 0
        %2606 = vmatprep.subr.bf16.mxu0 0
        %2607 = vmatpush1.bf16.msra.mxu0 0
        %2608 = vmatprep.subr.bf16.mxu0 0
        %2609 = vmatpush1.bf16.msra.mxu0 0
        %2610 = vmatprep.subr.bf16.mxu0 0
        %2611 = vmatpush1.bf16.msra.mxu0 0
        %2612 = vmatprep.subr.bf16.mxu0 0
        %2613 = vmatpush1.bf16.msra.mxu0 0
        %2614 = vmatprep.subr.bf16.mxu0 0
        %2615 = vmatpush1.bf16.msra.mxu0 0
        %2616 = vmatprep.subr.bf16.mxu0 0
        %2617 = vmatpush1.bf16.msra.mxu0 0
        %2618 = vmatprep.subr.bf16.mxu0 0
        %2619 = vmatpush1.bf16.msra.mxu0 0
        %2620 = vmatprep.subr.bf16.mxu0 0
        %2621 = vmatpush1.bf16.msra.mxu0 0
        %2622 = vmatprep.subr.bf16.mxu0 0
        %2623 = vmatpush1.bf16.msra.mxu0 0
        %2624 = vmatprep.subr.bf16.mxu0 0
        %2625 = vmatpush1.bf16.msra.mxu0 0
        %2626 = vmatprep.subr.bf16.mxu0 0
        %2627 = vmatpush1.bf16.msra.mxu0 0
        %2628 = vmatprep.subr.bf16.mxu0 0
        %2629 = vmatpush1.bf16.msra.mxu0 0
        %2630 = vmatprep.subr.bf16.mxu0 0
        %2631 = vmatpush1.bf16.msra.mxu0 0
        %2632 = vmatprep.subr.bf16.mxu0 0
        %2633 = vmatpush1.bf16.msra.mxu0 0
        %2634 = vmatprep.mubr.bf16.mxu0 0
        %2635 = vmatmul.mubr.bf16.gmra.mrb[0].mxu0 %v2541
        %v2636 = vpop.f32.mrb[0].mxu0
        %v2637 = vadd.f32 0.0, %v2636
        %v2638 = vpop.f32.mrb[0].mxu0
        %v2639 = vadd.f32 0.0, %v2638
        %v2640 = vpop.f32.mrb[0].mxu0
        %v2641 = vpop.f32.mrb[0].mxu0
        %2642 = vdwg.mxu0
        %2643 = vmatprep.subr.bf16.mxu0 %v2559
        %2644 = vmatpush1.bf16.msra.mxu0 %v2556
        %2645 = vmatprep.subr.bf16.mxu0 0
        %2646 = vmatpush1.bf16.msra.mxu0 0
        %2647 = vmatprep.subr.bf16.mxu0 0
        %2648 = vmatpush1.bf16.msra.mxu0 0
        %2649 = vmatprep.subr.bf16.mxu0 0
        %2650 = vmatpush1.bf16.msra.mxu0 0
        %2651 = vmatprep.subr.bf16.mxu0 0
        %2652 = vmatpush1.bf16.msra.mxu0 0
        %2653 = vmatprep.subr.bf16.mxu0 0
        %2654 = vmatpush1.bf16.msra.mxu0 0
        %2655 = vmatprep.subr.bf16.mxu0 0
        %2656 = vmatpush1.bf16.msra.mxu0 0
        %2657 = vmatprep.subr.bf16.mxu0 0
        %2658 = vmatpush1.bf16.msra.mxu0 0
        %2659 = vmatprep.subr.bf16.mxu0 0
        %2660 = vmatpush1.bf16.msra.mxu0 0
        %2661 = vmatprep.subr.bf16.mxu0 0
        %2662 = vmatpush1.bf16.msra.mxu0 0
        %2663 = vmatprep.subr.bf16.mxu0 0
        %2664 = vmatpush1.bf16.msra.mxu0 0
        %2665 = vmatprep.subr.bf16.mxu0 0
        %2666 = vmatpush1.bf16.msra.mxu0 0
        %2667 = vmatprep.subr.bf16.mxu0 0
        %2668 = vmatpush1.bf16.msra.mxu0 0
        %2669 = vmatprep.subr.bf16.mxu0 0
        %2670 = vmatpush1.bf16.msra.mxu0 0
        %2671 = vmatprep.subr.bf16.mxu0 0
        %2672 = vmatpush1.bf16.msra.mxu0 0
        %2673 = vmatprep.subr.bf16.mxu0 0
        %2674 = vmatpush1.bf16.msra.mxu0 0
        %2675 = vmatprep.mubr.bf16.mxu0 0
        %2676 = vmatmul.mubr.bf16.gmra.mrb[0].mxu0 %v2541
        %v2677 = vpop.f32.mrb[0].mxu0
        %v2678 = vadd.f32 0.0, %v2677
        %v2679 = vpop.f32.mrb[0].mxu0
        %v2680 = vadd.f32 0.0, %v2679
        %v2681 = vpop.f32.mrb[0].mxu0
        %v2682 = vpop.f32.mrb[0].mxu0
        %2683 = vdwg.mxu0
        %v2684 = vld [vmem:[#allocation4] sm:$0xff]
        %v2685 = vld [vmem:[#allocation4 + $0x8] sm:$0xff]
        %v2686 = vld [vmem:[#allocation4 + $0x10] sm:$0xff]
        %v2687 = vld [vmem:[#allocation4 + $0x18] sm:$0xff]
        %v2688 = vld [vmem:[#allocation4 + $0x20] sm:$0xff]
        %v2689 = vld [vmem:[#allocation4 + $0x28] sm:$0xff]
        %v2690 = vadd.f32 %v2684, %v2596
        %v2691 = vadd.f32 %v2685, %v2598
        %v2692 = vadd.f32 %v2686, %v2637
        %v2693 = vadd.f32 %v2687, %v2639
        %v2694 = vadd.f32 %v2688, %v2678
        %v2695 = vadd.f32 %v2689, %v2680
        %2696 = vst [vmem:[#allocation4] sm:$0xff] %v2690
        %2697 = vst [vmem:[#allocation4 + $0x8] sm:$0xff] %v2691
        %2698 = vst [vmem:[#allocation4 + $0x10] sm:$0xff] %v2692
        %2699 = vst [vmem:[#allocation4 + $0x18] sm:$0xff] %v2693
        %2700 = vst [vmem:[#allocation4 + $0x20] sm:$0xff] %v2694
        %2701 = vst.msk [vmem:[#allocation4 + $0x28] sm:$0xff] %vm520, %v2695
        %s2702 = scalar_lea.vmem %s2, 48
        %v2703 = vld [vmem:[%s2702] sm:$0xf]
        %v2704 = vld [vmem:[#allocation2 + $0x4] sm:$0xff]
        %v2705 = vld [vmem:[#allocation2 + $0xc] sm:$0xff]
        %v2706 = vld [vmem:[#allocation2 + $0x14] sm:$0xff]
        %v2710 = vunpack.c.l.b16 %v2704
        %v2711 = vunpack.c.h.b16 %v2704
        %v2712 = vunpack.c.l.b16 %v2705
        %v2713 = vunpack.c.h.b16 %v2705
        %v2714 = vunpack.c.l.b16 %v2706
        %v2715 = vunpack.c.h.b16 %v2706
        %v2716 = vpack.c.b16 %v2710, %v2710
        %v2717 = vpack.c.b16 %v2711, %v2711
        %v2718 = vpack.c.b16 %v2712, %v2712
        %v2719 = vpack.c.b16 %v2713, %v2713
        %v2720 = vpack.c.b16 %v2714, %v2714
        %v2721 = vpack.c.b16 %v2715, %v2715
        %2722 = vrot.lane.b32.xlu0 %v2716, 119
        %v2723 = vpop.permute.xlu0 %2722
        %2724 = vrot.lane.b32.xlu0 %v2717, 119
        %v2725 = vpop.permute.xlu0 %2724
        %2726 = vrot.lane.b32.xlu0 %v2718, 119
        %v2727 = vpop.permute.xlu0 %2726
        %2728 = vrot.lane.b32.xlu0 %v2719, 119
        %v2729 = vpop.permute.xlu0 %2728
        %2730 = vrot.lane.b32.xlu0 %v2720, 119
        %v2731 = vpop.permute.xlu0 %2730
        %2732 = vrot.lane.b32.xlu0 %v2721, 119
        %v2733 = vpop.permute.xlu0 %2732
        %v2734 = vsel %vm954, %v2723, %v2725
        %v2735 = vsel %vm954, %v2725, %v2727
        %v2736 = vsel %vm954, %v2727, %v2729
        %v2737 = vsel %vm954, %v2729, %v2731
        %v2738 = vsel %vm954, %v2731, %v2733
        %v2740 = vsel %vm369, %v2703, 0
        %v2743 = vsel %vm373, %v2734, 0
        %v2746 = vsel %vm373, %v2735, 0
        %v2749 = vsel %vm373, %v2736, 0
        %v2752 = vsel %vm373, %v2737, 0
        %v2755 = vsel %vm373, %v2738, 0
        %v2758 = vsel %vm373, %v2733, 0
        %2760 = vmatprep.subr.bf16.mxu0 %v2746
        %2761 = vmatpush1.bf16.msra.mxu0 %v2743
        %2762 = vmatprep.subr.bf16.mxu0 0
        %2763 = vmatpush1.bf16.msra.mxu0 0
        %2764 = vmatprep.subr.bf16.mxu0 0
        %2765 = vmatpush1.bf16.msra.mxu0 0
        %2766 = vmatprep.subr.bf16.mxu0 0
        %2767 = vmatpush1.bf16.msra.mxu0 0
        %2768 = vmatprep.subr.bf16.mxu0 0
        %2769 = vmatpush1.bf16.msra.mxu0 0
        %2770 = vmatprep.subr.bf16.mxu0 0
        %2771 = vmatpush1.bf16.msra.mxu0 0
        %2772 = vmatprep.subr.bf16.mxu0 0
        %2773 = vmatpush1.bf16.msra.mxu0 0
        %2774 = vmatprep.subr.bf16.mxu0 0
        %2775 = vmatpush1.bf16.msra.mxu0 0
        %2776 = vmatprep.subr.bf16.mxu0 0
        %2777 = vmatpush1.bf16.msra.mxu0 0
        %2778 = vmatprep.subr.bf16.mxu0 0
        %2779 = vmatpush1.bf16.msra.mxu0 0
        %2780 = vmatprep.subr.bf16.mxu0 0
        %2781 = vmatpush1.bf16.msra.mxu0 0
        %2782 = vmatprep.subr.bf16.mxu0 0
        %2783 = vmatpush1.bf16.msra.mxu0 0
        %2784 = vmatprep.subr.bf16.mxu0 0
        %2785 = vmatpush1.bf16.msra.mxu0 0
        %2786 = vmatprep.subr.bf16.mxu0 0
        %2787 = vmatpush1.bf16.msra.mxu0 0
        %2788 = vmatprep.subr.bf16.mxu0 0
        %2789 = vmatpush1.bf16.msra.mxu0 0
        %2790 = vmatprep.subr.bf16.mxu0 0
        %2791 = vmatpush1.bf16.msra.mxu0 0
        %2792 = vmatprep.mubr.bf16.mxu0 0
        %2793 = vmatmul.mubr.bf16.gmra.mrb[0].mxu0 %v2740
        %v2794 = vpop.f32.mrb[0].mxu0
        %v2795 = vadd.f32 0.0, %v2794
        %v2796 = vpop.f32.mrb[0].mxu0
        %v2797 = vadd.f32 0.0, %v2796
        %v2798 = vpop.f32.mrb[0].mxu0
        %v2799 = vpop.f32.mrb[0].mxu0
        %2800 = vdwg.mxu0
        %2801 = vmatprep.subr.bf16.mxu0 %v2752
        %2802 = vmatpush1.bf16.msra.mxu0 %v2749
        %2803 = vmatprep.subr.bf16.mxu0 0
        %2804 = vmatpush1.bf16.msra.mxu0 0
        %2805 = vmatprep.subr.bf16.mxu0 0
        %2806 = vmatpush1.bf16.msra.mxu0 0
        %2807 = vmatprep.subr.bf16.mxu0 0
        %2808 = vmatpush1.bf16.msra.mxu0 0
        %2809 = vmatprep.subr.bf16.mxu0 0
        %2810 = vmatpush1.bf16.msra.mxu0 0
        %2811 = vmatprep.subr.bf16.mxu0 0
        %2812 = vmatpush1.bf16.msra.mxu0 0
        %2813 = vmatprep.subr.bf16.mxu0 0
        %2814 = vmatpush1.bf16.msra.mxu0 0
        %2815 = vmatprep.subr.bf16.mxu0 0
        %2816 = vmatpush1.bf16.msra.mxu0 0
        %2817 = vmatprep.subr.bf16.mxu0 0
        %2818 = vmatpush1.bf16.msra.mxu0 0
        %2819 = vmatprep.subr.bf16.mxu0 0
        %2820 = vmatpush1.bf16.msra.mxu0 0
        %2821 = vmatprep.subr.bf16.mxu0 0
        %2822 = vmatpush1.bf16.msra.mxu0 0
        %2823 = vmatprep.subr.bf16.mxu0 0
        %2824 = vmatpush1.bf16.msra.mxu0 0
        %2825 = vmatprep.subr.bf16.mxu0 0
        %2826 = vmatpush1.bf16.msra.mxu0 0
        %2827 = vmatprep.subr.bf16.mxu0 0
        %2828 = vmatpush1.bf16.msra.mxu0 0
        %2829 = vmatprep.subr.bf16.mxu0 0
        %2830 = vmatpush1.bf16.msra.mxu0 0
        %2831 = vmatprep.subr.bf16.mxu0 0
        %2832 = vmatpush1.bf16.msra.mxu0 0
        %2833 = vmatprep.mubr.bf16.mxu0 0
        %2834 = vmatmul.mubr.bf16.gmra.mrb[0].mxu0 %v2740
        %v2835 = vpop.f32.mrb[0].mxu0
        %v2836 = vadd.f32 0.0, %v2835
        %v2837 = vpop.f32.mrb[0].mxu0
        %v2838 = vadd.f32 0.0, %v2837
        %v2839 = vpop.f32.mrb[0].mxu0
        %v2840 = vpop.f32.mrb[0].mxu0
        %2841 = vdwg.mxu0
        %2842 = vmatprep.subr.bf16.mxu0 %v2758
        %2843 = vmatpush1.bf16.msra.mxu0 %v2755
        %2844 = vmatprep.subr.bf16.mxu0 0
        %2845 = vmatpush1.bf16.msra.mxu0 0
        %2846 = vmatprep.subr.bf16.mxu0 0
        %2847 = vmatpush1.bf16.msra.mxu0 0
        %2848 = vmatprep.subr.bf16.mxu0 0
        %2849 = vmatpush1.bf16.msra.mxu0 0
        %2850 = vmatprep.subr.bf16.mxu0 0
        %2851 = vmatpush1.bf16.msra.mxu0 0
        %2852 = vmatprep.subr.bf16.mxu0 0
        %2853 = vmatpush1.bf16.msra.mxu0 0
        %2854 = vmatprep.subr.bf16.mxu0 0
        %2855 = vmatpush1.bf16.msra.mxu0 0
        %2856 = vmatprep.subr.bf16.mxu0 0
        %2857 = vmatpush1.bf16.msra.mxu0 0
        %2858 = vmatprep.subr.bf16.mxu0 0
        %2859 = vmatpush1.bf16.msra.mxu0 0
        %2860 = vmatprep.subr.bf16.mxu0 0
        %2861 = vmatpush1.bf16.msra.mxu0 0
        %2862 = vmatprep.subr.bf16.mxu0 0
        %2863 = vmatpush1.bf16.msra.mxu0 0
        %2864 = vmatprep.subr.bf16.mxu0 0
        %2865 = vmatpush1.bf16.msra.mxu0 0
        %2866 = vmatprep.subr.bf16.mxu0 0
        %2867 = vmatpush1.bf16.msra.mxu0 0
        %2868 = vmatprep.subr.bf16.mxu0 0
        %2869 = vmatpush1.bf16.msra.mxu0 0
        %2870 = vmatprep.subr.bf16.mxu0 0
        %2871 = vmatpush1.bf16.msra.mxu0 0
        %2872 = vmatprep.subr.bf16.mxu0 0
        %2873 = vmatpush1.bf16.msra.mxu0 0
        %2874 = vmatprep.mubr.bf16.mxu0 0
        %2875 = vmatmul.mubr.bf16.gmra.mrb[0].mxu0 %v2740
        %v2876 = vpop.f32.mrb[0].mxu0
        %v2877 = vadd.f32 0.0, %v2876
        %v2878 = vpop.f32.mrb[0].mxu0
        %v2879 = vadd.f32 0.0, %v2878
        %v2880 = vpop.f32.mrb[0].mxu0
        %v2881 = vpop.f32.mrb[0].mxu0
        %2882 = vdwg.mxu0
        %v2883 = vld [vmem:[#allocation4] sm:$0xff]
        %v2884 = vld [vmem:[#allocation4 + $0x8] sm:$0xff]
        %v2885 = vld [vmem:[#allocation4 + $0x10] sm:$0xff]
        %v2886 = vld [vmem:[#allocation4 + $0x18] sm:$0xff]
        %v2887 = vld [vmem:[#allocation4 + $0x20] sm:$0xff]
        %v2888 = vld [vmem:[#allocation4 + $0x28] sm:$0xff]
        %v2889 = vadd.f32 %v2883, %v2795
        %v2890 = vadd.f32 %v2884, %v2797
        %v2891 = vadd.f32 %v2885, %v2836
        %v2892 = vadd.f32 %v2886, %v2838
        %v2893 = vadd.f32 %v2887, %v2877
        %v2894 = vadd.f32 %v2888, %v2879
        %2895 = vst [vmem:[#allocation4] sm:$0xff] %v2889
        %2896 = vst [vmem:[#allocation4 + $0x8] sm:$0xff] %v2890
        %2897 = vst [vmem:[#allocation4 + $0x10] sm:$0xff] %v2891
        %2898 = vst [vmem:[#allocation4 + $0x18] sm:$0xff] %v2892
        %2899 = vst [vmem:[#allocation4 + $0x20] sm:$0xff] %v2893
        %2900 = vst.msk [vmem:[#allocation4 + $0x28] sm:$0xff] %vm520, %v2894
        %s2901 = scalar_lea.vmem %s2, 52
        %v2902 = vld [vmem:[%s2901] sm:$0xf]
        %v2903 = vld [vmem:[#allocation2 + $0x4] sm:$0xff]
        %v2904 = vld [vmem:[#allocation2 + $0xc] sm:$0xff]
        %v2905 = vld [vmem:[#allocation2 + $0x14] sm:$0xff]
        %v2909 = vunpack.c.l.b16 %v2903
        %v2910 = vunpack.c.h.b16 %v2903
        %v2911 = vunpack.c.l.b16 %v2904
        %v2912 = vunpack.c.h.b16 %v2904
        %v2913 = vunpack.c.l.b16 %v2905
        %v2914 = vunpack.c.h.b16 %v2905
        %v2915 = vpack.c.b16 %v2909, %v2909
        %v2916 = vpack.c.b16 %v2910, %v2910
        %v2917 = vpack.c.b16 %v2911, %v2911
        %v2918 = vpack.c.b16 %v2912, %v2912
        %v2919 = vpack.c.b16 %v2913, %v2913
        %v2920 = vpack.c.b16 %v2914, %v2914
        %2921 = vrot.lane.b32.xlu0 %v2915, 118
        %v2922 = vpop.permute.xlu0 %2921
        %2923 = vrot.lane.b32.xlu0 %v2916, 118
        %v2924 = vpop.permute.xlu0 %2923
        %2925 = vrot.lane.b32.xlu0 %v2917, 118
        %v2926 = vpop.permute.xlu0 %2925
        %2927 = vrot.lane.b32.xlu0 %v2918, 118
        %v2928 = vpop.permute.xlu0 %2927
        %2929 = vrot.lane.b32.xlu0 %v2919, 118
        %v2930 = vpop.permute.xlu0 %2929
        %2931 = vrot.lane.b32.xlu0 %v2920, 118
        %v2932 = vpop.permute.xlu0 %2931
        %v2933 = vsel %vm1154, %v2922, %v2924
        %v2934 = vsel %vm1154, %v2924, %v2926
        %v2935 = vsel %vm1154, %v2926, %v2928
        %v2936 = vsel %vm1154, %v2928, %v2930
        %v2937 = vsel %vm1154, %v2930, %v2932
        %v2939 = vsel %vm369, %v2902, 0
        %v2942 = vsel %vm373, %v2933, 0
        %v2945 = vsel %vm373, %v2934, 0
        %v2948 = vsel %vm373, %v2935, 0
        %v2951 = vsel %vm373, %v2936, 0
        %v2954 = vsel %vm373, %v2937, 0
        %v2957 = vsel %vm373, %v2932, 0
        %2959 = vmatprep.subr.bf16.mxu0 %v2945
        %2960 = vmatpush1.bf16.msra.mxu0 %v2942
        %2961 = vmatprep.subr.bf16.mxu0 0
        %2962 = vmatpush1.bf16.msra.mxu0 0
        %2963 = vmatprep.subr.bf16.mxu0 0
        %2964 = vmatpush1.bf16.msra.mxu0 0
        %2965 = vmatprep.subr.bf16.mxu0 0
        %2966 = vmatpush1.bf16.msra.mxu0 0
        %2967 = vmatprep.subr.bf16.mxu0 0
        %2968 = vmatpush1.bf16.msra.mxu0 0
        %2969 = vmatprep.subr.bf16.mxu0 0
        %2970 = vmatpush1.bf16.msra.mxu0 0
        %2971 = vmatprep.subr.bf16.mxu0 0
        %2972 = vmatpush1.bf16.msra.mxu0 0
        %2973 = vmatprep.subr.bf16.mxu0 0
        %2974 = vmatpush1.bf16.msra.mxu0 0
        %2975 = vmatprep.subr.bf16.mxu0 0
        %2976 = vmatpush1.bf16.msra.mxu0 0
        %2977 = vmatprep.subr.bf16.mxu0 0
        %2978 = vmatpush1.bf16.msra.mxu0 0
        %2979 = vmatprep.subr.bf16.mxu0 0
        %2980 = vmatpush1.bf16.msra.mxu0 0
        %2981 = vmatprep.subr.bf16.mxu0 0
        %2982 = vmatpush1.bf16.msra.mxu0 0
        %2983 = vmatprep.subr.bf16.mxu0 0
        %2984 = vmatpush1.bf16.msra.mxu0 0
        %2985 = vmatprep.subr.bf16.mxu0 0
        %2986 = vmatpush1.bf16.msra.mxu0 0
        %2987 = vmatprep.subr.bf16.mxu0 0
        %2988 = vmatpush1.bf16.msra.mxu0 0
        %2989 = vmatprep.subr.bf16.mxu0 0
        %2990 = vmatpush1.bf16.msra.mxu0 0
        %2991 = vmatprep.mubr.bf16.mxu0 0
        %2992 = vmatmul.mubr.bf16.gmra.mrb[0].mxu0 %v2939
        %v2993 = vpop.f32.mrb[0].mxu0
        %v2994 = vadd.f32 0.0, %v2993
        %v2995 = vpop.f32.mrb[0].mxu0
        %v2996 = vadd.f32 0.0, %v2995
        %v2997 = vpop.f32.mrb[0].mxu0
        %v2998 = vpop.f32.mrb[0].mxu0
        %2999 = vdwg.mxu0
        %3000 = vmatprep.subr.bf16.mxu0 %v2951
        %3001 = vmatpush1.bf16.msra.mxu0 %v2948
        %3002 = vmatprep.subr.bf16.mxu0 0
        %3003 = vmatpush1.bf16.msra.mxu0 0
        %3004 = vmatprep.subr.bf16.mxu0 0
        %3005 = vmatpush1.bf16.msra.mxu0 0
        %3006 = vmatprep.subr.bf16.mxu0 0
        %3007 = vmatpush1.bf16.msra.mxu0 0
        %3008 = vmatprep.subr.bf16.mxu0 0
        %3009 = vmatpush1.bf16.msra.mxu0 0
        %3010 = vmatprep.subr.bf16.mxu0 0
        %3011 = vmatpush1.bf16.msra.mxu0 0
        %3012 = vmatprep.subr.bf16.mxu0 0
        %3013 = vmatpush1.bf16.msra.mxu0 0
        %3014 = vmatprep.subr.bf16.mxu0 0
        %3015 = vmatpush1.bf16.msra.mxu0 0
        %3016 = vmatprep.subr.bf16.mxu0 0
        %3017 = vmatpush1.bf16.msra.mxu0 0
        %3018 = vmatprep.subr.bf16.mxu0 0
        %3019 = vmatpush1.bf16.msra.mxu0 0
        %3020 = vmatprep.subr.bf16.mxu0 0
        %3021 = vmatpush1.bf16.msra.mxu0 0
        %3022 = vmatprep.subr.bf16.mxu0 0
        %3023 = vmatpush1.bf16.msra.mxu0 0
        %3024 = vmatprep.subr.bf16.mxu0 0
        %3025 = vmatpush1.bf16.msra.mxu0 0
        %3026 = vmatprep.subr.bf16.mxu0 0
        %3027 = vmatpush1.bf16.msra.mxu0 0
        %3028 = vmatprep.subr.bf16.mxu0 0
        %3029 = vmatpush1.bf16.msra.mxu0 0
        %3030 = vmatprep.subr.bf16.mxu0 0
        %3031 = vmatpush1.bf16.msra.mxu0 0
        %3032 = vmatprep.mubr.bf16.mxu0 0
        %3033 = vmatmul.mubr.bf16.gmra.mrb[0].mxu0 %v2939
        %v3034 = vpop.f32.mrb[0].mxu0
        %v3035 = vadd.f32 0.0, %v3034
        %v3036 = vpop.f32.mrb[0].mxu0
        %v3037 = vadd.f32 0.0, %v3036
        %v3038 = vpop.f32.mrb[0].mxu0
        %v3039 = vpop.f32.mrb[0].mxu0
        %3040 = vdwg.mxu0
        %3041 = vmatprep.subr.bf16.mxu0 %v2957
        %3042 = vmatpush1.bf16.msra.mxu0 %v2954
        %3043 = vmatprep.subr.bf16.mxu0 0
        %3044 = vmatpush1.bf16.msra.mxu0 0
        %3045 = vmatprep.subr.bf16.mxu0 0
        %3046 = vmatpush1.bf16.msra.mxu0 0
        %3047 = vmatprep.subr.bf16.mxu0 0
        %3048 = vmatpush1.bf16.msra.mxu0 0
        %3049 = vmatprep.subr.bf16.mxu0 0
        %3050 = vmatpush1.bf16.msra.mxu0 0
        %3051 = vmatprep.subr.bf16.mxu0 0
        %3052 = vmatpush1.bf16.msra.mxu0 0
        %3053 = vmatprep.subr.bf16.mxu0 0
        %3054 = vmatpush1.bf16.msra.mxu0 0
        %3055 = vmatprep.subr.bf16.mxu0 0
        %3056 = vmatpush1.bf16.msra.mxu0 0
        %3057 = vmatprep.subr.bf16.mxu0 0
        %3058 = vmatpush1.bf16.msra.mxu0 0
        %3059 = vmatprep.subr.bf16.mxu0 0
        %3060 = vmatpush1.bf16.msra.mxu0 0
        %3061 = vmatprep.subr.bf16.mxu0 0
        %3062 = vmatpush1.bf16.msra.mxu0 0
        %3063 = vmatprep.subr.bf16.mxu0 0
        %3064 = vmatpush1.bf16.msra.mxu0 0
        %3065 = vmatprep.subr.bf16.mxu0 0
        %3066 = vmatpush1.bf16.msra.mxu0 0
        %3067 = vmatprep.subr.bf16.mxu0 0
        %3068 = vmatpush1.bf16.msra.mxu0 0
        %3069 = vmatprep.subr.bf16.mxu0 0
        %3070 = vmatpush1.bf16.msra.mxu0 0
        %3071 = vmatprep.subr.bf16.mxu0 0
        %3072 = vmatpush1.bf16.msra.mxu0 0
        %3073 = vmatprep.mubr.bf16.mxu0 0
        %3074 = vmatmul.mubr.bf16.gmra.mrb[0].mxu0 %v2939
        %v3075 = vpop.f32.mrb[0].mxu0
        %v3076 = vadd.f32 0.0, %v3075
        %v3077 = vpop.f32.mrb[0].mxu0
        %v3078 = vadd.f32 0.0, %v3077
        %v3079 = vpop.f32.mrb[0].mxu0
        %v3080 = vpop.f32.mrb[0].mxu0
        %3081 = vdwg.mxu0
        %v3082 = vld [vmem:[#allocation4] sm:$0xff]
        %v3083 = vld [vmem:[#allocation4 + $0x8] sm:$0xff]
        %v3084 = vld [vmem:[#allocation4 + $0x10] sm:$0xff]
        %v3085 = vld [vmem:[#allocation4 + $0x18] sm:$0xff]
        %v3086 = vld [vmem:[#allocation4 + $0x20] sm:$0xff]
        %v3087 = vld [vmem:[#allocation4 + $0x28] sm:$0xff]
        %v3088 = vadd.f32 %v3082, %v2994
        %v3089 = vadd.f32 %v3083, %v2996
        %v3090 = vadd.f32 %v3084, %v3035
        %v3091 = vadd.f32 %v3085, %v3037
        %v3092 = vadd.f32 %v3086, %v3076
        %v3093 = vadd.f32 %v3087, %v3078
        %3094 = vst [vmem:[#allocation4] sm:$0xff] %v3088
        %3095 = vst [vmem:[#allocation4 + $0x8] sm:$0xff] %v3089
        %3096 = vst [vmem:[#allocation4 + $0x10] sm:$0xff] %v3090
        %3097 = vst [vmem:[#allocation4 + $0x18] sm:$0xff] %v3091
        %3098 = vst [vmem:[#allocation4 + $0x20] sm:$0xff] %v3092
        %3099 = vst.msk [vmem:[#allocation4 + $0x28] sm:$0xff] %vm520, %v3093
        %s3100 = scalar_lea.vmem %s2, 56
        %v3101 = vld [vmem:[%s3100] sm:$0xf]
        %v3102 = vld [vmem:[#allocation2 + $0x4] sm:$0xff]
        %v3103 = vld [vmem:[#allocation2 + $0xc] sm:$0xff]
        %v3104 = vld [vmem:[#allocation2 + $0x14] sm:$0xff]
        %v3108 = vunpack.c.l.b16 %v3102
        %v3109 = vunpack.c.h.b16 %v3102
        %v3110 = vunpack.c.l.b16 %v3103
        %v3111 = vunpack.c.h.b16 %v3103
        %v3112 = vunpack.c.l.b16 %v3104
        %v3113 = vunpack.c.h.b16 %v3104
        %v3114 = vpack.c.b16 %v3108, %v3108
        %v3115 = vpack.c.b16 %v3109, %v3109
        %v3116 = vpack.c.b16 %v3110, %v3110
        %v3117 = vpack.c.b16 %v3111, %v3111
        %v3118 = vpack.c.b16 %v3112, %v3112
        %v3119 = vpack.c.b16 %v3113, %v3113
        %3120 = vrot.lane.b32.xlu0 %v3114, 117
        %v3121 = vpop.permute.xlu0 %3120
        %3122 = vrot.lane.b32.xlu0 %v3115, 117
        %v3123 = vpop.permute.xlu0 %3122
        %3124 = vrot.lane.b32.xlu0 %v3116, 117
        %v3125 = vpop.permute.xlu0 %3124
        %3126 = vrot.lane.b32.xlu0 %v3117, 117
        %v3127 = vpop.permute.xlu0 %3126
        %3128 = vrot.lane.b32.xlu0 %v3118, 117
        %v3129 = vpop.permute.xlu0 %3128
        %3130 = vrot.lane.b32.xlu0 %v3119, 117
        %v3131 = vpop.permute.xlu0 %3130
        %v3132 = vsel %vm1354, %v3121, %v3123
        %v3133 = vsel %vm1354, %v3123, %v3125
        %v3134 = vsel %vm1354, %v3125, %v3127
        %v3135 = vsel %vm1354, %v3127, %v3129
        %v3136 = vsel %vm1354, %v3129, %v3131
        %v3138 = vsel %vm369, %v3101, 0
        %v3141 = vsel %vm373, %v3132, 0
        %v3144 = vsel %vm373, %v3133, 0
        %v3147 = vsel %vm373, %v3134, 0
        %v3150 = vsel %vm373, %v3135, 0
        %v3153 = vsel %vm373, %v3136, 0
        %v3156 = vsel %vm373, %v3131, 0
        %3158 = vmatprep.subr.bf16.mxu0 %v3144
        %3159 = vmatpush1.bf16.msra.mxu0 %v3141
        %3160 = vmatprep.subr.bf16.mxu0 0
        %3161 = vmatpush1.bf16.msra.mxu0 0
        %3162 = vmatprep.subr.bf16.mxu0 0
        %3163 = vmatpush1.bf16.msra.mxu0 0
        %3164 = vmatprep.subr.bf16.mxu0 0
        %3165 = vmatpush1.bf16.msra.mxu0 0
        %3166 = vmatprep.subr.bf16.mxu0 0
        %3167 = vmatpush1.bf16.msra.mxu0 0
        %3168 = vmatprep.subr.bf16.mxu0 0
        %3169 = vmatpush1.bf16.msra.mxu0 0
        %3170 = vmatprep.subr.bf16.mxu0 0
        %3171 = vmatpush1.bf16.msra.mxu0 0
        %3172 = vmatprep.subr.bf16.mxu0 0
        %3173 = vmatpush1.bf16.msra.mxu0 0
        %3174 = vmatprep.subr.bf16.mxu0 0
        %3175 = vmatpush1.bf16.msra.mxu0 0
        %3176 = vmatprep.subr.bf16.mxu0 0
        %3177 = vmatpush1.bf16.msra.mxu0 0
        %3178 = vmatprep.subr.bf16.mxu0 0
        %3179 = vmatpush1.bf16.msra.mxu0 0
        %3180 = vmatprep.subr.bf16.mxu0 0
        %3181 = vmatpush1.bf16.msra.mxu0 0
        %3182 = vmatprep.subr.bf16.mxu0 0
        %3183 = vmatpush1.bf16.msra.mxu0 0
        %3184 = vmatprep.subr.bf16.mxu0 0
        %3185 = vmatpush1.bf16.msra.mxu0 0
        %3186 = vmatprep.subr.bf16.mxu0 0
        %3187 = vmatpush1.bf16.msra.mxu0 0
        %3188 = vmatprep.subr.bf16.mxu0 0
        %3189 = vmatpush1.bf16.msra.mxu0 0
        %3190 = vmatprep.mubr.bf16.mxu0 0
        %3191 = vmatmul.mubr.bf16.gmra.mrb[0].mxu0 %v3138
        %v3192 = vpop.f32.mrb[0].mxu0
        %v3193 = vadd.f32 0.0, %v3192
        %v3194 = vpop.f32.mrb[0].mxu0
        %v3195 = vadd.f32 0.0, %v3194
        %v3196 = vpop.f32.mrb[0].mxu0
        %v3197 = vpop.f32.mrb[0].mxu0
        %3198 = vdwg.mxu0
        %3199 = vmatprep.subr.bf16.mxu0 %v3150
        %3200 = vmatpush1.bf16.msra.mxu0 %v3147
        %3201 = vmatprep.subr.bf16.mxu0 0
        %3202 = vmatpush1.bf16.msra.mxu0 0
        %3203 = vmatprep.subr.bf16.mxu0 0
        %3204 = vmatpush1.bf16.msra.mxu0 0
        %3205 = vmatprep.subr.bf16.mxu0 0
        %3206 = vmatpush1.bf16.msra.mxu0 0
        %3207 = vmatprep.subr.bf16.mxu0 0
        %3208 = vmatpush1.bf16.msra.mxu0 0
        %3209 = vmatprep.subr.bf16.mxu0 0
        %3210 = vmatpush1.bf16.msra.mxu0 0
        %3211 = vmatprep.subr.bf16.mxu0 0
        %3212 = vmatpush1.bf16.msra.mxu0 0
        %3213 = vmatprep.subr.bf16.mxu0 0
        %3214 = vmatpush1.bf16.msra.mxu0 0
        %3215 = vmatprep.subr.bf16.mxu0 0
        %3216 = vmatpush1.bf16.msra.mxu0 0
        %3217 = vmatprep.subr.bf16.mxu0 0
        %3218 = vmatpush1.bf16.msra.mxu0 0
        %3219 = vmatprep.subr.bf16.mxu0 0
        %3220 = vmatpush1.bf16.msra.mxu0 0
        %3221 = vmatprep.subr.bf16.mxu0 0
        %3222 = vmatpush1.bf16.msra.mxu0 0
        %3223 = vmatprep.subr.bf16.mxu0 0
        %3224 = vmatpush1.bf16.msra.mxu0 0
        %3225 = vmatprep.subr.bf16.mxu0 0
        %3226 = vmatpush1.bf16.msra.mxu0 0
        %3227 = vmatprep.subr.bf16.mxu0 0
        %3228 = vmatpush1.bf16.msra.mxu0 0
        %3229 = vmatprep.subr.bf16.mxu0 0
        %3230 = vmatpush1.bf16.msra.mxu0 0
        %3231 = vmatprep.mubr.bf16.mxu0 0
        %3232 = vmatmul.mubr.bf16.gmra.mrb[0].mxu0 %v3138
        %v3233 = vpop.f32.mrb[0].mxu0
        %v3234 = vadd.f32 0.0, %v3233
        %v3235 = vpop.f32.mrb[0].mxu0
        %v3236 = vadd.f32 0.0, %v3235
        %v3237 = vpop.f32.mrb[0].mxu0
        %v3238 = vpop.f32.mrb[0].mxu0
        %3239 = vdwg.mxu0
        %3240 = vmatprep.subr.bf16.mxu0 %v3156
        %3241 = vmatpush1.bf16.msra.mxu0 %v3153
        %3242 = vmatprep.subr.bf16.mxu0 0
        %3243 = vmatpush1.bf16.msra.mxu0 0
        %3244 = vmatprep.subr.bf16.mxu0 0
        %3245 = vmatpush1.bf16.msra.mxu0 0
        %3246 = vmatprep.subr.bf16.mxu0 0
        %3247 = vmatpush1.bf16.msra.mxu0 0
        %3248 = vmatprep.subr.bf16.mxu0 0
        %3249 = vmatpush1.bf16.msra.mxu0 0
        %3250 = vmatprep.subr.bf16.mxu0 0
        %3251 = vmatpush1.bf16.msra.mxu0 0
        %3252 = vmatprep.subr.bf16.mxu0 0
        %3253 = vmatpush1.bf16.msra.mxu0 0
        %3254 = vmatprep.subr.bf16.mxu0 0
        %3255 = vmatpush1.bf16.msra.mxu0 0
        %3256 = vmatprep.subr.bf16.mxu0 0
        %3257 = vmatpush1.bf16.msra.mxu0 0
        %3258 = vmatprep.subr.bf16.mxu0 0
        %3259 = vmatpush1.bf16.msra.mxu0 0
        %3260 = vmatprep.subr.bf16.mxu0 0
        %3261 = vmatpush1.bf16.msra.mxu0 0
        %3262 = vmatprep.subr.bf16.mxu0 0
        %3263 = vmatpush1.bf16.msra.mxu0 0
        %3264 = vmatprep.subr.bf16.mxu0 0
        %3265 = vmatpush1.bf16.msra.mxu0 0
        %3266 = vmatprep.subr.bf16.mxu0 0
        %3267 = vmatpush1.bf16.msra.mxu0 0
        %3268 = vmatprep.subr.bf16.mxu0 0
        %3269 = vmatpush1.bf16.msra.mxu0 0
        %3270 = vmatprep.subr.bf16.mxu0 0
        %3271 = vmatpush1.bf16.msra.mxu0 0
        %3272 = vmatprep.mubr.bf16.mxu0 0
        %3273 = vmatmul.mubr.bf16.gmra.mrb[0].mxu0 %v3138
        %v3274 = vpop.f32.mrb[0].mxu0
        %v3275 = vadd.f32 0.0, %v3274
        %v3276 = vpop.f32.mrb[0].mxu0
        %v3277 = vadd.f32 0.0, %v3276
        %v3278 = vpop.f32.mrb[0].mxu0
        %v3279 = vpop.f32.mrb[0].mxu0
        %3280 = vdwg.mxu0
        %v3281 = vld [vmem:[#allocation4] sm:$0xff]
        %v3282 = vld [vmem:[#allocation4 + $0x8] sm:$0xff]
        %v3283 = vld [vmem:[#allocation4 + $0x10] sm:$0xff]
        %v3284 = vld [vmem:[#allocation4 + $0x18] sm:$0xff]
        %v3285 = vld [vmem:[#allocation4 + $0x20] sm:$0xff]
        %v3286 = vld [vmem:[#allocation4 + $0x28] sm:$0xff]
        %v3287 = vadd.f32 %v3281, %v3193
        %v3288 = vadd.f32 %v3282, %v3195
        %v3289 = vadd.f32 %v3283, %v3234
        %v3290 = vadd.f32 %v3284, %v3236
        %v3291 = vadd.f32 %v3285, %v3275
        %v3292 = vadd.f32 %v3286, %v3277
        %3293 = vst [vmem:[#allocation4] sm:$0xff] %v3287
        %3294 = vst [vmem:[#allocation4 + $0x8] sm:$0xff] %v3288
        %3295 = vst [vmem:[#allocation4 + $0x10] sm:$0xff] %v3289
        %3296 = vst [vmem:[#allocation4 + $0x18] sm:$0xff] %v3290
        %3297 = vst [vmem:[#allocation4 + $0x20] sm:$0xff] %v3291
        %3298 = vst.msk [vmem:[#allocation4 + $0x28] sm:$0xff] %vm520, %v3292
        %s3299 = scalar_lea.vmem %s2, 60
        %v3300 = vld [vmem:[%s3299] sm:$0xf]
        %v3301 = vld [vmem:[#allocation2 + $0x4] sm:$0xff]
        %v3302 = vld [vmem:[#allocation2 + $0xc] sm:$0xff]
        %v3303 = vld [vmem:[#allocation2 + $0x14] sm:$0xff]
        %v3307 = vunpack.c.l.b16 %v3301
        %v3308 = vunpack.c.h.b16 %v3301
        %v3309 = vunpack.c.l.b16 %v3302
        %v3310 = vunpack.c.h.b16 %v3302
        %v3311 = vunpack.c.l.b16 %v3303
        %v3312 = vunpack.c.h.b16 %v3303
        %v3313 = vpack.c.b16 %v3307, %v3307
        %v3314 = vpack.c.b16 %v3308, %v3308
        %v3315 = vpack.c.b16 %v3309, %v3309
        %v3316 = vpack.c.b16 %v3310, %v3310
        %v3317 = vpack.c.b16 %v3311, %v3311
        %v3318 = vpack.c.b16 %v3312, %v3312
        %3319 = vrot.lane.b32.xlu0 %v3313, 110
        %v3320 = vpop.permute.xlu0 %3319
        %3321 = vrot.lane.b32.xlu0 %v3314, 110
        %v3322 = vpop.permute.xlu0 %3321
        %3323 = vrot.lane.b32.xlu0 %v3315, 110
        %v3324 = vpop.permute.xlu0 %3323
        %3325 = vrot.lane.b32.xlu0 %v3316, 110
        %v3326 = vpop.permute.xlu0 %3325
        %3327 = vrot.lane.b32.xlu0 %v3317, 110
        %v3328 = vpop.permute.xlu0 %3327
        %3329 = vrot.lane.b32.xlu0 %v3318, 110
        %v3330 = vpop.permute.xlu0 %3329
        %v3331 = vsel %vm1554, %v3320, %v3322
        %v3332 = vsel %vm1554, %v3322, %v3324
        %v3333 = vsel %vm1554, %v3324, %v3326
        %v3334 = vsel %vm1554, %v3326, %v3328
        %v3335 = vsel %vm1554, %v3328, %v3330
        %v3337 = vsel %vm369, %v3300, 0
        %v3340 = vsel %vm373, %v3331, 0
        %v3343 = vsel %vm373, %v3332, 0
        %v3346 = vsel %vm373, %v3333, 0
        %v3349 = vsel %vm373, %v3334, 0
        %v3352 = vsel %vm373, %v3335, 0
        %v3355 = vsel %vm373, %v3330, 0
        %3357 = vmatprep.subr.bf16.mxu0 %v3343
        %3358 = vmatpush1.bf16.msra.mxu0 %v3340
        %3359 = vmatprep.subr.bf16.mxu0 0
        %3360 = vmatpush1.bf16.msra.mxu0 0
        %3361 = vmatprep.subr.bf16.mxu0 0
        %3362 = vmatpush1.bf16.msra.mxu0 0
        %3363 = vmatprep.subr.bf16.mxu0 0
        %3364 = vmatpush1.bf16.msra.mxu0 0
        %3365 = vmatprep.subr.bf16.mxu0 0
        %3366 = vmatpush1.bf16.msra.mxu0 0
        %3367 = vmatprep.subr.bf16.mxu0 0
        %3368 = vmatpush1.bf16.msra.mxu0 0
        %3369 = vmatprep.subr.bf16.mxu0 0
        %3370 = vmatpush1.bf16.msra.mxu0 0
        %3371 = vmatprep.subr.bf16.mxu0 0
        %3372 = vmatpush1.bf16.msra.mxu0 0
        %3373 = vmatprep.subr.bf16.mxu0 0
        %3374 = vmatpush1.bf16.msra.mxu0 0
        %3375 = vmatprep.subr.bf16.mxu0 0
        %3376 = vmatpush1.bf16.msra.mxu0 0
        %3377 = vmatprep.subr.bf16.mxu0 0
        %3378 = vmatpush1.bf16.msra.mxu0 0
        %3379 = vmatprep.subr.bf16.mxu0 0
        %3380 = vmatpush1.bf16.msra.mxu0 0
        %3381 = vmatprep.subr.bf16.mxu0 0
        %3382 = vmatpush1.bf16.msra.mxu0 0
        %3383 = vmatprep.subr.bf16.mxu0 0
        %3384 = vmatpush1.bf16.msra.mxu0 0
        %3385 = vmatprep.subr.bf16.mxu0 0
        %3386 = vmatpush1.bf16.msra.mxu0 0
        %3387 = vmatprep.subr.bf16.mxu0 0
        %3388 = vmatpush1.bf16.msra.mxu0 0
        %3389 = vmatprep.mubr.bf16.mxu0 0
        %3390 = vmatmul.mubr.bf16.gmra.mrb[0].mxu0 %v3337
        %v3391 = vpop.f32.mrb[0].mxu0
        %v3392 = vadd.f32 0.0, %v3391
        %v3393 = vpop.f32.mrb[0].mxu0
        %v3394 = vadd.f32 0.0, %v3393
        %v3395 = vpop.f32.mrb[0].mxu0
        %v3396 = vpop.f32.mrb[0].mxu0
        %3397 = vdwg.mxu0
        %3398 = vmatprep.subr.bf16.mxu0 %v3349
        %3399 = vmatpush1.bf16.msra.mxu0 %v3346
        %3400 = vmatprep.subr.bf16.mxu0 0
        %3401 = vmatpush1.bf16.msra.mxu0 0
        %3402 = vmatprep.subr.bf16.mxu0 0
        %3403 = vmatpush1.bf16.msra.mxu0 0
        %3404 = vmatprep.subr.bf16.mxu0 0
        %3405 = vmatpush1.bf16.msra.mxu0 0
        %3406 = vmatprep.subr.bf16.mxu0 0
        %3407 = vmatpush1.bf16.msra.mxu0 0
        %3408 = vmatprep.subr.bf16.mxu0 0
        %3409 = vmatpush1.bf16.msra.mxu0 0
        %3410 = vmatprep.subr.bf16.mxu0 0
        %3411 = vmatpush1.bf16.msra.mxu0 0
        %3412 = vmatprep.subr.bf16.mxu0 0
        %3413 = vmatpush1.bf16.msra.mxu0 0
        %3414 = vmatprep.subr.bf16.mxu0 0
        %3415 = vmatpush1.bf16.msra.mxu0 0
        %3416 = vmatprep.subr.bf16.mxu0 0
        %3417 = vmatpush1.bf16.msra.mxu0 0
        %3418 = vmatprep.subr.bf16.mxu0 0
        %3419 = vmatpush1.bf16.msra.mxu0 0
        %3420 = vmatprep.subr.bf16.mxu0 0
        %3421 = vmatpush1.bf16.msra.mxu0 0
        %3422 = vmatprep.subr.bf16.mxu0 0
        %3423 = vmatpush1.bf16.msra.mxu0 0
        %3424 = vmatprep.subr.bf16.mxu0 0
        %3425 = vmatpush1.bf16.msra.mxu0 0
        %3426 = vmatprep.subr.bf16.mxu0 0
        %3427 = vmatpush1.bf16.msra.mxu0 0
        %3428 = vmatprep.subr.bf16.mxu0 0
        %3429 = vmatpush1.bf16.msra.mxu0 0
        %3430 = vmatprep.mubr.bf16.mxu0 0
        %3431 = vmatmul.mubr.bf16.gmra.mrb[0].mxu0 %v3337
        %v3432 = vpop.f32.mrb[0].mxu0
        %v3433 = vadd.f32 0.0, %v3432
        %v3434 = vpop.f32.mrb[0].mxu0
        %v3435 = vadd.f32 0.0, %v3434
        %v3436 = vpop.f32.mrb[0].mxu0
        %v3437 = vpop.f32.mrb[0].mxu0
        %3438 = vdwg.mxu0
        %3439 = vmatprep.subr.bf16.mxu0 %v3355
        %3440 = vmatpush1.bf16.msra.mxu0 %v3352
        %3441 = vmatprep.subr.bf16.mxu0 0
        %3442 = vmatpush1.bf16.msra.mxu0 0
        %3443 = vmatprep.subr.bf16.mxu0 0
        %3444 = vmatpush1.bf16.msra.mxu0 0
        %3445 = vmatprep.subr.bf16.mxu0 0
        %3446 = vmatpush1.bf16.msra.mxu0 0
        %3447 = vmatprep.subr.bf16.mxu0 0
        %3448 = vmatpush1.bf16.msra.mxu0 0
        %3449 = vmatprep.subr.bf16.mxu0 0
        %3450 = vmatpush1.bf16.msra.mxu0 0
        %3451 = vmatprep.subr.bf16.mxu0 0
        %3452 = vmatpush1.bf16.msra.mxu0 0
        %3453 = vmatprep.subr.bf16.mxu0 0
        %3454 = vmatpush1.bf16.msra.mxu0 0
        %3455 = vmatprep.subr.bf16.mxu0 0
        %3456 = vmatpush1.bf16.msra.mxu0 0
        %3457 = vmatprep.subr.bf16.mxu0 0
        %3458 = vmatpush1.bf16.msra.mxu0 0
        %3459 = vmatprep.subr.bf16.mxu0 0
        %3460 = vmatpush1.bf16.msra.mxu0 0
        %3461 = vmatprep.subr.bf16.mxu0 0
        %3462 = vmatpush1.bf16.msra.mxu0 0
        %3463 = vmatprep.subr.bf16.mxu0 0
        %3464 = vmatpush1.bf16.msra.mxu0 0
        %3465 = vmatprep.subr.bf16.mxu0 0
        %3466 = vmatpush1.bf16.msra.mxu0 0
        %3467 = vmatprep.subr.bf16.mxu0 0
        %3468 = vmatpush1.bf16.msra.mxu0 0
        %3469 = vmatprep.subr.bf16.mxu0 0
        %3470 = vmatpush1.bf16.msra.mxu0 0
        %3471 = vmatprep.mubr.bf16.mxu0 0
        %3472 = vmatmul.mubr.bf16.gmra.mrb[0].mxu0 %v3337
        %v3473 = vpop.f32.mrb[0].mxu0
        %v3474 = vadd.f32 0.0, %v3473
        %v3475 = vpop.f32.mrb[0].mxu0
        %v3476 = vadd.f32 0.0, %v3475
        %v3477 = vpop.f32.mrb[0].mxu0
        %v3478 = vpop.f32.mrb[0].mxu0
        %3479 = vdwg.mxu0
        %v3480 = vld [vmem:[#allocation4] sm:$0xff]
        %v3481 = vld [vmem:[#allocation4 + $0x8] sm:$0xff]
        %v3482 = vld [vmem:[#allocation4 + $0x10] sm:$0xff]
        %v3483 = vld [vmem:[#allocation4 + $0x18] sm:$0xff]
        %v3484 = vld [vmem:[#allocation4 + $0x20] sm:$0xff]
        %v3485 = vld [vmem:[#allocation4 + $0x28] sm:$0xff]
        %v3486 = vadd.f32 %v3480, %v3392
        %v3487 = vadd.f32 %v3481, %v3394
        %v3488 = vadd.f32 %v3482, %v3433
        %v3489 = vadd.f32 %v3483, %v3435
        %v3490 = vadd.f32 %v3484, %v3474
        %v3491 = vadd.f32 %v3485, %v3476
        %3492 = vst [vmem:[#allocation4] sm:$0xff] %v3486
        %3493 = vst [vmem:[#allocation4 + $0x8] sm:$0xff] %v3487
        %3494 = vst [vmem:[#allocation4 + $0x10] sm:$0xff] %v3488
        %3495 = vst [vmem:[#allocation4 + $0x18] sm:$0xff] %v3489
        %3496 = vst [vmem:[#allocation4 + $0x20] sm:$0xff] %v3490
        %3497 = vst.msk [vmem:[#allocation4 + $0x28] sm:$0xff] %vm520, %v3491
        %s3498 = scalar_lea.vmem %s2, 64
        %v3499 = vld [vmem:[%s3498] sm:$0xf]
        %v3500 = vld [vmem:[#allocation2 + $0x4] sm:$0xff]
        %v3501 = vld [vmem:[#allocation2 + $0xc] sm:$0xff]
        %v3502 = vld [vmem:[#allocation2 + $0x14] sm:$0xff]
        %v3506 = vunpack.c.l.b16 %v3500
        %v3507 = vunpack.c.h.b16 %v3500
        %v3508 = vunpack.c.l.b16 %v3501
        %v3509 = vunpack.c.h.b16 %v3501
        %v3510 = vunpack.c.l.b16 %v3502
        %v3511 = vunpack.c.h.b16 %v3502
        %v3512 = vpack.c.b16 %v3506, %v3506
        %v3513 = vpack.c.b16 %v3507, %v3507
        %v3514 = vpack.c.b16 %v3508, %v3508
        %v3515 = vpack.c.b16 %v3509, %v3509
        %v3516 = vpack.c.b16 %v3510, %v3510
        %v3517 = vpack.c.b16 %v3511, %v3511
        %3518 = vrot.lane.b32.xlu0 %v3512, 109
        %v3519 = vpop.permute.xlu0 %3518
        %3520 = vrot.lane.b32.xlu0 %v3513, 109
        %v3521 = vpop.permute.xlu0 %3520
        %3522 = vrot.lane.b32.xlu0 %v3514, 109
        %v3523 = vpop.permute.xlu0 %3522
        %3524 = vrot.lane.b32.xlu0 %v3515, 109
        %v3525 = vpop.permute.xlu0 %3524
        %3526 = vrot.lane.b32.xlu0 %v3516, 109
        %v3527 = vpop.permute.xlu0 %3526
        %3528 = vrot.lane.b32.xlu0 %v3517, 109
        %v3529 = vpop.permute.xlu0 %3528
        %v3530 = vsel %vm1754, %v3519, %v3521
        %v3531 = vsel %vm1754, %v3521, %v3523
        %v3532 = vsel %vm1754, %v3523, %v3525
        %v3533 = vsel %vm1754, %v3525, %v3527
        %v3534 = vsel %vm1754, %v3527, %v3529
        %v3536 = vsel %vm369, %v3499, 0
        %v3539 = vsel %vm373, %v3530, 0
        %v3542 = vsel %vm373, %v3531, 0
        %v3545 = vsel %vm373, %v3532, 0
        %v3548 = vsel %vm373, %v3533, 0
        %v3551 = vsel %vm373, %v3534, 0
        %v3554 = vsel %vm373, %v3529, 0
        %3556 = vmatprep.subr.bf16.mxu0 %v3542
        %3557 = vmatpush1.bf16.msra.mxu0 %v3539
        %3558 = vmatprep.subr.bf16.mxu0 0
        %3559 = vmatpush1.bf16.msra.mxu0 0
        %3560 = vmatprep.subr.bf16.mxu0 0
        %3561 = vmatpush1.bf16.msra.mxu0 0
        %3562 = vmatprep.subr.bf16.mxu0 0
        %3563 = vmatpush1.bf16.msra.mxu0 0
        %3564 = vmatprep.subr.bf16.mxu0 0
        %3565 = vmatpush1.bf16.msra.mxu0 0
        %3566 = vmatprep.subr.bf16.mxu0 0
        %3567 = vmatpush1.bf16.msra.mxu0 0
        %3568 = vmatprep.subr.bf16.mxu0 0
        %3569 = vmatpush1.bf16.msra.mxu0 0
        %3570 = vmatprep.subr.bf16.mxu0 0
        %3571 = vmatpush1.bf16.msra.mxu0 0
        %3572 = vmatprep.subr.bf16.mxu0 0
        %3573 = vmatpush1.bf16.msra.mxu0 0
        %3574 = vmatprep.subr.bf16.mxu0 0
        %3575 = vmatpush1.bf16.msra.mxu0 0
        %3576 = vmatprep.subr.bf16.mxu0 0
        %3577 = vmatpush1.bf16.msra.mxu0 0
        %3578 = vmatprep.subr.bf16.mxu0 0
        %3579 = vmatpush1.bf16.msra.mxu0 0
        %3580 = vmatprep.subr.bf16.mxu0 0
        %3581 = vmatpush1.bf16.msra.mxu0 0
        %3582 = vmatprep.subr.bf16.mxu0 0
        %3583 = vmatpush1.bf16.msra.mxu0 0
        %3584 = vmatprep.subr.bf16.mxu0 0
        %3585 = vmatpush1.bf16.msra.mxu0 0
        %3586 = vmatprep.subr.bf16.mxu0 0
        %3587 = vmatpush1.bf16.msra.mxu0 0
        %3588 = vmatprep.mubr.bf16.mxu0 0
        %3589 = vmatmul.mubr.bf16.gmra.mrb[0].mxu0 %v3536
        %v3590 = vpop.f32.mrb[0].mxu0
        %v3591 = vadd.f32 0.0, %v3590
        %v3592 = vpop.f32.mrb[0].mxu0
        %v3593 = vadd.f32 0.0, %v3592
        %v3594 = vpop.f32.mrb[0].mxu0
        %v3595 = vpop.f32.mrb[0].mxu0
        %3596 = vdwg.mxu0
        %3597 = vmatprep.subr.bf16.mxu0 %v3548
        %3598 = vmatpush1.bf16.msra.mxu0 %v3545
        %3599 = vmatprep.subr.bf16.mxu0 0
        %3600 = vmatpush1.bf16.msra.mxu0 0
        %3601 = vmatprep.subr.bf16.mxu0 0
        %3602 = vmatpush1.bf16.msra.mxu0 0
        %3603 = vmatprep.subr.bf16.mxu0 0
        %3604 = vmatpush1.bf16.msra.mxu0 0
        %3605 = vmatprep.subr.bf16.mxu0 0
        %3606 = vmatpush1.bf16.msra.mxu0 0
        %3607 = vmatprep.subr.bf16.mxu0 0
        %3608 = vmatpush1.bf16.msra.mxu0 0
        %3609 = vmatprep.subr.bf16.mxu0 0
        %3610 = vmatpush1.bf16.msra.mxu0 0
        %3611 = vmatprep.subr.bf16.mxu0 0
        %3612 = vmatpush1.bf16.msra.mxu0 0
        %3613 = vmatprep.subr.bf16.mxu0 0
        %3614 = vmatpush1.bf16.msra.mxu0 0
        %3615 = vmatprep.subr.bf16.mxu0 0
        %3616 = vmatpush1.bf16.msra.mxu0 0
        %3617 = vmatprep.subr.bf16.mxu0 0
        %3618 = vmatpush1.bf16.msra.mxu0 0
        %3619 = vmatprep.subr.bf16.mxu0 0
        %3620 = vmatpush1.bf16.msra.mxu0 0
        %3621 = vmatprep.subr.bf16.mxu0 0
        %3622 = vmatpush1.bf16.msra.mxu0 0
        %3623 = vmatprep.subr.bf16.mxu0 0
        %3624 = vmatpush1.bf16.msra.mxu0 0
        %3625 = vmatprep.subr.bf16.mxu0 0
        %3626 = vmatpush1.bf16.msra.mxu0 0
        %3627 = vmatprep.subr.bf16.mxu0 0
        %3628 = vmatpush1.bf16.msra.mxu0 0
        %3629 = vmatprep.mubr.bf16.mxu0 0
        %3630 = vmatmul.mubr.bf16.gmra.mrb[0].mxu0 %v3536
        %v3631 = vpop.f32.mrb[0].mxu0
        %v3632 = vadd.f32 0.0, %v3631
        %v3633 = vpop.f32.mrb[0].mxu0
        %v3634 = vadd.f32 0.0, %v3633
        %v3635 = vpop.f32.mrb[0].mxu0
        %v3636 = vpop.f32.mrb[0].mxu0
        %3637 = vdwg.mxu0
        %3638 = vmatprep.subr.bf16.mxu0 %v3554
        %3639 = vmatpush1.bf16.msra.mxu0 %v3551
        %3640 = vmatprep.subr.bf16.mxu0 0
        %3641 = vmatpush1.bf16.msra.mxu0 0
        %3642 = vmatprep.subr.bf16.mxu0 0
        %3643 = vmatpush1.bf16.msra.mxu0 0
        %3644 = vmatprep.subr.bf16.mxu0 0
        %3645 = vmatpush1.bf16.msra.mxu0 0
        %3646 = vmatprep.subr.bf16.mxu0 0
        %3647 = vmatpush1.bf16.msra.mxu0 0
        %3648 = vmatprep.subr.bf16.mxu0 0
        %3649 = vmatpush1.bf16.msra.mxu0 0
        %3650 = vmatprep.subr.bf16.mxu0 0
        %3651 = vmatpush1.bf16.msra.mxu0 0
        %3652 = vmatprep.subr.bf16.mxu0 0
        %3653 = vmatpush1.bf16.msra.mxu0 0
        %3654 = vmatprep.subr.bf16.mxu0 0
        %3655 = vmatpush1.bf16.msra.mxu0 0
        %3656 = vmatprep.subr.bf16.mxu0 0
        %3657 = vmatpush1.bf16.msra.mxu0 0
        %3658 = vmatprep.subr.bf16.mxu0 0
        %3659 = vmatpush1.bf16.msra.mxu0 0
        %3660 = vmatprep.subr.bf16.mxu0 0
        %3661 = vmatpush1.bf16.msra.mxu0 0
        %3662 = vmatprep.subr.bf16.mxu0 0
        %3663 = vmatpush1.bf16.msra.mxu0 0
        %3664 = vmatprep.subr.bf16.mxu0 0
        %3665 = vmatpush1.bf16.msra.mxu0 0
        %3666 = vmatprep.subr.bf16.mxu0 0
        %3667 = vmatpush1.bf16.msra.mxu0 0
        %3668 = vmatprep.subr.bf16.mxu0 0
        %3669 = vmatpush1.bf16.msra.mxu0 0
        %3670 = vmatprep.mubr.bf16.mxu0 0
        %3671 = vmatmul.mubr.bf16.gmra.mrb[0].mxu0 %v3536
        %v3672 = vpop.f32.mrb[0].mxu0
        %v3673 = vadd.f32 0.0, %v3672
        %v3674 = vpop.f32.mrb[0].mxu0
        %v3675 = vadd.f32 0.0, %v3674
        %v3676 = vpop.f32.mrb[0].mxu0
        %v3677 = vpop.f32.mrb[0].mxu0
        %3678 = vdwg.mxu0
        %v3679 = vld [vmem:[#allocation4] sm:$0xff]
        %v3680 = vld [vmem:[#allocation4 + $0x8] sm:$0xff]
        %v3681 = vld [vmem:[#allocation4 + $0x10] sm:$0xff]
        %v3682 = vld [vmem:[#allocation4 + $0x18] sm:$0xff]
        %v3683 = vld [vmem:[#allocation4 + $0x20] sm:$0xff]
        %v3684 = vld [vmem:[#allocation4 + $0x28] sm:$0xff]
        %v3685 = vadd.f32 %v3679, %v3591
        %v3686 = vadd.f32 %v3680, %v3593
        %v3687 = vadd.f32 %v3681, %v3632
        %v3688 = vadd.f32 %v3682, %v3634
        %v3689 = vadd.f32 %v3683, %v3673
        %v3690 = vadd.f32 %v3684, %v3675
        %3691 = vst [vmem:[#allocation4] sm:$0xff] %v3685
        %3692 = vst [vmem:[#allocation4 + $0x8] sm:$0xff] %v3686
        %3693 = vst [vmem:[#allocation4 + $0x10] sm:$0xff] %v3687
        %3694 = vst [vmem:[#allocation4 + $0x18] sm:$0xff] %v3688
        %3695 = vst [vmem:[#allocation4 + $0x20] sm:$0xff] %v3689
        %3696 = vst.msk [vmem:[#allocation4 + $0x28] sm:$0xff] %vm520, %v3690
        %s3697 = scalar_lea.vmem %s2, 68
        %v3698 = vld [vmem:[%s3697] sm:$0xf]
        %v3699 = vld [vmem:[#allocation2 + $0x4] sm:$0xff]
        %v3700 = vld [vmem:[#allocation2 + $0xc] sm:$0xff]
        %v3701 = vld [vmem:[#allocation2 + $0x14] sm:$0xff]
        %v3705 = vunpack.c.l.b16 %v3699
        %v3706 = vunpack.c.h.b16 %v3699
        %v3707 = vunpack.c.l.b16 %v3700
        %v3708 = vunpack.c.h.b16 %v3700
        %v3709 = vunpack.c.l.b16 %v3701
        %v3710 = vunpack.c.h.b16 %v3701
        %v3711 = vpack.c.b16 %v3705, %v3705
        %v3712 = vpack.c.b16 %v3706, %v3706
        %v3713 = vpack.c.b16 %v3707, %v3707
        %v3714 = vpack.c.b16 %v3708, %v3708
        %v3715 = vpack.c.b16 %v3709, %v3709
        %v3716 = vpack.c.b16 %v3710, %v3710
        %3717 = vrot.lane.b32.xlu0 %v3711, 108
        %v3718 = vpop.permute.xlu0 %3717
        %3719 = vrot.lane.b32.xlu0 %v3712, 108
        %v3720 = vpop.permute.xlu0 %3719
        %3721 = vrot.lane.b32.xlu0 %v3713, 108
        %v3722 = vpop.permute.xlu0 %3721
        %3723 = vrot.lane.b32.xlu0 %v3714, 108
        %v3724 = vpop.permute.xlu0 %3723
        %3725 = vrot.lane.b32.xlu0 %v3715, 108
        %v3726 = vpop.permute.xlu0 %3725
        %3727 = vrot.lane.b32.xlu0 %v3716, 108
        %v3728 = vpop.permute.xlu0 %3727
        %v3729 = vsel %vm1954, %v3718, %v3720
        %v3730 = vsel %vm1954, %v3720, %v3722
        %v3731 = vsel %vm1954, %v3722, %v3724
        %v3732 = vsel %vm1954, %v3724, %v3726
        %v3733 = vsel %vm1954, %v3726, %v3728
        %v3735 = vsel %vm369, %v3698, 0
        %v3738 = vsel %vm373, %v3729, 0
        %v3741 = vsel %vm373, %v3730, 0
        %v3744 = vsel %vm373, %v3731, 0
        %v3747 = vsel %vm373, %v3732, 0
        %v3750 = vsel %vm373, %v3733, 0
        %v3753 = vsel %vm373, %v3728, 0
        %3755 = vmatprep.subr.bf16.mxu0 %v3741
        %3756 = vmatpush1.bf16.msra.mxu0 %v3738
        %3757 = vmatprep.subr.bf16.mxu0 0
        %3758 = vmatpush1.bf16.msra.mxu0 0
        %3759 = vmatprep.subr.bf16.mxu0 0
        %3760 = vmatpush1.bf16.msra.mxu0 0
        %3761 = vmatprep.subr.bf16.mxu0 0
        %3762 = vmatpush1.bf16.msra.mxu0 0
        %3763 = vmatprep.subr.bf16.mxu0 0
        %3764 = vmatpush1.bf16.msra.mxu0 0
        %3765 = vmatprep.subr.bf16.mxu0 0
        %3766 = vmatpush1.bf16.msra.mxu0 0
        %3767 = vmatprep.subr.bf16.mxu0 0
        %3768 = vmatpush1.bf16.msra.mxu0 0
        %3769 = vmatprep.subr.bf16.mxu0 0
        %3770 = vmatpush1.bf16.msra.mxu0 0
        %3771 = vmatprep.subr.bf16.mxu0 0
        %3772 = vmatpush1.bf16.msra.mxu0 0
        %3773 = vmatprep.subr.bf16.mxu0 0
        %3774 = vmatpush1.bf16.msra.mxu0 0
        %3775 = vmatprep.subr.bf16.mxu0 0
        %3776 = vmatpush1.bf16.msra.mxu0 0
        %3777 = vmatprep.subr.bf16.mxu0 0
        %3778 = vmatpush1.bf16.msra.mxu0 0
        %3779 = vmatprep.subr.bf16.mxu0 0
        %3780 = vmatpush1.bf16.msra.mxu0 0
        %3781 = vmatprep.subr.bf16.mxu0 0
        %3782 = vmatpush1.bf16.msra.mxu0 0
        %3783 = vmatprep.subr.bf16.mxu0 0
        %3784 = vmatpush1.bf16.msra.mxu0 0
        %3785 = vmatprep.subr.bf16.mxu0 0
        %3786 = vmatpush1.bf16.msra.mxu0 0
        %3787 = vmatprep.mubr.bf16.mxu0 0
        %3788 = vmatmul.mubr.bf16.gmra.mrb[0].mxu0 %v3735
        %v3789 = vpop.f32.mrb[0].mxu0
        %v3790 = vadd.f32 0.0, %v3789
        %v3791 = vpop.f32.mrb[0].mxu0
        %v3792 = vadd.f32 0.0, %v3791
        %v3793 = vpop.f32.mrb[0].mxu0
        %v3794 = vpop.f32.mrb[0].mxu0
        %3795 = vdwg.mxu0
        %3796 = vmatprep.subr.bf16.mxu0 %v3747
        %3797 = vmatpush1.bf16.msra.mxu0 %v3744
        %3798 = vmatprep.subr.bf16.mxu0 0
        %3799 = vmatpush1.bf16.msra.mxu0 0
        %3800 = vmatprep.subr.bf16.mxu0 0
        %3801 = vmatpush1.bf16.msra.mxu0 0
        %3802 = vmatprep.subr.bf16.mxu0 0
        %3803 = vmatpush1.bf16.msra.mxu0 0
        %3804 = vmatprep.subr.bf16.mxu0 0
        %3805 = vmatpush1.bf16.msra.mxu0 0
        %3806 = vmatprep.subr.bf16.mxu0 0
        %3807 = vmatpush1.bf16.msra.mxu0 0
        %3808 = vmatprep.subr.bf16.mxu0 0
        %3809 = vmatpush1.bf16.msra.mxu0 0
        %3810 = vmatprep.subr.bf16.mxu0 0
        %3811 = vmatpush1.bf16.msra.mxu0 0
        %3812 = vmatprep.subr.bf16.mxu0 0
        %3813 = vmatpush1.bf16.msra.mxu0 0
        %3814 = vmatprep.subr.bf16.mxu0 0
        %3815 = vmatpush1.bf16.msra.mxu0 0
        %3816 = vmatprep.subr.bf16.mxu0 0
        %3817 = vmatpush1.bf16.msra.mxu0 0
        %3818 = vmatprep.subr.bf16.mxu0 0
        %3819 = vmatpush1.bf16.msra.mxu0 0
        %3820 = vmatprep.subr.bf16.mxu0 0
        %3821 = vmatpush1.bf16.msra.mxu0 0
        %3822 = vmatprep.subr.bf16.mxu0 0
        %3823 = vmatpush1.bf16.msra.mxu0 0
        %3824 = vmatprep.subr.bf16.mxu0 0
        %3825 = vmatpush1.bf16.msra.mxu0 0
        %3826 = vmatprep.subr.bf16.mxu0 0
        %3827 = vmatpush1.bf16.msra.mxu0 0
        %3828 = vmatprep.mubr.bf16.mxu0 0
        %3829 = vmatmul.mubr.bf16.gmra.mrb[0].mxu0 %v3735
        %v3830 = vpop.f32.mrb[0].mxu0
        %v3831 = vadd.f32 0.0, %v3830
        %v3832 = vpop.f32.mrb[0].mxu0
        %v3833 = vadd.f32 0.0, %v3832
        %v3834 = vpop.f32.mrb[0].mxu0
        %v3835 = vpop.f32.mrb[0].mxu0
        %3836 = vdwg.mxu0
        %3837 = vmatprep.subr.bf16.mxu0 %v3753
        %3838 = vmatpush1.bf16.msra.mxu0 %v3750
        %3839 = vmatprep.subr.bf16.mxu0 0
        %3840 = vmatpush1.bf16.msra.mxu0 0
        %3841 = vmatprep.subr.bf16.mxu0 0
        %3842 = vmatpush1.bf16.msra.mxu0 0
        %3843 = vmatprep.subr.bf16.mxu0 0
        %3844 = vmatpush1.bf16.msra.mxu0 0
        %3845 = vmatprep.subr.bf16.mxu0 0
        %3846 = vmatpush1.bf16.msra.mxu0 0
        %3847 = vmatprep.subr.bf16.mxu0 0
        %3848 = vmatpush1.bf16.msra.mxu0 0
        %3849 = vmatprep.subr.bf16.mxu0 0
        %3850 = vmatpush1.bf16.msra.mxu0 0
        %3851 = vmatprep.subr.bf16.mxu0 0
        %3852 = vmatpush1.bf16.msra.mxu0 0
        %3853 = vmatprep.subr.bf16.mxu0 0
        %3854 = vmatpush1.bf16.msra.mxu0 0
        %3855 = vmatprep.subr.bf16.mxu0 0
        %3856 = vmatpush1.bf16.msra.mxu0 0
        %3857 = vmatprep.subr.bf16.mxu0 0
        %3858 = vmatpush1.bf16.msra.mxu0 0
        %3859 = vmatprep.subr.bf16.mxu0 0
        %3860 = vmatpush1.bf16.msra.mxu0 0
        %3861 = vmatprep.subr.bf16.mxu0 0
        %3862 = vmatpush1.bf16.msra.mxu0 0
        %3863 = vmatprep.subr.bf16.mxu0 0
        %3864 = vmatpush1.bf16.msra.mxu0 0
        %3865 = vmatprep.subr.bf16.mxu0 0
        %3866 = vmatpush1.bf16.msra.mxu0 0
        %3867 = vmatprep.subr.bf16.mxu0 0
        %3868 = vmatpush1.bf16.msra.mxu0 0
        %3869 = vmatprep.mubr.bf16.mxu0 0
        %3870 = vmatmul.mubr.bf16.gmra.mrb[0].mxu0 %v3735
        %v3871 = vpop.f32.mrb[0].mxu0
        %v3872 = vadd.f32 0.0, %v3871
        %v3873 = vpop.f32.mrb[0].mxu0
        %v3874 = vadd.f32 0.0, %v3873
        %v3875 = vpop.f32.mrb[0].mxu0
        %v3876 = vpop.f32.mrb[0].mxu0
        %3877 = vdwg.mxu0
        %v3878 = vld [vmem:[#allocation4] sm:$0xff]
        %v3879 = vld [vmem:[#allocation4 + $0x8] sm:$0xff]
        %v3880 = vld [vmem:[#allocation4 + $0x10] sm:$0xff]
        %v3881 = vld [vmem:[#allocation4 + $0x18] sm:$0xff]
        %v3882 = vld [vmem:[#allocation4 + $0x20] sm:$0xff]
        %v3883 = vld [vmem:[#allocation4 + $0x28] sm:$0xff]
        %v3884 = vadd.f32 %v3878, %v3790
        %v3885 = vadd.f32 %v3879, %v3792
        %v3886 = vadd.f32 %v3880, %v3831
        %v3887 = vadd.f32 %v3881, %v3833
        %v3888 = vadd.f32 %v3882, %v3872
        %v3889 = vadd.f32 %v3883, %v3874
        %3890 = vst [vmem:[#allocation4] sm:$0xff] %v3884
        %3891 = vst [vmem:[#allocation4 + $0x8] sm:$0xff] %v3885
        %3892 = vst [vmem:[#allocation4 + $0x10] sm:$0xff] %v3886
        %3893 = vst [vmem:[#allocation4 + $0x18] sm:$0xff] %v3887
        %3894 = vst [vmem:[#allocation4 + $0x20] sm:$0xff] %v3888
        %3895 = vst.msk [vmem:[#allocation4 + $0x28] sm:$0xff] %vm520, %v3889
        %s3896 = scalar_lea.vmem %s2, 72
        %v3897 = vld [vmem:[%s3896] sm:$0xf]
        %v3898 = vld [vmem:[#allocation2 + $0x8] sm:$0xff]
        %v3899 = vld [vmem:[#allocation2 + $0x10] sm:$0xff]
        %v3900 = vld [vmem:[#allocation2 + $0x18] sm:$0xff]
        %v3904 = vunpack.c.l.b16 %v3898
        %v3905 = vunpack.c.h.b16 %v3898
        %v3906 = vunpack.c.l.b16 %v3899
        %v3907 = vunpack.c.h.b16 %v3899
        %v3908 = vunpack.c.l.b16 %v3900
        %v3909 = vunpack.c.h.b16 %v3900
        %v3910 = vpack.c.b16 %v3904, %v3904
        %v3911 = vpack.c.b16 %v3905, %v3905
        %v3912 = vpack.c.b16 %v3906, %v3906
        %v3913 = vpack.c.b16 %v3907, %v3907
        %v3914 = vpack.c.b16 %v3908, %v3908
        %v3915 = vpack.c.b16 %v3909, %v3909
        %v3917 = vsel %vm369, %v3897, 0
        %v3920 = vsel %vm373, %v3910, 0
        %v3923 = vsel %vm373, %v3911, 0
        %v3926 = vsel %vm373, %v3912, 0
        %v3929 = vsel %vm373, %v3913, 0
        %v3932 = vsel %vm373, %v3914, 0
        %v3935 = vsel %vm373, %v3915, 0
        %3937 = vmatprep.subr.bf16.mxu0 %v3923
        %3938 = vmatpush1.bf16.msra.mxu0 %v3920
        %3939 = vmatprep.subr.bf16.mxu0 0
        %3940 = vmatpush1.bf16.msra.mxu0 0
        %3941 = vmatprep.subr.bf16.mxu0 0
        %3942 = vmatpush1.bf16.msra.mxu0 0
        %3943 = vmatprep.subr.bf16.mxu0 0
        %3944 = vmatpush1.bf16.msra.mxu0 0
        %3945 = vmatprep.subr.bf16.mxu0 0
        %3946 = vmatpush1.bf16.msra.mxu0 0
        %3947 = vmatprep.subr.bf16.mxu0 0
        %3948 = vmatpush1.bf16.msra.mxu0 0
        %3949 = vmatprep.subr.bf16.mxu0 0
        %3950 = vmatpush1.bf16.msra.mxu0 0
        %3951 = vmatprep.subr.bf16.mxu0 0
        %3952 = vmatpush1.bf16.msra.mxu0 0
        %3953 = vmatprep.subr.bf16.mxu0 0
        %3954 = vmatpush1.bf16.msra.mxu0 0
        %3955 = vmatprep.subr.bf16.mxu0 0
        %3956 = vmatpush1.bf16.msra.mxu0 0
        %3957 = vmatprep.subr.bf16.mxu0 0
        %3958 = vmatpush1.bf16.msra.mxu0 0
        %3959 = vmatprep.subr.bf16.mxu0 0
        %3960 = vmatpush1.bf16.msra.mxu0 0
        %3961 = vmatprep.subr.bf16.mxu0 0
        %3962 = vmatpush1.bf16.msra.mxu0 0
        %3963 = vmatprep.subr.bf16.mxu0 0
        %3964 = vmatpush1.bf16.msra.mxu0 0
        %3965 = vmatprep.subr.bf16.mxu0 0
        %3966 = vmatpush1.bf16.msra.mxu0 0
        %3967 = vmatprep.subr.bf16.mxu0 0
        %3968 = vmatpush1.bf16.msra.mxu0 0
        %3969 = vmatprep.mubr.bf16.mxu0 0
        %3970 = vmatmul.mubr.bf16.gmra.mrb[0].mxu0 %v3917
        %v3971 = vpop.f32.mrb[0].mxu0
        %v3972 = vadd.f32 0.0, %v3971
        %v3973 = vpop.f32.mrb[0].mxu0
        %v3974 = vadd.f32 0.0, %v3973
        %v3975 = vpop.f32.mrb[0].mxu0
        %v3976 = vpop.f32.mrb[0].mxu0
        %3977 = vdwg.mxu0
        %3978 = vmatprep.subr.bf16.mxu0 %v3929
        %3979 = vmatpush1.bf16.msra.mxu0 %v3926
        %3980 = vmatprep.subr.bf16.mxu0 0
        %3981 = vmatpush1.bf16.msra.mxu0 0
        %3982 = vmatprep.subr.bf16.mxu0 0
        %3983 = vmatpush1.bf16.msra.mxu0 0
        %3984 = vmatprep.subr.bf16.mxu0 0
        %3985 = vmatpush1.bf16.msra.mxu0 0
        %3986 = vmatprep.subr.bf16.mxu0 0
        %3987 = vmatpush1.bf16.msra.mxu0 0
        %3988 = vmatprep.subr.bf16.mxu0 0
        %3989 = vmatpush1.bf16.msra.mxu0 0
        %3990 = vmatprep.subr.bf16.mxu0 0
        %3991 = vmatpush1.bf16.msra.mxu0 0
        %3992 = vmatprep.subr.bf16.mxu0 0
        %3993 = vmatpush1.bf16.msra.mxu0 0
        %3994 = vmatprep.subr.bf16.mxu0 0
        %3995 = vmatpush1.bf16.msra.mxu0 0
        %3996 = vmatprep.subr.bf16.mxu0 0
        %3997 = vmatpush1.bf16.msra.mxu0 0
        %3998 = vmatprep.subr.bf16.mxu0 0
        %3999 = vmatpush1.bf16.msra.mxu0 0
        %4000 = vmatprep.subr.bf16.mxu0 0
        %4001 = vmatpush1.bf16.msra.mxu0 0
        %4002 = vmatprep.subr.bf16.mxu0 0
        %4003 = vmatpush1.bf16.msra.mxu0 0
        %4004 = vmatprep.subr.bf16.mxu0 0
        %4005 = vmatpush1.bf16.msra.mxu0 0
        %4006 = vmatprep.subr.bf16.mxu0 0
        %4007 = vmatpush1.bf16.msra.mxu0 0
        %4008 = vmatprep.subr.bf16.mxu0 0
        %4009 = vmatpush1.bf16.msra.mxu0 0
        %4010 = vmatprep.mubr.bf16.mxu0 0
        %4011 = vmatmul.mubr.bf16.gmra.mrb[0].mxu0 %v3917
        %v4012 = vpop.f32.mrb[0].mxu0
        %v4013 = vadd.f32 0.0, %v4012
        %v4014 = vpop.f32.mrb[0].mxu0
        %v4015 = vadd.f32 0.0, %v4014
        %v4016 = vpop.f32.mrb[0].mxu0
        %v4017 = vpop.f32.mrb[0].mxu0
        %4018 = vdwg.mxu0
        %4019 = vmatprep.subr.bf16.mxu0 %v3935
        %4020 = vmatpush1.bf16.msra.mxu0 %v3932
        %4021 = vmatprep.subr.bf16.mxu0 0
        %4022 = vmatpush1.bf16.msra.mxu0 0
        %4023 = vmatprep.subr.bf16.mxu0 0
        %4024 = vmatpush1.bf16.msra.mxu0 0
        %4025 = vmatprep.subr.bf16.mxu0 0
        %4026 = vmatpush1.bf16.msra.mxu0 0
        %4027 = vmatprep.subr.bf16.mxu0 0
        %4028 = vmatpush1.bf16.msra.mxu0 0
        %4029 = vmatprep.subr.bf16.mxu0 0
        %4030 = vmatpush1.bf16.msra.mxu0 0
        %4031 = vmatprep.subr.bf16.mxu0 0
        %4032 = vmatpush1.bf16.msra.mxu0 0
        %4033 = vmatprep.subr.bf16.mxu0 0
        %4034 = vmatpush1.bf16.msra.mxu0 0
        %4035 = vmatprep.subr.bf16.mxu0 0
        %4036 = vmatpush1.bf16.msra.mxu0 0
        %4037 = vmatprep.subr.bf16.mxu0 0
        %4038 = vmatpush1.bf16.msra.mxu0 0
        %4039 = vmatprep.subr.bf16.mxu0 0
        %4040 = vmatpush1.bf16.msra.mxu0 0
        %4041 = vmatprep.subr.bf16.mxu0 0
        %4042 = vmatpush1.bf16.msra.mxu0 0
        %4043 = vmatprep.subr.bf16.mxu0 0
        %4044 = vmatpush1.bf16.msra.mxu0 0
        %4045 = vmatprep.subr.bf16.mxu0 0
        %4046 = vmatpush1.bf16.msra.mxu0 0
        %4047 = vmatprep.subr.bf16.mxu0 0
        %4048 = vmatpush1.bf16.msra.mxu0 0
        %4049 = vmatprep.subr.bf16.mxu0 0
        %4050 = vmatpush1.bf16.msra.mxu0 0
        %4051 = vmatprep.mubr.bf16.mxu0 0
        %4052 = vmatmul.mubr.bf16.gmra.mrb[0].mxu0 %v3917
        %v4053 = vpop.f32.mrb[0].mxu0
        %v4054 = vadd.f32 0.0, %v4053
        %v4055 = vpop.f32.mrb[0].mxu0
        %v4056 = vadd.f32 0.0, %v4055
        %v4057 = vpop.f32.mrb[0].mxu0
        %v4058 = vpop.f32.mrb[0].mxu0
        %4059 = vdwg.mxu0
        %v4060 = vld [vmem:[#allocation4] sm:$0xff]
        %v4061 = vld [vmem:[#allocation4 + $0x8] sm:$0xff]
        %v4062 = vld [vmem:[#allocation4 + $0x10] sm:$0xff]
        %v4063 = vld [vmem:[#allocation4 + $0x18] sm:$0xff]
        %v4064 = vld [vmem:[#allocation4 + $0x20] sm:$0xff]
        %v4065 = vld [vmem:[#allocation4 + $0x28] sm:$0xff]
        %v4066 = vadd.f32 %v4060, %v3972
        %v4067 = vadd.f32 %v4061, %v3974
        %v4068 = vadd.f32 %v4062, %v4013
        %v4069 = vadd.f32 %v4063, %v4015
        %v4070 = vadd.f32 %v4064, %v4054
        %v4071 = vadd.f32 %v4065, %v4056
        %4072 = vst [vmem:[#allocation4] sm:$0xff] %v4066
        %4073 = vst [vmem:[#allocation4 + $0x8] sm:$0xff] %v4067
        %4074 = vst [vmem:[#allocation4 + $0x10] sm:$0xff] %v4068
        %4075 = vst [vmem:[#allocation4 + $0x18] sm:$0xff] %v4069
        %4076 = vst [vmem:[#allocation4 + $0x20] sm:$0xff] %v4070
        %4077 = vst.msk [vmem:[#allocation4 + $0x28] sm:$0xff] %vm520, %v4071
        %s4078 = scalar_lea.vmem %s2, 76
        %v4079 = vld [vmem:[%s4078] sm:$0xf]
        %v4080 = vld [vmem:[#allocation2 + $0x8] sm:$0xff]
        %v4081 = vld [vmem:[#allocation2 + $0x10] sm:$0xff]
        %v4082 = vld [vmem:[#allocation2 + $0x18] sm:$0xff]
        %v4086 = vunpack.c.l.b16 %v4080
        %v4087 = vunpack.c.h.b16 %v4080
        %v4088 = vunpack.c.l.b16 %v4081
        %v4089 = vunpack.c.h.b16 %v4081
        %v4090 = vunpack.c.l.b16 %v4082
        %v4091 = vunpack.c.h.b16 %v4082
        %v4092 = vpack.c.b16 %v4086, %v4086
        %v4093 = vpack.c.b16 %v4087, %v4087
        %v4094 = vpack.c.b16 %v4088, %v4088
        %v4095 = vpack.c.b16 %v4089, %v4089
        %v4096 = vpack.c.b16 %v4090, %v4090
        %v4097 = vpack.c.b16 %v4091, %v4091
        %4098 = vrot.lane.b32.xlu0 %v4092, 127
        %v4099 = vpop.permute.xlu0 %4098
        %4100 = vrot.lane.b32.xlu0 %v4093, 127
        %v4101 = vpop.permute.xlu0 %4100
        %4102 = vrot.lane.b32.xlu0 %v4094, 127
        %v4103 = vpop.permute.xlu0 %4102
        %4104 = vrot.lane.b32.xlu0 %v4095, 127
        %v4105 = vpop.permute.xlu0 %4104
        %4106 = vrot.lane.b32.xlu0 %v4096, 127
        %v4107 = vpop.permute.xlu0 %4106
        %4108 = vrot.lane.b32.xlu0 %v4097, 127
        %v4109 = vpop.permute.xlu0 %4108
        %v4110 = vsel %vm554, %v4099, %v4101
        %v4111 = vsel %vm554, %v4101, %v4103
        %v4112 = vsel %vm554, %v4103, %v4105
        %v4113 = vsel %vm554, %v4105, %v4107
        %v4114 = vsel %vm554, %v4107, %v4109
        %v4116 = vsel %vm369, %v4079, 0
        %v4119 = vsel %vm373, %v4110, 0
        %v4122 = vsel %vm373, %v4111, 0
        %v4125 = vsel %vm373, %v4112, 0
        %v4128 = vsel %vm373, %v4113, 0
        %v4131 = vsel %vm373, %v4114, 0
        %v4134 = vsel %vm373, %v4109, 0
        %4136 = vmatprep.subr.bf16.mxu0 %v4122
        %4137 = vmatpush1.bf16.msra.mxu0 %v4119
        %4138 = vmatprep.subr.bf16.mxu0 0
        %4139 = vmatpush1.bf16.msra.mxu0 0
        %4140 = vmatprep.subr.bf16.mxu0 0
        %4141 = vmatpush1.bf16.msra.mxu0 0
        %4142 = vmatprep.subr.bf16.mxu0 0
        %4143 = vmatpush1.bf16.msra.mxu0 0
        %4144 = vmatprep.subr.bf16.mxu0 0
        %4145 = vmatpush1.bf16.msra.mxu0 0
        %4146 = vmatprep.subr.bf16.mxu0 0
        %4147 = vmatpush1.bf16.msra.mxu0 0
        %4148 = vmatprep.subr.bf16.mxu0 0
        %4149 = vmatpush1.bf16.msra.mxu0 0
        %4150 = vmatprep.subr.bf16.mxu0 0
        %4151 = vmatpush1.bf16.msra.mxu0 0
        %4152 = vmatprep.subr.bf16.mxu0 0
        %4153 = vmatpush1.bf16.msra.mxu0 0
        %4154 = vmatprep.subr.bf16.mxu0 0
        %4155 = vmatpush1.bf16.msra.mxu0 0
        %4156 = vmatprep.subr.bf16.mxu0 0
        %4157 = vmatpush1.bf16.msra.mxu0 0
        %4158 = vmatprep.subr.bf16.mxu0 0
        %4159 = vmatpush1.bf16.msra.mxu0 0
        %4160 = vmatprep.subr.bf16.mxu0 0
        %4161 = vmatpush1.bf16.msra.mxu0 0
        %4162 = vmatprep.subr.bf16.mxu0 0
        %4163 = vmatpush1.bf16.msra.mxu0 0
        %4164 = vmatprep.subr.bf16.mxu0 0
        %4165 = vmatpush1.bf16.msra.mxu0 0
        %4166 = vmatprep.subr.bf16.mxu0 0
        %4167 = vmatpush1.bf16.msra.mxu0 0
        %4168 = vmatprep.mubr.bf16.mxu0 0
        %4169 = vmatmul.mubr.bf16.gmra.mrb[0].mxu0 %v4116
        %v4170 = vpop.f32.mrb[0].mxu0
        %v4171 = vadd.f32 0.0, %v4170
        %v4172 = vpop.f32.mrb[0].mxu0
        %v4173 = vadd.f32 0.0, %v4172
        %v4174 = vpop.f32.mrb[0].mxu0
        %v4175 = vpop.f32.mrb[0].mxu0
        %4176 = vdwg.mxu0
        %4177 = vmatprep.subr.bf16.mxu0 %v4128
        %4178 = vmatpush1.bf16.msra.mxu0 %v4125
        %4179 = vmatprep.subr.bf16.mxu0 0
        %4180 = vmatpush1.bf16.msra.mxu0 0
        %4181 = vmatprep.subr.bf16.mxu0 0
        %4182 = vmatpush1.bf16.msra.mxu0 0
        %4183 = vmatprep.subr.bf16.mxu0 0
        %4184 = vmatpush1.bf16.msra.mxu0 0
        %4185 = vmatprep.subr.bf16.mxu0 0
        %4186 = vmatpush1.bf16.msra.mxu0 0
        %4187 = vmatprep.subr.bf16.mxu0 0
        %4188 = vmatpush1.bf16.msra.mxu0 0
        %4189 = vmatprep.subr.bf16.mxu0 0
        %4190 = vmatpush1.bf16.msra.mxu0 0
        %4191 = vmatprep.subr.bf16.mxu0 0
        %4192 = vmatpush1.bf16.msra.mxu0 0
        %4193 = vmatprep.subr.bf16.mxu0 0
        %4194 = vmatpush1.bf16.msra.mxu0 0
        %4195 = vmatprep.subr.bf16.mxu0 0
        %4196 = vmatpush1.bf16.msra.mxu0 0
        %4197 = vmatprep.subr.bf16.mxu0 0
        %4198 = vmatpush1.bf16.msra.mxu0 0
        %4199 = vmatprep.subr.bf16.mxu0 0
        %4200 = vmatpush1.bf16.msra.mxu0 0
        %4201 = vmatprep.subr.bf16.mxu0 0
        %4202 = vmatpush1.bf16.msra.mxu0 0
        %4203 = vmatprep.subr.bf16.mxu0 0
        %4204 = vmatpush1.bf16.msra.mxu0 0
        %4205 = vmatprep.subr.bf16.mxu0 0
        %4206 = vmatpush1.bf16.msra.mxu0 0
        %4207 = vmatprep.subr.bf16.mxu0 0
        %4208 = vmatpush1.bf16.msra.mxu0 0
        %4209 = vmatprep.mubr.bf16.mxu0 0
        %4210 = vmatmul.mubr.bf16.gmra.mrb[0].mxu0 %v4116
        %v4211 = vpop.f32.mrb[0].mxu0
        %v4212 = vadd.f32 0.0, %v4211
        %v4213 = vpop.f32.mrb[0].mxu0
        %v4214 = vadd.f32 0.0, %v4213
        %v4215 = vpop.f32.mrb[0].mxu0
        %v4216 = vpop.f32.mrb[0].mxu0
        %4217 = vdwg.mxu0
        %4218 = vmatprep.subr.bf16.mxu0 %v4134
        %4219 = vmatpush1.bf16.msra.mxu0 %v4131
        %4220 = vmatprep.subr.bf16.mxu0 0
        %4221 = vmatpush1.bf16.msra.mxu0 0
        %4222 = vmatprep.subr.bf16.mxu0 0
        %4223 = vmatpush1.bf16.msra.mxu0 0
        %4224 = vmatprep.subr.bf16.mxu0 0
        %4225 = vmatpush1.bf16.msra.mxu0 0
        %4226 = vmatprep.subr.bf16.mxu0 0
        %4227 = vmatpush1.bf16.msra.mxu0 0
        %4228 = vmatprep.subr.bf16.mxu0 0
        %4229 = vmatpush1.bf16.msra.mxu0 0
        %4230 = vmatprep.subr.bf16.mxu0 0
        %4231 = vmatpush1.bf16.msra.mxu0 0
        %4232 = vmatprep.subr.bf16.mxu0 0
        %4233 = vmatpush1.bf16.msra.mxu0 0
        %4234 = vmatprep.subr.bf16.mxu0 0
        %4235 = vmatpush1.bf16.msra.mxu0 0
        %4236 = vmatprep.subr.bf16.mxu0 0
        %4237 = vmatpush1.bf16.msra.mxu0 0
        %4238 = vmatprep.subr.bf16.mxu0 0
        %4239 = vmatpush1.bf16.msra.mxu0 0
        %4240 = vmatprep.subr.bf16.mxu0 0
        %4241 = vmatpush1.bf16.msra.mxu0 0
        %4242 = vmatprep.subr.bf16.mxu0 0
        %4243 = vmatpush1.bf16.msra.mxu0 0
        %4244 = vmatprep.subr.bf16.mxu0 0
        %4245 = vmatpush1.bf16.msra.mxu0 0
        %4246 = vmatprep.subr.bf16.mxu0 0
        %4247 = vmatpush1.bf16.msra.mxu0 0
        %4248 = vmatprep.subr.bf16.mxu0 0
        %4249 = vmatpush1.bf16.msra.mxu0 0
        %4250 = vmatprep.mubr.bf16.mxu0 0
        %4251 = vmatmul.mubr.bf16.gmra.mrb[0].mxu0 %v4116
        %v4252 = vpop.f32.mrb[0].mxu0
        %v4253 = vadd.f32 0.0, %v4252
        %v4254 = vpop.f32.mrb[0].mxu0
        %v4255 = vadd.f32 0.0, %v4254
        %v4256 = vpop.f32.mrb[0].mxu0
        %v4257 = vpop.f32.mrb[0].mxu0
        %4258 = vdwg.mxu0
        %v4259 = vld [vmem:[#allocation4] sm:$0xff]
        %v4260 = vld [vmem:[#allocation4 + $0x8] sm:$0xff]
        %v4261 = vld [vmem:[#allocation4 + $0x10] sm:$0xff]
        %v4262 = vld [vmem:[#allocation4 + $0x18] sm:$0xff]
        %v4263 = vld [vmem:[#allocation4 + $0x20] sm:$0xff]
        %v4264 = vld [vmem:[#allocation4 + $0x28] sm:$0xff]
        %v4265 = vadd.f32 %v4259, %v4171
        %v4266 = vadd.f32 %v4260, %v4173
        %v4267 = vadd.f32 %v4261, %v4212
        %v4268 = vadd.f32 %v4262, %v4214
        %v4269 = vadd.f32 %v4263, %v4253
        %v4270 = vadd.f32 %v4264, %v4255
        %4271 = vst [vmem:[#allocation4] sm:$0xff] %v4265
        %4272 = vst [vmem:[#allocation4 + $0x8] sm:$0xff] %v4266
        %4273 = vst [vmem:[#allocation4 + $0x10] sm:$0xff] %v4267
        %4274 = vst [vmem:[#allocation4 + $0x18] sm:$0xff] %v4268
        %4275 = vst [vmem:[#allocation4 + $0x20] sm:$0xff] %v4269
        %4276 = vst.msk [vmem:[#allocation4 + $0x28] sm:$0xff] %vm520, %v4270
        %s4277 = scalar_lea.vmem %s2, 80
        %v4278 = vld [vmem:[%s4277] sm:$0xf]
        %v4279 = vld [vmem:[#allocation2 + $0x8] sm:$0xff]
        %v4280 = vld [vmem:[#allocation2 + $0x10] sm:$0xff]
        %v4281 = vld [vmem:[#allocation2 + $0x18] sm:$0xff]
        %v4285 = vunpack.c.l.b16 %v4279
        %v4286 = vunpack.c.h.b16 %v4279
        %v4287 = vunpack.c.l.b16 %v4280
        %v4288 = vunpack.c.h.b16 %v4280
        %v4289 = vunpack.c.l.b16 %v4281
        %v4290 = vunpack.c.h.b16 %v4281
        %v4291 = vpack.c.b16 %v4285, %v4285
        %v4292 = vpack.c.b16 %v4286, %v4286
        %v4293 = vpack.c.b16 %v4287, %v4287
        %v4294 = vpack.c.b16 %v4288, %v4288
        %v4295 = vpack.c.b16 %v4289, %v4289
        %v4296 = vpack.c.b16 %v4290, %v4290
        %4297 = vrot.lane.b32.xlu0 %v4291, 126
        %v4298 = vpop.permute.xlu0 %4297
        %4299 = vrot.lane.b32.xlu0 %v4292, 126
        %v4300 = vpop.permute.xlu0 %4299
        %4301 = vrot.lane.b32.xlu0 %v4293, 126
        %v4302 = vpop.permute.xlu0 %4301
        %4303 = vrot.lane.b32.xlu0 %v4294, 126
        %v4304 = vpop.permute.xlu0 %4303
        %4305 = vrot.lane.b32.xlu0 %v4295, 126
        %v4306 = vpop.permute.xlu0 %4305
        %4307 = vrot.lane.b32.xlu0 %v4296, 126
        %v4308 = vpop.permute.xlu0 %4307
        %v4309 = vsel %vm754, %v4298, %v4300
        %v4310 = vsel %vm754, %v4300, %v4302
        %v4311 = vsel %vm754, %v4302, %v4304
        %v4312 = vsel %vm754, %v4304, %v4306
        %v4313 = vsel %vm754, %v4306, %v4308
        %v4315 = vsel %vm369, %v4278, 0
        %v4318 = vsel %vm373, %v4309, 0
        %v4321 = vsel %vm373, %v4310, 0
        %v4324 = vsel %vm373, %v4311, 0
        %v4327 = vsel %vm373, %v4312, 0
        %v4330 = vsel %vm373, %v4313, 0
        %v4333 = vsel %vm373, %v4308, 0
        %4335 = vmatprep.subr.bf16.mxu0 %v4321
        %4336 = vmatpush1.bf16.msra.mxu0 %v4318
        %4337 = vmatprep.subr.bf16.mxu0 0
        %4338 = vmatpush1.bf16.msra.mxu0 0
        %4339 = vmatprep.subr.bf16.mxu0 0
        %4340 = vmatpush1.bf16.msra.mxu0 0
        %4341 = vmatprep.subr.bf16.mxu0 0
        %4342 = vmatpush1.bf16.msra.mxu0 0
        %4343 = vmatprep.subr.bf16.mxu0 0
        %4344 = vmatpush1.bf16.msra.mxu0 0
        %4345 = vmatprep.subr.bf16.mxu0 0
        %4346 = vmatpush1.bf16.msra.mxu0 0
        %4347 = vmatprep.subr.bf16.mxu0 0
        %4348 = vmatpush1.bf16.msra.mxu0 0
        %4349 = vmatprep.subr.bf16.mxu0 0
        %4350 = vmatpush1.bf16.msra.mxu0 0
        %4351 = vmatprep.subr.bf16.mxu0 0
        %4352 = vmatpush1.bf16.msra.mxu0 0
        %4353 = vmatprep.subr.bf16.mxu0 0
        %4354 = vmatpush1.bf16.msra.mxu0 0
        %4355 = vmatprep.subr.bf16.mxu0 0
        %4356 = vmatpush1.bf16.msra.mxu0 0
        %4357 = vmatprep.subr.bf16.mxu0 0
        %4358 = vmatpush1.bf16.msra.mxu0 0
        %4359 = vmatprep.subr.bf16.mxu0 0
        %4360 = vmatpush1.bf16.msra.mxu0 0
        %4361 = vmatprep.subr.bf16.mxu0 0
        %4362 = vmatpush1.bf16.msra.mxu0 0
        %4363 = vmatprep.subr.bf16.mxu0 0
        %4364 = vmatpush1.bf16.msra.mxu0 0
        %4365 = vmatprep.subr.bf16.mxu0 0
        %4366 = vmatpush1.bf16.msra.mxu0 0
        %4367 = vmatprep.mubr.bf16.mxu0 0
        %4368 = vmatmul.mubr.bf16.gmra.mrb[0].mxu0 %v4315
        %v4369 = vpop.f32.mrb[0].mxu0
        %v4370 = vadd.f32 0.0, %v4369
        %v4371 = vpop.f32.mrb[0].mxu0
        %v4372 = vadd.f32 0.0, %v4371
        %v4373 = vpop.f32.mrb[0].mxu0
        %v4374 = vpop.f32.mrb[0].mxu0
        %4375 = vdwg.mxu0
        %4376 = vmatprep.subr.bf16.mxu0 %v4327
        %4377 = vmatpush1.bf16.msra.mxu0 %v4324
        %4378 = vmatprep.subr.bf16.mxu0 0
        %4379 = vmatpush1.bf16.msra.mxu0 0
        %4380 = vmatprep.subr.bf16.mxu0 0
        %4381 = vmatpush1.bf16.msra.mxu0 0
        %4382 = vmatprep.subr.bf16.mxu0 0
        %4383 = vmatpush1.bf16.msra.mxu0 0
        %4384 = vmatprep.subr.bf16.mxu0 0
        %4385 = vmatpush1.bf16.msra.mxu0 0
        %4386 = vmatprep.subr.bf16.mxu0 0
        %4387 = vmatpush1.bf16.msra.mxu0 0
        %4388 = vmatprep.subr.bf16.mxu0 0
        %4389 = vmatpush1.bf16.msra.mxu0 0
        %4390 = vmatprep.subr.bf16.mxu0 0
        %4391 = vmatpush1.bf16.msra.mxu0 0
        %4392 = vmatprep.subr.bf16.mxu0 0
        %4393 = vmatpush1.bf16.msra.mxu0 0
        %4394 = vmatprep.subr.bf16.mxu0 0
        %4395 = vmatpush1.bf16.msra.mxu0 0
        %4396 = vmatprep.subr.bf16.mxu0 0
        %4397 = vmatpush1.bf16.msra.mxu0 0
        %4398 = vmatprep.subr.bf16.mxu0 0
        %4399 = vmatpush1.bf16.msra.mxu0 0
        %4400 = vmatprep.subr.bf16.mxu0 0
        %4401 = vmatpush1.bf16.msra.mxu0 0
        %4402 = vmatprep.subr.bf16.mxu0 0
        %4403 = vmatpush1.bf16.msra.mxu0 0
        %4404 = vmatprep.subr.bf16.mxu0 0
        %4405 = vmatpush1.bf16.msra.mxu0 0
        %4406 = vmatprep.subr.bf16.mxu0 0
        %4407 = vmatpush1.bf16.msra.mxu0 0
        %4408 = vmatprep.mubr.bf16.mxu0 0
        %4409 = vmatmul.mubr.bf16.gmra.mrb[0].mxu0 %v4315
        %v4410 = vpop.f32.mrb[0].mxu0
        %v4411 = vadd.f32 0.0, %v4410
        %v4412 = vpop.f32.mrb[0].mxu0
        %v4413 = vadd.f32 0.0, %v4412
        %v4414 = vpop.f32.mrb[0].mxu0
        %v4415 = vpop.f32.mrb[0].mxu0
        %4416 = vdwg.mxu0
        %4417 = vmatprep.subr.bf16.mxu0 %v4333
        %4418 = vmatpush1.bf16.msra.mxu0 %v4330
        %4419 = vmatprep.subr.bf16.mxu0 0
        %4420 = vmatpush1.bf16.msra.mxu0 0
        %4421 = vmatprep.subr.bf16.mxu0 0
        %4422 = vmatpush1.bf16.msra.mxu0 0
        %4423 = vmatprep.subr.bf16.mxu0 0
        %4424 = vmatpush1.bf16.msra.mxu0 0
        %4425 = vmatprep.subr.bf16.mxu0 0
        %4426 = vmatpush1.bf16.msra.mxu0 0
        %4427 = vmatprep.subr.bf16.mxu0 0
        %4428 = vmatpush1.bf16.msra.mxu0 0
        %4429 = vmatprep.subr.bf16.mxu0 0
        %4430 = vmatpush1.bf16.msra.mxu0 0
        %4431 = vmatprep.subr.bf16.mxu0 0
        %4432 = vmatpush1.bf16.msra.mxu0 0
        %4433 = vmatprep.subr.bf16.mxu0 0
        %4434 = vmatpush1.bf16.msra.mxu0 0
        %4435 = vmatprep.subr.bf16.mxu0 0
        %4436 = vmatpush1.bf16.msra.mxu0 0
        %4437 = vmatprep.subr.bf16.mxu0 0
        %4438 = vmatpush1.bf16.msra.mxu0 0
        %4439 = vmatprep.subr.bf16.mxu0 0
        %4440 = vmatpush1.bf16.msra.mxu0 0
        %4441 = vmatprep.subr.bf16.mxu0 0
        %4442 = vmatpush1.bf16.msra.mxu0 0
        %4443 = vmatprep.subr.bf16.mxu0 0
        %4444 = vmatpush1.bf16.msra.mxu0 0
        %4445 = vmatprep.subr.bf16.mxu0 0
        %4446 = vmatpush1.bf16.msra.mxu0 0
        %4447 = vmatprep.subr.bf16.mxu0 0
        %4448 = vmatpush1.bf16.msra.mxu0 0
        %4449 = vmatprep.mubr.bf16.mxu0 0
        %4450 = vmatmul.mubr.bf16.gmra.mrb[0].mxu0 %v4315
        %v4451 = vpop.f32.mrb[0].mxu0
        %v4452 = vadd.f32 0.0, %v4451
        %v4453 = vpop.f32.mrb[0].mxu0
        %v4454 = vadd.f32 0.0, %v4453
        %v4455 = vpop.f32.mrb[0].mxu0
        %v4456 = vpop.f32.mrb[0].mxu0
        %4457 = vdwg.mxu0
        %v4458 = vld [vmem:[#allocation4] sm:$0xff]
        %v4459 = vld [vmem:[#allocation4 + $0x8] sm:$0xff]
        %v4460 = vld [vmem:[#allocation4 + $0x10] sm:$0xff]
        %v4461 = vld [vmem:[#allocation4 + $0x18] sm:$0xff]
        %v4462 = vld [vmem:[#allocation4 + $0x20] sm:$0xff]
        %v4463 = vld [vmem:[#allocation4 + $0x28] sm:$0xff]
        %v4464 = vadd.f32 %v4458, %v4370
        %v4465 = vadd.f32 %v4459, %v4372
        %v4466 = vadd.f32 %v4460, %v4411
        %v4467 = vadd.f32 %v4461, %v4413
        %v4468 = vadd.f32 %v4462, %v4452
        %v4469 = vadd.f32 %v4463, %v4454
        %4470 = vst [vmem:[#allocation4] sm:$0xff] %v4464
        %4471 = vst [vmem:[#allocation4 + $0x8] sm:$0xff] %v4465
        %4472 = vst [vmem:[#allocation4 + $0x10] sm:$0xff] %v4466
        %4473 = vst [vmem:[#allocation4 + $0x18] sm:$0xff] %v4467
        %4474 = vst [vmem:[#allocation4 + $0x20] sm:$0xff] %v4468
        %4475 = vst.msk [vmem:[#allocation4 + $0x28] sm:$0xff] %vm520, %v4469
        %s4476 = scalar_lea.vmem %s2, 84
        %v4477 = vld [vmem:[%s4476] sm:$0xf]
        %v4478 = vld [vmem:[#allocation2 + $0x8] sm:$0xff]
        %v4479 = vld [vmem:[#allocation2 + $0x10] sm:$0xff]
        %v4480 = vld [vmem:[#allocation2 + $0x18] sm:$0xff]
        %v4484 = vunpack.c.l.b16 %v4478
        %v4485 = vunpack.c.h.b16 %v4478
        %v4486 = vunpack.c.l.b16 %v4479
        %v4487 = vunpack.c.h.b16 %v4479
        %v4488 = vunpack.c.l.b16 %v4480
        %v4489 = vunpack.c.h.b16 %v4480
        %v4490 = vpack.c.b16 %v4484, %v4484
        %v4491 = vpack.c.b16 %v4485, %v4485
        %v4492 = vpack.c.b16 %v4486, %v4486
        %v4493 = vpack.c.b16 %v4487, %v4487
        %v4494 = vpack.c.b16 %v4488, %v4488
        %v4495 = vpack.c.b16 %v4489, %v4489
        %4496 = vrot.lane.b32.xlu0 %v4490, 119
        %v4497 = vpop.permute.xlu0 %4496
        %4498 = vrot.lane.b32.xlu0 %v4491, 119
        %v4499 = vpop.permute.xlu0 %4498
        %4500 = vrot.lane.b32.xlu0 %v4492, 119
        %v4501 = vpop.permute.xlu0 %4500
        %4502 = vrot.lane.b32.xlu0 %v4493, 119
        %v4503 = vpop.permute.xlu0 %4502
        %4504 = vrot.lane.b32.xlu0 %v4494, 119
        %v4505 = vpop.permute.xlu0 %4504
        %4506 = vrot.lane.b32.xlu0 %v4495, 119
        %v4507 = vpop.permute.xlu0 %4506
        %v4508 = vsel %vm954, %v4497, %v4499
        %v4509 = vsel %vm954, %v4499, %v4501
        %v4510 = vsel %vm954, %v4501, %v4503
        %v4511 = vsel %vm954, %v4503, %v4505
        %v4512 = vsel %vm954, %v4505, %v4507
        %v4514 = vsel %vm369, %v4477, 0
        %v4517 = vsel %vm373, %v4508, 0
        %v4520 = vsel %vm373, %v4509, 0
        %v4523 = vsel %vm373, %v4510, 0
        %v4526 = vsel %vm373, %v4511, 0
        %v4529 = vsel %vm373, %v4512, 0
        %v4532 = vsel %vm373, %v4507, 0
        %4534 = vmatprep.subr.bf16.mxu0 %v4520
        %4535 = vmatpush1.bf16.msra.mxu0 %v4517
        %4536 = vmatprep.subr.bf16.mxu0 0
        %4537 = vmatpush1.bf16.msra.mxu0 0
        %4538 = vmatprep.subr.bf16.mxu0 0
        %4539 = vmatpush1.bf16.msra.mxu0 0
        %4540 = vmatprep.subr.bf16.mxu0 0
        %4541 = vmatpush1.bf16.msra.mxu0 0
        %4542 = vmatprep.subr.bf16.mxu0 0
        %4543 = vmatpush1.bf16.msra.mxu0 0
        %4544 = vmatprep.subr.bf16.mxu0 0
        %4545 = vmatpush1.bf16.msra.mxu0 0
        %4546 = vmatprep.subr.bf16.mxu0 0
        %4547 = vmatpush1.bf16.msra.mxu0 0
        %4548 = vmatprep.subr.bf16.mxu0 0
        %4549 = vmatpush1.bf16.msra.mxu0 0
        %4550 = vmatprep.subr.bf16.mxu0 0
        %4551 = vmatpush1.bf16.msra.mxu0 0
        %4552 = vmatprep.subr.bf16.mxu0 0
        %4553 = vmatpush1.bf16.msra.mxu0 0
        %4554 = vmatprep.subr.bf16.mxu0 0
        %4555 = vmatpush1.bf16.msra.mxu0 0
        %4556 = vmatprep.subr.bf16.mxu0 0
        %4557 = vmatpush1.bf16.msra.mxu0 0
        %4558 = vmatprep.subr.bf16.mxu0 0
        %4559 = vmatpush1.bf16.msra.mxu0 0
        %4560 = vmatprep.subr.bf16.mxu0 0
        %4561 = vmatpush1.bf16.msra.mxu0 0
        %4562 = vmatprep.subr.bf16.mxu0 0
        %4563 = vmatpush1.bf16.msra.mxu0 0
        %4564 = vmatprep.subr.bf16.mxu0 0
        %4565 = vmatpush1.bf16.msra.mxu0 0
        %4566 = vmatprep.mubr.bf16.mxu0 0
        %4567 = vmatmul.mubr.bf16.gmra.mrb[0].mxu0 %v4514
        %v4568 = vpop.f32.mrb[0].mxu0
        %v4569 = vadd.f32 0.0, %v4568
        %v4570 = vpop.f32.mrb[0].mxu0
        %v4571 = vadd.f32 0.0, %v4570
        %v4572 = vpop.f32.mrb[0].mxu0
        %v4573 = vpop.f32.mrb[0].mxu0
        %4574 = vdwg.mxu0
        %4575 = vmatprep.subr.bf16.mxu0 %v4526
        %4576 = vmatpush1.bf16.msra.mxu0 %v4523
        %4577 = vmatprep.subr.bf16.mxu0 0
        %4578 = vmatpush1.bf16.msra.mxu0 0
        %4579 = vmatprep.subr.bf16.mxu0 0
        %4580 = vmatpush1.bf16.msra.mxu0 0
        %4581 = vmatprep.subr.bf16.mxu0 0
        %4582 = vmatpush1.bf16.msra.mxu0 0
        %4583 = vmatprep.subr.bf16.mxu0 0
        %4584 = vmatpush1.bf16.msra.mxu0 0
        %4585 = vmatprep.subr.bf16.mxu0 0
        %4586 = vmatpush1.bf16.msra.mxu0 0
        %4587 = vmatprep.subr.bf16.mxu0 0
        %4588 = vmatpush1.bf16.msra.mxu0 0
        %4589 = vmatprep.subr.bf16.mxu0 0
        %4590 = vmatpush1.bf16.msra.mxu0 0
        %4591 = vmatprep.subr.bf16.mxu0 0
        %4592 = vmatpush1.bf16.msra.mxu0 0
        %4593 = vmatprep.subr.bf16.mxu0 0
        %4594 = vmatpush1.bf16.msra.mxu0 0
        %4595 = vmatprep.subr.bf16.mxu0 0
        %4596 = vmatpush1.bf16.msra.mxu0 0
        %4597 = vmatprep.subr.bf16.mxu0 0
        %4598 = vmatpush1.bf16.msra.mxu0 0
        %4599 = vmatprep.subr.bf16.mxu0 0
        %4600 = vmatpush1.bf16.msra.mxu0 0
        %4601 = vmatprep.subr.bf16.mxu0 0
        %4602 = vmatpush1.bf16.msra.mxu0 0
        %4603 = vmatprep.subr.bf16.mxu0 0
        %4604 = vmatpush1.bf16.msra.mxu0 0
        %4605 = vmatprep.subr.bf16.mxu0 0
        %4606 = vmatpush1.bf16.msra.mxu0 0
        %4607 = vmatprep.mubr.bf16.mxu0 0
        %4608 = vmatmul.mubr.bf16.gmra.mrb[0].mxu0 %v4514
        %v4609 = vpop.f32.mrb[0].mxu0
        %v4610 = vadd.f32 0.0, %v4609
        %v4611 = vpop.f32.mrb[0].mxu0
        %v4612 = vadd.f32 0.0, %v4611
        %v4613 = vpop.f32.mrb[0].mxu0
        %v4614 = vpop.f32.mrb[0].mxu0
        %4615 = vdwg.mxu0
        %4616 = vmatprep.subr.bf16.mxu0 %v4532
        %4617 = vmatpush1.bf16.msra.mxu0 %v4529
        %4618 = vmatprep.subr.bf16.mxu0 0
        %4619 = vmatpush1.bf16.msra.mxu0 0
        %4620 = vmatprep.subr.bf16.mxu0 0
        %4621 = vmatpush1.bf16.msra.mxu0 0
        %4622 = vmatprep.subr.bf16.mxu0 0
        %4623 = vmatpush1.bf16.msra.mxu0 0
        %4624 = vmatprep.subr.bf16.mxu0 0
        %4625 = vmatpush1.bf16.msra.mxu0 0
        %4626 = vmatprep.subr.bf16.mxu0 0
        %4627 = vmatpush1.bf16.msra.mxu0 0
        %4628 = vmatprep.subr.bf16.mxu0 0
        %4629 = vmatpush1.bf16.msra.mxu0 0
        %4630 = vmatprep.subr.bf16.mxu0 0
        %4631 = vmatpush1.bf16.msra.mxu0 0
        %4632 = vmatprep.subr.bf16.mxu0 0
        %4633 = vmatpush1.bf16.msra.mxu0 0
        %4634 = vmatprep.subr.bf16.mxu0 0
        %4635 = vmatpush1.bf16.msra.mxu0 0
        %4636 = vmatprep.subr.bf16.mxu0 0
        %4637 = vmatpush1.bf16.msra.mxu0 0
        %4638 = vmatprep.subr.bf16.mxu0 0
        %4639 = vmatpush1.bf16.msra.mxu0 0
        %4640 = vmatprep.subr.bf16.mxu0 0
        %4641 = vmatpush1.bf16.msra.mxu0 0
        %4642 = vmatprep.subr.bf16.mxu0 0
        %4643 = vmatpush1.bf16.msra.mxu0 0
        %4644 = vmatprep.subr.bf16.mxu0 0
        %4645 = vmatpush1.bf16.msra.mxu0 0
        %4646 = vmatprep.subr.bf16.mxu0 0
        %4647 = vmatpush1.bf16.msra.mxu0 0
        %4648 = vmatprep.mubr.bf16.mxu0 0
        %4649 = vmatmul.mubr.bf16.gmra.mrb[0].mxu0 %v4514
        %v4650 = vpop.f32.mrb[0].mxu0
        %v4651 = vadd.f32 0.0, %v4650
        %v4652 = vpop.f32.mrb[0].mxu0
        %v4653 = vadd.f32 0.0, %v4652
        %v4654 = vpop.f32.mrb[0].mxu0
        %v4655 = vpop.f32.mrb[0].mxu0
        %4656 = vdwg.mxu0
        %v4657 = vld [vmem:[#allocation4] sm:$0xff]
        %v4658 = vld [vmem:[#allocation4 + $0x8] sm:$0xff]
        %v4659 = vld [vmem:[#allocation4 + $0x10] sm:$0xff]
        %v4660 = vld [vmem:[#allocation4 + $0x18] sm:$0xff]
        %v4661 = vld [vmem:[#allocation4 + $0x20] sm:$0xff]
        %v4662 = vld [vmem:[#allocation4 + $0x28] sm:$0xff]
        %v4663 = vadd.f32 %v4657, %v4569
        %v4664 = vadd.f32 %v4658, %v4571
        %v4665 = vadd.f32 %v4659, %v4610
        %v4666 = vadd.f32 %v4660, %v4612
        %v4667 = vadd.f32 %v4661, %v4651
        %v4668 = vadd.f32 %v4662, %v4653
        %4669 = vst [vmem:[#allocation4] sm:$0xff] %v4663
        %4670 = vst [vmem:[#allocation4 + $0x8] sm:$0xff] %v4664
        %4671 = vst [vmem:[#allocation4 + $0x10] sm:$0xff] %v4665
        %4672 = vst [vmem:[#allocation4 + $0x18] sm:$0xff] %v4666
        %4673 = vst [vmem:[#allocation4 + $0x20] sm:$0xff] %v4667
        %4674 = vst.msk [vmem:[#allocation4 + $0x28] sm:$0xff] %vm520, %v4668
        %s4675 = scalar_lea.vmem %s2, 88
        %v4676 = vld [vmem:[%s4675] sm:$0xf]
        %v4677 = vld [vmem:[#allocation2 + $0x8] sm:$0xff]
        %v4678 = vld [vmem:[#allocation2 + $0x10] sm:$0xff]
        %v4679 = vld [vmem:[#allocation2 + $0x18] sm:$0xff]
        %v4683 = vunpack.c.l.b16 %v4677
        %v4684 = vunpack.c.h.b16 %v4677
        %v4685 = vunpack.c.l.b16 %v4678
        %v4686 = vunpack.c.h.b16 %v4678
        %v4687 = vunpack.c.l.b16 %v4679
        %v4688 = vunpack.c.h.b16 %v4679
        %v4689 = vpack.c.b16 %v4683, %v4683
        %v4690 = vpack.c.b16 %v4684, %v4684
        %v4691 = vpack.c.b16 %v4685, %v4685
        %v4692 = vpack.c.b16 %v4686, %v4686
        %v4693 = vpack.c.b16 %v4687, %v4687
        %v4694 = vpack.c.b16 %v4688, %v4688
        %4695 = vrot.lane.b32.xlu0 %v4689, 118
        %v4696 = vpop.permute.xlu0 %4695
        %4697 = vrot.lane.b32.xlu0 %v4690, 118
        %v4698 = vpop.permute.xlu0 %4697
        %4699 = vrot.lane.b32.xlu0 %v4691, 118
        %v4700 = vpop.permute.xlu0 %4699
        %4701 = vrot.lane.b32.xlu0 %v4692, 118
        %v4702 = vpop.permute.xlu0 %4701
        %4703 = vrot.lane.b32.xlu0 %v4693, 118
        %v4704 = vpop.permute.xlu0 %4703
        %4705 = vrot.lane.b32.xlu0 %v4694, 118
        %v4706 = vpop.permute.xlu0 %4705
        %v4707 = vsel %vm1154, %v4696, %v4698
        %v4708 = vsel %vm1154, %v4698, %v4700
        %v4709 = vsel %vm1154, %v4700, %v4702
        %v4710 = vsel %vm1154, %v4702, %v4704
        %v4711 = vsel %vm1154, %v4704, %v4706
        %v4713 = vsel %vm369, %v4676, 0
        %v4716 = vsel %vm373, %v4707, 0
        %v4719 = vsel %vm373, %v4708, 0
        %v4722 = vsel %vm373, %v4709, 0
        %v4725 = vsel %vm373, %v4710, 0
        %v4728 = vsel %vm373, %v4711, 0
        %v4731 = vsel %vm373, %v4706, 0
        %4733 = vmatprep.subr.bf16.mxu0 %v4719
        %4734 = vmatpush1.bf16.msra.mxu0 %v4716
        %4735 = vmatprep.subr.bf16.mxu0 0
        %4736 = vmatpush1.bf16.msra.mxu0 0
        %4737 = vmatprep.subr.bf16.mxu0 0
        %4738 = vmatpush1.bf16.msra.mxu0 0
        %4739 = vmatprep.subr.bf16.mxu0 0
        %4740 = vmatpush1.bf16.msra.mxu0 0
        %4741 = vmatprep.subr.bf16.mxu0 0
        %4742 = vmatpush1.bf16.msra.mxu0 0
        %4743 = vmatprep.subr.bf16.mxu0 0
        %4744 = vmatpush1.bf16.msra.mxu0 0
        %4745 = vmatprep.subr.bf16.mxu0 0
        %4746 = vmatpush1.bf16.msra.mxu0 0
        %4747 = vmatprep.subr.bf16.mxu0 0
        %4748 = vmatpush1.bf16.msra.mxu0 0
        %4749 = vmatprep.subr.bf16.mxu0 0
        %4750 = vmatpush1.bf16.msra.mxu0 0
        %4751 = vmatprep.subr.bf16.mxu0 0
        %4752 = vmatpush1.bf16.msra.mxu0 0
        %4753 = vmatprep.subr.bf16.mxu0 0
        %4754 = vmatpush1.bf16.msra.mxu0 0
        %4755 = vmatprep.subr.bf16.mxu0 0
        %4756 = vmatpush1.bf16.msra.mxu0 0
        %4757 = vmatprep.subr.bf16.mxu0 0
        %4758 = vmatpush1.bf16.msra.mxu0 0
        %4759 = vmatprep.subr.bf16.mxu0 0
        %4760 = vmatpush1.bf16.msra.mxu0 0
        %4761 = vmatprep.subr.bf16.mxu0 0
        %4762 = vmatpush1.bf16.msra.mxu0 0
        %4763 = vmatprep.subr.bf16.mxu0 0
        %4764 = vmatpush1.bf16.msra.mxu0 0
        %4765 = vmatprep.mubr.bf16.mxu0 0
        %4766 = vmatmul.mubr.bf16.gmra.mrb[0].mxu0 %v4713
        %v4767 = vpop.f32.mrb[0].mxu0
        %v4768 = vadd.f32 0.0, %v4767
        %v4769 = vpop.f32.mrb[0].mxu0
        %v4770 = vadd.f32 0.0, %v4769
        %v4771 = vpop.f32.mrb[0].mxu0
        %v4772 = vpop.f32.mrb[0].mxu0
        %4773 = vdwg.mxu0
        %4774 = vmatprep.subr.bf16.mxu0 %v4725
        %4775 = vmatpush1.bf16.msra.mxu0 %v4722
        %4776 = vmatprep.subr.bf16.mxu0 0
        %4777 = vmatpush1.bf16.msra.mxu0 0
        %4778 = vmatprep.subr.bf16.mxu0 0
        %4779 = vmatpush1.bf16.msra.mxu0 0
        %4780 = vmatprep.subr.bf16.mxu0 0
        %4781 = vmatpush1.bf16.msra.mxu0 0
        %4782 = vmatprep.subr.bf16.mxu0 0
        %4783 = vmatpush1.bf16.msra.mxu0 0
        %4784 = vmatprep.subr.bf16.mxu0 0
        %4785 = vmatpush1.bf16.msra.mxu0 0
        %4786 = vmatprep.subr.bf16.mxu0 0
        %4787 = vmatpush1.bf16.msra.mxu0 0
        %4788 = vmatprep.subr.bf16.mxu0 0
        %4789 = vmatpush1.bf16.msra.mxu0 0
        %4790 = vmatprep.subr.bf16.mxu0 0
        %4791 = vmatpush1.bf16.msra.mxu0 0
        %4792 = vmatprep.subr.bf16.mxu0 0
        %4793 = vmatpush1.bf16.msra.mxu0 0
        %4794 = vmatprep.subr.bf16.mxu0 0
        %4795 = vmatpush1.bf16.msra.mxu0 0
        %4796 = vmatprep.subr.bf16.mxu0 0
        %4797 = vmatpush1.bf16.msra.mxu0 0
        %4798 = vmatprep.subr.bf16.mxu0 0
        %4799 = vmatpush1.bf16.msra.mxu0 0
        %4800 = vmatprep.subr.bf16.mxu0 0
        %4801 = vmatpush1.bf16.msra.mxu0 0
        %4802 = vmatprep.subr.bf16.mxu0 0
        %4803 = vmatpush1.bf16.msra.mxu0 0
        %4804 = vmatprep.subr.bf16.mxu0 0
        %4805 = vmatpush1.bf16.msra.mxu0 0
        %4806 = vmatprep.mubr.bf16.mxu0 0
        %4807 = vmatmul.mubr.bf16.gmra.mrb[0].mxu0 %v4713
        %v4808 = vpop.f32.mrb[0].mxu0
        %v4809 = vadd.f32 0.0, %v4808
        %v4810 = vpop.f32.mrb[0].mxu0
        %v4811 = vadd.f32 0.0, %v4810
        %v4812 = vpop.f32.mrb[0].mxu0
        %v4813 = vpop.f32.mrb[0].mxu0
        %4814 = vdwg.mxu0
        %4815 = vmatprep.subr.bf16.mxu0 %v4731
        %4816 = vmatpush1.bf16.msra.mxu0 %v4728
        %4817 = vmatprep.subr.bf16.mxu0 0
        %4818 = vmatpush1.bf16.msra.mxu0 0
        %4819 = vmatprep.subr.bf16.mxu0 0
        %4820 = vmatpush1.bf16.msra.mxu0 0
        %4821 = vmatprep.subr.bf16.mxu0 0
        %4822 = vmatpush1.bf16.msra.mxu0 0
        %4823 = vmatprep.subr.bf16.mxu0 0
        %4824 = vmatpush1.bf16.msra.mxu0 0
        %4825 = vmatprep.subr.bf16.mxu0 0
        %4826 = vmatpush1.bf16.msra.mxu0 0
        %4827 = vmatprep.subr.bf16.mxu0 0
        %4828 = vmatpush1.bf16.msra.mxu0 0
        %4829 = vmatprep.subr.bf16.mxu0 0
        %4830 = vmatpush1.bf16.msra.mxu0 0
        %4831 = vmatprep.subr.bf16.mxu0 0
        %4832 = vmatpush1.bf16.msra.mxu0 0
        %4833 = vmatprep.subr.bf16.mxu0 0
        %4834 = vmatpush1.bf16.msra.mxu0 0
        %4835 = vmatprep.subr.bf16.mxu0 0
        %4836 = vmatpush1.bf16.msra.mxu0 0
        %4837 = vmatprep.subr.bf16.mxu0 0
        %4838 = vmatpush1.bf16.msra.mxu0 0
        %4839 = vmatprep.subr.bf16.mxu0 0
        %4840 = vmatpush1.bf16.msra.mxu0 0
        %4841 = vmatprep.subr.bf16.mxu0 0
        %4842 = vmatpush1.bf16.msra.mxu0 0
        %4843 = vmatprep.subr.bf16.mxu0 0
        %4844 = vmatpush1.bf16.msra.mxu0 0
        %4845 = vmatprep.subr.bf16.mxu0 0
        %4846 = vmatpush1.bf16.msra.mxu0 0
        %4847 = vmatprep.mubr.bf16.mxu0 0
        %4848 = vmatmul.mubr.bf16.gmra.mrb[0].mxu0 %v4713
        %v4849 = vpop.f32.mrb[0].mxu0
        %v4850 = vadd.f32 0.0, %v4849
        %v4851 = vpop.f32.mrb[0].mxu0
        %v4852 = vadd.f32 0.0, %v4851
        %v4853 = vpop.f32.mrb[0].mxu0
        %v4854 = vpop.f32.mrb[0].mxu0
        %4855 = vdwg.mxu0
        %v4856 = vld [vmem:[#allocation4] sm:$0xff]
        %v4857 = vld [vmem:[#allocation4 + $0x8] sm:$0xff]
        %v4858 = vld [vmem:[#allocation4 + $0x10] sm:$0xff]
        %v4859 = vld [vmem:[#allocation4 + $0x18] sm:$0xff]
        %v4860 = vld [vmem:[#allocation4 + $0x20] sm:$0xff]
        %v4861 = vld [vmem:[#allocation4 + $0x28] sm:$0xff]
        %v4862 = vadd.f32 %v4856, %v4768
        %v4863 = vadd.f32 %v4857, %v4770
        %v4864 = vadd.f32 %v4858, %v4809
        %v4865 = vadd.f32 %v4859, %v4811
        %v4866 = vadd.f32 %v4860, %v4850
        %v4867 = vadd.f32 %v4861, %v4852
        %4868 = vst [vmem:[#allocation4] sm:$0xff] %v4862
        %4869 = vst [vmem:[#allocation4 + $0x8] sm:$0xff] %v4863
        %4870 = vst [vmem:[#allocation4 + $0x10] sm:$0xff] %v4864
        %4871 = vst [vmem:[#allocation4 + $0x18] sm:$0xff] %v4865
        %4872 = vst [vmem:[#allocation4 + $0x20] sm:$0xff] %v4866
        %4873 = vst.msk [vmem:[#allocation4 + $0x28] sm:$0xff] %vm520, %v4867
        %s4874 = scalar_lea.vmem %s2, 92
        %v4875 = vld [vmem:[%s4874] sm:$0xf]
        %v4876 = vld [vmem:[#allocation2 + $0x8] sm:$0xff]
        %v4877 = vld [vmem:[#allocation2 + $0x10] sm:$0xff]
        %v4878 = vld [vmem:[#allocation2 + $0x18] sm:$0xff]
        %v4882 = vunpack.c.l.b16 %v4876
        %v4883 = vunpack.c.h.b16 %v4876
        %v4884 = vunpack.c.l.b16 %v4877
        %v4885 = vunpack.c.h.b16 %v4877
        %v4886 = vunpack.c.l.b16 %v4878
        %v4887 = vunpack.c.h.b16 %v4878
        %v4888 = vpack.c.b16 %v4882, %v4882
        %v4889 = vpack.c.b16 %v4883, %v4883
        %v4890 = vpack.c.b16 %v4884, %v4884
        %v4891 = vpack.c.b16 %v4885, %v4885
        %v4892 = vpack.c.b16 %v4886, %v4886
        %v4893 = vpack.c.b16 %v4887, %v4887
        %4894 = vrot.lane.b32.xlu0 %v4888, 117
        %v4895 = vpop.permute.xlu0 %4894
        %4896 = vrot.lane.b32.xlu0 %v4889, 117
        %v4897 = vpop.permute.xlu0 %4896
        %4898 = vrot.lane.b32.xlu0 %v4890, 117
        %v4899 = vpop.permute.xlu0 %4898
        %4900 = vrot.lane.b32.xlu0 %v4891, 117
        %v4901 = vpop.permute.xlu0 %4900
        %4902 = vrot.lane.b32.xlu0 %v4892, 117
        %v4903 = vpop.permute.xlu0 %4902
        %4904 = vrot.lane.b32.xlu0 %v4893, 117
        %v4905 = vpop.permute.xlu0 %4904
        %v4906 = vsel %vm1354, %v4895, %v4897
        %v4907 = vsel %vm1354, %v4897, %v4899
        %v4908 = vsel %vm1354, %v4899, %v4901
        %v4909 = vsel %vm1354, %v4901, %v4903
        %v4910 = vsel %vm1354, %v4903, %v4905
        %v4912 = vsel %vm369, %v4875, 0
        %v4915 = vsel %vm373, %v4906, 0
        %v4918 = vsel %vm373, %v4907, 0
        %v4921 = vsel %vm373, %v4908, 0
        %v4924 = vsel %vm373, %v4909, 0
        %v4927 = vsel %vm373, %v4910, 0
        %v4930 = vsel %vm373, %v4905, 0
        %4932 = vmatprep.subr.bf16.mxu0 %v4918
        %4933 = vmatpush1.bf16.msra.mxu0 %v4915
        %4934 = vmatprep.subr.bf16.mxu0 0
        %4935 = vmatpush1.bf16.msra.mxu0 0
        %4936 = vmatprep.subr.bf16.mxu0 0
        %4937 = vmatpush1.bf16.msra.mxu0 0
        %4938 = vmatprep.subr.bf16.mxu0 0
        %4939 = vmatpush1.bf16.msra.mxu0 0
        %4940 = vmatprep.subr.bf16.mxu0 0
        %4941 = vmatpush1.bf16.msra.mxu0 0
        %4942 = vmatprep.subr.bf16.mxu0 0
        %4943 = vmatpush1.bf16.msra.mxu0 0
        %4944 = vmatprep.subr.bf16.mxu0 0
        %4945 = vmatpush1.bf16.msra.mxu0 0
        %4946 = vmatprep.subr.bf16.mxu0 0
        %4947 = vmatpush1.bf16.msra.mxu0 0
        %4948 = vmatprep.subr.bf16.mxu0 0
        %4949 = vmatpush1.bf16.msra.mxu0 0
        %4950 = vmatprep.subr.bf16.mxu0 0
        %4951 = vmatpush1.bf16.msra.mxu0 0
        %4952 = vmatprep.subr.bf16.mxu0 0
        %4953 = vmatpush1.bf16.msra.mxu0 0
        %4954 = vmatprep.subr.bf16.mxu0 0
        %4955 = vmatpush1.bf16.msra.mxu0 0
        %4956 = vmatprep.subr.bf16.mxu0 0
        %4957 = vmatpush1.bf16.msra.mxu0 0
        %4958 = vmatprep.subr.bf16.mxu0 0
        %4959 = vmatpush1.bf16.msra.mxu0 0
        %4960 = vmatprep.subr.bf16.mxu0 0
        %4961 = vmatpush1.bf16.msra.mxu0 0
        %4962 = vmatprep.subr.bf16.mxu0 0
        %4963 = vmatpush1.bf16.msra.mxu0 0
        %4964 = vmatprep.mubr.bf16.mxu0 0
        %4965 = vmatmul.mubr.bf16.gmra.mrb[0].mxu0 %v4912
        %v4966 = vpop.f32.mrb[0].mxu0
        %v4967 = vadd.f32 0.0, %v4966
        %v4968 = vpop.f32.mrb[0].mxu0
        %v4969 = vadd.f32 0.0, %v4968
        %v4970 = vpop.f32.mrb[0].mxu0
        %v4971 = vpop.f32.mrb[0].mxu0
        %4972 = vdwg.mxu0
        %4973 = vmatprep.subr.bf16.mxu0 %v4924
        %4974 = vmatpush1.bf16.msra.mxu0 %v4921
        %4975 = vmatprep.subr.bf16.mxu0 0
        %4976 = vmatpush1.bf16.msra.mxu0 0
        %4977 = vmatprep.subr.bf16.mxu0 0
        %4978 = vmatpush1.bf16.msra.mxu0 0
        %4979 = vmatprep.subr.bf16.mxu0 0
        %4980 = vmatpush1.bf16.msra.mxu0 0
        %4981 = vmatprep.subr.bf16.mxu0 0
        %4982 = vmatpush1.bf16.msra.mxu0 0
        %4983 = vmatprep.subr.bf16.mxu0 0
        %4984 = vmatpush1.bf16.msra.mxu0 0
        %4985 = vmatprep.subr.bf16.mxu0 0
        %4986 = vmatpush1.bf16.msra.mxu0 0
        %4987 = vmatprep.subr.bf16.mxu0 0
        %4988 = vmatpush1.bf16.msra.mxu0 0
        %4989 = vmatprep.subr.bf16.mxu0 0
        %4990 = vmatpush1.bf16.msra.mxu0 0
        %4991 = vmatprep.subr.bf16.mxu0 0
        %4992 = vmatpush1.bf16.msra.mxu0 0
        %4993 = vmatprep.subr.bf16.mxu0 0
        %4994 = vmatpush1.bf16.msra.mxu0 0
        %4995 = vmatprep.subr.bf16.mxu0 0
        %4996 = vmatpush1.bf16.msra.mxu0 0
        %4997 = vmatprep.subr.bf16.mxu0 0
        %4998 = vmatpush1.bf16.msra.mxu0 0
        %4999 = vmatprep.subr.bf16.mxu0 0
        %5000 = vmatpush1.bf16.msra.mxu0 0
        %5001 = vmatprep.subr.bf16.mxu0 0
        %5002 = vmatpush1.bf16.msra.mxu0 0
        %5003 = vmatprep.subr.bf16.mxu0 0
        %5004 = vmatpush1.bf16.msra.mxu0 0
        %5005 = vmatprep.mubr.bf16.mxu0 0
        %5006 = vmatmul.mubr.bf16.gmra.mrb[0].mxu0 %v4912
        %v5007 = vpop.f32.mrb[0].mxu0
        %v5008 = vadd.f32 0.0, %v5007
        %v5009 = vpop.f32.mrb[0].mxu0
        %v5010 = vadd.f32 0.0, %v5009
        %v5011 = vpop.f32.mrb[0].mxu0
        %v5012 = vpop.f32.mrb[0].mxu0
        %5013 = vdwg.mxu0
        %5014 = vmatprep.subr.bf16.mxu0 %v4930
        %5015 = vmatpush1.bf16.msra.mxu0 %v4927
        %5016 = vmatprep.subr.bf16.mxu0 0
        %5017 = vmatpush1.bf16.msra.mxu0 0
        %5018 = vmatprep.subr.bf16.mxu0 0
        %5019 = vmatpush1.bf16.msra.mxu0 0
        %5020 = vmatprep.subr.bf16.mxu0 0
        %5021 = vmatpush1.bf16.msra.mxu0 0
        %5022 = vmatprep.subr.bf16.mxu0 0
        %5023 = vmatpush1.bf16.msra.mxu0 0
        %5024 = vmatprep.subr.bf16.mxu0 0
        %5025 = vmatpush1.bf16.msra.mxu0 0
        %5026 = vmatprep.subr.bf16.mxu0 0
        %5027 = vmatpush1.bf16.msra.mxu0 0
        %5028 = vmatprep.subr.bf16.mxu0 0
        %5029 = vmatpush1.bf16.msra.mxu0 0
        %5030 = vmatprep.subr.bf16.mxu0 0
        %5031 = vmatpush1.bf16.msra.mxu0 0
        %5032 = vmatprep.subr.bf16.mxu0 0
        %5033 = vmatpush1.bf16.msra.mxu0 0
        %5034 = vmatprep.subr.bf16.mxu0 0
        %5035 = vmatpush1.bf16.msra.mxu0 0
        %5036 = vmatprep.subr.bf16.mxu0 0
        %5037 = vmatpush1.bf16.msra.mxu0 0
        %5038 = vmatprep.subr.bf16.mxu0 0
        %5039 = vmatpush1.bf16.msra.mxu0 0
        %5040 = vmatprep.subr.bf16.mxu0 0
        %5041 = vmatpush1.bf16.msra.mxu0 0
        %5042 = vmatprep.subr.bf16.mxu0 0
        %5043 = vmatpush1.bf16.msra.mxu0 0
        %5044 = vmatprep.subr.bf16.mxu0 0
        %5045 = vmatpush1.bf16.msra.mxu0 0
        %5046 = vmatprep.mubr.bf16.mxu0 0
        %5047 = vmatmul.mubr.bf16.gmra.mrb[0].mxu0 %v4912
        %v5048 = vpop.f32.mrb[0].mxu0
        %v5049 = vadd.f32 0.0, %v5048
        %v5050 = vpop.f32.mrb[0].mxu0
        %v5051 = vadd.f32 0.0, %v5050
        %v5052 = vpop.f32.mrb[0].mxu0
        %v5053 = vpop.f32.mrb[0].mxu0
        %5054 = vdwg.mxu0
        %v5055 = vld [vmem:[#allocation4] sm:$0xff]
        %v5056 = vld [vmem:[#allocation4 + $0x8] sm:$0xff]
        %v5057 = vld [vmem:[#allocation4 + $0x10] sm:$0xff]
        %v5058 = vld [vmem:[#allocation4 + $0x18] sm:$0xff]
        %v5059 = vld [vmem:[#allocation4 + $0x20] sm:$0xff]
        %v5060 = vld [vmem:[#allocation4 + $0x28] sm:$0xff]
        %v5061 = vadd.f32 %v5055, %v4967
        %v5062 = vadd.f32 %v5056, %v4969
        %v5063 = vadd.f32 %v5057, %v5008
        %v5064 = vadd.f32 %v5058, %v5010
        %v5065 = vadd.f32 %v5059, %v5049
        %v5066 = vadd.f32 %v5060, %v5051
        %5067 = vst [vmem:[#allocation4] sm:$0xff] %v5061
        %5068 = vst [vmem:[#allocation4 + $0x8] sm:$0xff] %v5062
        %5069 = vst [vmem:[#allocation4 + $0x10] sm:$0xff] %v5063
        %5070 = vst [vmem:[#allocation4 + $0x18] sm:$0xff] %v5064
        %5071 = vst [vmem:[#allocation4 + $0x20] sm:$0xff] %v5065
        %5072 = vst.msk [vmem:[#allocation4 + $0x28] sm:$0xff] %vm520, %v5066
        %s5073 = scalar_lea.vmem %s2, 96
        %v5074 = vld [vmem:[%s5073] sm:$0xf]
        %v5075 = vld [vmem:[#allocation2 + $0x8] sm:$0xff]
        %v5076 = vld [vmem:[#allocation2 + $0x10] sm:$0xff]
        %v5077 = vld [vmem:[#allocation2 + $0x18] sm:$0xff]
        %v5081 = vunpack.c.l.b16 %v5075
        %v5082 = vunpack.c.h.b16 %v5075
        %v5083 = vunpack.c.l.b16 %v5076
        %v5084 = vunpack.c.h.b16 %v5076
        %v5085 = vunpack.c.l.b16 %v5077
        %v5086 = vunpack.c.h.b16 %v5077
        %v5087 = vpack.c.b16 %v5081, %v5081
        %v5088 = vpack.c.b16 %v5082, %v5082
        %v5089 = vpack.c.b16 %v5083, %v5083
        %v5090 = vpack.c.b16 %v5084, %v5084
        %v5091 = vpack.c.b16 %v5085, %v5085
        %v5092 = vpack.c.b16 %v5086, %v5086
        %5093 = vrot.lane.b32.xlu0 %v5087, 110
        %v5094 = vpop.permute.xlu0 %5093
        %5095 = vrot.lane.b32.xlu0 %v5088, 110
        %v5096 = vpop.permute.xlu0 %5095
        %5097 = vrot.lane.b32.xlu0 %v5089, 110
        %v5098 = vpop.permute.xlu0 %5097
        %5099 = vrot.lane.b32.xlu0 %v5090, 110
        %v5100 = vpop.permute.xlu0 %5099
        %5101 = vrot.lane.b32.xlu0 %v5091, 110
        %v5102 = vpop.permute.xlu0 %5101
        %5103 = vrot.lane.b32.xlu0 %v5092, 110
        %v5104 = vpop.permute.xlu0 %5103
        %v5105 = vsel %vm1554, %v5094, %v5096
        %v5106 = vsel %vm1554, %v5096, %v5098
        %v5107 = vsel %vm1554, %v5098, %v5100
        %v5108 = vsel %vm1554, %v5100, %v5102
        %v5109 = vsel %vm1554, %v5102, %v5104
        %v5111 = vsel %vm369, %v5074, 0
        %v5114 = vsel %vm373, %v5105, 0
        %v5117 = vsel %vm373, %v5106, 0
        %v5120 = vsel %vm373, %v5107, 0
        %v5123 = vsel %vm373, %v5108, 0
        %v5126 = vsel %vm373, %v5109, 0
        %v5129 = vsel %vm373, %v5104, 0
        %5131 = vmatprep.subr.bf16.mxu0 %v5117
        %5132 = vmatpush1.bf16.msra.mxu0 %v5114
        %5133 = vmatprep.subr.bf16.mxu0 0
        %5134 = vmatpush1.bf16.msra.mxu0 0
        %5135 = vmatprep.subr.bf16.mxu0 0
        %5136 = vmatpush1.bf16.msra.mxu0 0
        %5137 = vmatprep.subr.bf16.mxu0 0
        %5138 = vmatpush1.bf16.msra.mxu0 0
        %5139 = vmatprep.subr.bf16.mxu0 0
        %5140 = vmatpush1.bf16.msra.mxu0 0
        %5141 = vmatprep.subr.bf16.mxu0 0
        %5142 = vmatpush1.bf16.msra.mxu0 0
        %5143 = vmatprep.subr.bf16.mxu0 0
        %5144 = vmatpush1.bf16.msra.mxu0 0
        %5145 = vmatprep.subr.bf16.mxu0 0
        %5146 = vmatpush1.bf16.msra.mxu0 0
        %5147 = vmatprep.subr.bf16.mxu0 0
        %5148 = vmatpush1.bf16.msra.mxu0 0
        %5149 = vmatprep.subr.bf16.mxu0 0
        %5150 = vmatpush1.bf16.msra.mxu0 0
        %5151 = vmatprep.subr.bf16.mxu0 0
        %5152 = vmatpush1.bf16.msra.mxu0 0
        %5153 = vmatprep.subr.bf16.mxu0 0
        %5154 = vmatpush1.bf16.msra.mxu0 0
        %5155 = vmatprep.subr.bf16.mxu0 0
        %5156 = vmatpush1.bf16.msra.mxu0 0
        %5157 = vmatprep.subr.bf16.mxu0 0
        %5158 = vmatpush1.bf16.msra.mxu0 0
        %5159 = vmatprep.subr.bf16.mxu0 0
        %5160 = vmatpush1.bf16.msra.mxu0 0
        %5161 = vmatprep.subr.bf16.mxu0 0
        %5162 = vmatpush1.bf16.msra.mxu0 0
        %5163 = vmatprep.mubr.bf16.mxu0 0
        %5164 = vmatmul.mubr.bf16.gmra.mrb[0].mxu0 %v5111
        %v5165 = vpop.f32.mrb[0].mxu0
        %v5166 = vadd.f32 0.0, %v5165
        %v5167 = vpop.f32.mrb[0].mxu0
        %v5168 = vadd.f32 0.0, %v5167
        %v5169 = vpop.f32.mrb[0].mxu0
        %v5170 = vpop.f32.mrb[0].mxu0
        %5171 = vdwg.mxu0
        %5172 = vmatprep.subr.bf16.mxu0 %v5123
        %5173 = vmatpush1.bf16.msra.mxu0 %v5120
        %5174 = vmatprep.subr.bf16.mxu0 0
        %5175 = vmatpush1.bf16.msra.mxu0 0
        %5176 = vmatprep.subr.bf16.mxu0 0
        %5177 = vmatpush1.bf16.msra.mxu0 0
        %5178 = vmatprep.subr.bf16.mxu0 0
        %5179 = vmatpush1.bf16.msra.mxu0 0
        %5180 = vmatprep.subr.bf16.mxu0 0
        %5181 = vmatpush1.bf16.msra.mxu0 0
        %5182 = vmatprep.subr.bf16.mxu0 0
        %5183 = vmatpush1.bf16.msra.mxu0 0
        %5184 = vmatprep.subr.bf16.mxu0 0
        %5185 = vmatpush1.bf16.msra.mxu0 0
        %5186 = vmatprep.subr.bf16.mxu0 0
        %5187 = vmatpush1.bf16.msra.mxu0 0
        %5188 = vmatprep.subr.bf16.mxu0 0
        %5189 = vmatpush1.bf16.msra.mxu0 0
        %5190 = vmatprep.subr.bf16.mxu0 0
        %5191 = vmatpush1.bf16.msra.mxu0 0
        %5192 = vmatprep.subr.bf16.mxu0 0
        %5193 = vmatpush1.bf16.msra.mxu0 0
        %5194 = vmatprep.subr.bf16.mxu0 0
        %5195 = vmatpush1.bf16.msra.mxu0 0
        %5196 = vmatprep.subr.bf16.mxu0 0
        %5197 = vmatpush1.bf16.msra.mxu0 0
        %5198 = vmatprep.subr.bf16.mxu0 0
        %5199 = vmatpush1.bf16.msra.mxu0 0
        %5200 = vmatprep.subr.bf16.mxu0 0
        %5201 = vmatpush1.bf16.msra.mxu0 0
        %5202 = vmatprep.subr.bf16.mxu0 0
        %5203 = vmatpush1.bf16.msra.mxu0 0
        %5204 = vmatprep.mubr.bf16.mxu0 0
        %5205 = vmatmul.mubr.bf16.gmra.mrb[0].mxu0 %v5111
        %v5206 = vpop.f32.mrb[0].mxu0
        %v5207 = vadd.f32 0.0, %v5206
        %v5208 = vpop.f32.mrb[0].mxu0
        %v5209 = vadd.f32 0.0, %v5208
        %v5210 = vpop.f32.mrb[0].mxu0
        %v5211 = vpop.f32.mrb[0].mxu0
        %5212 = vdwg.mxu0
        %5213 = vmatprep.subr.bf16.mxu0 %v5129
        %5214 = vmatpush1.bf16.msra.mxu0 %v5126
        %5215 = vmatprep.subr.bf16.mxu0 0
        %5216 = vmatpush1.bf16.msra.mxu0 0
        %5217 = vmatprep.subr.bf16.mxu0 0
        %5218 = vmatpush1.bf16.msra.mxu0 0
        %5219 = vmatprep.subr.bf16.mxu0 0
        %5220 = vmatpush1.bf16.msra.mxu0 0
        %5221 = vmatprep.subr.bf16.mxu0 0
        %5222 = vmatpush1.bf16.msra.mxu0 0
        %5223 = vmatprep.subr.bf16.mxu0 0
        %5224 = vmatpush1.bf16.msra.mxu0 0
        %5225 = vmatprep.subr.bf16.mxu0 0
        %5226 = vmatpush1.bf16.msra.mxu0 0
        %5227 = vmatprep.subr.bf16.mxu0 0
        %5228 = vmatpush1.bf16.msra.mxu0 0
        %5229 = vmatprep.subr.bf16.mxu0 0
        %5230 = vmatpush1.bf16.msra.mxu0 0
        %5231 = vmatprep.subr.bf16.mxu0 0
        %5232 = vmatpush1.bf16.msra.mxu0 0
        %5233 = vmatprep.subr.bf16.mxu0 0
        %5234 = vmatpush1.bf16.msra.mxu0 0
        %5235 = vmatprep.subr.bf16.mxu0 0
        %5236 = vmatpush1.bf16.msra.mxu0 0
        %5237 = vmatprep.subr.bf16.mxu0 0
        %5238 = vmatpush1.bf16.msra.mxu0 0
        %5239 = vmatprep.subr.bf16.mxu0 0
        %5240 = vmatpush1.bf16.msra.mxu0 0
        %5241 = vmatprep.subr.bf16.mxu0 0
        %5242 = vmatpush1.bf16.msra.mxu0 0
        %5243 = vmatprep.subr.bf16.mxu0 0
        %5244 = vmatpush1.bf16.msra.mxu0 0
        %5245 = vmatprep.mubr.bf16.mxu0 0
        %5246 = vmatmul.mubr.bf16.gmra.mrb[0].mxu0 %v5111
        %v5247 = vpop.f32.mrb[0].mxu0
        %v5248 = vadd.f32 0.0, %v5247
        %v5249 = vpop.f32.mrb[0].mxu0
        %v5250 = vadd.f32 0.0, %v5249
        %v5251 = vpop.f32.mrb[0].mxu0
        %v5252 = vpop.f32.mrb[0].mxu0
        %5253 = vdwg.mxu0
        %v5254 = vld [vmem:[#allocation4] sm:$0xff]
        %v5255 = vld [vmem:[#allocation4 + $0x8] sm:$0xff]
        %v5256 = vld [vmem:[#allocation4 + $0x10] sm:$0xff]
        %v5257 = vld [vmem:[#allocation4 + $0x18] sm:$0xff]
        %v5258 = vld [vmem:[#allocation4 + $0x20] sm:$0xff]
        %v5259 = vld [vmem:[#allocation4 + $0x28] sm:$0xff]
        %v5260 = vadd.f32 %v5254, %v5166
        %v5261 = vadd.f32 %v5255, %v5168
        %v5262 = vadd.f32 %v5256, %v5207
        %v5263 = vadd.f32 %v5257, %v5209
        %v5264 = vadd.f32 %v5258, %v5248
        %v5265 = vadd.f32 %v5259, %v5250
        %5266 = vst [vmem:[#allocation4] sm:$0xff] %v5260
        %5267 = vst [vmem:[#allocation4 + $0x8] sm:$0xff] %v5261
        %5268 = vst [vmem:[#allocation4 + $0x10] sm:$0xff] %v5262
        %5269 = vst [vmem:[#allocation4 + $0x18] sm:$0xff] %v5263
        %5270 = vst [vmem:[#allocation4 + $0x20] sm:$0xff] %v5264
        %5271 = vst.msk [vmem:[#allocation4 + $0x28] sm:$0xff] %vm520, %v5265
        %s5272 = scalar_lea.vmem %s2, 100
        %v5273 = vld [vmem:[%s5272] sm:$0xf]
        %v5274 = vld [vmem:[#allocation2 + $0x8] sm:$0xff]
        %v5275 = vld [vmem:[#allocation2 + $0x10] sm:$0xff]
        %v5276 = vld [vmem:[#allocation2 + $0x18] sm:$0xff]
        %v5280 = vunpack.c.l.b16 %v5274
        %v5281 = vunpack.c.h.b16 %v5274
        %v5282 = vunpack.c.l.b16 %v5275
        %v5283 = vunpack.c.h.b16 %v5275
        %v5284 = vunpack.c.l.b16 %v5276
        %v5285 = vunpack.c.h.b16 %v5276
        %v5286 = vpack.c.b16 %v5280, %v5280
        %v5287 = vpack.c.b16 %v5281, %v5281
        %v5288 = vpack.c.b16 %v5282, %v5282
        %v5289 = vpack.c.b16 %v5283, %v5283
        %v5290 = vpack.c.b16 %v5284, %v5284
        %v5291 = vpack.c.b16 %v5285, %v5285
        %5292 = vrot.lane.b32.xlu0 %v5286, 109
        %v5293 = vpop.permute.xlu0 %5292
        %5294 = vrot.lane.b32.xlu0 %v5287, 109
        %v5295 = vpop.permute.xlu0 %5294
        %5296 = vrot.lane.b32.xlu0 %v5288, 109
        %v5297 = vpop.permute.xlu0 %5296
        %5298 = vrot.lane.b32.xlu0 %v5289, 109
        %v5299 = vpop.permute.xlu0 %5298
        %5300 = vrot.lane.b32.xlu0 %v5290, 109
        %v5301 = vpop.permute.xlu0 %5300
        %5302 = vrot.lane.b32.xlu0 %v5291, 109
        %v5303 = vpop.permute.xlu0 %5302
        %v5304 = vsel %vm1754, %v5293, %v5295
        %v5305 = vsel %vm1754, %v5295, %v5297
        %v5306 = vsel %vm1754, %v5297, %v5299
        %v5307 = vsel %vm1754, %v5299, %v5301
        %v5308 = vsel %vm1754, %v5301, %v5303
        %v5310 = vsel %vm369, %v5273, 0
        %v5313 = vsel %vm373, %v5304, 0
        %v5316 = vsel %vm373, %v5305, 0
        %v5319 = vsel %vm373, %v5306, 0
        %v5322 = vsel %vm373, %v5307, 0
        %v5325 = vsel %vm373, %v5308, 0
        %v5328 = vsel %vm373, %v5303, 0
        %5330 = vmatprep.subr.bf16.mxu0 %v5316
        %5331 = vmatpush1.bf16.msra.mxu0 %v5313
        %5332 = vmatprep.subr.bf16.mxu0 0
        %5333 = vmatpush1.bf16.msra.mxu0 0
        %5334 = vmatprep.subr.bf16.mxu0 0
        %5335 = vmatpush1.bf16.msra.mxu0 0
        %5336 = vmatprep.subr.bf16.mxu0 0
        %5337 = vmatpush1.bf16.msra.mxu0 0
        %5338 = vmatprep.subr.bf16.mxu0 0
        %5339 = vmatpush1.bf16.msra.mxu0 0
        %5340 = vmatprep.subr.bf16.mxu0 0
        %5341 = vmatpush1.bf16.msra.mxu0 0
        %5342 = vmatprep.subr.bf16.mxu0 0
        %5343 = vmatpush1.bf16.msra.mxu0 0
        %5344 = vmatprep.subr.bf16.mxu0 0
        %5345 = vmatpush1.bf16.msra.mxu0 0
        %5346 = vmatprep.subr.bf16.mxu0 0
        %5347 = vmatpush1.bf16.msra.mxu0 0
        %5348 = vmatprep.subr.bf16.mxu0 0
        %5349 = vmatpush1.bf16.msra.mxu0 0
        %5350 = vmatprep.subr.bf16.mxu0 0
        %5351 = vmatpush1.bf16.msra.mxu0 0
        %5352 = vmatprep.subr.bf16.mxu0 0
        %5353 = vmatpush1.bf16.msra.mxu0 0
        %5354 = vmatprep.subr.bf16.mxu0 0
        %5355 = vmatpush1.bf16.msra.mxu0 0
        %5356 = vmatprep.subr.bf16.mxu0 0
        %5357 = vmatpush1.bf16.msra.mxu0 0
        %5358 = vmatprep.subr.bf16.mxu0 0
        %5359 = vmatpush1.bf16.msra.mxu0 0
        %5360 = vmatprep.subr.bf16.mxu0 0
        %5361 = vmatpush1.bf16.msra.mxu0 0
        %5362 = vmatprep.mubr.bf16.mxu0 0
        %5363 = vmatmul.mubr.bf16.gmra.mrb[0].mxu0 %v5310
        %v5364 = vpop.f32.mrb[0].mxu0
        %v5365 = vadd.f32 0.0, %v5364
        %v5366 = vpop.f32.mrb[0].mxu0
        %v5367 = vadd.f32 0.0, %v5366
        %v5368 = vpop.f32.mrb[0].mxu0
        %v5369 = vpop.f32.mrb[0].mxu0
        %5370 = vdwg.mxu0
        %5371 = vmatprep.subr.bf16.mxu0 %v5322
        %5372 = vmatpush1.bf16.msra.mxu0 %v5319
        %5373 = vmatprep.subr.bf16.mxu0 0
        %5374 = vmatpush1.bf16.msra.mxu0 0
        %5375 = vmatprep.subr.bf16.mxu0 0
        %5376 = vmatpush1.bf16.msra.mxu0 0
        %5377 = vmatprep.subr.bf16.mxu0 0
        %5378 = vmatpush1.bf16.msra.mxu0 0
        %5379 = vmatprep.subr.bf16.mxu0 0
        %5380 = vmatpush1.bf16.msra.mxu0 0
        %5381 = vmatprep.subr.bf16.mxu0 0
        %5382 = vmatpush1.bf16.msra.mxu0 0
        %5383 = vmatprep.subr.bf16.mxu0 0
        %5384 = vmatpush1.bf16.msra.mxu0 0
        %5385 = vmatprep.subr.bf16.mxu0 0
        %5386 = vmatpush1.bf16.msra.mxu0 0
        %5387 = vmatprep.subr.bf16.mxu0 0
        %5388 = vmatpush1.bf16.msra.mxu0 0
        %5389 = vmatprep.subr.bf16.mxu0 0
        %5390 = vmatpush1.bf16.msra.mxu0 0
        %5391 = vmatprep.subr.bf16.mxu0 0
        %5392 = vmatpush1.bf16.msra.mxu0 0
        %5393 = vmatprep.subr.bf16.mxu0 0
        %5394 = vmatpush1.bf16.msra.mxu0 0
        %5395 = vmatprep.subr.bf16.mxu0 0
        %5396 = vmatpush1.bf16.msra.mxu0 0
        %5397 = vmatprep.subr.bf16.mxu0 0
        %5398 = vmatpush1.bf16.msra.mxu0 0
        %5399 = vmatprep.subr.bf16.mxu0 0
        %5400 = vmatpush1.bf16.msra.mxu0 0
        %5401 = vmatprep.subr.bf16.mxu0 0
        %5402 = vmatpush1.bf16.msra.mxu0 0
        %5403 = vmatprep.mubr.bf16.mxu0 0
        %5404 = vmatmul.mubr.bf16.gmra.mrb[0].mxu0 %v5310
        %v5405 = vpop.f32.mrb[0].mxu0
        %v5406 = vadd.f32 0.0, %v5405
        %v5407 = vpop.f32.mrb[0].mxu0
        %v5408 = vadd.f32 0.0, %v5407
        %v5409 = vpop.f32.mrb[0].mxu0
        %v5410 = vpop.f32.mrb[0].mxu0
        %5411 = vdwg.mxu0
        %5412 = vmatprep.subr.bf16.mxu0 %v5328
        %5413 = vmatpush1.bf16.msra.mxu0 %v5325
        %5414 = vmatprep.subr.bf16.mxu0 0
        %5415 = vmatpush1.bf16.msra.mxu0 0
        %5416 = vmatprep.subr.bf16.mxu0 0
        %5417 = vmatpush1.bf16.msra.mxu0 0
        %5418 = vmatprep.subr.bf16.mxu0 0
        %5419 = vmatpush1.bf16.msra.mxu0 0
        %5420 = vmatprep.subr.bf16.mxu0 0
        %5421 = vmatpush1.bf16.msra.mxu0 0
        %5422 = vmatprep.subr.bf16.mxu0 0
        %5423 = vmatpush1.bf16.msra.mxu0 0
        %5424 = vmatprep.subr.bf16.mxu0 0
        %5425 = vmatpush1.bf16.msra.mxu0 0
        %5426 = vmatprep.subr.bf16.mxu0 0
        %5427 = vmatpush1.bf16.msra.mxu0 0
        %5428 = vmatprep.subr.bf16.mxu0 0
        %5429 = vmatpush1.bf16.msra.mxu0 0
        %5430 = vmatprep.subr.bf16.mxu0 0
        %5431 = vmatpush1.bf16.msra.mxu0 0
        %5432 = vmatprep.subr.bf16.mxu0 0
        %5433 = vmatpush1.bf16.msra.mxu0 0
        %5434 = vmatprep.subr.bf16.mxu0 0
        %5435 = vmatpush1.bf16.msra.mxu0 0
        %5436 = vmatprep.subr.bf16.mxu0 0
        %5437 = vmatpush1.bf16.msra.mxu0 0
        %5438 = vmatprep.subr.bf16.mxu0 0
        %5439 = vmatpush1.bf16.msra.mxu0 0
        %5440 = vmatprep.subr.bf16.mxu0 0
        %5441 = vmatpush1.bf16.msra.mxu0 0
        %5442 = vmatprep.subr.bf16.mxu0 0
        %5443 = vmatpush1.bf16.msra.mxu0 0
        %5444 = vmatprep.mubr.bf16.mxu0 0
        %5445 = vmatmul.mubr.bf16.gmra.mrb[0].mxu0 %v5310
        %v5446 = vpop.f32.mrb[0].mxu0
        %v5447 = vadd.f32 0.0, %v5446
        %v5448 = vpop.f32.mrb[0].mxu0
        %v5449 = vadd.f32 0.0, %v5448
        %v5450 = vpop.f32.mrb[0].mxu0
        %v5451 = vpop.f32.mrb[0].mxu0
        %5452 = vdwg.mxu0
        %v5453 = vld [vmem:[#allocation4] sm:$0xff]
        %v5454 = vld [vmem:[#allocation4 + $0x8] sm:$0xff]
        %v5455 = vld [vmem:[#allocation4 + $0x10] sm:$0xff]
        %v5456 = vld [vmem:[#allocation4 + $0x18] sm:$0xff]
        %v5457 = vld [vmem:[#allocation4 + $0x20] sm:$0xff]
        %v5458 = vld [vmem:[#allocation4 + $0x28] sm:$0xff]
        %v5459 = vadd.f32 %v5453, %v5365
        %v5460 = vadd.f32 %v5454, %v5367
        %v5461 = vadd.f32 %v5455, %v5406
        %v5462 = vadd.f32 %v5456, %v5408
        %v5463 = vadd.f32 %v5457, %v5447
        %v5464 = vadd.f32 %v5458, %v5449
        %5465 = vst [vmem:[#allocation4] sm:$0xff] %v5459
        %5466 = vst [vmem:[#allocation4 + $0x8] sm:$0xff] %v5460
        %5467 = vst [vmem:[#allocation4 + $0x10] sm:$0xff] %v5461
        %5468 = vst [vmem:[#allocation4 + $0x18] sm:$0xff] %v5462
        %5469 = vst [vmem:[#allocation4 + $0x20] sm:$0xff] %v5463
        %5470 = vst.msk [vmem:[#allocation4 + $0x28] sm:$0xff] %vm520, %v5464
        %s5471 = scalar_lea.vmem %s2, 104
        %v5472 = vld [vmem:[%s5471] sm:$0xf]
        %v5473 = vld [vmem:[#allocation2 + $0x8] sm:$0xff]
        %v5474 = vld [vmem:[#allocation2 + $0x10] sm:$0xff]
        %v5475 = vld [vmem:[#allocation2 + $0x18] sm:$0xff]
        %v5479 = vunpack.c.l.b16 %v5473
        %v5480 = vunpack.c.h.b16 %v5473
        %v5481 = vunpack.c.l.b16 %v5474
        %v5482 = vunpack.c.h.b16 %v5474
        %v5483 = vunpack.c.l.b16 %v5475
        %v5484 = vunpack.c.h.b16 %v5475
        %v5485 = vpack.c.b16 %v5479, %v5479
        %v5486 = vpack.c.b16 %v5480, %v5480
        %v5487 = vpack.c.b16 %v5481, %v5481
        %v5488 = vpack.c.b16 %v5482, %v5482
        %v5489 = vpack.c.b16 %v5483, %v5483
        %v5490 = vpack.c.b16 %v5484, %v5484
        %5491 = vrot.lane.b32.xlu0 %v5485, 108
        %v5492 = vpop.permute.xlu0 %5491
        %5493 = vrot.lane.b32.xlu0 %v5486, 108
        %v5494 = vpop.permute.xlu0 %5493
        %5495 = vrot.lane.b32.xlu0 %v5487, 108
        %v5496 = vpop.permute.xlu0 %5495
        %5497 = vrot.lane.b32.xlu0 %v5488, 108
        %v5498 = vpop.permute.xlu0 %5497
        %5499 = vrot.lane.b32.xlu0 %v5489, 108
        %v5500 = vpop.permute.xlu0 %5499
        %5501 = vrot.lane.b32.xlu0 %v5490, 108
        %v5502 = vpop.permute.xlu0 %5501
        %v5503 = vsel %vm1954, %v5492, %v5494
        %v5504 = vsel %vm1954, %v5494, %v5496
        %v5505 = vsel %vm1954, %v5496, %v5498
        %v5506 = vsel %vm1954, %v5498, %v5500
        %v5507 = vsel %vm1954, %v5500, %v5502
        %v5509 = vsel %vm369, %v5472, 0
        %v5512 = vsel %vm373, %v5503, 0
        %v5515 = vsel %vm373, %v5504, 0
        %v5518 = vsel %vm373, %v5505, 0
        %v5521 = vsel %vm373, %v5506, 0
        %v5524 = vsel %vm373, %v5507, 0
        %v5527 = vsel %vm373, %v5502, 0
        %5529 = vmatprep.subr.bf16.mxu0 %v5515
        %5530 = vmatpush1.bf16.msra.mxu0 %v5512
        %5531 = vmatprep.subr.bf16.mxu0 0
        %5532 = vmatpush1.bf16.msra.mxu0 0
        %5533 = vmatprep.subr.bf16.mxu0 0
        %5534 = vmatpush1.bf16.msra.mxu0 0
        %5535 = vmatprep.subr.bf16.mxu0 0
        %5536 = vmatpush1.bf16.msra.mxu0 0
        %5537 = vmatprep.subr.bf16.mxu0 0
        %5538 = vmatpush1.bf16.msra.mxu0 0
        %5539 = vmatprep.subr.bf16.mxu0 0
        %5540 = vmatpush1.bf16.msra.mxu0 0
        %5541 = vmatprep.subr.bf16.mxu0 0
        %5542 = vmatpush1.bf16.msra.mxu0 0
        %5543 = vmatprep.subr.bf16.mxu0 0
        %5544 = vmatpush1.bf16.msra.mxu0 0
        %5545 = vmatprep.subr.bf16.mxu0 0
        %5546 = vmatpush1.bf16.msra.mxu0 0
        %5547 = vmatprep.subr.bf16.mxu0 0
        %5548 = vmatpush1.bf16.msra.mxu0 0
        %5549 = vmatprep.subr.bf16.mxu0 0
        %5550 = vmatpush1.bf16.msra.mxu0 0
        %5551 = vmatprep.subr.bf16.mxu0 0
        %5552 = vmatpush1.bf16.msra.mxu0 0
        %5553 = vmatprep.subr.bf16.mxu0 0
        %5554 = vmatpush1.bf16.msra.mxu0 0
        %5555 = vmatprep.subr.bf16.mxu0 0
        %5556 = vmatpush1.bf16.msra.mxu0 0
        %5557 = vmatprep.subr.bf16.mxu0 0
        %5558 = vmatpush1.bf16.msra.mxu0 0
        %5559 = vmatprep.subr.bf16.mxu0 0
        %5560 = vmatpush1.bf16.msra.mxu0 0
        %5561 = vmatprep.mubr.bf16.mxu0 0
        %5562 = vmatmul.mubr.bf16.gmra.mrb[0].mxu0 %v5509
        %v5563 = vpop.f32.mrb[0].mxu0
        %v5564 = vadd.f32 0.0, %v5563
        %v5565 = vpop.f32.mrb[0].mxu0
        %v5566 = vadd.f32 0.0, %v5565
        %v5567 = vpop.f32.mrb[0].mxu0
        %v5568 = vpop.f32.mrb[0].mxu0
        %5569 = vdwg.mxu0
        %5570 = vmatprep.subr.bf16.mxu0 %v5521
        %5571 = vmatpush1.bf16.msra.mxu0 %v5518
        %5572 = vmatprep.subr.bf16.mxu0 0
        %5573 = vmatpush1.bf16.msra.mxu0 0
        %5574 = vmatprep.subr.bf16.mxu0 0
        %5575 = vmatpush1.bf16.msra.mxu0 0
        %5576 = vmatprep.subr.bf16.mxu0 0
        %5577 = vmatpush1.bf16.msra.mxu0 0
        %5578 = vmatprep.subr.bf16.mxu0 0
        %5579 = vmatpush1.bf16.msra.mxu0 0
        %5580 = vmatprep.subr.bf16.mxu0 0
        %5581 = vmatpush1.bf16.msra.mxu0 0
        %5582 = vmatprep.subr.bf16.mxu0 0
        %5583 = vmatpush1.bf16.msra.mxu0 0
        %5584 = vmatprep.subr.bf16.mxu0 0
        %5585 = vmatpush1.bf16.msra.mxu0 0
        %5586 = vmatprep.subr.bf16.mxu0 0
        %5587 = vmatpush1.bf16.msra.mxu0 0
        %5588 = vmatprep.subr.bf16.mxu0 0
        %5589 = vmatpush1.bf16.msra.mxu0 0
        %5590 = vmatprep.subr.bf16.mxu0 0
        %5591 = vmatpush1.bf16.msra.mxu0 0
        %5592 = vmatprep.subr.bf16.mxu0 0
        %5593 = vmatpush1.bf16.msra.mxu0 0
        %5594 = vmatprep.subr.bf16.mxu0 0
        %5595 = vmatpush1.bf16.msra.mxu0 0
        %5596 = vmatprep.subr.bf16.mxu0 0
        %5597 = vmatpush1.bf16.msra.mxu0 0
        %5598 = vmatprep.subr.bf16.mxu0 0
        %5599 = vmatpush1.bf16.msra.mxu0 0
        %5600 = vmatprep.subr.bf16.mxu0 0
        %5601 = vmatpush1.bf16.msra.mxu0 0
        %5602 = vmatprep.mubr.bf16.mxu0 0
        %5603 = vmatmul.mubr.bf16.gmra.mrb[0].mxu0 %v5509
        %v5604 = vpop.f32.mrb[0].mxu0
        %v5605 = vadd.f32 0.0, %v5604
        %v5606 = vpop.f32.mrb[0].mxu0
        %v5607 = vadd.f32 0.0, %v5606
        %v5608 = vpop.f32.mrb[0].mxu0
        %v5609 = vpop.f32.mrb[0].mxu0
        %5610 = vdwg.mxu0
        %5611 = vmatprep.subr.bf16.mxu0 %v5527
        %5612 = vmatpush1.bf16.msra.mxu0 %v5524
        %5613 = vmatprep.subr.bf16.mxu0 0
        %5614 = vmatpush1.bf16.msra.mxu0 0
        %5615 = vmatprep.subr.bf16.mxu0 0
        %5616 = vmatpush1.bf16.msra.mxu0 0
        %5617 = vmatprep.subr.bf16.mxu0 0
        %5618 = vmatpush1.bf16.msra.mxu0 0
        %5619 = vmatprep.subr.bf16.mxu0 0
        %5620 = vmatpush1.bf16.msra.mxu0 0
        %5621 = vmatprep.subr.bf16.mxu0 0
        %5622 = vmatpush1.bf16.msra.mxu0 0
        %5623 = vmatprep.subr.bf16.mxu0 0
        %5624 = vmatpush1.bf16.msra.mxu0 0
        %5625 = vmatprep.subr.bf16.mxu0 0
        %5626 = vmatpush1.bf16.msra.mxu0 0
        %5627 = vmatprep.subr.bf16.mxu0 0
        %5628 = vmatpush1.bf16.msra.mxu0 0
        %5629 = vmatprep.subr.bf16.mxu0 0
        %5630 = vmatpush1.bf16.msra.mxu0 0
        %5631 = vmatprep.subr.bf16.mxu0 0
        %5632 = vmatpush1.bf16.msra.mxu0 0
        %5633 = vmatprep.subr.bf16.mxu0 0
        %5634 = vmatpush1.bf16.msra.mxu0 0
        %5635 = vmatprep.subr.bf16.mxu0 0
        %5636 = vmatpush1.bf16.msra.mxu0 0
        %5637 = vmatprep.subr.bf16.mxu0 0
        %5638 = vmatpush1.bf16.msra.mxu0 0
        %5639 = vmatprep.subr.bf16.mxu0 0
        %5640 = vmatpush1.bf16.msra.mxu0 0
        %5641 = vmatprep.subr.bf16.mxu0 0
        %5642 = vmatpush1.bf16.msra.mxu0 0
        %5643 = vmatprep.mubr.bf16.mxu0 0
        %5644 = vmatmul.mubr.bf16.gmra.mrb[0].mxu0 %v5509
        %v5645 = vpop.f32.mrb[0].mxu0
        %v5646 = vadd.f32 0.0, %v5645
        %v5647 = vpop.f32.mrb[0].mxu0
        %v5648 = vadd.f32 0.0, %v5647
        %v5649 = vpop.f32.mrb[0].mxu0
        %v5650 = vpop.f32.mrb[0].mxu0
        %5651 = vdwg.mxu0
        %v5652 = vld [vmem:[#allocation4] sm:$0xff]
        %v5653 = vld [vmem:[#allocation4 + $0x8] sm:$0xff]
        %v5654 = vld [vmem:[#allocation4 + $0x10] sm:$0xff]
        %v5655 = vld [vmem:[#allocation4 + $0x18] sm:$0xff]
        %v5656 = vld [vmem:[#allocation4 + $0x20] sm:$0xff]
        %v5657 = vld [vmem:[#allocation4 + $0x28] sm:$0xff]
        %v5658 = vadd.f32 %v5652, %v5564
        %v5659 = vadd.f32 %v5653, %v5566
        %v5660 = vadd.f32 %v5654, %v5605
        %v5661 = vadd.f32 %v5655, %v5607
        %v5662 = vadd.f32 %v5656, %v5646
        %v5663 = vadd.f32 %v5657, %v5648
        %5664 = vst [vmem:[#allocation4] sm:$0xff] %v5658
        %5665 = vst [vmem:[#allocation4 + $0x8] sm:$0xff] %v5659
        %5666 = vst [vmem:[#allocation4 + $0x10] sm:$0xff] %v5660
        %5667 = vst [vmem:[#allocation4 + $0x18] sm:$0xff] %v5661
        %5668 = vst [vmem:[#allocation4 + $0x20] sm:$0xff] %v5662
        %5669 = vst.msk [vmem:[#allocation4 + $0x28] sm:$0xff] %vm520, %v5663
        %v5670 = vld [vmem:[#allocation4] sm:$0xff]
        %v5671 = vld [vmem:[#allocation4 + $0x8] sm:$0xff]
        %v5672 = vld [vmem:[#allocation4 + $0x10] sm:$0xff]
        %v5673 = vld [vmem:[#allocation4 + $0x18] sm:$0xff]
        %v5674 = vld [vmem:[#allocation4 + $0x20] sm:$0xff]
        %v5675 = vld [vmem:[#allocation4 + $0x28] sm:$0xff]
        %v5676 = vld [vmem:[%s4] sm:$0xff]
        %5678 = vset.pattern.permute.xlu0 0
        %5679 = vperm.xlu0 %5678, %v5676
        %v5680 = vpop.permute.xlu0 %5679
        %v5682 = vmul.f32 %v5670, %v5680
        %v5683 = vmul.f32 %v5671, %v5680
        %v5684 = vmul.f32 %v5672, %v5680
        %v5685 = vmul.f32 %v5673, %v5680
        %v5686 = vmul.f32 %v5674, %v5680
        %v5687 = vmul.f32 %v5675, %v5680
        %5688 = vset.pattern.permute.xlu0 1
        %5689 = vperm.xlu0 %5688, %v5676
        %v5690 = vpop.permute.xlu0 %5689
        %v5692 = vadd.f32 %v5682, %v5690
        %v5693 = vadd.f32 %v5683, %v5690
        %v5694 = vadd.f32 %v5684, %v5690
        %v5695 = vadd.f32 %v5685, %v5690
        %v5696 = vadd.f32 %v5686, %v5690
        %v5697 = vadd.f32 %v5687, %v5690
        %v5698 = vmax.f32 %v5692, 0.0
        %v5699 = vmax.f32 %v5693, 0.0
        %v5700 = vmax.f32 %v5694, 0.0
        %v5701 = vmax.f32 %v5695, 0.0
        %v5702 = vmax.f32 %v5696, 0.0
        %v5703 = vmax.f32 %v5697, 0.0
        %v5704 = vld [vmem:[%s339] sm:$0x3f]
        %v5706 = vlaneseq
        %v5707 = vshrl.u32 %v5706, 7
        %v5708 = vsub.s32 0, %v5707
        %v5709 = vrot.slane %v5704, %v5708
        %v5710 = vlaneseq
        %v5711 = vshrl.u32 %v5710, 7
        %v5712 = vsub.s32 1, %v5711
        %v5713 = vrot.slane %v5704, %v5712
        %v5714 = vlaneseq
        %v5715 = vshrl.u32 %v5714, 7
        %v5716 = vsub.s32 2, %v5715
        %v5717 = vrot.slane %v5704, %v5716
        %v5718 = vlaneseq
        %v5719 = vshrl.u32 %v5718, 7
        %v5720 = vsub.s32 3, %v5719
        %v5721 = vrot.slane %v5704, %v5720
        %v5722 = vlaneseq
        %v5723 = vshrl.u32 %v5722, 7
        %v5724 = vsub.s32 4, %v5723
        %v5725 = vrot.slane %v5704, %v5724
        %v5726 = vlaneseq
        %v5727 = vshrl.u32 %v5726, 7
        %v5728 = vsub.s32 5, %v5727
        %v5729 = vrot.slane %v5704, %v5728
        %v5736 = vmul.f32 %v5698, %v5709
        %v5737 = vmul.f32 %v5699, %v5713
        %v5738 = vmul.f32 %v5700, %v5717
        %v5739 = vmul.f32 %v5701, %v5721
        %v5740 = vmul.f32 %v5702, %v5725
        %v5741 = vmul.f32 %v5703, %v5729
        %5742 = vst [vmem:[#allocation3] sm:$0xf] 0
        %v5743 = vpack.c.bf16 %v5736, %v5736
        %v5744 = vpack.c.bf16 %v5737, %v5737
        %v5745 = vpack.c.bf16 %v5738, %v5738
        %v5746 = vpack.c.bf16 %v5739, %v5739
        %v5747 = vpack.c.bf16 %v5740, %v5740
        %v5748 = vpack.c.bf16 %v5741, %v5741
        %v5755 = vunpack.c.l.b16 %v5743
        %v5756 = vunpack.c.l.b16 %v5744
        %v5757 = vunpack.c.l.b16 %v5745
        %v5758 = vunpack.c.l.b16 %v5746
        %v5759 = vunpack.c.l.b16 %v5747
        %v5760 = vunpack.c.l.b16 %v5748
        %v5761 = vpack.c.b16 %v5756, %v5755
        %v5762 = vpack.c.b16 %v5758, %v5757
        %v5763 = vpack.c.b16 %v5760, %v5759
        %5767 = vst [vmem:[#allocation3 + $0x4] sm:$0xff] %v5761
        %5768 = vst [vmem:[#allocation3 + $0xc] sm:$0xff] %v5762
        %vm5769 = vcmask 351236
        %vm5770 = vmor %vm5769, %vm373
        %5771 = vst.msk [vmem:[#allocation3 + $0x14] sm:$0xff] %vm5770, %v5763
        %vm5772 = vcmask 1043800
        %vm5773 = vcmask 1047556
        %vm5774 = vmor %vm5773, %vm5772
        %5775 = vst.msk [vmem:[#allocation3 + $0x18] sm:$0xff] %vm5774, 0
        %v5776 = vld [vmem:[%s3] sm:$0xf]
        %v5777 = vld [vmem:[#allocation3] sm:$0xff]
        %v5778 = vld [vmem:[#allocation3 + $0x8] sm:$0xff]
        %v5779 = vld [vmem:[#allocation3 + $0x10] sm:$0xf]
        %v5783 = vunpack.c.l.b16 %v5777
        %v5784 = vunpack.c.h.b16 %v5777
        %v5785 = vunpack.c.l.b16 %v5778
        %v5786 = vunpack.c.h.b16 %v5778
        %v5787 = vunpack.c.l.b16 %v5779
        %v5788 = vpack.c.b16 %v5783, %v5783
        %v5789 = vpack.c.b16 %v5784, %v5784
        %v5790 = vpack.c.b16 %v5785, %v5785
        %v5791 = vpack.c.b16 %v5786, %v5786
        %v5792 = vpack.c.b16 %v5787, %v5787
        %5793 = vrot.lane.b32.xlu0 %v5788, 10
        %v5794 = vpop.permute.xlu0 %5793
        %5795 = vrot.lane.b32.xlu0 %v5789, 10
        %v5796 = vpop.permute.xlu0 %5795
        %5797 = vrot.lane.b32.xlu0 %v5790, 10
        %v5798 = vpop.permute.xlu0 %5797
        %5799 = vrot.lane.b32.xlu0 %v5791, 10
        %v5800 = vpop.permute.xlu0 %5799
        %5801 = vrot.lane.b32.xlu0 %v5792, 10
        %v5802 = vpop.permute.xlu0 %5801
        %vm5803 = vcmask 80896
        %v5804 = vsel %vm5803, %v5794, %v5796
        %v5805 = vsel %vm5803, %v5796, %v5798
        %v5806 = vsel %vm5803, %v5798, %v5800
        %v5807 = vsel %vm5803, %v5800, %v5802
        %v5809 = vsel %vm369, %v5776, 0
        %v5812 = vsel %vm373, %v5804, 0
        %v5815 = vsel %vm373, %v5805, 0
        %v5818 = vsel %vm373, %v5806, 0
        %v5821 = vsel %vm373, %v5807, 0
        %5823 = vmatprep.subr.bf16.mxu0 %v5815
        %5824 = vmatpush1.bf16.msra.mxu0 %v5812
        %5825 = vmatprep.subr.bf16.mxu0 0
        %5826 = vmatpush1.bf16.msra.mxu0 0
        %5827 = vmatprep.subr.bf16.mxu0 0
        %5828 = vmatpush1.bf16.msra.mxu0 0
        %5829 = vmatprep.subr.bf16.mxu0 0
        %5830 = vmatpush1.bf16.msra.mxu0 0
        %5831 = vmatprep.subr.bf16.mxu0 0
        %5832 = vmatpush1.bf16.msra.mxu0 0
        %5833 = vmatprep.subr.bf16.mxu0 0
        %5834 = vmatpush1.bf16.msra.mxu0 0
        %5835 = vmatprep.subr.bf16.mxu0 0
        %5836 = vmatpush1.bf16.msra.mxu0 0
        %5837 = vmatprep.subr.bf16.mxu0 0
        %5838 = vmatpush1.bf16.msra.mxu0 0
        %5839 = vmatprep.subr.bf16.mxu0 0
        %5840 = vmatpush1.bf16.msra.mxu0 0
        %5841 = vmatprep.subr.bf16.mxu0 0
        %5842 = vmatpush1.bf16.msra.mxu0 0
        %5843 = vmatprep.subr.bf16.mxu0 0
        %5844 = vmatpush1.bf16.msra.mxu0 0
        %5845 = vmatprep.subr.bf16.mxu0 0
        %5846 = vmatpush1.bf16.msra.mxu0 0
        %5847 = vmatprep.subr.bf16.mxu0 0
        %5848 = vmatpush1.bf16.msra.mxu0 0
        %5849 = vmatprep.subr.bf16.mxu0 0
        %5850 = vmatpush1.bf16.msra.mxu0 0
        %5851 = vmatprep.subr.bf16.mxu0 0
        %5852 = vmatpush1.bf16.msra.mxu0 0
        %5853 = vmatprep.subr.bf16.mxu0 0
        %5854 = vmatpush1.bf16.msra.mxu0 0
        %5855 = vmatprep.mubr.bf16.mxu0 0
        %5856 = vmatmul.mubr.bf16.gmra.mrb[0].mxu0 %v5809
        %v5857 = vpop.f32.mrb[0].mxu0
        %v5858 = vadd.f32 0.0, %v5857
        %v5859 = vpop.f32.mrb[0].mxu0
        %v5860 = vadd.f32 0.0, %v5859
        %v5861 = vpop.f32.mrb[0].mxu0
        %v5862 = vpop.f32.mrb[0].mxu0
        %5863 = vdwg.mxu0
        %5864 = vmatprep.subr.bf16.mxu0 %v5821
        %5865 = vmatpush1.bf16.msra.mxu0 %v5818
        %5866 = vmatprep.subr.bf16.mxu0 0
        %5867 = vmatpush1.bf16.msra.mxu0 0
        %5868 = vmatprep.subr.bf16.mxu0 0
        %5869 = vmatpush1.bf16.msra.mxu0 0
        %5870 = vmatprep.subr.bf16.mxu0 0
        %5871 = vmatpush1.bf16.msra.mxu0 0
        %5872 = vmatprep.subr.bf16.mxu0 0
        %5873 = vmatpush1.bf16.msra.mxu0 0
        %5874 = vmatprep.subr.bf16.mxu0 0
        %5875 = vmatpush1.bf16.msra.mxu0 0
        %5876 = vmatprep.subr.bf16.mxu0 0
        %5877 = vmatpush1.bf16.msra.mxu0 0
        %5878 = vmatprep.subr.bf16.mxu0 0
        %5879 = vmatpush1.bf16.msra.mxu0 0
        %5880 = vmatprep.subr.bf16.mxu0 0
        %5881 = vmatpush1.bf16.msra.mxu0 0
        %5882 = vmatprep.subr.bf16.mxu0 0
        %5883 = vmatpush1.bf16.msra.mxu0 0
        %5884 = vmatprep.subr.bf16.mxu0 0
        %5885 = vmatpush1.bf16.msra.mxu0 0
        %5886 = vmatprep.subr.bf16.mxu0 0
        %5887 = vmatpush1.bf16.msra.mxu0 0
        %5888 = vmatprep.subr.bf16.mxu0 0
        %5889 = vmatpush1.bf16.msra.mxu0 0
        %5890 = vmatprep.subr.bf16.mxu0 0
        %5891 = vmatpush1.bf16.msra.mxu0 0
        %5892 = vmatprep.subr.bf16.mxu0 0
        %5893 = vmatpush1.bf16.msra.mxu0 0
        %5894 = vmatprep.subr.bf16.mxu0 0
        %5895 = vmatpush1.bf16.msra.mxu0 0
        %5896 = vmatprep.mubr.bf16.mxu0 0
        %5897 = vmatmul.mubr.bf16.gmra.mrb[0].mxu0 %v5809
        %v5898 = vpop.f32.mrb[0].mxu0
        %v5899 = vadd.f32 0.0, %v5898
        %v5900 = vpop.f32.mrb[0].mxu0
        %v5901 = vadd.f32 0.0, %v5900
        %v5902 = vpop.f32.mrb[0].mxu0
        %v5903 = vpop.f32.mrb[0].mxu0
        %5904 = vdwg.mxu0
        %5905 = vst [vmem:[#allocation4] sm:$0xff] %v5858
        %5906 = vst [vmem:[#allocation4 + $0x8] sm:$0xff] %v5860
        %5907 = vst [vmem:[#allocation4 + $0x10] sm:$0xff] %v5899
        %5908 = vst [vmem:[#allocation4 + $0x18] sm:$0xff] %v5901
        %s5909 = scalar_lea.vmem %s3, 4
        %v5910 = vld [vmem:[%s5909] sm:$0xf]
        %v5911 = vld [vmem:[#allocation3] sm:$0xff]
        %v5912 = vld [vmem:[#allocation3 + $0x8] sm:$0xff]
        %v5913 = vld [vmem:[#allocation3 + $0x10] sm:$0xf]
        %v5917 = vunpack.c.l.b16 %v5911
        %v5918 = vunpack.c.h.b16 %v5911
        %v5919 = vunpack.c.l.b16 %v5912
        %v5920 = vunpack.c.h.b16 %v5912
        %v5921 = vunpack.c.l.b16 %v5913
        %v5922 = vpack.c.b16 %v5917, %v5917
        %v5923 = vpack.c.b16 %v5918, %v5918
        %v5924 = vpack.c.b16 %v5919, %v5919
        %v5925 = vpack.c.b16 %v5920, %v5920
        %v5926 = vpack.c.b16 %v5921, %v5921
        %5927 = vrot.lane.b32.xlu0 %v5922, 9
        %v5928 = vpop.permute.xlu0 %5927
        %5929 = vrot.lane.b32.xlu0 %v5923, 9
        %v5930 = vpop.permute.xlu0 %5929
        %5931 = vrot.lane.b32.xlu0 %v5924, 9
        %v5932 = vpop.permute.xlu0 %5931
        %5933 = vrot.lane.b32.xlu0 %v5925, 9
        %v5934 = vpop.permute.xlu0 %5933
        %5935 = vrot.lane.b32.xlu0 %v5926, 9
        %v5936 = vpop.permute.xlu0 %5935
        %vm5937 = vcmask 72704
        %v5938 = vsel %vm5937, %v5928, %v5930
        %v5939 = vsel %vm5937, %v5930, %v5932
        %v5940 = vsel %vm5937, %v5932, %v5934
        %v5941 = vsel %vm5937, %v5934, %v5936
        %v5943 = vsel %vm369, %v5910, 0
        %v5946 = vsel %vm373, %v5938, 0
        %v5949 = vsel %vm373, %v5939, 0
        %v5952 = vsel %vm373, %v5940, 0
        %v5955 = vsel %vm373, %v5941, 0
        %5957 = vmatprep.subr.bf16.mxu0 %v5949
        %5958 = vmatpush1.bf16.msra.mxu0 %v5946
        %5959 = vmatprep.subr.bf16.mxu0 0
        %5960 = vmatpush1.bf16.msra.mxu0 0
        %5961 = vmatprep.subr.bf16.mxu0 0
        %5962 = vmatpush1.bf16.msra.mxu0 0
        %5963 = vmatprep.subr.bf16.mxu0 0
        %5964 = vmatpush1.bf16.msra.mxu0 0
        %5965 = vmatprep.subr.bf16.mxu0 0
        %5966 = vmatpush1.bf16.msra.mxu0 0
        %5967 = vmatprep.subr.bf16.mxu0 0
        %5968 = vmatpush1.bf16.msra.mxu0 0
        %5969 = vmatprep.subr.bf16.mxu0 0
        %5970 = vmatpush1.bf16.msra.mxu0 0
        %5971 = vmatprep.subr.bf16.mxu0 0
        %5972 = vmatpush1.bf16.msra.mxu0 0
        %5973 = vmatprep.subr.bf16.mxu0 0
        %5974 = vmatpush1.bf16.msra.mxu0 0
        %5975 = vmatprep.subr.bf16.mxu0 0
        %5976 = vmatpush1.bf16.msra.mxu0 0
        %5977 = vmatprep.subr.bf16.mxu0 0
        %5978 = vmatpush1.bf16.msra.mxu0 0
        %5979 = vmatprep.subr.bf16.mxu0 0
        %5980 = vmatpush1.bf16.msra.mxu0 0
        %5981 = vmatprep.subr.bf16.mxu0 0
        %5982 = vmatpush1.bf16.msra.mxu0 0
        %5983 = vmatprep.subr.bf16.mxu0 0
        %5984 = vmatpush1.bf16.msra.mxu0 0
        %5985 = vmatprep.subr.bf16.mxu0 0
        %5986 = vmatpush1.bf16.msra.mxu0 0
        %5987 = vmatprep.subr.bf16.mxu0 0
        %5988 = vmatpush1.bf16.msra.mxu0 0
        %5989 = vmatprep.mubr.bf16.mxu0 0
        %5990 = vmatmul.mubr.bf16.gmra.mrb[0].mxu0 %v5943
        %v5991 = vpop.f32.mrb[0].mxu0
        %v5992 = vadd.f32 0.0, %v5991
        %v5993 = vpop.f32.mrb[0].mxu0
        %v5994 = vadd.f32 0.0, %v5993
        %v5995 = vpop.f32.mrb[0].mxu0
        %v5996 = vpop.f32.mrb[0].mxu0
        %5997 = vdwg.mxu0
        %5998 = vmatprep.subr.bf16.mxu0 %v5955
        %5999 = vmatpush1.bf16.msra.mxu0 %v5952
        %6000 = vmatprep.subr.bf16.mxu0 0
        %6001 = vmatpush1.bf16.msra.mxu0 0
        %6002 = vmatprep.subr.bf16.mxu0 0
        %6003 = vmatpush1.bf16.msra.mxu0 0
        %6004 = vmatprep.subr.bf16.mxu0 0
        %6005 = vmatpush1.bf16.msra.mxu0 0
        %6006 = vmatprep.subr.bf16.mxu0 0
        %6007 = vmatpush1.bf16.msra.mxu0 0
        %6008 = vmatprep.subr.bf16.mxu0 0
        %6009 = vmatpush1.bf16.msra.mxu0 0
        %6010 = vmatprep.subr.bf16.mxu0 0
        %6011 = vmatpush1.bf16.msra.mxu0 0
        %6012 = vmatprep.subr.bf16.mxu0 0
        %6013 = vmatpush1.bf16.msra.mxu0 0
        %6014 = vmatprep.subr.bf16.mxu0 0
        %6015 = vmatpush1.bf16.msra.mxu0 0
        %6016 = vmatprep.subr.bf16.mxu0 0
        %6017 = vmatpush1.bf16.msra.mxu0 0
        %6018 = vmatprep.subr.bf16.mxu0 0
        %6019 = vmatpush1.bf16.msra.mxu0 0
        %6020 = vmatprep.subr.bf16.mxu0 0
        %6021 = vmatpush1.bf16.msra.mxu0 0
        %6022 = vmatprep.subr.bf16.mxu0 0
        %6023 = vmatpush1.bf16.msra.mxu0 0
        %6024 = vmatprep.subr.bf16.mxu0 0
        %6025 = vmatpush1.bf16.msra.mxu0 0
        %6026 = vmatprep.subr.bf16.mxu0 0
        %6027 = vmatpush1.bf16.msra.mxu0 0
        %6028 = vmatprep.subr.bf16.mxu0 0
        %6029 = vmatpush1.bf16.msra.mxu0 0
        %6030 = vmatprep.mubr.bf16.mxu0 0
        %6031 = vmatmul.mubr.bf16.gmra.mrb[0].mxu0 %v5943
        %v6032 = vpop.f32.mrb[0].mxu0
        %v6033 = vadd.f32 0.0, %v6032
        %v6034 = vpop.f32.mrb[0].mxu0
        %v6035 = vadd.f32 0.0, %v6034
        %v6036 = vpop.f32.mrb[0].mxu0
        %v6037 = vpop.f32.mrb[0].mxu0
        %6038 = vdwg.mxu0
        %v6039 = vld [vmem:[#allocation4] sm:$0xff]
        %v6040 = vld [vmem:[#allocation4 + $0x8] sm:$0xff]
        %v6041 = vld [vmem:[#allocation4 + $0x10] sm:$0xff]
        %v6042 = vld [vmem:[#allocation4 + $0x18] sm:$0xff]
        %v6043 = vadd.f32 %v6039, %v5992
        %v6044 = vadd.f32 %v6040, %v5994
        %v6045 = vadd.f32 %v6041, %v6033
        %v6046 = vadd.f32 %v6042, %v6035
        %6047 = vst [vmem:[#allocation4] sm:$0xff] %v6043
        %6048 = vst [vmem:[#allocation4 + $0x8] sm:$0xff] %v6044
        %6049 = vst [vmem:[#allocation4 + $0x10] sm:$0xff] %v6045
        %6050 = vst [vmem:[#allocation4 + $0x18] sm:$0xff] %v6046
        %s6051 = scalar_lea.vmem %s3, 8
        %v6052 = vld [vmem:[%s6051] sm:$0xf]
        %v6053 = vld [vmem:[#allocation3] sm:$0xff]
        %v6054 = vld [vmem:[#allocation3 + $0x8] sm:$0xff]
        %v6055 = vld [vmem:[#allocation3 + $0x10] sm:$0xf]
        %v6059 = vunpack.c.l.b16 %v6053
        %v6060 = vunpack.c.h.b16 %v6053
        %v6061 = vunpack.c.l.b16 %v6054
        %v6062 = vunpack.c.h.b16 %v6054
        %v6063 = vunpack.c.l.b16 %v6055
        %v6064 = vpack.c.b16 %v6059, %v6059
        %v6065 = vpack.c.b16 %v6060, %v6060
        %v6066 = vpack.c.b16 %v6061, %v6061
        %v6067 = vpack.c.b16 %v6062, %v6062
        %v6068 = vpack.c.b16 %v6063, %v6063
        %6069 = vrot.lane.b32.xlu0 %v6064, 8
        %v6070 = vpop.permute.xlu0 %6069
        %6071 = vrot.lane.b32.xlu0 %v6065, 8
        %v6072 = vpop.permute.xlu0 %6071
        %6073 = vrot.lane.b32.xlu0 %v6066, 8
        %v6074 = vpop.permute.xlu0 %6073
        %6075 = vrot.lane.b32.xlu0 %v6067, 8
        %v6076 = vpop.permute.xlu0 %6075
        %6077 = vrot.lane.b32.xlu0 %v6068, 8
        %v6078 = vpop.permute.xlu0 %6077
        %vm6079 = vcmask 64512
        %v6080 = vsel %vm6079, %v6070, %v6072
        %v6081 = vsel %vm6079, %v6072, %v6074
        %v6082 = vsel %vm6079, %v6074, %v6076
        %v6083 = vsel %vm6079, %v6076, %v6078
        %v6085 = vsel %vm369, %v6052, 0
        %v6088 = vsel %vm373, %v6080, 0
        %v6091 = vsel %vm373, %v6081, 0
        %v6094 = vsel %vm373, %v6082, 0
        %v6097 = vsel %vm373, %v6083, 0
        %6099 = vmatprep.subr.bf16.mxu0 %v6091
        %6100 = vmatpush1.bf16.msra.mxu0 %v6088
        %6101 = vmatprep.subr.bf16.mxu0 0
        %6102 = vmatpush1.bf16.msra.mxu0 0
        %6103 = vmatprep.subr.bf16.mxu0 0
        %6104 = vmatpush1.bf16.msra.mxu0 0
        %6105 = vmatprep.subr.bf16.mxu0 0
        %6106 = vmatpush1.bf16.msra.mxu0 0
        %6107 = vmatprep.subr.bf16.mxu0 0
        %6108 = vmatpush1.bf16.msra.mxu0 0
        %6109 = vmatprep.subr.bf16.mxu0 0
        %6110 = vmatpush1.bf16.msra.mxu0 0
        %6111 = vmatprep.subr.bf16.mxu0 0
        %6112 = vmatpush1.bf16.msra.mxu0 0
        %6113 = vmatprep.subr.bf16.mxu0 0
        %6114 = vmatpush1.bf16.msra.mxu0 0
        %6115 = vmatprep.subr.bf16.mxu0 0
        %6116 = vmatpush1.bf16.msra.mxu0 0
        %6117 = vmatprep.subr.bf16.mxu0 0
        %6118 = vmatpush1.bf16.msra.mxu0 0
        %6119 = vmatprep.subr.bf16.mxu0 0
        %6120 = vmatpush1.bf16.msra.mxu0 0
        %6121 = vmatprep.subr.bf16.mxu0 0
        %6122 = vmatpush1.bf16.msra.mxu0 0
        %6123 = vmatprep.subr.bf16.mxu0 0
        %6124 = vmatpush1.bf16.msra.mxu0 0
        %6125 = vmatprep.subr.bf16.mxu0 0
        %6126 = vmatpush1.bf16.msra.mxu0 0
        %6127 = vmatprep.subr.bf16.mxu0 0
        %6128 = vmatpush1.bf16.msra.mxu0 0
        %6129 = vmatprep.subr.bf16.mxu0 0
        %6130 = vmatpush1.bf16.msra.mxu0 0
        %6131 = vmatprep.mubr.bf16.mxu0 0
        %6132 = vmatmul.mubr.bf16.gmra.mrb[0].mxu0 %v6085
        %v6133 = vpop.f32.mrb[0].mxu0
        %v6134 = vadd.f32 0.0, %v6133
        %v6135 = vpop.f32.mrb[0].mxu0
        %v6136 = vadd.f32 0.0, %v6135
        %v6137 = vpop.f32.mrb[0].mxu0
        %v6138 = vpop.f32.mrb[0].mxu0
        %6139 = vdwg.mxu0
        %6140 = vmatprep.subr.bf16.mxu0 %v6097
        %6141 = vmatpush1.bf16.msra.mxu0 %v6094
        %6142 = vmatprep.subr.bf16.mxu0 0
        %6143 = vmatpush1.bf16.msra.mxu0 0
        %6144 = vmatprep.subr.bf16.mxu0 0
        %6145 = vmatpush1.bf16.msra.mxu0 0
        %6146 = vmatprep.subr.bf16.mxu0 0
        %6147 = vmatpush1.bf16.msra.mxu0 0
        %6148 = vmatprep.subr.bf16.mxu0 0
        %6149 = vmatpush1.bf16.msra.mxu0 0
        %6150 = vmatprep.subr.bf16.mxu0 0
        %6151 = vmatpush1.bf16.msra.mxu0 0
        %6152 = vmatprep.subr.bf16.mxu0 0
        %6153 = vmatpush1.bf16.msra.mxu0 0
        %6154 = vmatprep.subr.bf16.mxu0 0
        %6155 = vmatpush1.bf16.msra.mxu0 0
        %6156 = vmatprep.subr.bf16.mxu0 0
        %6157 = vmatpush1.bf16.msra.mxu0 0
        %6158 = vmatprep.subr.bf16.mxu0 0
        %6159 = vmatpush1.bf16.msra.mxu0 0
        %6160 = vmatprep.subr.bf16.mxu0 0
        %6161 = vmatpush1.bf16.msra.mxu0 0
        %6162 = vmatprep.subr.bf16.mxu0 0
        %6163 = vmatpush1.bf16.msra.mxu0 0
        %6164 = vmatprep.subr.bf16.mxu0 0
        %6165 = vmatpush1.bf16.msra.mxu0 0
        %6166 = vmatprep.subr.bf16.mxu0 0
        %6167 = vmatpush1.bf16.msra.mxu0 0
        %6168 = vmatprep.subr.bf16.mxu0 0
        %6169 = vmatpush1.bf16.msra.mxu0 0
        %6170 = vmatprep.subr.bf16.mxu0 0
        %6171 = vmatpush1.bf16.msra.mxu0 0
        %6172 = vmatprep.mubr.bf16.mxu0 0
        %6173 = vmatmul.mubr.bf16.gmra.mrb[0].mxu0 %v6085
        %v6174 = vpop.f32.mrb[0].mxu0
        %v6175 = vadd.f32 0.0, %v6174
        %v6176 = vpop.f32.mrb[0].mxu0
        %v6177 = vadd.f32 0.0, %v6176
        %v6178 = vpop.f32.mrb[0].mxu0
        %v6179 = vpop.f32.mrb[0].mxu0
        %6180 = vdwg.mxu0
        %v6181 = vld [vmem:[#allocation4] sm:$0xff]
        %v6182 = vld [vmem:[#allocation4 + $0x8] sm:$0xff]
        %v6183 = vld [vmem:[#allocation4 + $0x10] sm:$0xff]
        %v6184 = vld [vmem:[#allocation4 + $0x18] sm:$0xff]
        %v6185 = vadd.f32 %v6181, %v6134
        %v6186 = vadd.f32 %v6182, %v6136
        %v6187 = vadd.f32 %v6183, %v6175
        %v6188 = vadd.f32 %v6184, %v6177
        %6189 = vst [vmem:[#allocation4] sm:$0xff] %v6185
        %6190 = vst [vmem:[#allocation4 + $0x8] sm:$0xff] %v6186
        %6191 = vst [vmem:[#allocation4 + $0x10] sm:$0xff] %v6187
        %6192 = vst [vmem:[#allocation4 + $0x18] sm:$0xff] %v6188
        %s6193 = scalar_lea.vmem %s3, 12
        %v6194 = vld [vmem:[%s6193] sm:$0xf]
        %v6195 = vld [vmem:[#allocation3] sm:$0xff]
        %v6196 = vld [vmem:[#allocation3 + $0x8] sm:$0xff]
        %v6197 = vld [vmem:[#allocation3 + $0x10] sm:$0xf]
        %v6201 = vunpack.c.l.b16 %v6195
        %v6202 = vunpack.c.h.b16 %v6195
        %v6203 = vunpack.c.l.b16 %v6196
        %v6204 = vunpack.c.h.b16 %v6196
        %v6205 = vunpack.c.l.b16 %v6197
        %v6206 = vpack.c.b16 %v6201, %v6201
        %v6207 = vpack.c.b16 %v6202, %v6202
        %v6208 = vpack.c.b16 %v6203, %v6203
        %v6209 = vpack.c.b16 %v6204, %v6204
        %v6210 = vpack.c.b16 %v6205, %v6205
        %6211 = vrot.lane.b32.xlu0 %v6206, 1
        %v6212 = vpop.permute.xlu0 %6211
        %6213 = vrot.lane.b32.xlu0 %v6207, 1
        %v6214 = vpop.permute.xlu0 %6213
        %6215 = vrot.lane.b32.xlu0 %v6208, 1
        %v6216 = vpop.permute.xlu0 %6215
        %6217 = vrot.lane.b32.xlu0 %v6209, 1
        %v6218 = vpop.permute.xlu0 %6217
        %6219 = vrot.lane.b32.xlu0 %v6210, 1
        %v6220 = vpop.permute.xlu0 %6219
        %vm6221 = vcmask 7168
        %v6222 = vsel %vm6221, %v6212, %v6214
        %v6223 = vsel %vm6221, %v6214, %v6216
        %v6224 = vsel %vm6221, %v6216, %v6218
        %v6225 = vsel %vm6221, %v6218, %v6220
        %v6227 = vsel %vm369, %v6194, 0
        %v6230 = vsel %vm373, %v6222, 0
        %v6233 = vsel %vm373, %v6223, 0
        %v6236 = vsel %vm373, %v6224, 0
        %v6239 = vsel %vm373, %v6225, 0
        %6241 = vmatprep.subr.bf16.mxu0 %v6233
        %6242 = vmatpush1.bf16.msra.mxu0 %v6230
        %6243 = vmatprep.subr.bf16.mxu0 0
        %6244 = vmatpush1.bf16.msra.mxu0 0
        %6245 = vmatprep.subr.bf16.mxu0 0
        %6246 = vmatpush1.bf16.msra.mxu0 0
        %6247 = vmatprep.subr.bf16.mxu0 0
        %6248 = vmatpush1.bf16.msra.mxu0 0
        %6249 = vmatprep.subr.bf16.mxu0 0
        %6250 = vmatpush1.bf16.msra.mxu0 0
        %6251 = vmatprep.subr.bf16.mxu0 0
        %6252 = vmatpush1.bf16.msra.mxu0 0
        %6253 = vmatprep.subr.bf16.mxu0 0
        %6254 = vmatpush1.bf16.msra.mxu0 0
        %6255 = vmatprep.subr.bf16.mxu0 0
        %6256 = vmatpush1.bf16.msra.mxu0 0
        %6257 = vmatprep.subr.bf16.mxu0 0
        %6258 = vmatpush1.bf16.msra.mxu0 0
        %6259 = vmatprep.subr.bf16.mxu0 0
        %6260 = vmatpush1.bf16.msra.mxu0 0
        %6261 = vmatprep.subr.bf16.mxu0 0
        %6262 = vmatpush1.bf16.msra.mxu0 0
        %6263 = vmatprep.subr.bf16.mxu0 0
        %6264 = vmatpush1.bf16.msra.mxu0 0
        %6265 = vmatprep.subr.bf16.mxu0 0
        %6266 = vmatpush1.bf16.msra.mxu0 0
        %6267 = vmatprep.subr.bf16.mxu0 0
        %6268 = vmatpush1.bf16.msra.mxu0 0
        %6269 = vmatprep.subr.bf16.mxu0 0
        %6270 = vmatpush1.bf16.msra.mxu0 0
        %6271 = vmatprep.subr.bf16.mxu0 0
        %6272 = vmatpush1.bf16.msra.mxu0 0
        %6273 = vmatprep.mubr.bf16.mxu0 0
        %6274 = vmatmul.mubr.bf16.gmra.mrb[0].mxu0 %v6227
        %v6275 = vpop.f32.mrb[0].mxu0
        %v6276 = vadd.f32 0.0, %v6275
        %v6277 = vpop.f32.mrb[0].mxu0
        %v6278 = vadd.f32 0.0, %v6277
        %v6279 = vpop.f32.mrb[0].mxu0
        %v6280 = vpop.f32.mrb[0].mxu0
        %6281 = vdwg.mxu0
        %6282 = vmatprep.subr.bf16.mxu0 %v6239
        %6283 = vmatpush1.bf16.msra.mxu0 %v6236
        %6284 = vmatprep.subr.bf16.mxu0 0
        %6285 = vmatpush1.bf16.msra.mxu0 0
        %6286 = vmatprep.subr.bf16.mxu0 0
        %6287 = vmatpush1.bf16.msra.mxu0 0
        %6288 = vmatprep.subr.bf16.mxu0 0
        %6289 = vmatpush1.bf16.msra.mxu0 0
        %6290 = vmatprep.subr.bf16.mxu0 0
        %6291 = vmatpush1.bf16.msra.mxu0 0
        %6292 = vmatprep.subr.bf16.mxu0 0
        %6293 = vmatpush1.bf16.msra.mxu0 0
        %6294 = vmatprep.subr.bf16.mxu0 0
        %6295 = vmatpush1.bf16.msra.mxu0 0
        %6296 = vmatprep.subr.bf16.mxu0 0
        %6297 = vmatpush1.bf16.msra.mxu0 0
        %6298 = vmatprep.subr.bf16.mxu0 0
        %6299 = vmatpush1.bf16.msra.mxu0 0
        %6300 = vmatprep.subr.bf16.mxu0 0
        %6301 = vmatpush1.bf16.msra.mxu0 0
        %6302 = vmatprep.subr.bf16.mxu0 0
        %6303 = vmatpush1.bf16.msra.mxu0 0
        %6304 = vmatprep.subr.bf16.mxu0 0
        %6305 = vmatpush1.bf16.msra.mxu0 0
        %6306 = vmatprep.subr.bf16.mxu0 0
        %6307 = vmatpush1.bf16.msra.mxu0 0
        %6308 = vmatprep.subr.bf16.mxu0 0
        %6309 = vmatpush1.bf16.msra.mxu0 0
        %6310 = vmatprep.subr.bf16.mxu0 0
        %6311 = vmatpush1.bf16.msra.mxu0 0
        %6312 = vmatprep.subr.bf16.mxu0 0
        %6313 = vmatpush1.bf16.msra.mxu0 0
        %6314 = vmatprep.mubr.bf16.mxu0 0
        %6315 = vmatmul.mubr.bf16.gmra.mrb[0].mxu0 %v6227
        %v6316 = vpop.f32.mrb[0].mxu0
        %v6317 = vadd.f32 0.0, %v6316
        %v6318 = vpop.f32.mrb[0].mxu0
        %v6319 = vadd.f32 0.0, %v6318
        %v6320 = vpop.f32.mrb[0].mxu0
        %v6321 = vpop.f32.mrb[0].mxu0
        %6322 = vdwg.mxu0
        %v6323 = vld [vmem:[#allocation4] sm:$0xff]
        %v6324 = vld [vmem:[#allocation4 + $0x8] sm:$0xff]
        %v6325 = vld [vmem:[#allocation4 + $0x10] sm:$0xff]
        %v6326 = vld [vmem:[#allocation4 + $0x18] sm:$0xff]
        %v6327 = vadd.f32 %v6323, %v6276
        %v6328 = vadd.f32 %v6324, %v6278
        %v6329 = vadd.f32 %v6325, %v6317
        %v6330 = vadd.f32 %v6326, %v6319
        %6331 = vst [vmem:[#allocation4] sm:$0xff] %v6327
        %6332 = vst [vmem:[#allocation4 + $0x8] sm:$0xff] %v6328
        %6333 = vst [vmem:[#allocation4 + $0x10] sm:$0xff] %v6329
        %6334 = vst [vmem:[#allocation4 + $0x18] sm:$0xff] %v6330
        %s6335 = scalar_lea.vmem %s3, 16
        %v6336 = vld [vmem:[%s6335] sm:$0xf]
        %v6337 = vld [vmem:[#allocation3 + $0x4] sm:$0xff]
        %v6338 = vld [vmem:[#allocation3 + $0xc] sm:$0xff]
        %v6341 = vunpack.c.l.b16 %v6337
        %v6342 = vunpack.c.h.b16 %v6337
        %v6343 = vunpack.c.l.b16 %v6338
        %v6344 = vunpack.c.h.b16 %v6338
        %v6345 = vpack.c.b16 %v6341, %v6341
        %v6346 = vpack.c.b16 %v6342, %v6342
        %v6347 = vpack.c.b16 %v6343, %v6343
        %v6348 = vpack.c.b16 %v6344, %v6344
        %v6350 = vsel %vm369, %v6336, 0
        %v6353 = vsel %vm373, %v6345, 0
        %v6356 = vsel %vm373, %v6346, 0
        %v6359 = vsel %vm373, %v6347, 0
        %v6362 = vsel %vm373, %v6348, 0
        %6364 = vmatprep.subr.bf16.mxu0 %v6356
        %6365 = vmatpush1.bf16.msra.mxu0 %v6353
        %6366 = vmatprep.subr.bf16.mxu0 0
        %6367 = vmatpush1.bf16.msra.mxu0 0
        %6368 = vmatprep.subr.bf16.mxu0 0
        %6369 = vmatpush1.bf16.msra.mxu0 0
        %6370 = vmatprep.subr.bf16.mxu0 0
        %6371 = vmatpush1.bf16.msra.mxu0 0
        %6372 = vmatprep.subr.bf16.mxu0 0
        %6373 = vmatpush1.bf16.msra.mxu0 0
        %6374 = vmatprep.subr.bf16.mxu0 0
        %6375 = vmatpush1.bf16.msra.mxu0 0
        %6376 = vmatprep.subr.bf16.mxu0 0
        %6377 = vmatpush1.bf16.msra.mxu0 0
        %6378 = vmatprep.subr.bf16.mxu0 0
        %6379 = vmatpush1.bf16.msra.mxu0 0
        %6380 = vmatprep.subr.bf16.mxu0 0
        %6381 = vmatpush1.bf16.msra.mxu0 0
        %6382 = vmatprep.subr.bf16.mxu0 0
        %6383 = vmatpush1.bf16.msra.mxu0 0
        %6384 = vmatprep.subr.bf16.mxu0 0
        %6385 = vmatpush1.bf16.msra.mxu0 0
        %6386 = vmatprep.subr.bf16.mxu0 0
        %6387 = vmatpush1.bf16.msra.mxu0 0
        %6388 = vmatprep.subr.bf16.mxu0 0
        %6389 = vmatpush1.bf16.msra.mxu0 0
        %6390 = vmatprep.subr.bf16.mxu0 0
        %6391 = vmatpush1.bf16.msra.mxu0 0
        %6392 = vmatprep.subr.bf16.mxu0 0
        %6393 = vmatpush1.bf16.msra.mxu0 0
        %6394 = vmatprep.subr.bf16.mxu0 0
        %6395 = vmatpush1.bf16.msra.mxu0 0
        %6396 = vmatprep.mubr.bf16.mxu0 0
        %6397 = vmatmul.mubr.bf16.gmra.mrb[0].mxu0 %v6350
        %v6398 = vpop.f32.mrb[0].mxu0
        %v6399 = vadd.f32 0.0, %v6398
        %v6400 = vpop.f32.mrb[0].mxu0
        %v6401 = vadd.f32 0.0, %v6400
        %v6402 = vpop.f32.mrb[0].mxu0
        %v6403 = vpop.f32.mrb[0].mxu0
        %6404 = vdwg.mxu0
        %6405 = vmatprep.subr.bf16.mxu0 %v6362
        %6406 = vmatpush1.bf16.msra.mxu0 %v6359
        %6407 = vmatprep.subr.bf16.mxu0 0
        %6408 = vmatpush1.bf16.msra.mxu0 0
        %6409 = vmatprep.subr.bf16.mxu0 0
        %6410 = vmatpush1.bf16.msra.mxu0 0
        %6411 = vmatprep.subr.bf16.mxu0 0
        %6412 = vmatpush1.bf16.msra.mxu0 0
        %6413 = vmatprep.subr.bf16.mxu0 0
        %6414 = vmatpush1.bf16.msra.mxu0 0
        %6415 = vmatprep.subr.bf16.mxu0 0
        %6416 = vmatpush1.bf16.msra.mxu0 0
        %6417 = vmatprep.subr.bf16.mxu0 0
        %6418 = vmatpush1.bf16.msra.mxu0 0
        %6419 = vmatprep.subr.bf16.mxu0 0
        %6420 = vmatpush1.bf16.msra.mxu0 0
        %6421 = vmatprep.subr.bf16.mxu0 0
        %6422 = vmatpush1.bf16.msra.mxu0 0
        %6423 = vmatprep.subr.bf16.mxu0 0
        %6424 = vmatpush1.bf16.msra.mxu0 0
        %6425 = vmatprep.subr.bf16.mxu0 0
        %6426 = vmatpush1.bf16.msra.mxu0 0
        %6427 = vmatprep.subr.bf16.mxu0 0
        %6428 = vmatpush1.bf16.msra.mxu0 0
        %6429 = vmatprep.subr.bf16.mxu0 0
        %6430 = vmatpush1.bf16.msra.mxu0 0
        %6431 = vmatprep.subr.bf16.mxu0 0
        %6432 = vmatpush1.bf16.msra.mxu0 0
        %6433 = vmatprep.subr.bf16.mxu0 0
        %6434 = vmatpush1.bf16.msra.mxu0 0
        %6435 = vmatprep.subr.bf16.mxu0 0
        %6436 = vmatpush1.bf16.msra.mxu0 0
        %6437 = vmatprep.mubr.bf16.mxu0 0
        %6438 = vmatmul.mubr.bf16.gmra.mrb[0].mxu0 %v6350
        %v6439 = vpop.f32.mrb[0].mxu0
        %v6440 = vadd.f32 0.0, %v6439
        %v6441 = vpop.f32.mrb[0].mxu0
        %v6442 = vadd.f32 0.0, %v6441
        %v6443 = vpop.f32.mrb[0].mxu0
        %v6444 = vpop.f32.mrb[0].mxu0
        %6445 = vdwg.mxu0
        %v6446 = vld [vmem:[#allocation4] sm:$0xff]
        %v6447 = vld [vmem:[#allocation4 + $0x8] sm:$0xff]
        %v6448 = vld [vmem:[#allocation4 + $0x10] sm:$0xff]
        %v6449 = vld [vmem:[#allocation4 + $0x18] sm:$0xff]
        %v6450 = vadd.f32 %v6446, %v6399
        %v6451 = vadd.f32 %v6447, %v6401
        %v6452 = vadd.f32 %v6448, %v6440
        %v6453 = vadd.f32 %v6449, %v6442
        %6454 = vst [vmem:[#allocation4] sm:$0xff] %v6450
        %6455 = vst [vmem:[#allocation4 + $0x8] sm:$0xff] %v6451
        %6456 = vst [vmem:[#allocation4 + $0x10] sm:$0xff] %v6452
        %6457 = vst [vmem:[#allocation4 + $0x18] sm:$0xff] %v6453
        %s6458 = scalar_lea.vmem %s3, 20
        %v6459 = vld [vmem:[%s6458] sm:$0xf]
        %v6460 = vld [vmem:[#allocation3 + $0x4] sm:$0xff]
        %v6461 = vld [vmem:[#allocation3 + $0xc] sm:$0xff]
        %v6462 = vld [vmem:[#allocation3 + $0x14] sm:$0xf]
        %v6466 = vunpack.c.l.b16 %v6460
        %v6467 = vunpack.c.h.b16 %v6460
        %v6468 = vunpack.c.l.b16 %v6461
        %v6469 = vunpack.c.h.b16 %v6461
        %v6470 = vunpack.c.l.b16 %v6462
        %v6471 = vpack.c.b16 %v6466, %v6466
        %v6472 = vpack.c.b16 %v6467, %v6467
        %v6473 = vpack.c.b16 %v6468, %v6468
        %v6474 = vpack.c.b16 %v6469, %v6469
        %v6475 = vpack.c.b16 %v6470, %v6470
        %6476 = vrot.lane.b32.xlu0 %v6471, 127
        %v6477 = vpop.permute.xlu0 %6476
        %6478 = vrot.lane.b32.xlu0 %v6472, 127
        %v6479 = vpop.permute.xlu0 %6478
        %6480 = vrot.lane.b32.xlu0 %v6473, 127
        %v6481 = vpop.permute.xlu0 %6480
        %6482 = vrot.lane.b32.xlu0 %v6474, 127
        %v6483 = vpop.permute.xlu0 %6482
        %6484 = vrot.lane.b32.xlu0 %v6475, 127
        %v6485 = vpop.permute.xlu0 %6484
        %v6486 = vsel %vm554, %v6477, %v6479
        %v6487 = vsel %vm554, %v6479, %v6481
        %v6488 = vsel %vm554, %v6481, %v6483
        %v6489 = vsel %vm554, %v6483, %v6485
        %v6491 = vsel %vm369, %v6459, 0
        %v6494 = vsel %vm373, %v6486, 0
        %v6497 = vsel %vm373, %v6487, 0
        %v6500 = vsel %vm373, %v6488, 0
        %v6503 = vsel %vm373, %v6489, 0
        %6505 = vmatprep.subr.bf16.mxu0 %v6497
        %6506 = vmatpush1.bf16.msra.mxu0 %v6494
        %6507 = vmatprep.subr.bf16.mxu0 0
        %6508 = vmatpush1.bf16.msra.mxu0 0
        %6509 = vmatprep.subr.bf16.mxu0 0
        %6510 = vmatpush1.bf16.msra.mxu0 0
        %6511 = vmatprep.subr.bf16.mxu0 0
        %6512 = vmatpush1.bf16.msra.mxu0 0
        %6513 = vmatprep.subr.bf16.mxu0 0
        %6514 = vmatpush1.bf16.msra.mxu0 0
        %6515 = vmatprep.subr.bf16.mxu0 0
        %6516 = vmatpush1.bf16.msra.mxu0 0
        %6517 = vmatprep.subr.bf16.mxu0 0
        %6518 = vmatpush1.bf16.msra.mxu0 0
        %6519 = vmatprep.subr.bf16.mxu0 0
        %6520 = vmatpush1.bf16.msra.mxu0 0
        %6521 = vmatprep.subr.bf16.mxu0 0
        %6522 = vmatpush1.bf16.msra.mxu0 0
        %6523 = vmatprep.subr.bf16.mxu0 0
        %6524 = vmatpush1.bf16.msra.mxu0 0
        %6525 = vmatprep.subr.bf16.mxu0 0
        %6526 = vmatpush1.bf16.msra.mxu0 0
        %6527 = vmatprep.subr.bf16.mxu0 0
        %6528 = vmatpush1.bf16.msra.mxu0 0
        %6529 = vmatprep.subr.bf16.mxu0 0
        %6530 = vmatpush1.bf16.msra.mxu0 0
        %6531 = vmatprep.subr.bf16.mxu0 0
        %6532 = vmatpush1.bf16.msra.mxu0 0
        %6533 = vmatprep.subr.bf16.mxu0 0
        %6534 = vmatpush1.bf16.msra.mxu0 0
        %6535 = vmatprep.subr.bf16.mxu0 0
        %6536 = vmatpush1.bf16.msra.mxu0 0
        %6537 = vmatprep.mubr.bf16.mxu0 0
        %6538 = vmatmul.mubr.bf16.gmra.mrb[0].mxu0 %v6491
        %v6539 = vpop.f32.mrb[0].mxu0
        %v6540 = vadd.f32 0.0, %v6539
        %v6541 = vpop.f32.mrb[0].mxu0
        %v6542 = vadd.f32 0.0, %v6541
        %v6543 = vpop.f32.mrb[0].mxu0
        %v6544 = vpop.f32.mrb[0].mxu0
        %6545 = vdwg.mxu0
        %6546 = vmatprep.subr.bf16.mxu0 %v6503
        %6547 = vmatpush1.bf16.msra.mxu0 %v6500
        %6548 = vmatprep.subr.bf16.mxu0 0
        %6549 = vmatpush1.bf16.msra.mxu0 0
        %6550 = vmatprep.subr.bf16.mxu0 0
        %6551 = vmatpush1.bf16.msra.mxu0 0
        %6552 = vmatprep.subr.bf16.mxu0 0
        %6553 = vmatpush1.bf16.msra.mxu0 0
        %6554 = vmatprep.subr.bf16.mxu0 0
        %6555 = vmatpush1.bf16.msra.mxu0 0
        %6556 = vmatprep.subr.bf16.mxu0 0
        %6557 = vmatpush1.bf16.msra.mxu0 0
        %6558 = vmatprep.subr.bf16.mxu0 0
        %6559 = vmatpush1.bf16.msra.mxu0 0
        %6560 = vmatprep.subr.bf16.mxu0 0
        %6561 = vmatpush1.bf16.msra.mxu0 0
        %6562 = vmatprep.subr.bf16.mxu0 0
        %6563 = vmatpush1.bf16.msra.mxu0 0
        %6564 = vmatprep.subr.bf16.mxu0 0
        %6565 = vmatpush1.bf16.msra.mxu0 0
        %6566 = vmatprep.subr.bf16.mxu0 0
        %6567 = vmatpush1.bf16.msra.mxu0 0
        %6568 = vmatprep.subr.bf16.mxu0 0
        %6569 = vmatpush1.bf16.msra.mxu0 0
        %6570 = vmatprep.subr.bf16.mxu0 0
        %6571 = vmatpush1.bf16.msra.mxu0 0
        %6572 = vmatprep.subr.bf16.mxu0 0
        %6573 = vmatpush1.bf16.msra.mxu0 0
        %6574 = vmatprep.subr.bf16.mxu0 0
        %6575 = vmatpush1.bf16.msra.mxu0 0
        %6576 = vmatprep.subr.bf16.mxu0 0
        %6577 = vmatpush1.bf16.msra.mxu0 0
        %6578 = vmatprep.mubr.bf16.mxu0 0
        %6579 = vmatmul.mubr.bf16.gmra.mrb[0].mxu0 %v6491
        %v6580 = vpop.f32.mrb[0].mxu0
        %v6581 = vadd.f32 0.0, %v6580
        %v6582 = vpop.f32.mrb[0].mxu0
        %v6583 = vadd.f32 0.0, %v6582
        %v6584 = vpop.f32.mrb[0].mxu0
        %v6585 = vpop.f32.mrb[0].mxu0
        %6586 = vdwg.mxu0
        %v6587 = vld [vmem:[#allocation4] sm:$0xff]
        %v6588 = vld [vmem:[#allocation4 + $0x8] sm:$0xff]
        %v6589 = vld [vmem:[#allocation4 + $0x10] sm:$0xff]
        %v6590 = vld [vmem:[#allocation4 + $0x18] sm:$0xff]
        %v6591 = vadd.f32 %v6587, %v6540
        %v6592 = vadd.f32 %v6588, %v6542
        %v6593 = vadd.f32 %v6589, %v6581
        %v6594 = vadd.f32 %v6590, %v6583
        %6595 = vst [vmem:[#allocation4] sm:$0xff] %v6591
        %6596 = vst [vmem:[#allocation4 + $0x8] sm:$0xff] %v6592
        %6597 = vst [vmem:[#allocation4 + $0x10] sm:$0xff] %v6593
        %6598 = vst [vmem:[#allocation4 + $0x18] sm:$0xff] %v6594
        %s6599 = scalar_lea.vmem %s3, 24
        %v6600 = vld [vmem:[%s6599] sm:$0xf]
        %v6601 = vld [vmem:[#allocation3 + $0x4] sm:$0xff]
        %v6602 = vld [vmem:[#allocation3 + $0xc] sm:$0xff]
        %v6603 = vld [vmem:[#allocation3 + $0x14] sm:$0xf]
        %v6607 = vunpack.c.l.b16 %v6601
        %v6608 = vunpack.c.h.b16 %v6601
        %v6609 = vunpack.c.l.b16 %v6602
        %v6610 = vunpack.c.h.b16 %v6602
        %v6611 = vunpack.c.l.b16 %v6603
        %v6612 = vpack.c.b16 %v6607, %v6607
        %v6613 = vpack.c.b16 %v6608, %v6608
        %v6614 = vpack.c.b16 %v6609, %v6609
        %v6615 = vpack.c.b16 %v6610, %v6610
        %v6616 = vpack.c.b16 %v6611, %v6611
        %6617 = vrot.lane.b32.xlu0 %v6612, 120
        %v6618 = vpop.permute.xlu0 %6617
        %6619 = vrot.lane.b32.xlu0 %v6613, 120
        %v6620 = vpop.permute.xlu0 %6619
        %6621 = vrot.lane.b32.xlu0 %v6614, 120
        %v6622 = vpop.permute.xlu0 %6621
        %6623 = vrot.lane.b32.xlu0 %v6615, 120
        %v6624 = vpop.permute.xlu0 %6623
        %6625 = vrot.lane.b32.xlu0 %v6616, 120
        %v6626 = vpop.permute.xlu0 %6625
        %vm6627 = vcmask 982016
        %v6628 = vsel %vm6627, %v6618, %v6620
        %v6629 = vsel %vm6627, %v6620, %v6622
        %v6630 = vsel %vm6627, %v6622, %v6624
        %v6631 = vsel %vm6627, %v6624, %v6626
        %v6633 = vsel %vm369, %v6600, 0
        %v6636 = vsel %vm373, %v6628, 0
        %v6639 = vsel %vm373, %v6629, 0
        %v6642 = vsel %vm373, %v6630, 0
        %v6645 = vsel %vm373, %v6631, 0
        %6647 = vmatprep.subr.bf16.mxu0 %v6639
        %6648 = vmatpush1.bf16.msra.mxu0 %v6636
        %6649 = vmatprep.subr.bf16.mxu0 0
        %6650 = vmatpush1.bf16.msra.mxu0 0
        %6651 = vmatprep.subr.bf16.mxu0 0
        %6652 = vmatpush1.bf16.msra.mxu0 0
        %6653 = vmatprep.subr.bf16.mxu0 0
        %6654 = vmatpush1.bf16.msra.mxu0 0
        %6655 = vmatprep.subr.bf16.mxu0 0
        %6656 = vmatpush1.bf16.msra.mxu0 0
        %6657 = vmatprep.subr.bf16.mxu0 0
        %6658 = vmatpush1.bf16.msra.mxu0 0
        %6659 = vmatprep.subr.bf16.mxu0 0
        %6660 = vmatpush1.bf16.msra.mxu0 0
        %6661 = vmatprep.subr.bf16.mxu0 0
        %6662 = vmatpush1.bf16.msra.mxu0 0
        %6663 = vmatprep.subr.bf16.mxu0 0
        %6664 = vmatpush1.bf16.msra.mxu0 0
        %6665 = vmatprep.subr.bf16.mxu0 0
        %6666 = vmatpush1.bf16.msra.mxu0 0
        %6667 = vmatprep.subr.bf16.mxu0 0
        %6668 = vmatpush1.bf16.msra.mxu0 0
        %6669 = vmatprep.subr.bf16.mxu0 0
        %6670 = vmatpush1.bf16.msra.mxu0 0
        %6671 = vmatprep.subr.bf16.mxu0 0
        %6672 = vmatpush1.bf16.msra.mxu0 0
        %6673 = vmatprep.subr.bf16.mxu0 0
        %6674 = vmatpush1.bf16.msra.mxu0 0
        %6675 = vmatprep.subr.bf16.mxu0 0
        %6676 = vmatpush1.bf16.msra.mxu0 0
        %6677 = vmatprep.subr.bf16.mxu0 0
        %6678 = vmatpush1.bf16.msra.mxu0 0
        %6679 = vmatprep.mubr.bf16.mxu0 0
        %6680 = vmatmul.mubr.bf16.gmra.mrb[0].mxu0 %v6633
        %v6681 = vpop.f32.mrb[0].mxu0
        %v6682 = vadd.f32 0.0, %v6681
        %v6683 = vpop.f32.mrb[0].mxu0
        %v6684 = vadd.f32 0.0, %v6683
        %v6685 = vpop.f32.mrb[0].mxu0
        %v6686 = vpop.f32.mrb[0].mxu0
        %6687 = vdwg.mxu0
        %6688 = vmatprep.subr.bf16.mxu0 %v6645
        %6689 = vmatpush1.bf16.msra.mxu0 %v6642
        %6690 = vmatprep.subr.bf16.mxu0 0
        %6691 = vmatpush1.bf16.msra.mxu0 0
        %6692 = vmatprep.subr.bf16.mxu0 0
        %6693 = vmatpush1.bf16.msra.mxu0 0
        %6694 = vmatprep.subr.bf16.mxu0 0
        %6695 = vmatpush1.bf16.msra.mxu0 0
        %6696 = vmatprep.subr.bf16.mxu0 0
        %6697 = vmatpush1.bf16.msra.mxu0 0
        %6698 = vmatprep.subr.bf16.mxu0 0
        %6699 = vmatpush1.bf16.msra.mxu0 0
        %6700 = vmatprep.subr.bf16.mxu0 0
        %6701 = vmatpush1.bf16.msra.mxu0 0
        %6702 = vmatprep.subr.bf16.mxu0 0
        %6703 = vmatpush1.bf16.msra.mxu0 0
        %6704 = vmatprep.subr.bf16.mxu0 0
        %6705 = vmatpush1.bf16.msra.mxu0 0
        %6706 = vmatprep.subr.bf16.mxu0 0
        %6707 = vmatpush1.bf16.msra.mxu0 0
        %6708 = vmatprep.subr.bf16.mxu0 0
        %6709 = vmatpush1.bf16.msra.mxu0 0
        %6710 = vmatprep.subr.bf16.mxu0 0
        %6711 = vmatpush1.bf16.msra.mxu0 0
        %6712 = vmatprep.subr.bf16.mxu0 0
        %6713 = vmatpush1.bf16.msra.mxu0 0
        %6714 = vmatprep.subr.bf16.mxu0 0
        %6715 = vmatpush1.bf16.msra.mxu0 0
        %6716 = vmatprep.subr.bf16.mxu0 0
        %6717 = vmatpush1.bf16.msra.mxu0 0
        %6718 = vmatprep.subr.bf16.mxu0 0
        %6719 = vmatpush1.bf16.msra.mxu0 0
        %6720 = vmatprep.mubr.bf16.mxu0 0
        %6721 = vmatmul.mubr.bf16.gmra.mrb[0].mxu0 %v6633
        %v6722 = vpop.f32.mrb[0].mxu0
        %v6723 = vadd.f32 0.0, %v6722
        %v6724 = vpop.f32.mrb[0].mxu0
        %v6725 = vadd.f32 0.0, %v6724
        %v6726 = vpop.f32.mrb[0].mxu0
        %v6727 = vpop.f32.mrb[0].mxu0
        %6728 = vdwg.mxu0
        %v6729 = vld [vmem:[#allocation4] sm:$0xff]
        %v6730 = vld [vmem:[#allocation4 + $0x8] sm:$0xff]
        %v6731 = vld [vmem:[#allocation4 + $0x10] sm:$0xff]
        %v6732 = vld [vmem:[#allocation4 + $0x18] sm:$0xff]
        %v6733 = vadd.f32 %v6729, %v6682
        %v6734 = vadd.f32 %v6730, %v6684
        %v6735 = vadd.f32 %v6731, %v6723
        %v6736 = vadd.f32 %v6732, %v6725
        %6737 = vst [vmem:[#allocation4] sm:$0xff] %v6733
        %6738 = vst [vmem:[#allocation4 + $0x8] sm:$0xff] %v6734
        %6739 = vst [vmem:[#allocation4 + $0x10] sm:$0xff] %v6735
        %6740 = vst [vmem:[#allocation4 + $0x18] sm:$0xff] %v6736
        %s6741 = scalar_lea.vmem %s3, 28
        %v6742 = vld [vmem:[%s6741] sm:$0xf]
        %v6743 = vld [vmem:[#allocation3 + $0x4] sm:$0xff]
        %v6744 = vld [vmem:[#allocation3 + $0xc] sm:$0xff]
        %v6745 = vld [vmem:[#allocation3 + $0x14] sm:$0xf]
        %v6749 = vunpack.c.l.b16 %v6743
        %v6750 = vunpack.c.h.b16 %v6743
        %v6751 = vunpack.c.l.b16 %v6744
        %v6752 = vunpack.c.h.b16 %v6744
        %v6753 = vunpack.c.l.b16 %v6745
        %v6754 = vpack.c.b16 %v6749, %v6749
        %v6755 = vpack.c.b16 %v6750, %v6750
        %v6756 = vpack.c.b16 %v6751, %v6751
        %v6757 = vpack.c.b16 %v6752, %v6752
        %v6758 = vpack.c.b16 %v6753, %v6753
        %6759 = vrot.lane.b32.xlu0 %v6754, 119
        %v6760 = vpop.permute.xlu0 %6759
        %6761 = vrot.lane.b32.xlu0 %v6755, 119
        %v6762 = vpop.permute.xlu0 %6761
        %6763 = vrot.lane.b32.xlu0 %v6756, 119
        %v6764 = vpop.permute.xlu0 %6763
        %6765 = vrot.lane.b32.xlu0 %v6757, 119
        %v6766 = vpop.permute.xlu0 %6765
        %6767 = vrot.lane.b32.xlu0 %v6758, 119
        %v6768 = vpop.permute.xlu0 %6767
        %v6769 = vsel %vm954, %v6760, %v6762
        %v6770 = vsel %vm954, %v6762, %v6764
        %v6771 = vsel %vm954, %v6764, %v6766
        %v6772 = vsel %vm954, %v6766, %v6768
        %v6774 = vsel %vm369, %v6742, 0
        %v6777 = vsel %vm373, %v6769, 0
        %v6780 = vsel %vm373, %v6770, 0
        %v6783 = vsel %vm373, %v6771, 0
        %v6786 = vsel %vm373, %v6772, 0
        %6788 = vmatprep.subr.bf16.mxu0 %v6780
        %6789 = vmatpush1.bf16.msra.mxu0 %v6777
        %6790 = vmatprep.subr.bf16.mxu0 0
        %6791 = vmatpush1.bf16.msra.mxu0 0
        %6792 = vmatprep.subr.bf16.mxu0 0
        %6793 = vmatpush1.bf16.msra.mxu0 0
        %6794 = vmatprep.subr.bf16.mxu0 0
        %6795 = vmatpush1.bf16.msra.mxu0 0
        %6796 = vmatprep.subr.bf16.mxu0 0
        %6797 = vmatpush1.bf16.msra.mxu0 0
        %6798 = vmatprep.subr.bf16.mxu0 0
        %6799 = vmatpush1.bf16.msra.mxu0 0
        %6800 = vmatprep.subr.bf16.mxu0 0
        %6801 = vmatpush1.bf16.msra.mxu0 0
        %6802 = vmatprep.subr.bf16.mxu0 0
        %6803 = vmatpush1.bf16.msra.mxu0 0
        %6804 = vmatprep.subr.bf16.mxu0 0
        %6805 = vmatpush1.bf16.msra.mxu0 0
        %6806 = vmatprep.subr.bf16.mxu0 0
        %6807 = vmatpush1.bf16.msra.mxu0 0
        %6808 = vmatprep.subr.bf16.mxu0 0
        %6809 = vmatpush1.bf16.msra.mxu0 0
        %6810 = vmatprep.subr.bf16.mxu0 0
        %6811 = vmatpush1.bf16.msra.mxu0 0
        %6812 = vmatprep.subr.bf16.mxu0 0
        %6813 = vmatpush1.bf16.msra.mxu0 0
        %6814 = vmatprep.subr.bf16.mxu0 0
        %6815 = vmatpush1.bf16.msra.mxu0 0
        %6816 = vmatprep.subr.bf16.mxu0 0
        %6817 = vmatpush1.bf16.msra.mxu0 0
        %6818 = vmatprep.subr.bf16.mxu0 0
        %6819 = vmatpush1.bf16.msra.mxu0 0
        %6820 = vmatprep.mubr.bf16.mxu0 0
        %6821 = vmatmul.mubr.bf16.gmra.mrb[0].mxu0 %v6774
        %v6822 = vpop.f32.mrb[0].mxu0
        %v6823 = vadd.f32 0.0, %v6822
        %v6824 = vpop.f32.mrb[0].mxu0
        %v6825 = vadd.f32 0.0, %v6824
        %v6826 = vpop.f32.mrb[0].mxu0
        %v6827 = vpop.f32.mrb[0].mxu0
        %6828 = vdwg.mxu0
        %6829 = vmatprep.subr.bf16.mxu0 %v6786
        %6830 = vmatpush1.bf16.msra.mxu0 %v6783
        %6831 = vmatprep.subr.bf16.mxu0 0
        %6832 = vmatpush1.bf16.msra.mxu0 0
        %6833 = vmatprep.subr.bf16.mxu0 0
        %6834 = vmatpush1.bf16.msra.mxu0 0
        %6835 = vmatprep.subr.bf16.mxu0 0
        %6836 = vmatpush1.bf16.msra.mxu0 0
        %6837 = vmatprep.subr.bf16.mxu0 0
        %6838 = vmatpush1.bf16.msra.mxu0 0
        %6839 = vmatprep.subr.bf16.mxu0 0
        %6840 = vmatpush1.bf16.msra.mxu0 0
        %6841 = vmatprep.subr.bf16.mxu0 0
        %6842 = vmatpush1.bf16.msra.mxu0 0
        %6843 = vmatprep.subr.bf16.mxu0 0
        %6844 = vmatpush1.bf16.msra.mxu0 0
        %6845 = vmatprep.subr.bf16.mxu0 0
        %6846 = vmatpush1.bf16.msra.mxu0 0
        %6847 = vmatprep.subr.bf16.mxu0 0
        %6848 = vmatpush1.bf16.msra.mxu0 0
        %6849 = vmatprep.subr.bf16.mxu0 0
        %6850 = vmatpush1.bf16.msra.mxu0 0
        %6851 = vmatprep.subr.bf16.mxu0 0
        %6852 = vmatpush1.bf16.msra.mxu0 0
        %6853 = vmatprep.subr.bf16.mxu0 0
        %6854 = vmatpush1.bf16.msra.mxu0 0
        %6855 = vmatprep.subr.bf16.mxu0 0
        %6856 = vmatpush1.bf16.msra.mxu0 0
        %6857 = vmatprep.subr.bf16.mxu0 0
        %6858 = vmatpush1.bf16.msra.mxu0 0
        %6859 = vmatprep.subr.bf16.mxu0 0
        %6860 = vmatpush1.bf16.msra.mxu0 0
        %6861 = vmatprep.mubr.bf16.mxu0 0
        %6862 = vmatmul.mubr.bf16.gmra.mrb[0].mxu0 %v6774
        %v6863 = vpop.f32.mrb[0].mxu0
        %v6864 = vadd.f32 0.0, %v6863
        %v6865 = vpop.f32.mrb[0].mxu0
        %v6866 = vadd.f32 0.0, %v6865
        %v6867 = vpop.f32.mrb[0].mxu0
        %v6868 = vpop.f32.mrb[0].mxu0
        %6869 = vdwg.mxu0
        %v6870 = vld [vmem:[#allocation4] sm:$0xff]
        %v6871 = vld [vmem:[#allocation4 + $0x8] sm:$0xff]
        %v6872 = vld [vmem:[#allocation4 + $0x10] sm:$0xff]
        %v6873 = vld [vmem:[#allocation4 + $0x18] sm:$0xff]
        %v6874 = vadd.f32 %v6870, %v6823
        %v6875 = vadd.f32 %v6871, %v6825
        %v6876 = vadd.f32 %v6872, %v6864
        %v6877 = vadd.f32 %v6873, %v6866
        %6878 = vst [vmem:[#allocation4] sm:$0xff] %v6874
        %6879 = vst [vmem:[#allocation4 + $0x8] sm:$0xff] %v6875
        %6880 = vst [vmem:[#allocation4 + $0x10] sm:$0xff] %v6876
        %6881 = vst [vmem:[#allocation4 + $0x18] sm:$0xff] %v6877
        %s6882 = scalar_lea.vmem %s3, 32
        %v6883 = vld [vmem:[%s6882] sm:$0xf]
        %v6884 = vld [vmem:[#allocation3 + $0x4] sm:$0xff]
        %v6885 = vld [vmem:[#allocation3 + $0xc] sm:$0xff]
        %v6886 = vld [vmem:[#allocation3 + $0x14] sm:$0xf]
        %v6890 = vunpack.c.l.b16 %v6884
        %v6891 = vunpack.c.h.b16 %v6884
        %v6892 = vunpack.c.l.b16 %v6885
        %v6893 = vunpack.c.h.b16 %v6885
        %v6894 = vunpack.c.l.b16 %v6886
        %v6895 = vpack.c.b16 %v6890, %v6890
        %v6896 = vpack.c.b16 %v6891, %v6891
        %v6897 = vpack.c.b16 %v6892, %v6892
        %v6898 = vpack.c.b16 %v6893, %v6893
        %v6899 = vpack.c.b16 %v6894, %v6894
        %6900 = vrot.lane.b32.xlu0 %v6895, 118
        %v6901 = vpop.permute.xlu0 %6900
        %6902 = vrot.lane.b32.xlu0 %v6896, 118
        %v6903 = vpop.permute.xlu0 %6902
        %6904 = vrot.lane.b32.xlu0 %v6897, 118
        %v6905 = vpop.permute.xlu0 %6904
        %6906 = vrot.lane.b32.xlu0 %v6898, 118
        %v6907 = vpop.permute.xlu0 %6906
        %6908 = vrot.lane.b32.xlu0 %v6899, 118
        %v6909 = vpop.permute.xlu0 %6908
        %v6910 = vsel %vm1154, %v6901, %v6903
        %v6911 = vsel %vm1154, %v6903, %v6905
        %v6912 = vsel %vm1154, %v6905, %v6907
        %v6913 = vsel %vm1154, %v6907, %v6909
        %v6915 = vsel %vm369, %v6883, 0
        %v6918 = vsel %vm373, %v6910, 0
        %v6921 = vsel %vm373, %v6911, 0
        %v6924 = vsel %vm373, %v6912, 0
        %v6927 = vsel %vm373, %v6913, 0
        %6929 = vmatprep.subr.bf16.mxu0 %v6921
        %6930 = vmatpush1.bf16.msra.mxu0 %v6918
        %6931 = vmatprep.subr.bf16.mxu0 0
        %6932 = vmatpush1.bf16.msra.mxu0 0
        %6933 = vmatprep.subr.bf16.mxu0 0
        %6934 = vmatpush1.bf16.msra.mxu0 0
        %6935 = vmatprep.subr.bf16.mxu0 0
        %6936 = vmatpush1.bf16.msra.mxu0 0
        %6937 = vmatprep.subr.bf16.mxu0 0
        %6938 = vmatpush1.bf16.msra.mxu0 0
        %6939 = vmatprep.subr.bf16.mxu0 0
        %6940 = vmatpush1.bf16.msra.mxu0 0
        %6941 = vmatprep.subr.bf16.mxu0 0
        %6942 = vmatpush1.bf16.msra.mxu0 0
        %6943 = vmatprep.subr.bf16.mxu0 0
        %6944 = vmatpush1.bf16.msra.mxu0 0
        %6945 = vmatprep.subr.bf16.mxu0 0
        %6946 = vmatpush1.bf16.msra.mxu0 0
        %6947 = vmatprep.subr.bf16.mxu0 0
        %6948 = vmatpush1.bf16.msra.mxu0 0
        %6949 = vmatprep.subr.bf16.mxu0 0
        %6950 = vmatpush1.bf16.msra.mxu0 0
        %6951 = vmatprep.subr.bf16.mxu0 0
        %6952 = vmatpush1.bf16.msra.mxu0 0
        %6953 = vmatprep.subr.bf16.mxu0 0
        %6954 = vmatpush1.bf16.msra.mxu0 0
        %6955 = vmatprep.subr.bf16.mxu0 0
        %6956 = vmatpush1.bf16.msra.mxu0 0
        %6957 = vmatprep.subr.bf16.mxu0 0
        %6958 = vmatpush1.bf16.msra.mxu0 0
        %6959 = vmatprep.subr.bf16.mxu0 0
        %6960 = vmatpush1.bf16.msra.mxu0 0
        %6961 = vmatprep.mubr.bf16.mxu0 0
        %6962 = vmatmul.mubr.bf16.gmra.mrb[0].mxu0 %v6915
        %v6963 = vpop.f32.mrb[0].mxu0
        %v6964 = vadd.f32 0.0, %v6963
        %v6965 = vpop.f32.mrb[0].mxu0
        %v6966 = vadd.f32 0.0, %v6965
        %v6967 = vpop.f32.mrb[0].mxu0
        %v6968 = vpop.f32.mrb[0].mxu0
        %6969 = vdwg.mxu0
        %6970 = vmatprep.subr.bf16.mxu0 %v6927
        %6971 = vmatpush1.bf16.msra.mxu0 %v6924
        %6972 = vmatprep.subr.bf16.mxu0 0
        %6973 = vmatpush1.bf16.msra.mxu0 0
        %6974 = vmatprep.subr.bf16.mxu0 0
        %6975 = vmatpush1.bf16.msra.mxu0 0
        %6976 = vmatprep.subr.bf16.mxu0 0
        %6977 = vmatpush1.bf16.msra.mxu0 0
        %6978 = vmatprep.subr.bf16.mxu0 0
        %6979 = vmatpush1.bf16.msra.mxu0 0
        %6980 = vmatprep.subr.bf16.mxu0 0
        %6981 = vmatpush1.bf16.msra.mxu0 0
        %6982 = vmatprep.subr.bf16.mxu0 0
        %6983 = vmatpush1.bf16.msra.mxu0 0
        %6984 = vmatprep.subr.bf16.mxu0 0
        %6985 = vmatpush1.bf16.msra.mxu0 0
        %6986 = vmatprep.subr.bf16.mxu0 0
        %6987 = vmatpush1.bf16.msra.mxu0 0
        %6988 = vmatprep.subr.bf16.mxu0 0
        %6989 = vmatpush1.bf16.msra.mxu0 0
        %6990 = vmatprep.subr.bf16.mxu0 0
        %6991 = vmatpush1.bf16.msra.mxu0 0
        %6992 = vmatprep.subr.bf16.mxu0 0
        %6993 = vmatpush1.bf16.msra.mxu0 0
        %6994 = vmatprep.subr.bf16.mxu0 0
        %6995 = vmatpush1.bf16.msra.mxu0 0
        %6996 = vmatprep.subr.bf16.mxu0 0
        %6997 = vmatpush1.bf16.msra.mxu0 0
        %6998 = vmatprep.subr.bf16.mxu0 0
        %6999 = vmatpush1.bf16.msra.mxu0 0
        %7000 = vmatprep.subr.bf16.mxu0 0
        %7001 = vmatpush1.bf16.msra.mxu0 0
        %7002 = vmatprep.mubr.bf16.mxu0 0
        %7003 = vmatmul.mubr.bf16.gmra.mrb[0].mxu0 %v6915
        %v7004 = vpop.f32.mrb[0].mxu0
        %v7005 = vadd.f32 0.0, %v7004
        %v7006 = vpop.f32.mrb[0].mxu0
        %v7007 = vadd.f32 0.0, %v7006
        %v7008 = vpop.f32.mrb[0].mxu0
        %v7009 = vpop.f32.mrb[0].mxu0
        %7010 = vdwg.mxu0
        %v7011 = vld [vmem:[#allocation4] sm:$0xff]
        %v7012 = vld [vmem:[#allocation4 + $0x8] sm:$0xff]
        %v7013 = vld [vmem:[#allocation4 + $0x10] sm:$0xff]
        %v7014 = vld [vmem:[#allocation4 + $0x18] sm:$0xff]
        %v7015 = vadd.f32 %v7011, %v6964
        %v7016 = vadd.f32 %v7012, %v6966
        %v7017 = vadd.f32 %v7013, %v7005
        %v7018 = vadd.f32 %v7014, %v7007
        %7019 = vst [vmem:[#allocation4] sm:$0xff] %v7015
        %7020 = vst [vmem:[#allocation4 + $0x8] sm:$0xff] %v7016
        %7021 = vst [vmem:[#allocation4 + $0x10] sm:$0xff] %v7017
        %7022 = vst [vmem:[#allocation4 + $0x18] sm:$0xff] %v7018
        %s7023 = scalar_lea.vmem %s3, 36
        %v7024 = vld [vmem:[%s7023] sm:$0xf]
        %v7025 = vld [vmem:[#allocation3 + $0x4] sm:$0xff]
        %v7026 = vld [vmem:[#allocation3 + $0xc] sm:$0xff]
        %v7027 = vld [vmem:[#allocation3 + $0x14] sm:$0xf]
        %v7031 = vunpack.c.l.b16 %v7025
        %v7032 = vunpack.c.h.b16 %v7025
        %v7033 = vunpack.c.l.b16 %v7026
        %v7034 = vunpack.c.h.b16 %v7026
        %v7035 = vunpack.c.l.b16 %v7027
        %v7036 = vpack.c.b16 %v7031, %v7031
        %v7037 = vpack.c.b16 %v7032, %v7032
        %v7038 = vpack.c.b16 %v7033, %v7033
        %v7039 = vpack.c.b16 %v7034, %v7034
        %v7040 = vpack.c.b16 %v7035, %v7035
        %7041 = vrot.lane.b32.xlu0 %v7036, 10
        %v7042 = vpop.permute.xlu0 %7041
        %7043 = vrot.lane.b32.xlu0 %v7037, 10
        %v7044 = vpop.permute.xlu0 %7043
        %7045 = vrot.lane.b32.xlu0 %v7038, 10
        %v7046 = vpop.permute.xlu0 %7045
        %7047 = vrot.lane.b32.xlu0 %v7039, 10
        %v7048 = vpop.permute.xlu0 %7047
        %7049 = vrot.lane.b32.xlu0 %v7040, 10
        %v7050 = vpop.permute.xlu0 %7049
        %v7051 = vsel %vm5803, %v7042, %v7044
        %v7052 = vsel %vm5803, %v7044, %v7046
        %v7053 = vsel %vm5803, %v7046, %v7048
        %v7054 = vsel %vm5803, %v7048, %v7050
        %v7056 = vsel %vm369, %v7024, 0
        %v7059 = vsel %vm373, %v7051, 0
        %v7062 = vsel %vm373, %v7052, 0
        %v7065 = vsel %vm373, %v7053, 0
        %v7068 = vsel %vm373, %v7054, 0
        %7070 = vmatprep.subr.bf16.mxu0 %v7062
        %7071 = vmatpush1.bf16.msra.mxu0 %v7059
        %7072 = vmatprep.subr.bf16.mxu0 0
        %7073 = vmatpush1.bf16.msra.mxu0 0
        %7074 = vmatprep.subr.bf16.mxu0 0
        %7075 = vmatpush1.bf16.msra.mxu0 0
        %7076 = vmatprep.subr.bf16.mxu0 0
        %7077 = vmatpush1.bf16.msra.mxu0 0
        %7078 = vmatprep.subr.bf16.mxu0 0
        %7079 = vmatpush1.bf16.msra.mxu0 0
        %7080 = vmatprep.subr.bf16.mxu0 0
        %7081 = vmatpush1.bf16.msra.mxu0 0
        %7082 = vmatprep.subr.bf16.mxu0 0
        %7083 = vmatpush1.bf16.msra.mxu0 0
        %7084 = vmatprep.subr.bf16.mxu0 0
        %7085 = vmatpush1.bf16.msra.mxu0 0
        %7086 = vmatprep.subr.bf16.mxu0 0
        %7087 = vmatpush1.bf16.msra.mxu0 0
        %7088 = vmatprep.subr.bf16.mxu0 0
        %7089 = vmatpush1.bf16.msra.mxu0 0
        %7090 = vmatprep.subr.bf16.mxu0 0
        %7091 = vmatpush1.bf16.msra.mxu0 0
        %7092 = vmatprep.subr.bf16.mxu0 0
        %7093 = vmatpush1.bf16.msra.mxu0 0
        %7094 = vmatprep.subr.bf16.mxu0 0
        %7095 = vmatpush1.bf16.msra.mxu0 0
        %7096 = vmatprep.subr.bf16.mxu0 0
        %7097 = vmatpush1.bf16.msra.mxu0 0
        %7098 = vmatprep.subr.bf16.mxu0 0
        %7099 = vmatpush1.bf16.msra.mxu0 0
        %7100 = vmatprep.subr.bf16.mxu0 0
        %7101 = vmatpush1.bf16.msra.mxu0 0
        %7102 = vmatprep.mubr.bf16.mxu0 0
        %7103 = vmatmul.mubr.bf16.gmra.mrb[0].mxu0 %v7056
        %v7104 = vpop.f32.mrb[0].mxu0
        %v7105 = vadd.f32 0.0, %v7104
        %v7106 = vpop.f32.mrb[0].mxu0
        %v7107 = vadd.f32 0.0, %v7106
        %v7108 = vpop.f32.mrb[0].mxu0
        %v7109 = vpop.f32.mrb[0].mxu0
        %7110 = vdwg.mxu0
        %7111 = vmatprep.subr.bf16.mxu0 %v7068
        %7112 = vmatpush1.bf16.msra.mxu0 %v7065
        %7113 = vmatprep.subr.bf16.mxu0 0
        %7114 = vmatpush1.bf16.msra.mxu0 0
        %7115 = vmatprep.subr.bf16.mxu0 0
        %7116 = vmatpush1.bf16.msra.mxu0 0
        %7117 = vmatprep.subr.bf16.mxu0 0
        %7118 = vmatpush1.bf16.msra.mxu0 0
        %7119 = vmatprep.subr.bf16.mxu0 0
        %7120 = vmatpush1.bf16.msra.mxu0 0
        %7121 = vmatprep.subr.bf16.mxu0 0
        %7122 = vmatpush1.bf16.msra.mxu0 0
        %7123 = vmatprep.subr.bf16.mxu0 0
        %7124 = vmatpush1.bf16.msra.mxu0 0
        %7125 = vmatprep.subr.bf16.mxu0 0
        %7126 = vmatpush1.bf16.msra.mxu0 0
        %7127 = vmatprep.subr.bf16.mxu0 0
        %7128 = vmatpush1.bf16.msra.mxu0 0
        %7129 = vmatprep.subr.bf16.mxu0 0
        %7130 = vmatpush1.bf16.msra.mxu0 0
        %7131 = vmatprep.subr.bf16.mxu0 0
        %7132 = vmatpush1.bf16.msra.mxu0 0
        %7133 = vmatprep.subr.bf16.mxu0 0
        %7134 = vmatpush1.bf16.msra.mxu0 0
        %7135 = vmatprep.subr.bf16.mxu0 0
        %7136 = vmatpush1.bf16.msra.mxu0 0
        %7137 = vmatprep.subr.bf16.mxu0 0
        %7138 = vmatpush1.bf16.msra.mxu0 0
        %7139 = vmatprep.subr.bf16.mxu0 0
        %7140 = vmatpush1.bf16.msra.mxu0 0
        %7141 = vmatprep.subr.bf16.mxu0 0
        %7142 = vmatpush1.bf16.msra.mxu0 0
        %7143 = vmatprep.mubr.bf16.mxu0 0
        %7144 = vmatmul.mubr.bf16.gmra.mrb[0].mxu0 %v7056
        %v7145 = vpop.f32.mrb[0].mxu0
        %v7146 = vadd.f32 0.0, %v7145
        %v7147 = vpop.f32.mrb[0].mxu0
        %v7148 = vadd.f32 0.0, %v7147
        %v7149 = vpop.f32.mrb[0].mxu0
        %v7150 = vpop.f32.mrb[0].mxu0
        %7151 = vdwg.mxu0
        %v7152 = vld [vmem:[#allocation4] sm:$0xff]
        %v7153 = vld [vmem:[#allocation4 + $0x8] sm:$0xff]
        %v7154 = vld [vmem:[#allocation4 + $0x10] sm:$0xff]
        %v7155 = vld [vmem:[#allocation4 + $0x18] sm:$0xff]
        %v7156 = vadd.f32 %v7152, %v7105
        %v7157 = vadd.f32 %v7153, %v7107
        %v7158 = vadd.f32 %v7154, %v7146
        %v7159 = vadd.f32 %v7155, %v7148
        %7160 = vst [vmem:[#allocation4] sm:$0xff] %v7156
        %7161 = vst [vmem:[#allocation4 + $0x8] sm:$0xff] %v7157
        %7162 = vst [vmem:[#allocation4 + $0x10] sm:$0xff] %v7158
        %7163 = vst [vmem:[#allocation4 + $0x18] sm:$0xff] %v7159
        %s7164 = scalar_lea.vmem %s3, 40
        %v7165 = vld [vmem:[%s7164] sm:$0xf]
        %v7166 = vld [vmem:[#allocation3 + $0x4] sm:$0xff]
        %v7167 = vld [vmem:[#allocation3 + $0xc] sm:$0xff]
        %v7168 = vld [vmem:[#allocation3 + $0x14] sm:$0xf]
        %v7172 = vunpack.c.l.b16 %v7166
        %v7173 = vunpack.c.h.b16 %v7166
        %v7174 = vunpack.c.l.b16 %v7167
        %v7175 = vunpack.c.h.b16 %v7167
        %v7176 = vunpack.c.l.b16 %v7168
        %v7177 = vpack.c.b16 %v7172, %v7172
        %v7178 = vpack.c.b16 %v7173, %v7173
        %v7179 = vpack.c.b16 %v7174, %v7174
        %v7180 = vpack.c.b16 %v7175, %v7175
        %v7181 = vpack.c.b16 %v7176, %v7176
        %7182 = vrot.lane.b32.xlu0 %v7177, 9
        %v7183 = vpop.permute.xlu0 %7182
        %7184 = vrot.lane.b32.xlu0 %v7178, 9
        %v7185 = vpop.permute.xlu0 %7184
        %7186 = vrot.lane.b32.xlu0 %v7179, 9
        %v7187 = vpop.permute.xlu0 %7186
        %7188 = vrot.lane.b32.xlu0 %v7180, 9
        %v7189 = vpop.permute.xlu0 %7188
        %7190 = vrot.lane.b32.xlu0 %v7181, 9
        %v7191 = vpop.permute.xlu0 %7190
        %v7192 = vsel %vm5937, %v7183, %v7185
        %v7193 = vsel %vm5937, %v7185, %v7187
        %v7194 = vsel %vm5937, %v7187, %v7189
        %v7195 = vsel %vm5937, %v7189, %v7191
        %v7197 = vsel %vm369, %v7165, 0
        %v7200 = vsel %vm373, %v7192, 0
        %v7203 = vsel %vm373, %v7193, 0
        %v7206 = vsel %vm373, %v7194, 0
        %v7209 = vsel %vm373, %v7195, 0
        %7211 = vmatprep.subr.bf16.mxu0 %v7203
        %7212 = vmatpush1.bf16.msra.mxu0 %v7200
        %7213 = vmatprep.subr.bf16.mxu0 0
        %7214 = vmatpush1.bf16.msra.mxu0 0
        %7215 = vmatprep.subr.bf16.mxu0 0
        %7216 = vmatpush1.bf16.msra.mxu0 0
        %7217 = vmatprep.subr.bf16.mxu0 0
        %7218 = vmatpush1.bf16.msra.mxu0 0
        %7219 = vmatprep.subr.bf16.mxu0 0
        %7220 = vmatpush1.bf16.msra.mxu0 0
        %7221 = vmatprep.subr.bf16.mxu0 0
        %7222 = vmatpush1.bf16.msra.mxu0 0
        %7223 = vmatprep.subr.bf16.mxu0 0
        %7224 = vmatpush1.bf16.msra.mxu0 0
        %7225 = vmatprep.subr.bf16.mxu0 0
        %7226 = vmatpush1.bf16.msra.mxu0 0
        %7227 = vmatprep.subr.bf16.mxu0 0
        %7228 = vmatpush1.bf16.msra.mxu0 0
        %7229 = vmatprep.subr.bf16.mxu0 0
        %7230 = vmatpush1.bf16.msra.mxu0 0
        %7231 = vmatprep.subr.bf16.mxu0 0
        %7232 = vmatpush1.bf16.msra.mxu0 0
        %7233 = vmatprep.subr.bf16.mxu0 0
        %7234 = vmatpush1.bf16.msra.mxu0 0
        %7235 = vmatprep.subr.bf16.mxu0 0
        %7236 = vmatpush1.bf16.msra.mxu0 0
        %7237 = vmatprep.subr.bf16.mxu0 0
        %7238 = vmatpush1.bf16.msra.mxu0 0
        %7239 = vmatprep.subr.bf16.mxu0 0
        %7240 = vmatpush1.bf16.msra.mxu0 0
        %7241 = vmatprep.subr.bf16.mxu0 0
        %7242 = vmatpush1.bf16.msra.mxu0 0
        %7243 = vmatprep.mubr.bf16.mxu0 0
        %7244 = vmatmul.mubr.bf16.gmra.mrb[0].mxu0 %v7197
        %v7245 = vpop.f32.mrb[0].mxu0
        %v7246 = vadd.f32 0.0, %v7245
        %v7247 = vpop.f32.mrb[0].mxu0
        %v7248 = vadd.f32 0.0, %v7247
        %v7249 = vpop.f32.mrb[0].mxu0
        %v7250 = vpop.f32.mrb[0].mxu0
        %7251 = vdwg.mxu0
        %7252 = vmatprep.subr.bf16.mxu0 %v7209
        %7253 = vmatpush1.bf16.msra.mxu0 %v7206
        %7254 = vmatprep.subr.bf16.mxu0 0
        %7255 = vmatpush1.bf16.msra.mxu0 0
        %7256 = vmatprep.subr.bf16.mxu0 0
        %7257 = vmatpush1.bf16.msra.mxu0 0
        %7258 = vmatprep.subr.bf16.mxu0 0
        %7259 = vmatpush1.bf16.msra.mxu0 0
        %7260 = vmatprep.subr.bf16.mxu0 0
        %7261 = vmatpush1.bf16.msra.mxu0 0
        %7262 = vmatprep.subr.bf16.mxu0 0
        %7263 = vmatpush1.bf16.msra.mxu0 0
        %7264 = vmatprep.subr.bf16.mxu0 0
        %7265 = vmatpush1.bf16.msra.mxu0 0
        %7266 = vmatprep.subr.bf16.mxu0 0
        %7267 = vmatpush1.bf16.msra.mxu0 0
        %7268 = vmatprep.subr.bf16.mxu0 0
        %7269 = vmatpush1.bf16.msra.mxu0 0
        %7270 = vmatprep.subr.bf16.mxu0 0
        %7271 = vmatpush1.bf16.msra.mxu0 0
        %7272 = vmatprep.subr.bf16.mxu0 0
        %7273 = vmatpush1.bf16.msra.mxu0 0
        %7274 = vmatprep.subr.bf16.mxu0 0
        %7275 = vmatpush1.bf16.msra.mxu0 0
        %7276 = vmatprep.subr.bf16.mxu0 0
        %7277 = vmatpush1.bf16.msra.mxu0 0
        %7278 = vmatprep.subr.bf16.mxu0 0
        %7279 = vmatpush1.bf16.msra.mxu0 0
        %7280 = vmatprep.subr.bf16.mxu0 0
        %7281 = vmatpush1.bf16.msra.mxu0 0
        %7282 = vmatprep.subr.bf16.mxu0 0
        %7283 = vmatpush1.bf16.msra.mxu0 0
        %7284 = vmatprep.mubr.bf16.mxu0 0
        %7285 = vmatmul.mubr.bf16.gmra.mrb[0].mxu0 %v7197
        %v7286 = vpop.f32.mrb[0].mxu0
        %v7287 = vadd.f32 0.0, %v7286
        %v7288 = vpop.f32.mrb[0].mxu0
        %v7289 = vadd.f32 0.0, %v7288
        %v7290 = vpop.f32.mrb[0].mxu0
        %v7291 = vpop.f32.mrb[0].mxu0
        %7292 = vdwg.mxu0
        %v7293 = vld [vmem:[#allocation4] sm:$0xff]
        %v7294 = vld [vmem:[#allocation4 + $0x8] sm:$0xff]
        %v7295 = vld [vmem:[#allocation4 + $0x10] sm:$0xff]
        %v7296 = vld [vmem:[#allocation4 + $0x18] sm:$0xff]
        %v7297 = vadd.f32 %v7293, %v7246
        %v7298 = vadd.f32 %v7294, %v7248
        %v7299 = vadd.f32 %v7295, %v7287
        %v7300 = vadd.f32 %v7296, %v7289
        %7301 = vst [vmem:[#allocation4] sm:$0xff] %v7297
        %7302 = vst [vmem:[#allocation4 + $0x8] sm:$0xff] %v7298
        %7303 = vst [vmem:[#allocation4 + $0x10] sm:$0xff] %v7299
        %7304 = vst [vmem:[#allocation4 + $0x18] sm:$0xff] %v7300
        %s7305 = scalar_lea.vmem %s3, 44
        %v7306 = vld [vmem:[%s7305] sm:$0xf]
        %v7307 = vld [vmem:[#allocation3 + $0x4] sm:$0xff]
        %v7308 = vld [vmem:[#allocation3 + $0xc] sm:$0xff]
        %v7309 = vld [vmem:[#allocation3 + $0x14] sm:$0xf]
        %v7313 = vunpack.c.l.b16 %v7307
        %v7314 = vunpack.c.h.b16 %v7307
        %v7315 = vunpack.c.l.b16 %v7308
        %v7316 = vunpack.c.h.b16 %v7308
        %v7317 = vunpack.c.l.b16 %v7309
        %v7318 = vpack.c.b16 %v7313, %v7313
        %v7319 = vpack.c.b16 %v7314, %v7314
        %v7320 = vpack.c.b16 %v7315, %v7315
        %v7321 = vpack.c.b16 %v7316, %v7316
        %v7322 = vpack.c.b16 %v7317, %v7317
        %7323 = vrot.lane.b32.xlu0 %v7318, 8
        %v7324 = vpop.permute.xlu0 %7323
        %7325 = vrot.lane.b32.xlu0 %v7319, 8
        %v7326 = vpop.permute.xlu0 %7325
        %7327 = vrot.lane.b32.xlu0 %v7320, 8
        %v7328 = vpop.permute.xlu0 %7327
        %7329 = vrot.lane.b32.xlu0 %v7321, 8
        %v7330 = vpop.permute.xlu0 %7329
        %7331 = vrot.lane.b32.xlu0 %v7322, 8
        %v7332 = vpop.permute.xlu0 %7331
        %v7333 = vsel %vm6079, %v7324, %v7326
        %v7334 = vsel %vm6079, %v7326, %v7328
        %v7335 = vsel %vm6079, %v7328, %v7330
        %v7336 = vsel %vm6079, %v7330, %v7332
        %v7338 = vsel %vm369, %v7306, 0
        %v7341 = vsel %vm373, %v7333, 0
        %v7344 = vsel %vm373, %v7334, 0
        %v7347 = vsel %vm373, %v7335, 0
        %v7350 = vsel %vm373, %v7336, 0
        %7352 = vmatprep.subr.bf16.mxu0 %v7344
        %7353 = vmatpush1.bf16.msra.mxu0 %v7341
        %7354 = vmatprep.subr.bf16.mxu0 0
        %7355 = vmatpush1.bf16.msra.mxu0 0
        %7356 = vmatprep.subr.bf16.mxu0 0
        %7357 = vmatpush1.bf16.msra.mxu0 0
        %7358 = vmatprep.subr.bf16.mxu0 0
        %7359 = vmatpush1.bf16.msra.mxu0 0
        %7360 = vmatprep.subr.bf16.mxu0 0
        %7361 = vmatpush1.bf16.msra.mxu0 0
        %7362 = vmatprep.subr.bf16.mxu0 0
        %7363 = vmatpush1.bf16.msra.mxu0 0
        %7364 = vmatprep.subr.bf16.mxu0 0
        %7365 = vmatpush1.bf16.msra.mxu0 0
        %7366 = vmatprep.subr.bf16.mxu0 0
        %7367 = vmatpush1.bf16.msra.mxu0 0
        %7368 = vmatprep.subr.bf16.mxu0 0
        %7369 = vmatpush1.bf16.msra.mxu0 0
        %7370 = vmatprep.subr.bf16.mxu0 0
        %7371 = vmatpush1.bf16.msra.mxu0 0
        %7372 = vmatprep.subr.bf16.mxu0 0
        %7373 = vmatpush1.bf16.msra.mxu0 0
        %7374 = vmatprep.subr.bf16.mxu0 0
        %7375 = vmatpush1.bf16.msra.mxu0 0
        %7376 = vmatprep.subr.bf16.mxu0 0
        %7377 = vmatpush1.bf16.msra.mxu0 0
        %7378 = vmatprep.subr.bf16.mxu0 0
        %7379 = vmatpush1.bf16.msra.mxu0 0
        %7380 = vmatprep.subr.bf16.mxu0 0
        %7381 = vmatpush1.bf16.msra.mxu0 0
        %7382 = vmatprep.subr.bf16.mxu0 0
        %7383 = vmatpush1.bf16.msra.mxu0 0
        %7384 = vmatprep.mubr.bf16.mxu0 0
        %7385 = vmatmul.mubr.bf16.gmra.mrb[0].mxu0 %v7338
        %v7386 = vpop.f32.mrb[0].mxu0
        %v7387 = vadd.f32 0.0, %v7386
        %v7388 = vpop.f32.mrb[0].mxu0
        %v7389 = vadd.f32 0.0, %v7388
        %v7390 = vpop.f32.mrb[0].mxu0
        %v7391 = vpop.f32.mrb[0].mxu0
        %7392 = vdwg.mxu0
        %7393 = vmatprep.subr.bf16.mxu0 %v7350
        %7394 = vmatpush1.bf16.msra.mxu0 %v7347
        %7395 = vmatprep.subr.bf16.mxu0 0
        %7396 = vmatpush1.bf16.msra.mxu0 0
        %7397 = vmatprep.subr.bf16.mxu0 0
        %7398 = vmatpush1.bf16.msra.mxu0 0
        %7399 = vmatprep.subr.bf16.mxu0 0
        %7400 = vmatpush1.bf16.msra.mxu0 0
        %7401 = vmatprep.subr.bf16.mxu0 0
        %7402 = vmatpush1.bf16.msra.mxu0 0
        %7403 = vmatprep.subr.bf16.mxu0 0
        %7404 = vmatpush1.bf16.msra.mxu0 0
        %7405 = vmatprep.subr.bf16.mxu0 0
        %7406 = vmatpush1.bf16.msra.mxu0 0
        %7407 = vmatprep.subr.bf16.mxu0 0
        %7408 = vmatpush1.bf16.msra.mxu0 0
        %7409 = vmatprep.subr.bf16.mxu0 0
        %7410 = vmatpush1.bf16.msra.mxu0 0
        %7411 = vmatprep.subr.bf16.mxu0 0
        %7412 = vmatpush1.bf16.msra.mxu0 0
        %7413 = vmatprep.subr.bf16.mxu0 0
        %7414 = vmatpush1.bf16.msra.mxu0 0
        %7415 = vmatprep.subr.bf16.mxu0 0
        %7416 = vmatpush1.bf16.msra.mxu0 0
        %7417 = vmatprep.subr.bf16.mxu0 0
        %7418 = vmatpush1.bf16.msra.mxu0 0
        %7419 = vmatprep.subr.bf16.mxu0 0
        %7420 = vmatpush1.bf16.msra.mxu0 0
        %7421 = vmatprep.subr.bf16.mxu0 0
        %7422 = vmatpush1.bf16.msra.mxu0 0
        %7423 = vmatprep.subr.bf16.mxu0 0
        %7424 = vmatpush1.bf16.msra.mxu0 0
        %7425 = vmatprep.mubr.bf16.mxu0 0
        %7426 = vmatmul.mubr.bf16.gmra.mrb[0].mxu0 %v7338
        %v7427 = vpop.f32.mrb[0].mxu0
        %v7428 = vadd.f32 0.0, %v7427
        %v7429 = vpop.f32.mrb[0].mxu0
        %v7430 = vadd.f32 0.0, %v7429
        %v7431 = vpop.f32.mrb[0].mxu0
        %v7432 = vpop.f32.mrb[0].mxu0
        %7433 = vdwg.mxu0
        %v7434 = vld [vmem:[#allocation4] sm:$0xff]
        %v7435 = vld [vmem:[#allocation4 + $0x8] sm:$0xff]
        %v7436 = vld [vmem:[#allocation4 + $0x10] sm:$0xff]
        %v7437 = vld [vmem:[#allocation4 + $0x18] sm:$0xff]
        %v7438 = vadd.f32 %v7434, %v7387
        %v7439 = vadd.f32 %v7435, %v7389
        %v7440 = vadd.f32 %v7436, %v7428
        %v7441 = vadd.f32 %v7437, %v7430
        %7442 = vst [vmem:[#allocation4] sm:$0xff] %v7438
        %7443 = vst [vmem:[#allocation4 + $0x8] sm:$0xff] %v7439
        %7444 = vst [vmem:[#allocation4 + $0x10] sm:$0xff] %v7440
        %7445 = vst [vmem:[#allocation4 + $0x18] sm:$0xff] %v7441
        %s7446 = scalar_lea.vmem %s3, 48
        %v7447 = vld [vmem:[%s7446] sm:$0xf]
        %v7448 = vld [vmem:[#allocation3 + $0x4] sm:$0xff]
        %v7449 = vld [vmem:[#allocation3 + $0xc] sm:$0xff]
        %v7450 = vld [vmem:[#allocation3 + $0x14] sm:$0xf]
        %v7454 = vunpack.c.l.b16 %v7448
        %v7455 = vunpack.c.h.b16 %v7448
        %v7456 = vunpack.c.l.b16 %v7449
        %v7457 = vunpack.c.h.b16 %v7449
        %v7458 = vunpack.c.l.b16 %v7450
        %v7459 = vpack.c.b16 %v7454, %v7454
        %v7460 = vpack.c.b16 %v7455, %v7455
        %v7461 = vpack.c.b16 %v7456, %v7456
        %v7462 = vpack.c.b16 %v7457, %v7457
        %v7463 = vpack.c.b16 %v7458, %v7458
        %7464 = vrot.lane.b32.xlu0 %v7459, 1
        %v7465 = vpop.permute.xlu0 %7464
        %7466 = vrot.lane.b32.xlu0 %v7460, 1
        %v7467 = vpop.permute.xlu0 %7466
        %7468 = vrot.lane.b32.xlu0 %v7461, 1
        %v7469 = vpop.permute.xlu0 %7468
        %7470 = vrot.lane.b32.xlu0 %v7462, 1
        %v7471 = vpop.permute.xlu0 %7470
        %7472 = vrot.lane.b32.xlu0 %v7463, 1
        %v7473 = vpop.permute.xlu0 %7472
        %v7474 = vsel %vm6221, %v7465, %v7467
        %v7475 = vsel %vm6221, %v7467, %v7469
        %v7476 = vsel %vm6221, %v7469, %v7471
        %v7477 = vsel %vm6221, %v7471, %v7473
        %v7479 = vsel %vm369, %v7447, 0
        %v7482 = vsel %vm373, %v7474, 0
        %v7485 = vsel %vm373, %v7475, 0
        %v7488 = vsel %vm373, %v7476, 0
        %v7491 = vsel %vm373, %v7477, 0
        %7493 = vmatprep.subr.bf16.mxu0 %v7485
        %7494 = vmatpush1.bf16.msra.mxu0 %v7482
        %7495 = vmatprep.subr.bf16.mxu0 0
        %7496 = vmatpush1.bf16.msra.mxu0 0
        %7497 = vmatprep.subr.bf16.mxu0 0
        %7498 = vmatpush1.bf16.msra.mxu0 0
        %7499 = vmatprep.subr.bf16.mxu0 0
        %7500 = vmatpush1.bf16.msra.mxu0 0
        %7501 = vmatprep.subr.bf16.mxu0 0
        %7502 = vmatpush1.bf16.msra.mxu0 0
        %7503 = vmatprep.subr.bf16.mxu0 0
        %7504 = vmatpush1.bf16.msra.mxu0 0
        %7505 = vmatprep.subr.bf16.mxu0 0
        %7506 = vmatpush1.bf16.msra.mxu0 0
        %7507 = vmatprep.subr.bf16.mxu0 0
        %7508 = vmatpush1.bf16.msra.mxu0 0
        %7509 = vmatprep.subr.bf16.mxu0 0
        %7510 = vmatpush1.bf16.msra.mxu0 0
        %7511 = vmatprep.subr.bf16.mxu0 0
        %7512 = vmatpush1.bf16.msra.mxu0 0
        %7513 = vmatprep.subr.bf16.mxu0 0
        %7514 = vmatpush1.bf16.msra.mxu0 0
        %7515 = vmatprep.subr.bf16.mxu0 0
        %7516 = vmatpush1.bf16.msra.mxu0 0
        %7517 = vmatprep.subr.bf16.mxu0 0
        %7518 = vmatpush1.bf16.msra.mxu0 0
        %7519 = vmatprep.subr.bf16.mxu0 0
        %7520 = vmatpush1.bf16.msra.mxu0 0
        %7521 = vmatprep.subr.bf16.mxu0 0
        %7522 = vmatpush1.bf16.msra.mxu0 0
        %7523 = vmatprep.subr.bf16.mxu0 0
        %7524 = vmatpush1.bf16.msra.mxu0 0
        %7525 = vmatprep.mubr.bf16.mxu0 0
        %7526 = vmatmul.mubr.bf16.gmra.mrb[0].mxu0 %v7479
        %v7527 = vpop.f32.mrb[0].mxu0
        %v7528 = vadd.f32 0.0, %v7527
        %v7529 = vpop.f32.mrb[0].mxu0
        %v7530 = vadd.f32 0.0, %v7529
        %v7531 = vpop.f32.mrb[0].mxu0
        %v7532 = vpop.f32.mrb[0].mxu0
        %7533 = vdwg.mxu0
        %7534 = vmatprep.subr.bf16.mxu0 %v7491
        %7535 = vmatpush1.bf16.msra.mxu0 %v7488
        %7536 = vmatprep.subr.bf16.mxu0 0
        %7537 = vmatpush1.bf16.msra.mxu0 0
        %7538 = vmatprep.subr.bf16.mxu0 0
        %7539 = vmatpush1.bf16.msra.mxu0 0
        %7540 = vmatprep.subr.bf16.mxu0 0
        %7541 = vmatpush1.bf16.msra.mxu0 0
        %7542 = vmatprep.subr.bf16.mxu0 0
        %7543 = vmatpush1.bf16.msra.mxu0 0
        %7544 = vmatprep.subr.bf16.mxu0 0
        %7545 = vmatpush1.bf16.msra.mxu0 0
        %7546 = vmatprep.subr.bf16.mxu0 0
        %7547 = vmatpush1.bf16.msra.mxu0 0
        %7548 = vmatprep.subr.bf16.mxu0 0
        %7549 = vmatpush1.bf16.msra.mxu0 0
        %7550 = vmatprep.subr.bf16.mxu0 0
        %7551 = vmatpush1.bf16.msra.mxu0 0
        %7552 = vmatprep.subr.bf16.mxu0 0
        %7553 = vmatpush1.bf16.msra.mxu0 0
        %7554 = vmatprep.subr.bf16.mxu0 0
        %7555 = vmatpush1.bf16.msra.mxu0 0
        %7556 = vmatprep.subr.bf16.mxu0 0
        %7557 = vmatpush1.bf16.msra.mxu0 0
        %7558 = vmatprep.subr.bf16.mxu0 0
        %7559 = vmatpush1.bf16.msra.mxu0 0
        %7560 = vmatprep.subr.bf16.mxu0 0
        %7561 = vmatpush1.bf16.msra.mxu0 0
        %7562 = vmatprep.subr.bf16.mxu0 0
        %7563 = vmatpush1.bf16.msra.mxu0 0
        %7564 = vmatprep.subr.bf16.mxu0 0
        %7565 = vmatpush1.bf16.msra.mxu0 0
        %7566 = vmatprep.mubr.bf16.mxu0 0
        %7567 = vmatmul.mubr.bf16.gmra.mrb[0].mxu0 %v7479
        %v7568 = vpop.f32.mrb[0].mxu0
        %v7569 = vadd.f32 0.0, %v7568
        %v7570 = vpop.f32.mrb[0].mxu0
        %v7571 = vadd.f32 0.0, %v7570
        %v7572 = vpop.f32.mrb[0].mxu0
        %v7573 = vpop.f32.mrb[0].mxu0
        %7574 = vdwg.mxu0
        %v7575 = vld [vmem:[#allocation4] sm:$0xff]
        %v7576 = vld [vmem:[#allocation4 + $0x8] sm:$0xff]
        %v7577 = vld [vmem:[#allocation4 + $0x10] sm:$0xff]
        %v7578 = vld [vmem:[#allocation4 + $0x18] sm:$0xff]
        %v7579 = vadd.f32 %v7575, %v7528
        %v7580 = vadd.f32 %v7576, %v7530
        %v7581 = vadd.f32 %v7577, %v7569
        %v7582 = vadd.f32 %v7578, %v7571
        %7583 = vst [vmem:[#allocation4] sm:$0xff] %v7579
        %7584 = vst [vmem:[#allocation4 + $0x8] sm:$0xff] %v7580
        %7585 = vst [vmem:[#allocation4 + $0x10] sm:$0xff] %v7581
        %7586 = vst [vmem:[#allocation4 + $0x18] sm:$0xff] %v7582
        %s7587 = scalar_lea.vmem %s3, 52
        %v7588 = vld [vmem:[%s7587] sm:$0xf]
        %v7589 = vld [vmem:[#allocation3 + $0x8] sm:$0xff]
        %v7590 = vld [vmem:[#allocation3 + $0x10] sm:$0xff]
        %v7593 = vunpack.c.l.b16 %v7589
        %v7594 = vunpack.c.h.b16 %v7589
        %v7595 = vunpack.c.l.b16 %v7590
        %v7596 = vunpack.c.h.b16 %v7590
        %v7597 = vpack.c.b16 %v7593, %v7593
        %v7598 = vpack.c.b16 %v7594, %v7594
        %v7599 = vpack.c.b16 %v7595, %v7595
        %v7600 = vpack.c.b16 %v7596, %v7596
        %v7602 = vsel %vm369, %v7588, 0
        %v7605 = vsel %vm373, %v7597, 0
        %v7608 = vsel %vm373, %v7598, 0
        %v7611 = vsel %vm373, %v7599, 0
        %v7614 = vsel %vm373, %v7600, 0
        %7616 = vmatprep.subr.bf16.mxu0 %v7608
        %7617 = vmatpush1.bf16.msra.mxu0 %v7605
        %7618 = vmatprep.subr.bf16.mxu0 0
        %7619 = vmatpush1.bf16.msra.mxu0 0
        %7620 = vmatprep.subr.bf16.mxu0 0
        %7621 = vmatpush1.bf16.msra.mxu0 0
        %7622 = vmatprep.subr.bf16.mxu0 0
        %7623 = vmatpush1.bf16.msra.mxu0 0
        %7624 = vmatprep.subr.bf16.mxu0 0
        %7625 = vmatpush1.bf16.msra.mxu0 0
        %7626 = vmatprep.subr.bf16.mxu0 0
        %7627 = vmatpush1.bf16.msra.mxu0 0
        %7628 = vmatprep.subr.bf16.mxu0 0
        %7629 = vmatpush1.bf16.msra.mxu0 0
        %7630 = vmatprep.subr.bf16.mxu0 0
        %7631 = vmatpush1.bf16.msra.mxu0 0
        %7632 = vmatprep.subr.bf16.mxu0 0
        %7633 = vmatpush1.bf16.msra.mxu0 0
        %7634 = vmatprep.subr.bf16.mxu0 0
        %7635 = vmatpush1.bf16.msra.mxu0 0
        %7636 = vmatprep.subr.bf16.mxu0 0
        %7637 = vmatpush1.bf16.msra.mxu0 0
        %7638 = vmatprep.subr.bf16.mxu0 0
        %7639 = vmatpush1.bf16.msra.mxu0 0
        %7640 = vmatprep.subr.bf16.mxu0 0
        %7641 = vmatpush1.bf16.msra.mxu0 0
        %7642 = vmatprep.subr.bf16.mxu0 0
        %7643 = vmatpush1.bf16.msra.mxu0 0
        %7644 = vmatprep.subr.bf16.mxu0 0
        %7645 = vmatpush1.bf16.msra.mxu0 0
        %7646 = vmatprep.subr.bf16.mxu0 0
        %7647 = vmatpush1.bf16.msra.mxu0 0
        %7648 = vmatprep.mubr.bf16.mxu0 0
        %7649 = vmatmul.mubr.bf16.gmra.mrb[0].mxu0 %v7602
        %v7650 = vpop.f32.mrb[0].mxu0
        %v7651 = vadd.f32 0.0, %v7650
        %v7652 = vpop.f32.mrb[0].mxu0
        %v7653 = vadd.f32 0.0, %v7652
        %v7654 = vpop.f32.mrb[0].mxu0
        %v7655 = vpop.f32.mrb[0].mxu0
        %7656 = vdwg.mxu0
        %7657 = vmatprep.subr.bf16.mxu0 %v7614
        %7658 = vmatpush1.bf16.msra.mxu0 %v7611
        %7659 = vmatprep.subr.bf16.mxu0 0
        %7660 = vmatpush1.bf16.msra.mxu0 0
        %7661 = vmatprep.subr.bf16.mxu0 0
        %7662 = vmatpush1.bf16.msra.mxu0 0
        %7663 = vmatprep.subr.bf16.mxu0 0
        %7664 = vmatpush1.bf16.msra.mxu0 0
        %7665 = vmatprep.subr.bf16.mxu0 0
        %7666 = vmatpush1.bf16.msra.mxu0 0
        %7667 = vmatprep.subr.bf16.mxu0 0
        %7668 = vmatpush1.bf16.msra.mxu0 0
        %7669 = vmatprep.subr.bf16.mxu0 0
        %7670 = vmatpush1.bf16.msra.mxu0 0
        %7671 = vmatprep.subr.bf16.mxu0 0
        %7672 = vmatpush1.bf16.msra.mxu0 0
        %7673 = vmatprep.subr.bf16.mxu0 0
        %7674 = vmatpush1.bf16.msra.mxu0 0
        %7675 = vmatprep.subr.bf16.mxu0 0
        %7676 = vmatpush1.bf16.msra.mxu0 0
        %7677 = vmatprep.subr.bf16.mxu0 0
        %7678 = vmatpush1.bf16.msra.mxu0 0
        %7679 = vmatprep.subr.bf16.mxu0 0
        %7680 = vmatpush1.bf16.msra.mxu0 0
        %7681 = vmatprep.subr.bf16.mxu0 0
        %7682 = vmatpush1.bf16.msra.mxu0 0
        %7683 = vmatprep.subr.bf16.mxu0 0
        %7684 = vmatpush1.bf16.msra.mxu0 0
        %7685 = vmatprep.subr.bf16.mxu0 0
        %7686 = vmatpush1.bf16.msra.mxu0 0
        %7687 = vmatprep.subr.bf16.mxu0 0
        %7688 = vmatpush1.bf16.msra.mxu0 0
        %7689 = vmatprep.mubr.bf16.mxu0 0
        %7690 = vmatmul.mubr.bf16.gmra.mrb[0].mxu0 %v7602
        %v7691 = vpop.f32.mrb[0].mxu0
        %v7692 = vadd.f32 0.0, %v7691
        %v7693 = vpop.f32.mrb[0].mxu0
        %v7694 = vadd.f32 0.0, %v7693
        %v7695 = vpop.f32.mrb[0].mxu0
        %v7696 = vpop.f32.mrb[0].mxu0
        %7697 = vdwg.mxu0
        %v7698 = vld [vmem:[#allocation4] sm:$0xff]
        %v7699 = vld [vmem:[#allocation4 + $0x8] sm:$0xff]
        %v7700 = vld [vmem:[#allocation4 + $0x10] sm:$0xff]
        %v7701 = vld [vmem:[#allocation4 + $0x18] sm:$0xff]
        %v7702 = vadd.f32 %v7698, %v7651
        %v7703 = vadd.f32 %v7699, %v7653
        %v7704 = vadd.f32 %v7700, %v7692
        %v7705 = vadd.f32 %v7701, %v7694
        %7706 = vst [vmem:[#allocation4] sm:$0xff] %v7702
        %7707 = vst [vmem:[#allocation4 + $0x8] sm:$0xff] %v7703
        %7708 = vst [vmem:[#allocation4 + $0x10] sm:$0xff] %v7704
        %7709 = vst [vmem:[#allocation4 + $0x18] sm:$0xff] %v7705
        %s7710 = scalar_lea.vmem %s3, 56
        %v7711 = vld [vmem:[%s7710] sm:$0xf]
        %v7712 = vld [vmem:[#allocation3 + $0x8] sm:$0xff]
        %v7713 = vld [vmem:[#allocation3 + $0x10] sm:$0xff]
        %v7714 = vld [vmem:[#allocation3 + $0x18] sm:$0xf]
        %v7718 = vunpack.c.l.b16 %v7712
        %v7719 = vunpack.c.h.b16 %v7712
        %v7720 = vunpack.c.l.b16 %v7713
        %v7721 = vunpack.c.h.b16 %v7713
        %v7722 = vunpack.c.l.b16 %v7714
        %v7723 = vpack.c.b16 %v7718, %v7718
        %v7724 = vpack.c.b16 %v7719, %v7719
        %v7725 = vpack.c.b16 %v7720, %v7720
        %v7726 = vpack.c.b16 %v7721, %v7721
        %v7727 = vpack.c.b16 %v7722, %v7722
        %7728 = vrot.lane.b32.xlu0 %v7723, 127
        %v7729 = vpop.permute.xlu0 %7728
        %7730 = vrot.lane.b32.xlu0 %v7724, 127
        %v7731 = vpop.permute.xlu0 %7730
        %7732 = vrot.lane.b32.xlu0 %v7725, 127
        %v7733 = vpop.permute.xlu0 %7732
        %7734 = vrot.lane.b32.xlu0 %v7726, 127
        %v7735 = vpop.permute.xlu0 %7734
        %7736 = vrot.lane.b32.xlu0 %v7727, 127
        %v7737 = vpop.permute.xlu0 %7736
        %v7738 = vsel %vm554, %v7729, %v7731
        %v7739 = vsel %vm554, %v7731, %v7733
        %v7740 = vsel %vm554, %v7733, %v7735
        %v7741 = vsel %vm554, %v7735, %v7737
        %v7743 = vsel %vm369, %v7711, 0
        %v7746 = vsel %vm373, %v7738, 0
        %v7749 = vsel %vm373, %v7739, 0
        %v7752 = vsel %vm373, %v7740, 0
        %v7755 = vsel %vm373, %v7741, 0
        %7757 = vmatprep.subr.bf16.mxu0 %v7749
        %7758 = vmatpush1.bf16.msra.mxu0 %v7746
        %7759 = vmatprep.subr.bf16.mxu0 0
        %7760 = vmatpush1.bf16.msra.mxu0 0
        %7761 = vmatprep.subr.bf16.mxu0 0
        %7762 = vmatpush1.bf16.msra.mxu0 0
        %7763 = vmatprep.subr.bf16.mxu0 0
        %7764 = vmatpush1.bf16.msra.mxu0 0
        %7765 = vmatprep.subr.bf16.mxu0 0
        %7766 = vmatpush1.bf16.msra.mxu0 0
        %7767 = vmatprep.subr.bf16.mxu0 0
        %7768 = vmatpush1.bf16.msra.mxu0 0
        %7769 = vmatprep.subr.bf16.mxu0 0
        %7770 = vmatpush1.bf16.msra.mxu0 0
        %7771 = vmatprep.subr.bf16.mxu0 0
        %7772 = vmatpush1.bf16.msra.mxu0 0
        %7773 = vmatprep.subr.bf16.mxu0 0
        %7774 = vmatpush1.bf16.msra.mxu0 0
        %7775 = vmatprep.subr.bf16.mxu0 0
        %7776 = vmatpush1.bf16.msra.mxu0 0
        %7777 = vmatprep.subr.bf16.mxu0 0
        %7778 = vmatpush1.bf16.msra.mxu0 0
        %7779 = vmatprep.subr.bf16.mxu0 0
        %7780 = vmatpush1.bf16.msra.mxu0 0
        %7781 = vmatprep.subr.bf16.mxu0 0
        %7782 = vmatpush1.bf16.msra.mxu0 0
        %7783 = vmatprep.subr.bf16.mxu0 0
        %7784 = vmatpush1.bf16.msra.mxu0 0
        %7785 = vmatprep.subr.bf16.mxu0 0
        %7786 = vmatpush1.bf16.msra.mxu0 0
        %7787 = vmatprep.subr.bf16.mxu0 0
        %7788 = vmatpush1.bf16.msra.mxu0 0
        %7789 = vmatprep.mubr.bf16.mxu0 0
        %7790 = vmatmul.mubr.bf16.gmra.mrb[0].mxu0 %v7743
        %v7791 = vpop.f32.mrb[0].mxu0
        %v7792 = vadd.f32 0.0, %v7791
        %v7793 = vpop.f32.mrb[0].mxu0
        %v7794 = vadd.f32 0.0, %v7793
        %v7795 = vpop.f32.mrb[0].mxu0
        %v7796 = vpop.f32.mrb[0].mxu0
        %7797 = vdwg.mxu0
        %7798 = vmatprep.subr.bf16.mxu0 %v7755
        %7799 = vmatpush1.bf16.msra.mxu0 %v7752
        %7800 = vmatprep.subr.bf16.mxu0 0
        %7801 = vmatpush1.bf16.msra.mxu0 0
        %7802 = vmatprep.subr.bf16.mxu0 0
        %7803 = vmatpush1.bf16.msra.mxu0 0
        %7804 = vmatprep.subr.bf16.mxu0 0
        %7805 = vmatpush1.bf16.msra.mxu0 0
        %7806 = vmatprep.subr.bf16.mxu0 0
        %7807 = vmatpush1.bf16.msra.mxu0 0
        %7808 = vmatprep.subr.bf16.mxu0 0
        %7809 = vmatpush1.bf16.msra.mxu0 0
        %7810 = vmatprep.subr.bf16.mxu0 0
        %7811 = vmatpush1.bf16.msra.mxu0 0
        %7812 = vmatprep.subr.bf16.mxu0 0
        %7813 = vmatpush1.bf16.msra.mxu0 0
        %7814 = vmatprep.subr.bf16.mxu0 0
        %7815 = vmatpush1.bf16.msra.mxu0 0
        %7816 = vmatprep.subr.bf16.mxu0 0
        %7817 = vmatpush1.bf16.msra.mxu0 0
        %7818 = vmatprep.subr.bf16.mxu0 0
        %7819 = vmatpush1.bf16.msra.mxu0 0
        %7820 = vmatprep.subr.bf16.mxu0 0
        %7821 = vmatpush1.bf16.msra.mxu0 0
        %7822 = vmatprep.subr.bf16.mxu0 0
        %7823 = vmatpush1.bf16.msra.mxu0 0
        %7824 = vmatprep.subr.bf16.mxu0 0
        %7825 = vmatpush1.bf16.msra.mxu0 0
        %7826 = vmatprep.subr.bf16.mxu0 0
        %7827 = vmatpush1.bf16.msra.mxu0 0
        %7828 = vmatprep.subr.bf16.mxu0 0
        %7829 = vmatpush1.bf16.msra.mxu0 0
        %7830 = vmatprep.mubr.bf16.mxu0 0
        %7831 = vmatmul.mubr.bf16.gmra.mrb[0].mxu0 %v7743
        %v7832 = vpop.f32.mrb[0].mxu0
        %v7833 = vadd.f32 0.0, %v7832
        %v7834 = vpop.f32.mrb[0].mxu0
        %v7835 = vadd.f32 0.0, %v7834
        %v7836 = vpop.f32.mrb[0].mxu0
        %v7837 = vpop.f32.mrb[0].mxu0
        %7838 = vdwg.mxu0
        %v7839 = vld [vmem:[#allocation4] sm:$0xff]
        %v7840 = vld [vmem:[#allocation4 + $0x8] sm:$0xff]
        %v7841 = vld [vmem:[#allocation4 + $0x10] sm:$0xff]
        %v7842 = vld [vmem:[#allocation4 + $0x18] sm:$0xff]
        %v7843 = vadd.f32 %v7839, %v7792
        %v7844 = vadd.f32 %v7840, %v7794
        %v7845 = vadd.f32 %v7841, %v7833
        %v7846 = vadd.f32 %v7842, %v7835
        %7847 = vst [vmem:[#allocation4] sm:$0xff] %v7843
        %7848 = vst [vmem:[#allocation4 + $0x8] sm:$0xff] %v7844
        %7849 = vst [vmem:[#allocation4 + $0x10] sm:$0xff] %v7845
        %7850 = vst [vmem:[#allocation4 + $0x18] sm:$0xff] %v7846
        %s7851 = scalar_lea.vmem %s3, 60
        %v7852 = vld [vmem:[%s7851] sm:$0xf]
        %v7853 = vld [vmem:[#allocation3 + $0x8] sm:$0xff]
        %v7854 = vld [vmem:[#allocation3 + $0x10] sm:$0xff]
        %v7855 = vld [vmem:[#allocation3 + $0x18] sm:$0xf]
        %v7859 = vunpack.c.l.b16 %v7853
        %v7860 = vunpack.c.h.b16 %v7853
        %v7861 = vunpack.c.l.b16 %v7854
        %v7862 = vunpack.c.h.b16 %v7854
        %v7863 = vunpack.c.l.b16 %v7855
        %v7864 = vpack.c.b16 %v7859, %v7859
        %v7865 = vpack.c.b16 %v7860, %v7860
        %v7866 = vpack.c.b16 %v7861, %v7861
        %v7867 = vpack.c.b16 %v7862, %v7862
        %v7868 = vpack.c.b16 %v7863, %v7863
        %7869 = vrot.lane.b32.xlu0 %v7864, 120
        %v7870 = vpop.permute.xlu0 %7869
        %7871 = vrot.lane.b32.xlu0 %v7865, 120
        %v7872 = vpop.permute.xlu0 %7871
        %7873 = vrot.lane.b32.xlu0 %v7866, 120
        %v7874 = vpop.permute.xlu0 %7873
        %7875 = vrot.lane.b32.xlu0 %v7867, 120
        %v7876 = vpop.permute.xlu0 %7875
        %7877 = vrot.lane.b32.xlu0 %v7868, 120
        %v7878 = vpop.permute.xlu0 %7877
        %v7879 = vsel %vm6627, %v7870, %v7872
        %v7880 = vsel %vm6627, %v7872, %v7874
        %v7881 = vsel %vm6627, %v7874, %v7876
        %v7882 = vsel %vm6627, %v7876, %v7878
        %v7884 = vsel %vm369, %v7852, 0
        %v7887 = vsel %vm373, %v7879, 0
        %v7890 = vsel %vm373, %v7880, 0
        %v7893 = vsel %vm373, %v7881, 0
        %v7896 = vsel %vm373, %v7882, 0
        %7898 = vmatprep.subr.bf16.mxu0 %v7890
        %7899 = vmatpush1.bf16.msra.mxu0 %v7887
        %7900 = vmatprep.subr.bf16.mxu0 0
        %7901 = vmatpush1.bf16.msra.mxu0 0
        %7902 = vmatprep.subr.bf16.mxu0 0
        %7903 = vmatpush1.bf16.msra.mxu0 0
        %7904 = vmatprep.subr.bf16.mxu0 0
        %7905 = vmatpush1.bf16.msra.mxu0 0
        %7906 = vmatprep.subr.bf16.mxu0 0
        %7907 = vmatpush1.bf16.msra.mxu0 0
        %7908 = vmatprep.subr.bf16.mxu0 0
        %7909 = vmatpush1.bf16.msra.mxu0 0
        %7910 = vmatprep.subr.bf16.mxu0 0
        %7911 = vmatpush1.bf16.msra.mxu0 0
        %7912 = vmatprep.subr.bf16.mxu0 0
        %7913 = vmatpush1.bf16.msra.mxu0 0
        %7914 = vmatprep.subr.bf16.mxu0 0
        %7915 = vmatpush1.bf16.msra.mxu0 0
        %7916 = vmatprep.subr.bf16.mxu0 0
        %7917 = vmatpush1.bf16.msra.mxu0 0
        %7918 = vmatprep.subr.bf16.mxu0 0
        %7919 = vmatpush1.bf16.msra.mxu0 0
        %7920 = vmatprep.subr.bf16.mxu0 0
        %7921 = vmatpush1.bf16.msra.mxu0 0
        %7922 = vmatprep.subr.bf16.mxu0 0
        %7923 = vmatpush1.bf16.msra.mxu0 0
        %7924 = vmatprep.subr.bf16.mxu0 0
        %7925 = vmatpush1.bf16.msra.mxu0 0
        %7926 = vmatprep.subr.bf16.mxu0 0
        %7927 = vmatpush1.bf16.msra.mxu0 0
        %7928 = vmatprep.subr.bf16.mxu0 0
        %7929 = vmatpush1.bf16.msra.mxu0 0
        %7930 = vmatprep.mubr.bf16.mxu0 0
        %7931 = vmatmul.mubr.bf16.gmra.mrb[0].mxu0 %v7884
        %v7932 = vpop.f32.mrb[0].mxu0
        %v7933 = vadd.f32 0.0, %v7932
        %v7934 = vpop.f32.mrb[0].mxu0
        %v7935 = vadd.f32 0.0, %v7934
        %v7936 = vpop.f32.mrb[0].mxu0
        %v7937 = vpop.f32.mrb[0].mxu0
        %7938 = vdwg.mxu0
        %7939 = vmatprep.subr.bf16.mxu0 %v7896
        %7940 = vmatpush1.bf16.msra.mxu0 %v7893
        %7941 = vmatprep.subr.bf16.mxu0 0
        %7942 = vmatpush1.bf16.msra.mxu0 0
        %7943 = vmatprep.subr.bf16.mxu0 0
        %7944 = vmatpush1.bf16.msra.mxu0 0
        %7945 = vmatprep.subr.bf16.mxu0 0
        %7946 = vmatpush1.bf16.msra.mxu0 0
        %7947 = vmatprep.subr.bf16.mxu0 0
        %7948 = vmatpush1.bf16.msra.mxu0 0
        %7949 = vmatprep.subr.bf16.mxu0 0
        %7950 = vmatpush1.bf16.msra.mxu0 0
        %7951 = vmatprep.subr.bf16.mxu0 0
        %7952 = vmatpush1.bf16.msra.mxu0 0
        %7953 = vmatprep.subr.bf16.mxu0 0
        %7954 = vmatpush1.bf16.msra.mxu0 0
        %7955 = vmatprep.subr.bf16.mxu0 0
        %7956 = vmatpush1.bf16.msra.mxu0 0
        %7957 = vmatprep.subr.bf16.mxu0 0
        %7958 = vmatpush1.bf16.msra.mxu0 0
        %7959 = vmatprep.subr.bf16.mxu0 0
        %7960 = vmatpush1.bf16.msra.mxu0 0
        %7961 = vmatprep.subr.bf16.mxu0 0
        %7962 = vmatpush1.bf16.msra.mxu0 0
        %7963 = vmatprep.subr.bf16.mxu0 0
        %7964 = vmatpush1.bf16.msra.mxu0 0
        %7965 = vmatprep.subr.bf16.mxu0 0
        %7966 = vmatpush1.bf16.msra.mxu0 0
        %7967 = vmatprep.subr.bf16.mxu0 0
        %7968 = vmatpush1.bf16.msra.mxu0 0
        %7969 = vmatprep.subr.bf16.mxu0 0
        %7970 = vmatpush1.bf16.msra.mxu0 0
        %7971 = vmatprep.mubr.bf16.mxu0 0
        %7972 = vmatmul.mubr.bf16.gmra.mrb[0].mxu0 %v7884
        %v7973 = vpop.f32.mrb[0].mxu0
        %v7974 = vadd.f32 0.0, %v7973
        %v7975 = vpop.f32.mrb[0].mxu0
        %v7976 = vadd.f32 0.0, %v7975
        %v7977 = vpop.f32.mrb[0].mxu0
        %v7978 = vpop.f32.mrb[0].mxu0
        %7979 = vdwg.mxu0
        %v7980 = vld [vmem:[#allocation4] sm:$0xff]
        %v7981 = vld [vmem:[#allocation4 + $0x8] sm:$0xff]
        %v7982 = vld [vmem:[#allocation4 + $0x10] sm:$0xff]
        %v7983 = vld [vmem:[#allocation4 + $0x18] sm:$0xff]
        %v7984 = vadd.f32 %v7980, %v7933
        %v7985 = vadd.f32 %v7981, %v7935
        %v7986 = vadd.f32 %v7982, %v7974
        %v7987 = vadd.f32 %v7983, %v7976
        %7988 = vst [vmem:[#allocation4] sm:$0xff] %v7984
        %7989 = vst [vmem:[#allocation4 + $0x8] sm:$0xff] %v7985
        %7990 = vst [vmem:[#allocation4 + $0x10] sm:$0xff] %v7986
        %7991 = vst [vmem:[#allocation4 + $0x18] sm:$0xff] %v7987
        %s7992 = scalar_lea.vmem %s3, 64
        %v7993 = vld [vmem:[%s7992] sm:$0xf]
        %v7994 = vld [vmem:[#allocation3 + $0x8] sm:$0xff]
        %v7995 = vld [vmem:[#allocation3 + $0x10] sm:$0xff]
        %v7996 = vld [vmem:[#allocation3 + $0x18] sm:$0xf]
        %v8000 = vunpack.c.l.b16 %v7994
        %v8001 = vunpack.c.h.b16 %v7994
        %v8002 = vunpack.c.l.b16 %v7995
        %v8003 = vunpack.c.h.b16 %v7995
        %v8004 = vunpack.c.l.b16 %v7996
        %v8005 = vpack.c.b16 %v8000, %v8000
        %v8006 = vpack.c.b16 %v8001, %v8001
        %v8007 = vpack.c.b16 %v8002, %v8002
        %v8008 = vpack.c.b16 %v8003, %v8003
        %v8009 = vpack.c.b16 %v8004, %v8004
        %8010 = vrot.lane.b32.xlu0 %v8005, 119
        %v8011 = vpop.permute.xlu0 %8010
        %8012 = vrot.lane.b32.xlu0 %v8006, 119
        %v8013 = vpop.permute.xlu0 %8012
        %8014 = vrot.lane.b32.xlu0 %v8007, 119
        %v8015 = vpop.permute.xlu0 %8014
        %8016 = vrot.lane.b32.xlu0 %v8008, 119
        %v8017 = vpop.permute.xlu0 %8016
        %8018 = vrot.lane.b32.xlu0 %v8009, 119
        %v8019 = vpop.permute.xlu0 %8018
        %v8020 = vsel %vm954, %v8011, %v8013
        %v8021 = vsel %vm954, %v8013, %v8015
        %v8022 = vsel %vm954, %v8015, %v8017
        %v8023 = vsel %vm954, %v8017, %v8019
        %v8025 = vsel %vm369, %v7993, 0
        %v8028 = vsel %vm373, %v8020, 0
        %v8031 = vsel %vm373, %v8021, 0
        %v8034 = vsel %vm373, %v8022, 0
        %v8037 = vsel %vm373, %v8023, 0
        %8039 = vmatprep.subr.bf16.mxu0 %v8031
        %8040 = vmatpush1.bf16.msra.mxu0 %v8028
        %8041 = vmatprep.subr.bf16.mxu0 0
        %8042 = vmatpush1.bf16.msra.mxu0 0
        %8043 = vmatprep.subr.bf16.mxu0 0
        %8044 = vmatpush1.bf16.msra.mxu0 0
        %8045 = vmatprep.subr.bf16.mxu0 0
        %8046 = vmatpush1.bf16.msra.mxu0 0
        %8047 = vmatprep.subr.bf16.mxu0 0
        %8048 = vmatpush1.bf16.msra.mxu0 0
        %8049 = vmatprep.subr.bf16.mxu0 0
        %8050 = vmatpush1.bf16.msra.mxu0 0
        %8051 = vmatprep.subr.bf16.mxu0 0
        %8052 = vmatpush1.bf16.msra.mxu0 0
        %8053 = vmatprep.subr.bf16.mxu0 0
        %8054 = vmatpush1.bf16.msra.mxu0 0
        %8055 = vmatprep.subr.bf16.mxu0 0
        %8056 = vmatpush1.bf16.msra.mxu0 0
        %8057 = vmatprep.subr.bf16.mxu0 0
        %8058 = vmatpush1.bf16.msra.mxu0 0
        %8059 = vmatprep.subr.bf16.mxu0 0
        %8060 = vmatpush1.bf16.msra.mxu0 0
        %8061 = vmatprep.subr.bf16.mxu0 0
        %8062 = vmatpush1.bf16.msra.mxu0 0
        %8063 = vmatprep.subr.bf16.mxu0 0
        %8064 = vmatpush1.bf16.msra.mxu0 0
        %8065 = vmatprep.subr.bf16.mxu0 0
        %8066 = vmatpush1.bf16.msra.mxu0 0
        %8067 = vmatprep.subr.bf16.mxu0 0
        %8068 = vmatpush1.bf16.msra.mxu0 0
        %8069 = vmatprep.subr.bf16.mxu0 0
        %8070 = vmatpush1.bf16.msra.mxu0 0
        %8071 = vmatprep.mubr.bf16.mxu0 0
        %8072 = vmatmul.mubr.bf16.gmra.mrb[0].mxu0 %v8025
        %v8073 = vpop.f32.mrb[0].mxu0
        %v8074 = vadd.f32 0.0, %v8073
        %v8075 = vpop.f32.mrb[0].mxu0
        %v8076 = vadd.f32 0.0, %v8075
        %v8077 = vpop.f32.mrb[0].mxu0
        %v8078 = vpop.f32.mrb[0].mxu0
        %8079 = vdwg.mxu0
        %8080 = vmatprep.subr.bf16.mxu0 %v8037
        %8081 = vmatpush1.bf16.msra.mxu0 %v8034
        %8082 = vmatprep.subr.bf16.mxu0 0
        %8083 = vmatpush1.bf16.msra.mxu0 0
        %8084 = vmatprep.subr.bf16.mxu0 0
        %8085 = vmatpush1.bf16.msra.mxu0 0
        %8086 = vmatprep.subr.bf16.mxu0 0
        %8087 = vmatpush1.bf16.msra.mxu0 0
        %8088 = vmatprep.subr.bf16.mxu0 0
        %8089 = vmatpush1.bf16.msra.mxu0 0
        %8090 = vmatprep.subr.bf16.mxu0 0
        %8091 = vmatpush1.bf16.msra.mxu0 0
        %8092 = vmatprep.subr.bf16.mxu0 0
        %8093 = vmatpush1.bf16.msra.mxu0 0
        %8094 = vmatprep.subr.bf16.mxu0 0
        %8095 = vmatpush1.bf16.msra.mxu0 0
        %8096 = vmatprep.subr.bf16.mxu0 0
        %8097 = vmatpush1.bf16.msra.mxu0 0
        %8098 = vmatprep.subr.bf16.mxu0 0
        %8099 = vmatpush1.bf16.msra.mxu0 0
        %8100 = vmatprep.subr.bf16.mxu0 0
        %8101 = vmatpush1.bf16.msra.mxu0 0
        %8102 = vmatprep.subr.bf16.mxu0 0
        %8103 = vmatpush1.bf16.msra.mxu0 0
        %8104 = vmatprep.subr.bf16.mxu0 0
        %8105 = vmatpush1.bf16.msra.mxu0 0
        %8106 = vmatprep.subr.bf16.mxu0 0
        %8107 = vmatpush1.bf16.msra.mxu0 0
        %8108 = vmatprep.subr.bf16.mxu0 0
        %8109 = vmatpush1.bf16.msra.mxu0 0
        %8110 = vmatprep.subr.bf16.mxu0 0
        %8111 = vmatpush1.bf16.msra.mxu0 0
        %8112 = vmatprep.mubr.bf16.mxu0 0
        %8113 = vmatmul.mubr.bf16.gmra.mrb[0].mxu0 %v8025
        %v8114 = vpop.f32.mrb[0].mxu0
        %v8115 = vadd.f32 0.0, %v8114
        %v8116 = vpop.f32.mrb[0].mxu0
        %v8117 = vadd.f32 0.0, %v8116
        %v8118 = vpop.f32.mrb[0].mxu0
        %v8119 = vpop.f32.mrb[0].mxu0
        %8120 = vdwg.mxu0
        %v8121 = vld [vmem:[#allocation4] sm:$0xff]
        %v8122 = vld [vmem:[#allocation4 + $0x8] sm:$0xff]
        %v8123 = vld [vmem:[#allocation4 + $0x10] sm:$0xff]
        %v8124 = vld [vmem:[#allocation4 + $0x18] sm:$0xff]
        %v8125 = vadd.f32 %v8121, %v8074
        %v8126 = vadd.f32 %v8122, %v8076
        %v8127 = vadd.f32 %v8123, %v8115
        %v8128 = vadd.f32 %v8124, %v8117
        %8129 = vst [vmem:[#allocation4] sm:$0xff] %v8125
        %8130 = vst [vmem:[#allocation4 + $0x8] sm:$0xff] %v8126
        %8131 = vst [vmem:[#allocation4 + $0x10] sm:$0xff] %v8127
        %8132 = vst [vmem:[#allocation4 + $0x18] sm:$0xff] %v8128
        %s8133 = scalar_lea.vmem %s3, 68
        %v8134 = vld [vmem:[%s8133] sm:$0xf]
        %v8135 = vld [vmem:[#allocation3 + $0x8] sm:$0xff]
        %v8136 = vld [vmem:[#allocation3 + $0x10] sm:$0xff]
        %v8137 = vld [vmem:[#allocation3 + $0x18] sm:$0xf]
        %v8141 = vunpack.c.l.b16 %v8135
        %v8142 = vunpack.c.h.b16 %v8135
        %v8143 = vunpack.c.l.b16 %v8136
        %v8144 = vunpack.c.h.b16 %v8136
        %v8145 = vunpack.c.l.b16 %v8137
        %v8146 = vpack.c.b16 %v8141, %v8141
        %v8147 = vpack.c.b16 %v8142, %v8142
        %v8148 = vpack.c.b16 %v8143, %v8143
        %v8149 = vpack.c.b16 %v8144, %v8144
        %v8150 = vpack.c.b16 %v8145, %v8145
        %8151 = vrot.lane.b32.xlu0 %v8146, 118
        %v8152 = vpop.permute.xlu0 %8151
        %8153 = vrot.lane.b32.xlu0 %v8147, 118
        %v8154 = vpop.permute.xlu0 %8153
        %8155 = vrot.lane.b32.xlu0 %v8148, 118
        %v8156 = vpop.permute.xlu0 %8155
        %8157 = vrot.lane.b32.xlu0 %v8149, 118
        %v8158 = vpop.permute.xlu0 %8157
        %8159 = vrot.lane.b32.xlu0 %v8150, 118
        %v8160 = vpop.permute.xlu0 %8159
        %v8161 = vsel %vm1154, %v8152, %v8154
        %v8162 = vsel %vm1154, %v8154, %v8156
        %v8163 = vsel %vm1154, %v8156, %v8158
        %v8164 = vsel %vm1154, %v8158, %v8160
        %v8166 = vsel %vm369, %v8134, 0
        %v8169 = vsel %vm373, %v8161, 0
        %v8172 = vsel %vm373, %v8162, 0
        %v8175 = vsel %vm373, %v8163, 0
        %v8178 = vsel %vm373, %v8164, 0
        %8180 = vmatprep.subr.bf16.mxu0 %v8172
        %8181 = vmatpush1.bf16.msra.mxu0 %v8169
        %8182 = vmatprep.subr.bf16.mxu0 0
        %8183 = vmatpush1.bf16.msra.mxu0 0
        %8184 = vmatprep.subr.bf16.mxu0 0
        %8185 = vmatpush1.bf16.msra.mxu0 0
        %8186 = vmatprep.subr.bf16.mxu0 0
        %8187 = vmatpush1.bf16.msra.mxu0 0
        %8188 = vmatprep.subr.bf16.mxu0 0
        %8189 = vmatpush1.bf16.msra.mxu0 0
        %8190 = vmatprep.subr.bf16.mxu0 0
        %8191 = vmatpush1.bf16.msra.mxu0 0
        %8192 = vmatprep.subr.bf16.mxu0 0
        %8193 = vmatpush1.bf16.msra.mxu0 0
        %8194 = vmatprep.subr.bf16.mxu0 0
        %8195 = vmatpush1.bf16.msra.mxu0 0
        %8196 = vmatprep.subr.bf16.mxu0 0
        %8197 = vmatpush1.bf16.msra.mxu0 0
        %8198 = vmatprep.subr.bf16.mxu0 0
        %8199 = vmatpush1.bf16.msra.mxu0 0
        %8200 = vmatprep.subr.bf16.mxu0 0
        %8201 = vmatpush1.bf16.msra.mxu0 0
        %8202 = vmatprep.subr.bf16.mxu0 0
        %8203 = vmatpush1.bf16.msra.mxu0 0
        %8204 = vmatprep.subr.bf16.mxu0 0
        %8205 = vmatpush1.bf16.msra.mxu0 0
        %8206 = vmatprep.subr.bf16.mxu0 0
        %8207 = vmatpush1.bf16.msra.mxu0 0
        %8208 = vmatprep.subr.bf16.mxu0 0
        %8209 = vmatpush1.bf16.msra.mxu0 0
        %8210 = vmatprep.subr.bf16.mxu0 0
        %8211 = vmatpush1.bf16.msra.mxu0 0
        %8212 = vmatprep.mubr.bf16.mxu0 0
        %8213 = vmatmul.mubr.bf16.gmra.mrb[0].mxu0 %v8166
        %v8214 = vpop.f32.mrb[0].mxu0
        %v8215 = vadd.f32 0.0, %v8214
        %v8216 = vpop.f32.mrb[0].mxu0
        %v8217 = vadd.f32 0.0, %v8216
        %v8218 = vpop.f32.mrb[0].mxu0
        %v8219 = vpop.f32.mrb[0].mxu0
        %8220 = vdwg.mxu0
        %8221 = vmatprep.subr.bf16.mxu0 %v8178
        %8222 = vmatpush1.bf16.msra.mxu0 %v8175
        %8223 = vmatprep.subr.bf16.mxu0 0
        %8224 = vmatpush1.bf16.msra.mxu0 0
        %8225 = vmatprep.subr.bf16.mxu0 0
        %8226 = vmatpush1.bf16.msra.mxu0 0
        %8227 = vmatprep.subr.bf16.mxu0 0
        %8228 = vmatpush1.bf16.msra.mxu0 0
        %8229 = vmatprep.subr.bf16.mxu0 0
        %8230 = vmatpush1.bf16.msra.mxu0 0
        %8231 = vmatprep.subr.bf16.mxu0 0
        %8232 = vmatpush1.bf16.msra.mxu0 0
        %8233 = vmatprep.subr.bf16.mxu0 0
        %8234 = vmatpush1.bf16.msra.mxu0 0
        %8235 = vmatprep.subr.bf16.mxu0 0
        %8236 = vmatpush1.bf16.msra.mxu0 0
        %8237 = vmatprep.subr.bf16.mxu0 0
        %8238 = vmatpush1.bf16.msra.mxu0 0
        %8239 = vmatprep.subr.bf16.mxu0 0
        %8240 = vmatpush1.bf16.msra.mxu0 0
        %8241 = vmatprep.subr.bf16.mxu0 0
        %8242 = vmatpush1.bf16.msra.mxu0 0
        %8243 = vmatprep.subr.bf16.mxu0 0
        %8244 = vmatpush1.bf16.msra.mxu0 0
        %8245 = vmatprep.subr.bf16.mxu0 0
        %8246 = vmatpush1.bf16.msra.mxu0 0
        %8247 = vmatprep.subr.bf16.mxu0 0
        %8248 = vmatpush1.bf16.msra.mxu0 0
        %8249 = vmatprep.subr.bf16.mxu0 0
        %8250 = vmatpush1.bf16.msra.mxu0 0
        %8251 = vmatprep.subr.bf16.mxu0 0
        %8252 = vmatpush1.bf16.msra.mxu0 0
        %8253 = vmatprep.mubr.bf16.mxu0 0
        %8254 = vmatmul.mubr.bf16.gmra.mrb[0].mxu0 %v8166
        %v8255 = vpop.f32.mrb[0].mxu0
        %v8256 = vadd.f32 0.0, %v8255
        %v8257 = vpop.f32.mrb[0].mxu0
        %v8258 = vadd.f32 0.0, %v8257
        %v8259 = vpop.f32.mrb[0].mxu0
        %v8260 = vpop.f32.mrb[0].mxu0
        %8261 = vdwg.mxu0
        %v8262 = vld [vmem:[#allocation4] sm:$0xff]
        %v8263 = vld [vmem:[#allocation4 + $0x8] sm:$0xff]
        %v8264 = vld [vmem:[#allocation4 + $0x10] sm:$0xff]
        %v8265 = vld [vmem:[#allocation4 + $0x18] sm:$0xff]
        %v8266 = vadd.f32 %v8262, %v8215
        %v8267 = vadd.f32 %v8263, %v8217
        %v8268 = vadd.f32 %v8264, %v8256
        %v8269 = vadd.f32 %v8265, %v8258
        %8270 = vst [vmem:[#allocation4] sm:$0xff] %v8266
        %8271 = vst [vmem:[#allocation4 + $0x8] sm:$0xff] %v8267
        %8272 = vst [vmem:[#allocation4 + $0x10] sm:$0xff] %v8268
        %8273 = vst [vmem:[#allocation4 + $0x18] sm:$0xff] %v8269
        %s8274 = scalar_lea.vmem %s3, 72
        %v8275 = vld [vmem:[%s8274] sm:$0xf]
        %v8276 = vld [vmem:[#allocation3 + $0x8] sm:$0xff]
        %v8277 = vld [vmem:[#allocation3 + $0x10] sm:$0xff]
        %v8278 = vld [vmem:[#allocation3 + $0x18] sm:$0xf]
        %v8282 = vunpack.c.l.b16 %v8276
        %v8283 = vunpack.c.h.b16 %v8276
        %v8284 = vunpack.c.l.b16 %v8277
        %v8285 = vunpack.c.h.b16 %v8277
        %v8286 = vunpack.c.l.b16 %v8278
        %v8287 = vpack.c.b16 %v8282, %v8282
        %v8288 = vpack.c.b16 %v8283, %v8283
        %v8289 = vpack.c.b16 %v8284, %v8284
        %v8290 = vpack.c.b16 %v8285, %v8285
        %v8291 = vpack.c.b16 %v8286, %v8286
        %8292 = vrot.lane.b32.xlu0 %v8287, 10
        %v8293 = vpop.permute.xlu0 %8292
        %8294 = vrot.lane.b32.xlu0 %v8288, 10
        %v8295 = vpop.permute.xlu0 %8294
        %8296 = vrot.lane.b32.xlu0 %v8289, 10
        %v8297 = vpop.permute.xlu0 %8296
        %8298 = vrot.lane.b32.xlu0 %v8290, 10
        %v8299 = vpop.permute.xlu0 %8298
        %8300 = vrot.lane.b32.xlu0 %v8291, 10
        %v8301 = vpop.permute.xlu0 %8300
        %v8302 = vsel %vm5803, %v8293, %v8295
        %v8303 = vsel %vm5803, %v8295, %v8297
        %v8304 = vsel %vm5803, %v8297, %v8299
        %v8305 = vsel %vm5803, %v8299, %v8301
        %v8307 = vsel %vm369, %v8275, 0
        %v8310 = vsel %vm373, %v8302, 0
        %v8313 = vsel %vm373, %v8303, 0
        %v8316 = vsel %vm373, %v8304, 0
        %v8319 = vsel %vm373, %v8305, 0
        %8321 = vmatprep.subr.bf16.mxu0 %v8313
        %8322 = vmatpush1.bf16.msra.mxu0 %v8310
        %8323 = vmatprep.subr.bf16.mxu0 0
        %8324 = vmatpush1.bf16.msra.mxu0 0
        %8325 = vmatprep.subr.bf16.mxu0 0
        %8326 = vmatpush1.bf16.msra.mxu0 0
        %8327 = vmatprep.subr.bf16.mxu0 0
        %8328 = vmatpush1.bf16.msra.mxu0 0
        %8329 = vmatprep.subr.bf16.mxu0 0
        %8330 = vmatpush1.bf16.msra.mxu0 0
        %8331 = vmatprep.subr.bf16.mxu0 0
        %8332 = vmatpush1.bf16.msra.mxu0 0
        %8333 = vmatprep.subr.bf16.mxu0 0
        %8334 = vmatpush1.bf16.msra.mxu0 0
        %8335 = vmatprep.subr.bf16.mxu0 0
        %8336 = vmatpush1.bf16.msra.mxu0 0
        %8337 = vmatprep.subr.bf16.mxu0 0
        %8338 = vmatpush1.bf16.msra.mxu0 0
        %8339 = vmatprep.subr.bf16.mxu0 0
        %8340 = vmatpush1.bf16.msra.mxu0 0
        %8341 = vmatprep.subr.bf16.mxu0 0
        %8342 = vmatpush1.bf16.msra.mxu0 0
        %8343 = vmatprep.subr.bf16.mxu0 0
        %8344 = vmatpush1.bf16.msra.mxu0 0
        %8345 = vmatprep.subr.bf16.mxu0 0
        %8346 = vmatpush1.bf16.msra.mxu0 0
        %8347 = vmatprep.subr.bf16.mxu0 0
        %8348 = vmatpush1.bf16.msra.mxu0 0
        %8349 = vmatprep.subr.bf16.mxu0 0
        %8350 = vmatpush1.bf16.msra.mxu0 0
        %8351 = vmatprep.subr.bf16.mxu0 0
        %8352 = vmatpush1.bf16.msra.mxu0 0
        %8353 = vmatprep.mubr.bf16.mxu0 0
        %8354 = vmatmul.mubr.bf16.gmra.mrb[0].mxu0 %v8307
        %v8355 = vpop.f32.mrb[0].mxu0
        %v8356 = vadd.f32 0.0, %v8355
        %v8357 = vpop.f32.mrb[0].mxu0
        %v8358 = vadd.f32 0.0, %v8357
        %v8359 = vpop.f32.mrb[0].mxu0
        %v8360 = vpop.f32.mrb[0].mxu0
        %8361 = vdwg.mxu0
        %8362 = vmatprep.subr.bf16.mxu0 %v8319
        %8363 = vmatpush1.bf16.msra.mxu0 %v8316
        %8364 = vmatprep.subr.bf16.mxu0 0
        %8365 = vmatpush1.bf16.msra.mxu0 0
        %8366 = vmatprep.subr.bf16.mxu0 0
        %8367 = vmatpush1.bf16.msra.mxu0 0
        %8368 = vmatprep.subr.bf16.mxu0 0
        %8369 = vmatpush1.bf16.msra.mxu0 0
        %8370 = vmatprep.subr.bf16.mxu0 0
        %8371 = vmatpush1.bf16.msra.mxu0 0
        %8372 = vmatprep.subr.bf16.mxu0 0
        %8373 = vmatpush1.bf16.msra.mxu0 0
        %8374 = vmatprep.subr.bf16.mxu0 0
        %8375 = vmatpush1.bf16.msra.mxu0 0
        %8376 = vmatprep.subr.bf16.mxu0 0
        %8377 = vmatpush1.bf16.msra.mxu0 0
        %8378 = vmatprep.subr.bf16.mxu0 0
        %8379 = vmatpush1.bf16.msra.mxu0 0
        %8380 = vmatprep.subr.bf16.mxu0 0
        %8381 = vmatpush1.bf16.msra.mxu0 0
        %8382 = vmatprep.subr.bf16.mxu0 0
        %8383 = vmatpush1.bf16.msra.mxu0 0
        %8384 = vmatprep.subr.bf16.mxu0 0
        %8385 = vmatpush1.bf16.msra.mxu0 0
        %8386 = vmatprep.subr.bf16.mxu0 0
        %8387 = vmatpush1.bf16.msra.mxu0 0
        %8388 = vmatprep.subr.bf16.mxu0 0
        %8389 = vmatpush1.bf16.msra.mxu0 0
        %8390 = vmatprep.subr.bf16.mxu0 0
        %8391 = vmatpush1.bf16.msra.mxu0 0
        %8392 = vmatprep.subr.bf16.mxu0 0
        %8393 = vmatpush1.bf16.msra.mxu0 0
        %8394 = vmatprep.mubr.bf16.mxu0 0
        %8395 = vmatmul.mubr.bf16.gmra.mrb[0].mxu0 %v8307
        %v8396 = vpop.f32.mrb[0].mxu0
        %v8397 = vadd.f32 0.0, %v8396
        %v8398 = vpop.f32.mrb[0].mxu0
        %v8399 = vadd.f32 0.0, %v8398
        %v8400 = vpop.f32.mrb[0].mxu0
        %v8401 = vpop.f32.mrb[0].mxu0
        %8402 = vdwg.mxu0
        %v8403 = vld [vmem:[#allocation4] sm:$0xff]
        %v8404 = vld [vmem:[#allocation4 + $0x8] sm:$0xff]
        %v8405 = vld [vmem:[#allocation4 + $0x10] sm:$0xff]
        %v8406 = vld [vmem:[#allocation4 + $0x18] sm:$0xff]
        %v8407 = vadd.f32 %v8403, %v8356
        %v8408 = vadd.f32 %v8404, %v8358
        %v8409 = vadd.f32 %v8405, %v8397
        %v8410 = vadd.f32 %v8406, %v8399
        %8411 = vst [vmem:[#allocation4] sm:$0xff] %v8407
        %8412 = vst [vmem:[#allocation4 + $0x8] sm:$0xff] %v8408
        %8413 = vst [vmem:[#allocation4 + $0x10] sm:$0xff] %v8409
        %8414 = vst [vmem:[#allocation4 + $0x18] sm:$0xff] %v8410
        %s8415 = scalar_lea.vmem %s3, 76
        %v8416 = vld [vmem:[%s8415] sm:$0xf]
        %v8417 = vld [vmem:[#allocation3 + $0x8] sm:$0xff]
        %v8418 = vld [vmem:[#allocation3 + $0x10] sm:$0xff]
        %v8419 = vld [vmem:[#allocation3 + $0x18] sm:$0xf]
        %v8423 = vunpack.c.l.b16 %v8417
        %v8424 = vunpack.c.h.b16 %v8417
        %v8425 = vunpack.c.l.b16 %v8418
        %v8426 = vunpack.c.h.b16 %v8418
        %v8427 = vunpack.c.l.b16 %v8419
        %v8428 = vpack.c.b16 %v8423, %v8423
        %v8429 = vpack.c.b16 %v8424, %v8424
        %v8430 = vpack.c.b16 %v8425, %v8425
        %v8431 = vpack.c.b16 %v8426, %v8426
        %v8432 = vpack.c.b16 %v8427, %v8427
        %8433 = vrot.lane.b32.xlu0 %v8428, 9
        %v8434 = vpop.permute.xlu0 %8433
        %8435 = vrot.lane.b32.xlu0 %v8429, 9
        %v8436 = vpop.permute.xlu0 %8435
        %8437 = vrot.lane.b32.xlu0 %v8430, 9
        %v8438 = vpop.permute.xlu0 %8437
        %8439 = vrot.lane.b32.xlu0 %v8431, 9
        %v8440 = vpop.permute.xlu0 %8439
        %8441 = vrot.lane.b32.xlu0 %v8432, 9
        %v8442 = vpop.permute.xlu0 %8441
        %v8443 = vsel %vm5937, %v8434, %v8436
        %v8444 = vsel %vm5937, %v8436, %v8438
        %v8445 = vsel %vm5937, %v8438, %v8440
        %v8446 = vsel %vm5937, %v8440, %v8442
        %v8448 = vsel %vm369, %v8416, 0
        %v8451 = vsel %vm373, %v8443, 0
        %v8454 = vsel %vm373, %v8444, 0
        %v8457 = vsel %vm373, %v8445, 0
        %v8460 = vsel %vm373, %v8446, 0
        %8462 = vmatprep.subr.bf16.mxu0 %v8454
        %8463 = vmatpush1.bf16.msra.mxu0 %v8451
        %8464 = vmatprep.subr.bf16.mxu0 0
        %8465 = vmatpush1.bf16.msra.mxu0 0
        %8466 = vmatprep.subr.bf16.mxu0 0
        %8467 = vmatpush1.bf16.msra.mxu0 0
        %8468 = vmatprep.subr.bf16.mxu0 0
        %8469 = vmatpush1.bf16.msra.mxu0 0
        %8470 = vmatprep.subr.bf16.mxu0 0
        %8471 = vmatpush1.bf16.msra.mxu0 0
        %8472 = vmatprep.subr.bf16.mxu0 0
        %8473 = vmatpush1.bf16.msra.mxu0 0
        %8474 = vmatprep.subr.bf16.mxu0 0
        %8475 = vmatpush1.bf16.msra.mxu0 0
        %8476 = vmatprep.subr.bf16.mxu0 0
        %8477 = vmatpush1.bf16.msra.mxu0 0
        %8478 = vmatprep.subr.bf16.mxu0 0
        %8479 = vmatpush1.bf16.msra.mxu0 0
        %8480 = vmatprep.subr.bf16.mxu0 0
        %8481 = vmatpush1.bf16.msra.mxu0 0
        %8482 = vmatprep.subr.bf16.mxu0 0
        %8483 = vmatpush1.bf16.msra.mxu0 0
        %8484 = vmatprep.subr.bf16.mxu0 0
        %8485 = vmatpush1.bf16.msra.mxu0 0
        %8486 = vmatprep.subr.bf16.mxu0 0
        %8487 = vmatpush1.bf16.msra.mxu0 0
        %8488 = vmatprep.subr.bf16.mxu0 0
        %8489 = vmatpush1.bf16.msra.mxu0 0
        %8490 = vmatprep.subr.bf16.mxu0 0
        %8491 = vmatpush1.bf16.msra.mxu0 0
        %8492 = vmatprep.subr.bf16.mxu0 0
        %8493 = vmatpush1.bf16.msra.mxu0 0
        %8494 = vmatprep.mubr.bf16.mxu0 0
        %8495 = vmatmul.mubr.bf16.gmra.mrb[0].mxu0 %v8448
        %v8496 = vpop.f32.mrb[0].mxu0
        %v8497 = vadd.f32 0.0, %v8496
        %v8498 = vpop.f32.mrb[0].mxu0
        %v8499 = vadd.f32 0.0, %v8498
        %v8500 = vpop.f32.mrb[0].mxu0
        %v8501 = vpop.f32.mrb[0].mxu0
        %8502 = vdwg.mxu0
        %8503 = vmatprep.subr.bf16.mxu0 %v8460
        %8504 = vmatpush1.bf16.msra.mxu0 %v8457
        %8505 = vmatprep.subr.bf16.mxu0 0
        %8506 = vmatpush1.bf16.msra.mxu0 0
        %8507 = vmatprep.subr.bf16.mxu0 0
        %8508 = vmatpush1.bf16.msra.mxu0 0
        %8509 = vmatprep.subr.bf16.mxu0 0
        %8510 = vmatpush1.bf16.msra.mxu0 0
        %8511 = vmatprep.subr.bf16.mxu0 0
        %8512 = vmatpush1.bf16.msra.mxu0 0
        %8513 = vmatprep.subr.bf16.mxu0 0
        %8514 = vmatpush1.bf16.msra.mxu0 0
        %8515 = vmatprep.subr.bf16.mxu0 0
        %8516 = vmatpush1.bf16.msra.mxu0 0
        %8517 = vmatprep.subr.bf16.mxu0 0
        %8518 = vmatpush1.bf16.msra.mxu0 0
        %8519 = vmatprep.subr.bf16.mxu0 0
        %8520 = vmatpush1.bf16.msra.mxu0 0
        %8521 = vmatprep.subr.bf16.mxu0 0
        %8522 = vmatpush1.bf16.msra.mxu0 0
        %8523 = vmatprep.subr.bf16.mxu0 0
        %8524 = vmatpush1.bf16.msra.mxu0 0
        %8525 = vmatprep.subr.bf16.mxu0 0
        %8526 = vmatpush1.bf16.msra.mxu0 0
        %8527 = vmatprep.subr.bf16.mxu0 0
        %8528 = vmatpush1.bf16.msra.mxu0 0
        %8529 = vmatprep.subr.bf16.mxu0 0
        %8530 = vmatpush1.bf16.msra.mxu0 0
        %8531 = vmatprep.subr.bf16.mxu0 0
        %8532 = vmatpush1.bf16.msra.mxu0 0
        %8533 = vmatprep.subr.bf16.mxu0 0
        %8534 = vmatpush1.bf16.msra.mxu0 0
        %8535 = vmatprep.mubr.bf16.mxu0 0
        %8536 = vmatmul.mubr.bf16.gmra.mrb[0].mxu0 %v8448
        %v8537 = vpop.f32.mrb[0].mxu0
        %v8538 = vadd.f32 0.0, %v8537
        %v8539 = vpop.f32.mrb[0].mxu0
        %v8540 = vadd.f32 0.0, %v8539
        %v8541 = vpop.f32.mrb[0].mxu0
        %v8542 = vpop.f32.mrb[0].mxu0
        %8543 = vdwg.mxu0
        %v8544 = vld [vmem:[#allocation4] sm:$0xff]
        %v8545 = vld [vmem:[#allocation4 + $0x8] sm:$0xff]
        %v8546 = vld [vmem:[#allocation4 + $0x10] sm:$0xff]
        %v8547 = vld [vmem:[#allocation4 + $0x18] sm:$0xff]
        %v8548 = vadd.f32 %v8544, %v8497
        %v8549 = vadd.f32 %v8545, %v8499
        %v8550 = vadd.f32 %v8546, %v8538
        %v8551 = vadd.f32 %v8547, %v8540
        %8552 = vst [vmem:[#allocation4] sm:$0xff] %v8548
        %8553 = vst [vmem:[#allocation4 + $0x8] sm:$0xff] %v8549
        %8554 = vst [vmem:[#allocation4 + $0x10] sm:$0xff] %v8550
        %8555 = vst [vmem:[#allocation4 + $0x18] sm:$0xff] %v8551
        %s8556 = scalar_lea.vmem %s3, 80
        %v8557 = vld [vmem:[%s8556] sm:$0xf]
        %v8558 = vld [vmem:[#allocation3 + $0x8] sm:$0xff]
        %v8559 = vld [vmem:[#allocation3 + $0x10] sm:$0xff]
        %v8560 = vld [vmem:[#allocation3 + $0x18] sm:$0xf]
        %v8564 = vunpack.c.l.b16 %v8558
        %v8565 = vunpack.c.h.b16 %v8558
        %v8566 = vunpack.c.l.b16 %v8559
        %v8567 = vunpack.c.h.b16 %v8559
        %v8568 = vunpack.c.l.b16 %v8560
        %v8569 = vpack.c.b16 %v8564, %v8564
        %v8570 = vpack.c.b16 %v8565, %v8565
        %v8571 = vpack.c.b16 %v8566, %v8566
        %v8572 = vpack.c.b16 %v8567, %v8567
        %v8573 = vpack.c.b16 %v8568, %v8568
        %8574 = vrot.lane.b32.xlu0 %v8569, 8
        %v8575 = vpop.permute.xlu0 %8574
        %8576 = vrot.lane.b32.xlu0 %v8570, 8
        %v8577 = vpop.permute.xlu0 %8576
        %8578 = vrot.lane.b32.xlu0 %v8571, 8
        %v8579 = vpop.permute.xlu0 %8578
        %8580 = vrot.lane.b32.xlu0 %v8572, 8
        %v8581 = vpop.permute.xlu0 %8580
        %8582 = vrot.lane.b32.xlu0 %v8573, 8
        %v8583 = vpop.permute.xlu0 %8582
        %v8584 = vsel %vm6079, %v8575, %v8577
        %v8585 = vsel %vm6079, %v8577, %v8579
        %v8586 = vsel %vm6079, %v8579, %v8581
        %v8587 = vsel %vm6079, %v8581, %v8583
        %v8589 = vsel %vm369, %v8557, 0
        %v8592 = vsel %vm373, %v8584, 0
        %v8595 = vsel %vm373, %v8585, 0
        %v8598 = vsel %vm373, %v8586, 0
        %v8601 = vsel %vm373, %v8587, 0
        %8603 = vmatprep.subr.bf16.mxu0 %v8595
        %8604 = vmatpush1.bf16.msra.mxu0 %v8592
        %8605 = vmatprep.subr.bf16.mxu0 0
        %8606 = vmatpush1.bf16.msra.mxu0 0
        %8607 = vmatprep.subr.bf16.mxu0 0
        %8608 = vmatpush1.bf16.msra.mxu0 0
        %8609 = vmatprep.subr.bf16.mxu0 0
        %8610 = vmatpush1.bf16.msra.mxu0 0
        %8611 = vmatprep.subr.bf16.mxu0 0
        %8612 = vmatpush1.bf16.msra.mxu0 0
        %8613 = vmatprep.subr.bf16.mxu0 0
        %8614 = vmatpush1.bf16.msra.mxu0 0
        %8615 = vmatprep.subr.bf16.mxu0 0
        %8616 = vmatpush1.bf16.msra.mxu0 0
        %8617 = vmatprep.subr.bf16.mxu0 0
        %8618 = vmatpush1.bf16.msra.mxu0 0
        %8619 = vmatprep.subr.bf16.mxu0 0
        %8620 = vmatpush1.bf16.msra.mxu0 0
        %8621 = vmatprep.subr.bf16.mxu0 0
        %8622 = vmatpush1.bf16.msra.mxu0 0
        %8623 = vmatprep.subr.bf16.mxu0 0
        %8624 = vmatpush1.bf16.msra.mxu0 0
        %8625 = vmatprep.subr.bf16.mxu0 0
        %8626 = vmatpush1.bf16.msra.mxu0 0
        %8627 = vmatprep.subr.bf16.mxu0 0
        %8628 = vmatpush1.bf16.msra.mxu0 0
        %8629 = vmatprep.subr.bf16.mxu0 0
        %8630 = vmatpush1.bf16.msra.mxu0 0
        %8631 = vmatprep.subr.bf16.mxu0 0
        %8632 = vmatpush1.bf16.msra.mxu0 0
        %8633 = vmatprep.subr.bf16.mxu0 0
        %8634 = vmatpush1.bf16.msra.mxu0 0
        %8635 = vmatprep.mubr.bf16.mxu0 0
        %8636 = vmatmul.mubr.bf16.gmra.mrb[0].mxu0 %v8589
        %v8637 = vpop.f32.mrb[0].mxu0
        %v8638 = vadd.f32 0.0, %v8637
        %v8639 = vpop.f32.mrb[0].mxu0
        %v8640 = vadd.f32 0.0, %v8639
        %v8641 = vpop.f32.mrb[0].mxu0
        %v8642 = vpop.f32.mrb[0].mxu0
        %8643 = vdwg.mxu0
        %8644 = vmatprep.subr.bf16.mxu0 %v8601
        %8645 = vmatpush1.bf16.msra.mxu0 %v8598
        %8646 = vmatprep.subr.bf16.mxu0 0
        %8647 = vmatpush1.bf16.msra.mxu0 0
        %8648 = vmatprep.subr.bf16.mxu0 0
        %8649 = vmatpush1.bf16.msra.mxu0 0
        %8650 = vmatprep.subr.bf16.mxu0 0
        %8651 = vmatpush1.bf16.msra.mxu0 0
        %8652 = vmatprep.subr.bf16.mxu0 0
        %8653 = vmatpush1.bf16.msra.mxu0 0
        %8654 = vmatprep.subr.bf16.mxu0 0
        %8655 = vmatpush1.bf16.msra.mxu0 0
        %8656 = vmatprep.subr.bf16.mxu0 0
        %8657 = vmatpush1.bf16.msra.mxu0 0
        %8658 = vmatprep.subr.bf16.mxu0 0
        %8659 = vmatpush1.bf16.msra.mxu0 0
        %8660 = vmatprep.subr.bf16.mxu0 0
        %8661 = vmatpush1.bf16.msra.mxu0 0
        %8662 = vmatprep.subr.bf16.mxu0 0
        %8663 = vmatpush1.bf16.msra.mxu0 0
        %8664 = vmatprep.subr.bf16.mxu0 0
        %8665 = vmatpush1.bf16.msra.mxu0 0
        %8666 = vmatprep.subr.bf16.mxu0 0
        %8667 = vmatpush1.bf16.msra.mxu0 0
        %8668 = vmatprep.subr.bf16.mxu0 0
        %8669 = vmatpush1.bf16.msra.mxu0 0
        %8670 = vmatprep.subr.bf16.mxu0 0
        %8671 = vmatpush1.bf16.msra.mxu0 0
        %8672 = vmatprep.subr.bf16.mxu0 0
        %8673 = vmatpush1.bf16.msra.mxu0 0
        %8674 = vmatprep.subr.bf16.mxu0 0
        %8675 = vmatpush1.bf16.msra.mxu0 0
        %8676 = vmatprep.mubr.bf16.mxu0 0
        %8677 = vmatmul.mubr.bf16.gmra.mrb[0].mxu0 %v8589
        %v8678 = vpop.f32.mrb[0].mxu0
        %v8679 = vadd.f32 0.0, %v8678
        %v8680 = vpop.f32.mrb[0].mxu0
        %v8681 = vadd.f32 0.0, %v8680
        %v8682 = vpop.f32.mrb[0].mxu0
        %v8683 = vpop.f32.mrb[0].mxu0
        %8684 = vdwg.mxu0
        %v8685 = vld [vmem:[#allocation4] sm:$0xff]
        %v8686 = vld [vmem:[#allocation4 + $0x8] sm:$0xff]
        %v8687 = vld [vmem:[#allocation4 + $0x10] sm:$0xff]
        %v8688 = vld [vmem:[#allocation4 + $0x18] sm:$0xff]
        %v8689 = vadd.f32 %v8685, %v8638
        %v8690 = vadd.f32 %v8686, %v8640
        %v8691 = vadd.f32 %v8687, %v8679
        %v8692 = vadd.f32 %v8688, %v8681
        %8693 = vst [vmem:[#allocation4] sm:$0xff] %v8689
        %8694 = vst [vmem:[#allocation4 + $0x8] sm:$0xff] %v8690
        %8695 = vst [vmem:[#allocation4 + $0x10] sm:$0xff] %v8691
        %8696 = vst [vmem:[#allocation4 + $0x18] sm:$0xff] %v8692
        %s8697 = scalar_lea.vmem %s3, 84
        %v8698 = vld [vmem:[%s8697] sm:$0xf]
        %v8699 = vld [vmem:[#allocation3 + $0x8] sm:$0xff]
        %v8700 = vld [vmem:[#allocation3 + $0x10] sm:$0xff]
        %v8701 = vld [vmem:[#allocation3 + $0x18] sm:$0xf]
        %v8705 = vunpack.c.l.b16 %v8699
        %v8706 = vunpack.c.h.b16 %v8699
        %v8707 = vunpack.c.l.b16 %v8700
        %v8708 = vunpack.c.h.b16 %v8700
        %v8709 = vunpack.c.l.b16 %v8701
        %v8710 = vpack.c.b16 %v8705, %v8705
        %v8711 = vpack.c.b16 %v8706, %v8706
        %v8712 = vpack.c.b16 %v8707, %v8707
        %v8713 = vpack.c.b16 %v8708, %v8708
        %v8714 = vpack.c.b16 %v8709, %v8709
        %8715 = vrot.lane.b32.xlu0 %v8710, 1
        %v8716 = vpop.permute.xlu0 %8715
        %8717 = vrot.lane.b32.xlu0 %v8711, 1
        %v8718 = vpop.permute.xlu0 %8717
        %8719 = vrot.lane.b32.xlu0 %v8712, 1
        %v8720 = vpop.permute.xlu0 %8719
        %8721 = vrot.lane.b32.xlu0 %v8713, 1
        %v8722 = vpop.permute.xlu0 %8721
        %8723 = vrot.lane.b32.xlu0 %v8714, 1
        %v8724 = vpop.permute.xlu0 %8723
        %v8725 = vsel %vm6221, %v8716, %v8718
        %v8726 = vsel %vm6221, %v8718, %v8720
        %v8727 = vsel %vm6221, %v8720, %v8722
        %v8728 = vsel %vm6221, %v8722, %v8724
        %v8730 = vsel %vm369, %v8698, 0
        %v8733 = vsel %vm373, %v8725, 0
        %v8736 = vsel %vm373, %v8726, 0
        %v8739 = vsel %vm373, %v8727, 0
        %v8742 = vsel %vm373, %v8728, 0
        %8744 = vmatprep.subr.bf16.mxu0 %v8736
        %8745 = vmatpush1.bf16.msra.mxu0 %v8733
        %8746 = vmatprep.subr.bf16.mxu0 0
        %8747 = vmatpush1.bf16.msra.mxu0 0
        %8748 = vmatprep.subr.bf16.mxu0 0
        %8749 = vmatpush1.bf16.msra.mxu0 0
        %8750 = vmatprep.subr.bf16.mxu0 0
        %8751 = vmatpush1.bf16.msra.mxu0 0
        %8752 = vmatprep.subr.bf16.mxu0 0
        %8753 = vmatpush1.bf16.msra.mxu0 0
        %8754 = vmatprep.subr.bf16.mxu0 0
        %8755 = vmatpush1.bf16.msra.mxu0 0
        %8756 = vmatprep.subr.bf16.mxu0 0
        %8757 = vmatpush1.bf16.msra.mxu0 0
        %8758 = vmatprep.subr.bf16.mxu0 0
        %8759 = vmatpush1.bf16.msra.mxu0 0
        %8760 = vmatprep.subr.bf16.mxu0 0
        %8761 = vmatpush1.bf16.msra.mxu0 0
        %8762 = vmatprep.subr.bf16.mxu0 0
        %8763 = vmatpush1.bf16.msra.mxu0 0
        %8764 = vmatprep.subr.bf16.mxu0 0
        %8765 = vmatpush1.bf16.msra.mxu0 0
        %8766 = vmatprep.subr.bf16.mxu0 0
        %8767 = vmatpush1.bf16.msra.mxu0 0
        %8768 = vmatprep.subr.bf16.mxu0 0
        %8769 = vmatpush1.bf16.msra.mxu0 0
        %8770 = vmatprep.subr.bf16.mxu0 0
        %8771 = vmatpush1.bf16.msra.mxu0 0
        %8772 = vmatprep.subr.bf16.mxu0 0
        %8773 = vmatpush1.bf16.msra.mxu0 0
        %8774 = vmatprep.subr.bf16.mxu0 0
        %8775 = vmatpush1.bf16.msra.mxu0 0
        %8776 = vmatprep.mubr.bf16.mxu0 0
        %8777 = vmatmul.mubr.bf16.gmra.mrb[0].mxu0 %v8730
        %v8778 = vpop.f32.mrb[0].mxu0
        %v8779 = vadd.f32 0.0, %v8778
        %v8780 = vpop.f32.mrb[0].mxu0
        %v8781 = vadd.f32 0.0, %v8780
        %v8782 = vpop.f32.mrb[0].mxu0
        %v8783 = vpop.f32.mrb[0].mxu0
        %8784 = vdwg.mxu0
        %8785 = vmatprep.subr.bf16.mxu0 %v8742
        %8786 = vmatpush1.bf16.msra.mxu0 %v8739
        %8787 = vmatprep.subr.bf16.mxu0 0
        %8788 = vmatpush1.bf16.msra.mxu0 0
        %8789 = vmatprep.subr.bf16.mxu0 0
        %8790 = vmatpush1.bf16.msra.mxu0 0
        %8791 = vmatprep.subr.bf16.mxu0 0
        %8792 = vmatpush1.bf16.msra.mxu0 0
        %8793 = vmatprep.subr.bf16.mxu0 0
        %8794 = vmatpush1.bf16.msra.mxu0 0
        %8795 = vmatprep.subr.bf16.mxu0 0
        %8796 = vmatpush1.bf16.msra.mxu0 0
        %8797 = vmatprep.subr.bf16.mxu0 0
        %8798 = vmatpush1.bf16.msra.mxu0 0
        %8799 = vmatprep.subr.bf16.mxu0 0
        %8800 = vmatpush1.bf16.msra.mxu0 0
        %8801 = vmatprep.subr.bf16.mxu0 0
        %8802 = vmatpush1.bf16.msra.mxu0 0
        %8803 = vmatprep.subr.bf16.mxu0 0
        %8804 = vmatpush1.bf16.msra.mxu0 0
        %8805 = vmatprep.subr.bf16.mxu0 0
        %8806 = vmatpush1.bf16.msra.mxu0 0
        %8807 = vmatprep.subr.bf16.mxu0 0
        %8808 = vmatpush1.bf16.msra.mxu0 0
        %8809 = vmatprep.subr.bf16.mxu0 0
        %8810 = vmatpush1.bf16.msra.mxu0 0
        %8811 = vmatprep.subr.bf16.mxu0 0
        %8812 = vmatpush1.bf16.msra.mxu0 0
        %8813 = vmatprep.subr.bf16.mxu0 0
        %8814 = vmatpush1.bf16.msra.mxu0 0
        %8815 = vmatprep.subr.bf16.mxu0 0
        %8816 = vmatpush1.bf16.msra.mxu0 0
        %8817 = vmatprep.mubr.bf16.mxu0 0
        %8818 = vmatmul.mubr.bf16.gmra.mrb[0].mxu0 %v8730
        %v8819 = vpop.f32.mrb[0].mxu0
        %v8820 = vadd.f32 0.0, %v8819
        %v8821 = vpop.f32.mrb[0].mxu0
        %v8822 = vadd.f32 0.0, %v8821
        %v8823 = vpop.f32.mrb[0].mxu0
        %v8824 = vpop.f32.mrb[0].mxu0
        %8825 = vdwg.mxu0
        %v8826 = vld [vmem:[#allocation4] sm:$0xff]
        %v8827 = vld [vmem:[#allocation4 + $0x8] sm:$0xff]
        %v8828 = vld [vmem:[#allocation4 + $0x10] sm:$0xff]
        %v8829 = vld [vmem:[#allocation4 + $0x18] sm:$0xff]
        %v8830 = vadd.f32 %v8826, %v8779
        %v8831 = vadd.f32 %v8827, %v8781
        %v8832 = vadd.f32 %v8828, %v8820
        %v8833 = vadd.f32 %v8829, %v8822
        %8834 = vst [vmem:[#allocation4] sm:$0xff] %v8830
        %8835 = vst [vmem:[#allocation4 + $0x8] sm:$0xff] %v8831
        %8836 = vst [vmem:[#allocation4 + $0x10] sm:$0xff] %v8832
        %8837 = vst [vmem:[#allocation4 + $0x18] sm:$0xff] %v8833
        %s8838 = scalar_lea.vmem %s3, 88
        %v8839 = vld [vmem:[%s8838] sm:$0xf]
        %v8840 = vld [vmem:[#allocation3 + $0xc] sm:$0xff]
        %v8841 = vld [vmem:[#allocation3 + $0x14] sm:$0xff]
        %v8844 = vunpack.c.l.b16 %v8840
        %v8845 = vunpack.c.h.b16 %v8840
        %v8846 = vunpack.c.l.b16 %v8841
        %v8847 = vunpack.c.h.b16 %v8841
        %v8848 = vpack.c.b16 %v8844, %v8844
        %v8849 = vpack.c.b16 %v8845, %v8845
        %v8850 = vpack.c.b16 %v8846, %v8846
        %v8851 = vpack.c.b16 %v8847, %v8847
        %v8853 = vsel %vm369, %v8839, 0
        %v8856 = vsel %vm373, %v8848, 0
        %v8859 = vsel %vm373, %v8849, 0
        %v8862 = vsel %vm373, %v8850, 0
        %v8865 = vsel %vm373, %v8851, 0
        %8867 = vmatprep.subr.bf16.mxu0 %v8859
        %8868 = vmatpush1.bf16.msra.mxu0 %v8856
        %8869 = vmatprep.subr.bf16.mxu0 0
        %8870 = vmatpush1.bf16.msra.mxu0 0
        %8871 = vmatprep.subr.bf16.mxu0 0
        %8872 = vmatpush1.bf16.msra.mxu0 0
        %8873 = vmatprep.subr.bf16.mxu0 0
        %8874 = vmatpush1.bf16.msra.mxu0 0
        %8875 = vmatprep.subr.bf16.mxu0 0
        %8876 = vmatpush1.bf16.msra.mxu0 0
        %8877 = vmatprep.subr.bf16.mxu0 0
        %8878 = vmatpush1.bf16.msra.mxu0 0
        %8879 = vmatprep.subr.bf16.mxu0 0
        %8880 = vmatpush1.bf16.msra.mxu0 0
        %8881 = vmatprep.subr.bf16.mxu0 0
        %8882 = vmatpush1.bf16.msra.mxu0 0
        %8883 = vmatprep.subr.bf16.mxu0 0
        %8884 = vmatpush1.bf16.msra.mxu0 0
        %8885 = vmatprep.subr.bf16.mxu0 0
        %8886 = vmatpush1.bf16.msra.mxu0 0
        %8887 = vmatprep.subr.bf16.mxu0 0
        %8888 = vmatpush1.bf16.msra.mxu0 0
        %8889 = vmatprep.subr.bf16.mxu0 0
        %8890 = vmatpush1.bf16.msra.mxu0 0
        %8891 = vmatprep.subr.bf16.mxu0 0
        %8892 = vmatpush1.bf16.msra.mxu0 0
        %8893 = vmatprep.subr.bf16.mxu0 0
        %8894 = vmatpush1.bf16.msra.mxu0 0
        %8895 = vmatprep.subr.bf16.mxu0 0
        %8896 = vmatpush1.bf16.msra.mxu0 0
        %8897 = vmatprep.subr.bf16.mxu0 0
        %8898 = vmatpush1.bf16.msra.mxu0 0
        %8899 = vmatprep.mubr.bf16.mxu0 0
        %8900 = vmatmul.mubr.bf16.gmra.mrb[0].mxu0 %v8853
        %v8901 = vpop.f32.mrb[0].mxu0
        %v8902 = vadd.f32 0.0, %v8901
        %v8903 = vpop.f32.mrb[0].mxu0
        %v8904 = vadd.f32 0.0, %v8903
        %v8905 = vpop.f32.mrb[0].mxu0
        %v8906 = vpop.f32.mrb[0].mxu0
        %8907 = vdwg.mxu0
        %8908 = vmatprep.subr.bf16.mxu0 %v8865
        %8909 = vmatpush1.bf16.msra.mxu0 %v8862
        %8910 = vmatprep.subr.bf16.mxu0 0
        %8911 = vmatpush1.bf16.msra.mxu0 0
        %8912 = vmatprep.subr.bf16.mxu0 0
        %8913 = vmatpush1.bf16.msra.mxu0 0
        %8914 = vmatprep.subr.bf16.mxu0 0
        %8915 = vmatpush1.bf16.msra.mxu0 0
        %8916 = vmatprep.subr.bf16.mxu0 0
        %8917 = vmatpush1.bf16.msra.mxu0 0
        %8918 = vmatprep.subr.bf16.mxu0 0
        %8919 = vmatpush1.bf16.msra.mxu0 0
        %8920 = vmatprep.subr.bf16.mxu0 0
        %8921 = vmatpush1.bf16.msra.mxu0 0
        %8922 = vmatprep.subr.bf16.mxu0 0
        %8923 = vmatpush1.bf16.msra.mxu0 0
        %8924 = vmatprep.subr.bf16.mxu0 0
        %8925 = vmatpush1.bf16.msra.mxu0 0
        %8926 = vmatprep.subr.bf16.mxu0 0
        %8927 = vmatpush1.bf16.msra.mxu0 0
        %8928 = vmatprep.subr.bf16.mxu0 0
        %8929 = vmatpush1.bf16.msra.mxu0 0
        %8930 = vmatprep.subr.bf16.mxu0 0
        %8931 = vmatpush1.bf16.msra.mxu0 0
        %8932 = vmatprep.subr.bf16.mxu0 0
        %8933 = vmatpush1.bf16.msra.mxu0 0
        %8934 = vmatprep.subr.bf16.mxu0 0
        %8935 = vmatpush1.bf16.msra.mxu0 0
        %8936 = vmatprep.subr.bf16.mxu0 0
        %8937 = vmatpush1.bf16.msra.mxu0 0
        %8938 = vmatprep.subr.bf16.mxu0 0
        %8939 = vmatpush1.bf16.msra.mxu0 0
        %8940 = vmatprep.mubr.bf16.mxu0 0
        %8941 = vmatmul.mubr.bf16.gmra.mrb[0].mxu0 %v8853
        %v8942 = vpop.f32.mrb[0].mxu0
        %v8943 = vadd.f32 0.0, %v8942
        %v8944 = vpop.f32.mrb[0].mxu0
        %v8945 = vadd.f32 0.0, %v8944
        %v8946 = vpop.f32.mrb[0].mxu0
        %v8947 = vpop.f32.mrb[0].mxu0
        %8948 = vdwg.mxu0
        %v8949 = vld [vmem:[#allocation4] sm:$0xff]
        %v8950 = vld [vmem:[#allocation4 + $0x8] sm:$0xff]
        %v8951 = vld [vmem:[#allocation4 + $0x10] sm:$0xff]
        %v8952 = vld [vmem:[#allocation4 + $0x18] sm:$0xff]
        %v8953 = vadd.f32 %v8949, %v8902
        %v8954 = vadd.f32 %v8950, %v8904
        %v8955 = vadd.f32 %v8951, %v8943
        %v8956 = vadd.f32 %v8952, %v8945
        %8957 = vst [vmem:[#allocation4] sm:$0xff] %v8953
        %8958 = vst [vmem:[#allocation4 + $0x8] sm:$0xff] %v8954
        %8959 = vst [vmem:[#allocation4 + $0x10] sm:$0xff] %v8955
        %8960 = vst [vmem:[#allocation4 + $0x18] sm:$0xff] %v8956
        %s8961 = scalar_lea.vmem %s3, 92
        %v8962 = vld [vmem:[%s8961] sm:$0xf]
        %v8963 = vld [vmem:[#allocation3 + $0xc] sm:$0xff]
        %v8964 = vld [vmem:[#allocation3 + $0x14] sm:$0xff]
        %v8965 = vld [vmem:[#allocation3 + $0x1c] sm:$0xf]
        %v8969 = vunpack.c.l.b16 %v8963
        %v8970 = vunpack.c.h.b16 %v8963
        %v8971 = vunpack.c.l.b16 %v8964
        %v8972 = vunpack.c.h.b16 %v8964
        %v8973 = vunpack.c.l.b16 %v8965
        %v8974 = vpack.c.b16 %v8969, %v8969
        %v8975 = vpack.c.b16 %v8970, %v8970
        %v8976 = vpack.c.b16 %v8971, %v8971
        %v8977 = vpack.c.b16 %v8972, %v8972
        %v8978 = vpack.c.b16 %v8973, %v8973
        %8979 = vrot.lane.b32.xlu0 %v8974, 127
        %v8980 = vpop.permute.xlu0 %8979
        %8981 = vrot.lane.b32.xlu0 %v8975, 127
        %v8982 = vpop.permute.xlu0 %8981
        %8983 = vrot.lane.b32.xlu0 %v8976, 127
        %v8984 = vpop.permute.xlu0 %8983
        %8985 = vrot.lane.b32.xlu0 %v8977, 127
        %v8986 = vpop.permute.xlu0 %8985
        %8987 = vrot.lane.b32.xlu0 %v8978, 127
        %v8988 = vpop.permute.xlu0 %8987
        %v8989 = vsel %vm554, %v8980, %v8982
        %v8990 = vsel %vm554, %v8982, %v8984
        %v8991 = vsel %vm554, %v8984, %v8986
        %v8992 = vsel %vm554, %v8986, %v8988
        %v8994 = vsel %vm369, %v8962, 0
        %v8997 = vsel %vm373, %v8989, 0
        %v9000 = vsel %vm373, %v8990, 0
        %v9003 = vsel %vm373, %v8991, 0
        %v9006 = vsel %vm373, %v8992, 0
        %9008 = vmatprep.subr.bf16.mxu0 %v9000
        %9009 = vmatpush1.bf16.msra.mxu0 %v8997
        %9010 = vmatprep.subr.bf16.mxu0 0
        %9011 = vmatpush1.bf16.msra.mxu0 0
        %9012 = vmatprep.subr.bf16.mxu0 0
        %9013 = vmatpush1.bf16.msra.mxu0 0
        %9014 = vmatprep.subr.bf16.mxu0 0
        %9015 = vmatpush1.bf16.msra.mxu0 0
        %9016 = vmatprep.subr.bf16.mxu0 0
        %9017 = vmatpush1.bf16.msra.mxu0 0
        %9018 = vmatprep.subr.bf16.mxu0 0
        %9019 = vmatpush1.bf16.msra.mxu0 0
        %9020 = vmatprep.subr.bf16.mxu0 0
        %9021 = vmatpush1.bf16.msra.mxu0 0
        %9022 = vmatprep.subr.bf16.mxu0 0
        %9023 = vmatpush1.bf16.msra.mxu0 0
        %9024 = vmatprep.subr.bf16.mxu0 0
        %9025 = vmatpush1.bf16.msra.mxu0 0
        %9026 = vmatprep.subr.bf16.mxu0 0
        %9027 = vmatpush1.bf16.msra.mxu0 0
        %9028 = vmatprep.subr.bf16.mxu0 0
        %9029 = vmatpush1.bf16.msra.mxu0 0
        %9030 = vmatprep.subr.bf16.mxu0 0
        %9031 = vmatpush1.bf16.msra.mxu0 0
        %9032 = vmatprep.subr.bf16.mxu0 0
        %9033 = vmatpush1.bf16.msra.mxu0 0
        %9034 = vmatprep.subr.bf16.mxu0 0
        %9035 = vmatpush1.bf16.msra.mxu0 0
        %9036 = vmatprep.subr.bf16.mxu0 0
        %9037 = vmatpush1.bf16.msra.mxu0 0
        %9038 = vmatprep.subr.bf16.mxu0 0
        %9039 = vmatpush1.bf16.msra.mxu0 0
        %9040 = vmatprep.mubr.bf16.mxu0 0
        %9041 = vmatmul.mubr.bf16.gmra.mrb[0].mxu0 %v8994
        %v9042 = vpop.f32.mrb[0].mxu0
        %v9043 = vadd.f32 0.0, %v9042
        %v9044 = vpop.f32.mrb[0].mxu0
        %v9045 = vadd.f32 0.0, %v9044
        %v9046 = vpop.f32.mrb[0].mxu0
        %v9047 = vpop.f32.mrb[0].mxu0
        %9048 = vdwg.mxu0
        %9049 = vmatprep.subr.bf16.mxu0 %v9006
        %9050 = vmatpush1.bf16.msra.mxu0 %v9003
        %9051 = vmatprep.subr.bf16.mxu0 0
        %9052 = vmatpush1.bf16.msra.mxu0 0
        %9053 = vmatprep.subr.bf16.mxu0 0
        %9054 = vmatpush1.bf16.msra.mxu0 0
        %9055 = vmatprep.subr.bf16.mxu0 0
        %9056 = vmatpush1.bf16.msra.mxu0 0
        %9057 = vmatprep.subr.bf16.mxu0 0
        %9058 = vmatpush1.bf16.msra.mxu0 0
        %9059 = vmatprep.subr.bf16.mxu0 0
        %9060 = vmatpush1.bf16.msra.mxu0 0
        %9061 = vmatprep.subr.bf16.mxu0 0
        %9062 = vmatpush1.bf16.msra.mxu0 0
        %9063 = vmatprep.subr.bf16.mxu0 0
        %9064 = vmatpush1.bf16.msra.mxu0 0
        %9065 = vmatprep.subr.bf16.mxu0 0
        %9066 = vmatpush1.bf16.msra.mxu0 0
        %9067 = vmatprep.subr.bf16.mxu0 0
        %9068 = vmatpush1.bf16.msra.mxu0 0
        %9069 = vmatprep.subr.bf16.mxu0 0
        %9070 = vmatpush1.bf16.msra.mxu0 0
        %9071 = vmatprep.subr.bf16.mxu0 0
        %9072 = vmatpush1.bf16.msra.mxu0 0
        %9073 = vmatprep.subr.bf16.mxu0 0
        %9074 = vmatpush1.bf16.msra.mxu0 0
        %9075 = vmatprep.subr.bf16.mxu0 0
        %9076 = vmatpush1.bf16.msra.mxu0 0
        %9077 = vmatprep.subr.bf16.mxu0 0
        %9078 = vmatpush1.bf16.msra.mxu0 0
        %9079 = vmatprep.subr.bf16.mxu0 0
        %9080 = vmatpush1.bf16.msra.mxu0 0
        %9081 = vmatprep.mubr.bf16.mxu0 0
        %9082 = vmatmul.mubr.bf16.gmra.mrb[0].mxu0 %v8994
        %v9083 = vpop.f32.mrb[0].mxu0
        %v9084 = vadd.f32 0.0, %v9083
        %v9085 = vpop.f32.mrb[0].mxu0
        %v9086 = vadd.f32 0.0, %v9085
        %v9087 = vpop.f32.mrb[0].mxu0
        %v9088 = vpop.f32.mrb[0].mxu0
        %9089 = vdwg.mxu0
        %v9090 = vld [vmem:[#allocation4] sm:$0xff]
        %v9091 = vld [vmem:[#allocation4 + $0x8] sm:$0xff]
        %v9092 = vld [vmem:[#allocation4 + $0x10] sm:$0xff]
        %v9093 = vld [vmem:[#allocation4 + $0x18] sm:$0xff]
        %v9094 = vadd.f32 %v9090, %v9043
        %v9095 = vadd.f32 %v9091, %v9045
        %v9096 = vadd.f32 %v9092, %v9084
        %v9097 = vadd.f32 %v9093, %v9086
        %9098 = vst [vmem:[#allocation4] sm:$0xff] %v9094
        %9099 = vst [vmem:[#allocation4 + $0x8] sm:$0xff] %v9095
        %9100 = vst [vmem:[#allocation4 + $0x10] sm:$0xff] %v9096
        %9101 = vst [vmem:[#allocation4 + $0x18] sm:$0xff] %v9097
        %s9102 = scalar_lea.vmem %s3, 96
        %v9103 = vld [vmem:[%s9102] sm:$0xf]
        %v9104 = vld [vmem:[#allocation3 + $0xc] sm:$0xff]
        %v9105 = vld [vmem:[#allocation3 + $0x14] sm:$0xff]
        %v9106 = vld [vmem:[#allocation3 + $0x1c] sm:$0xf]
        %v9110 = vunpack.c.l.b16 %v9104
        %v9111 = vunpack.c.h.b16 %v9104
        %v9112 = vunpack.c.l.b16 %v9105
        %v9113 = vunpack.c.h.b16 %v9105
        %v9114 = vunpack.c.l.b16 %v9106
        %v9115 = vpack.c.b16 %v9110, %v9110
        %v9116 = vpack.c.b16 %v9111, %v9111
        %v9117 = vpack.c.b16 %v9112, %v9112
        %v9118 = vpack.c.b16 %v9113, %v9113
        %v9119 = vpack.c.b16 %v9114, %v9114
        %9120 = vrot.lane.b32.xlu0 %v9115, 120
        %v9121 = vpop.permute.xlu0 %9120
        %9122 = vrot.lane.b32.xlu0 %v9116, 120
        %v9123 = vpop.permute.xlu0 %9122
        %9124 = vrot.lane.b32.xlu0 %v9117, 120
        %v9125 = vpop.permute.xlu0 %9124
        %9126 = vrot.lane.b32.xlu0 %v9118, 120
        %v9127 = vpop.permute.xlu0 %9126
        %9128 = vrot.lane.b32.xlu0 %v9119, 120
        %v9129 = vpop.permute.xlu0 %9128
        %v9130 = vsel %vm6627, %v9121, %v9123
        %v9131 = vsel %vm6627, %v9123, %v9125
        %v9132 = vsel %vm6627, %v9125, %v9127
        %v9133 = vsel %vm6627, %v9127, %v9129
        %v9135 = vsel %vm369, %v9103, 0
        %v9138 = vsel %vm373, %v9130, 0
        %v9141 = vsel %vm373, %v9131, 0
        %v9144 = vsel %vm373, %v9132, 0
        %v9147 = vsel %vm373, %v9133, 0
        %9149 = vmatprep.subr.bf16.mxu0 %v9141
        %9150 = vmatpush1.bf16.msra.mxu0 %v9138
        %9151 = vmatprep.subr.bf16.mxu0 0
        %9152 = vmatpush1.bf16.msra.mxu0 0
        %9153 = vmatprep.subr.bf16.mxu0 0
        %9154 = vmatpush1.bf16.msra.mxu0 0
        %9155 = vmatprep.subr.bf16.mxu0 0
        %9156 = vmatpush1.bf16.msra.mxu0 0
        %9157 = vmatprep.subr.bf16.mxu0 0
        %9158 = vmatpush1.bf16.msra.mxu0 0
        %9159 = vmatprep.subr.bf16.mxu0 0
        %9160 = vmatpush1.bf16.msra.mxu0 0
        %9161 = vmatprep.subr.bf16.mxu0 0
        %9162 = vmatpush1.bf16.msra.mxu0 0
        %9163 = vmatprep.subr.bf16.mxu0 0
        %9164 = vmatpush1.bf16.msra.mxu0 0
        %9165 = vmatprep.subr.bf16.mxu0 0
        %9166 = vmatpush1.bf16.msra.mxu0 0
        %9167 = vmatprep.subr.bf16.mxu0 0
        %9168 = vmatpush1.bf16.msra.mxu0 0
        %9169 = vmatprep.subr.bf16.mxu0 0
        %9170 = vmatpush1.bf16.msra.mxu0 0
        %9171 = vmatprep.subr.bf16.mxu0 0
        %9172 = vmatpush1.bf16.msra.mxu0 0
        %9173 = vmatprep.subr.bf16.mxu0 0
        %9174 = vmatpush1.bf16.msra.mxu0 0
        %9175 = vmatprep.subr.bf16.mxu0 0
        %9176 = vmatpush1.bf16.msra.mxu0 0
        %9177 = vmatprep.subr.bf16.mxu0 0
        %9178 = vmatpush1.bf16.msra.mxu0 0
        %9179 = vmatprep.subr.bf16.mxu0 0
        %9180 = vmatpush1.bf16.msra.mxu0 0
        %9181 = vmatprep.mubr.bf16.mxu0 0
        %9182 = vmatmul.mubr.bf16.gmra.mrb[0].mxu0 %v9135
        %v9183 = vpop.f32.mrb[0].mxu0
        %v9184 = vadd.f32 0.0, %v9183
        %v9185 = vpop.f32.mrb[0].mxu0
        %v9186 = vadd.f32 0.0, %v9185
        %v9187 = vpop.f32.mrb[0].mxu0
        %v9188 = vpop.f32.mrb[0].mxu0
        %9189 = vdwg.mxu0
        %9190 = vmatprep.subr.bf16.mxu0 %v9147
        %9191 = vmatpush1.bf16.msra.mxu0 %v9144
        %9192 = vmatprep.subr.bf16.mxu0 0
        %9193 = vmatpush1.bf16.msra.mxu0 0
        %9194 = vmatprep.subr.bf16.mxu0 0
        %9195 = vmatpush1.bf16.msra.mxu0 0
        %9196 = vmatprep.subr.bf16.mxu0 0
        %9197 = vmatpush1.bf16.msra.mxu0 0
        %9198 = vmatprep.subr.bf16.mxu0 0
        %9199 = vmatpush1.bf16.msra.mxu0 0
        %9200 = vmatprep.subr.bf16.mxu0 0
        %9201 = vmatpush1.bf16.msra.mxu0 0
        %9202 = vmatprep.subr.bf16.mxu0 0
        %9203 = vmatpush1.bf16.msra.mxu0 0
        %9204 = vmatprep.subr.bf16.mxu0 0
        %9205 = vmatpush1.bf16.msra.mxu0 0
        %9206 = vmatprep.subr.bf16.mxu0 0
        %9207 = vmatpush1.bf16.msra.mxu0 0
        %9208 = vmatprep.subr.bf16.mxu0 0
        %9209 = vmatpush1.bf16.msra.mxu0 0
        %9210 = vmatprep.subr.bf16.mxu0 0
        %9211 = vmatpush1.bf16.msra.mxu0 0
        %9212 = vmatprep.subr.bf16.mxu0 0
        %9213 = vmatpush1.bf16.msra.mxu0 0
        %9214 = vmatprep.subr.bf16.mxu0 0
        %9215 = vmatpush1.bf16.msra.mxu0 0
        %9216 = vmatprep.subr.bf16.mxu0 0
        %9217 = vmatpush1.bf16.msra.mxu0 0
        %9218 = vmatprep.subr.bf16.mxu0 0
        %9219 = vmatpush1.bf16.msra.mxu0 0
        %9220 = vmatprep.subr.bf16.mxu0 0
        %9221 = vmatpush1.bf16.msra.mxu0 0
        %9222 = vmatprep.mubr.bf16.mxu0 0
        %9223 = vmatmul.mubr.bf16.gmra.mrb[0].mxu0 %v9135
        %v9224 = vpop.f32.mrb[0].mxu0
        %v9225 = vadd.f32 0.0, %v9224
        %v9226 = vpop.f32.mrb[0].mxu0
        %v9227 = vadd.f32 0.0, %v9226
        %v9228 = vpop.f32.mrb[0].mxu0
        %v9229 = vpop.f32.mrb[0].mxu0
        %9230 = vdwg.mxu0
        %v9231 = vld [vmem:[#allocation4] sm:$0xff]
        %v9232 = vld [vmem:[#allocation4 + $0x8] sm:$0xff]
        %v9233 = vld [vmem:[#allocation4 + $0x10] sm:$0xff]
        %v9234 = vld [vmem:[#allocation4 + $0x18] sm:$0xff]
        %v9235 = vadd.f32 %v9231, %v9184
        %v9236 = vadd.f32 %v9232, %v9186
        %v9237 = vadd.f32 %v9233, %v9225
        %v9238 = vadd.f32 %v9234, %v9227
        %9239 = vst [vmem:[#allocation4] sm:$0xff] %v9235
        %9240 = vst [vmem:[#allocation4 + $0x8] sm:$0xff] %v9236
        %9241 = vst [vmem:[#allocation4 + $0x10] sm:$0xff] %v9237
        %9242 = vst [vmem:[#allocation4 + $0x18] sm:$0xff] %v9238
        %s9243 = scalar_lea.vmem %s3, 100
        %v9244 = vld [vmem:[%s9243] sm:$0xf]
        %v9245 = vld [vmem:[#allocation3 + $0xc] sm:$0xff]
        %v9246 = vld [vmem:[#allocation3 + $0x14] sm:$0xff]
        %v9247 = vld [vmem:[#allocation3 + $0x1c] sm:$0xf]
        %v9251 = vunpack.c.l.b16 %v9245
        %v9252 = vunpack.c.h.b16 %v9245
        %v9253 = vunpack.c.l.b16 %v9246
        %v9254 = vunpack.c.h.b16 %v9246
        %v9255 = vunpack.c.l.b16 %v9247
        %v9256 = vpack.c.b16 %v9251, %v9251
        %v9257 = vpack.c.b16 %v9252, %v9252
        %v9258 = vpack.c.b16 %v9253, %v9253
        %v9259 = vpack.c.b16 %v9254, %v9254
        %v9260 = vpack.c.b16 %v9255, %v9255
        %9261 = vrot.lane.b32.xlu0 %v9256, 119
        %v9262 = vpop.permute.xlu0 %9261
        %9263 = vrot.lane.b32.xlu0 %v9257, 119
        %v9264 = vpop.permute.xlu0 %9263
        %9265 = vrot.lane.b32.xlu0 %v9258, 119
        %v9266 = vpop.permute.xlu0 %9265
        %9267 = vrot.lane.b32.xlu0 %v9259, 119
        %v9268 = vpop.permute.xlu0 %9267
        %9269 = vrot.lane.b32.xlu0 %v9260, 119
        %v9270 = vpop.permute.xlu0 %9269
        %v9271 = vsel %vm954, %v9262, %v9264
        %v9272 = vsel %vm954, %v9264, %v9266
        %v9273 = vsel %vm954, %v9266, %v9268
        %v9274 = vsel %vm954, %v9268, %v9270
        %v9276 = vsel %vm369, %v9244, 0
        %v9279 = vsel %vm373, %v9271, 0
        %v9282 = vsel %vm373, %v9272, 0
        %v9285 = vsel %vm373, %v9273, 0
        %v9288 = vsel %vm373, %v9274, 0
        %9290 = vmatprep.subr.bf16.mxu0 %v9282
        %9291 = vmatpush1.bf16.msra.mxu0 %v9279
        %9292 = vmatprep.subr.bf16.mxu0 0
        %9293 = vmatpush1.bf16.msra.mxu0 0
        %9294 = vmatprep.subr.bf16.mxu0 0
        %9295 = vmatpush1.bf16.msra.mxu0 0
        %9296 = vmatprep.subr.bf16.mxu0 0
        %9297 = vmatpush1.bf16.msra.mxu0 0
        %9298 = vmatprep.subr.bf16.mxu0 0
        %9299 = vmatpush1.bf16.msra.mxu0 0
        %9300 = vmatprep.subr.bf16.mxu0 0
        %9301 = vmatpush1.bf16.msra.mxu0 0
        %9302 = vmatprep.subr.bf16.mxu0 0
        %9303 = vmatpush1.bf16.msra.mxu0 0
        %9304 = vmatprep.subr.bf16.mxu0 0
        %9305 = vmatpush1.bf16.msra.mxu0 0
        %9306 = vmatprep.subr.bf16.mxu0 0
        %9307 = vmatpush1.bf16.msra.mxu0 0
        %9308 = vmatprep.subr.bf16.mxu0 0
        %9309 = vmatpush1.bf16.msra.mxu0 0
        %9310 = vmatprep.subr.bf16.mxu0 0
        %9311 = vmatpush1.bf16.msra.mxu0 0
        %9312 = vmatprep.subr.bf16.mxu0 0
        %9313 = vmatpush1.bf16.msra.mxu0 0
        %9314 = vmatprep.subr.bf16.mxu0 0
        %9315 = vmatpush1.bf16.msra.mxu0 0
        %9316 = vmatprep.subr.bf16.mxu0 0
        %9317 = vmatpush1.bf16.msra.mxu0 0
        %9318 = vmatprep.subr.bf16.mxu0 0
        %9319 = vmatpush1.bf16.msra.mxu0 0
        %9320 = vmatprep.subr.bf16.mxu0 0
        %9321 = vmatpush1.bf16.msra.mxu0 0
        %9322 = vmatprep.mubr.bf16.mxu0 0
        %9323 = vmatmul.mubr.bf16.gmra.mrb[0].mxu0 %v9276
        %v9324 = vpop.f32.mrb[0].mxu0
        %v9325 = vadd.f32 0.0, %v9324
        %v9326 = vpop.f32.mrb[0].mxu0
        %v9327 = vadd.f32 0.0, %v9326
        %v9328 = vpop.f32.mrb[0].mxu0
        %v9329 = vpop.f32.mrb[0].mxu0
        %9330 = vdwg.mxu0
        %9331 = vmatprep.subr.bf16.mxu0 %v9288
        %9332 = vmatpush1.bf16.msra.mxu0 %v9285
        %9333 = vmatprep.subr.bf16.mxu0 0
        %9334 = vmatpush1.bf16.msra.mxu0 0
        %9335 = vmatprep.subr.bf16.mxu0 0
        %9336 = vmatpush1.bf16.msra.mxu0 0
        %9337 = vmatprep.subr.bf16.mxu0 0
        %9338 = vmatpush1.bf16.msra.mxu0 0
        %9339 = vmatprep.subr.bf16.mxu0 0
        %9340 = vmatpush1.bf16.msra.mxu0 0
        %9341 = vmatprep.subr.bf16.mxu0 0
        %9342 = vmatpush1.bf16.msra.mxu0 0
        %9343 = vmatprep.subr.bf16.mxu0 0
        %9344 = vmatpush1.bf16.msra.mxu0 0
        %9345 = vmatprep.subr.bf16.mxu0 0
        %9346 = vmatpush1.bf16.msra.mxu0 0
        %9347 = vmatprep.subr.bf16.mxu0 0
        %9348 = vmatpush1.bf16.msra.mxu0 0
        %9349 = vmatprep.subr.bf16.mxu0 0
        %9350 = vmatpush1.bf16.msra.mxu0 0
        %9351 = vmatprep.subr.bf16.mxu0 0
        %9352 = vmatpush1.bf16.msra.mxu0 0
        %9353 = vmatprep.subr.bf16.mxu0 0
        %9354 = vmatpush1.bf16.msra.mxu0 0
        %9355 = vmatprep.subr.bf16.mxu0 0
        %9356 = vmatpush1.bf16.msra.mxu0 0
        %9357 = vmatprep.subr.bf16.mxu0 0
        %9358 = vmatpush1.bf16.msra.mxu0 0
        %9359 = vmatprep.subr.bf16.mxu0 0
        %9360 = vmatpush1.bf16.msra.mxu0 0
        %9361 = vmatprep.subr.bf16.mxu0 0
        %9362 = vmatpush1.bf16.msra.mxu0 0
        %9363 = vmatprep.mubr.bf16.mxu0 0
        %9364 = vmatmul.mubr.bf16.gmra.mrb[0].mxu0 %v9276
        %v9365 = vpop.f32.mrb[0].mxu0
        %v9366 = vadd.f32 0.0, %v9365
        %v9367 = vpop.f32.mrb[0].mxu0
        %v9368 = vadd.f32 0.0, %v9367
        %v9369 = vpop.f32.mrb[0].mxu0
        %v9370 = vpop.f32.mrb[0].mxu0
        %9371 = vdwg.mxu0
        %v9372 = vld [vmem:[#allocation4] sm:$0xff]
        %v9373 = vld [vmem:[#allocation4 + $0x8] sm:$0xff]
        %v9374 = vld [vmem:[#allocation4 + $0x10] sm:$0xff]
        %v9375 = vld [vmem:[#allocation4 + $0x18] sm:$0xff]
        %v9376 = vadd.f32 %v9372, %v9325
        %v9377 = vadd.f32 %v9373, %v9327
        %v9378 = vadd.f32 %v9374, %v9366
        %v9379 = vadd.f32 %v9375, %v9368
        %9380 = vst [vmem:[#allocation4] sm:$0xff] %v9376
        %9381 = vst [vmem:[#allocation4 + $0x8] sm:$0xff] %v9377
        %9382 = vst [vmem:[#allocation4 + $0x10] sm:$0xff] %v9378
        %9383 = vst [vmem:[#allocation4 + $0x18] sm:$0xff] %v9379
        %s9384 = scalar_lea.vmem %s3, 104
        %v9385 = vld [vmem:[%s9384] sm:$0xf]
        %v9386 = vld [vmem:[#allocation3 + $0xc] sm:$0xff]
        %v9387 = vld [vmem:[#allocation3 + $0x14] sm:$0xff]
        %v9388 = vld [vmem:[#allocation3 + $0x1c] sm:$0xf]
        %v9392 = vunpack.c.l.b16 %v9386
        %v9393 = vunpack.c.h.b16 %v9386
        %v9394 = vunpack.c.l.b16 %v9387
        %v9395 = vunpack.c.h.b16 %v9387
        %v9396 = vunpack.c.l.b16 %v9388
        %v9397 = vpack.c.b16 %v9392, %v9392
        %v9398 = vpack.c.b16 %v9393, %v9393
        %v9399 = vpack.c.b16 %v9394, %v9394
        %v9400 = vpack.c.b16 %v9395, %v9395
        %v9401 = vpack.c.b16 %v9396, %v9396
        %9402 = vrot.lane.b32.xlu0 %v9397, 118
        %v9403 = vpop.permute.xlu0 %9402
        %9404 = vrot.lane.b32.xlu0 %v9398, 118
        %v9405 = vpop.permute.xlu0 %9404
        %9406 = vrot.lane.b32.xlu0 %v9399, 118
        %v9407 = vpop.permute.xlu0 %9406
        %9408 = vrot.lane.b32.xlu0 %v9400, 118
        %v9409 = vpop.permute.xlu0 %9408
        %9410 = vrot.lane.b32.xlu0 %v9401, 118
        %v9411 = vpop.permute.xlu0 %9410
        %v9412 = vsel %vm1154, %v9403, %v9405
        %v9413 = vsel %vm1154, %v9405, %v9407
        %v9414 = vsel %vm1154, %v9407, %v9409
        %v9415 = vsel %vm1154, %v9409, %v9411
        %v9417 = vsel %vm369, %v9385, 0
        %v9420 = vsel %vm373, %v9412, 0
        %v9423 = vsel %vm373, %v9413, 0
        %v9426 = vsel %vm373, %v9414, 0
        %v9429 = vsel %vm373, %v9415, 0
        %9431 = vmatprep.subr.bf16.mxu0 %v9423
        %9432 = vmatpush1.bf16.msra.mxu0 %v9420
        %9433 = vmatprep.subr.bf16.mxu0 0
        %9434 = vmatpush1.bf16.msra.mxu0 0
        %9435 = vmatprep.subr.bf16.mxu0 0
        %9436 = vmatpush1.bf16.msra.mxu0 0
        %9437 = vmatprep.subr.bf16.mxu0 0
        %9438 = vmatpush1.bf16.msra.mxu0 0
        %9439 = vmatprep.subr.bf16.mxu0 0
        %9440 = vmatpush1.bf16.msra.mxu0 0
        %9441 = vmatprep.subr.bf16.mxu0 0
        %9442 = vmatpush1.bf16.msra.mxu0 0
        %9443 = vmatprep.subr.bf16.mxu0 0
        %9444 = vmatpush1.bf16.msra.mxu0 0
        %9445 = vmatprep.subr.bf16.mxu0 0
        %9446 = vmatpush1.bf16.msra.mxu0 0
        %9447 = vmatprep.subr.bf16.mxu0 0
        %9448 = vmatpush1.bf16.msra.mxu0 0
        %9449 = vmatprep.subr.bf16.mxu0 0
        %9450 = vmatpush1.bf16.msra.mxu0 0
        %9451 = vmatprep.subr.bf16.mxu0 0
        %9452 = vmatpush1.bf16.msra.mxu0 0
        %9453 = vmatprep.subr.bf16.mxu0 0
        %9454 = vmatpush1.bf16.msra.mxu0 0
        %9455 = vmatprep.subr.bf16.mxu0 0
        %9456 = vmatpush1.bf16.msra.mxu0 0
        %9457 = vmatprep.subr.bf16.mxu0 0
        %9458 = vmatpush1.bf16.msra.mxu0 0
        %9459 = vmatprep.subr.bf16.mxu0 0
        %9460 = vmatpush1.bf16.msra.mxu0 0
        %9461 = vmatprep.subr.bf16.mxu0 0
        %9462 = vmatpush1.bf16.msra.mxu0 0
        %9463 = vmatprep.mubr.bf16.mxu0 0
        %9464 = vmatmul.mubr.bf16.gmra.mrb[0].mxu0 %v9417
        %v9465 = vpop.f32.mrb[0].mxu0
        %v9466 = vadd.f32 0.0, %v9465
        %v9467 = vpop.f32.mrb[0].mxu0
        %v9468 = vadd.f32 0.0, %v9467
        %v9469 = vpop.f32.mrb[0].mxu0
        %v9470 = vpop.f32.mrb[0].mxu0
        %9471 = vdwg.mxu0
        %9472 = vmatprep.subr.bf16.mxu0 %v9429
        %9473 = vmatpush1.bf16.msra.mxu0 %v9426
        %9474 = vmatprep.subr.bf16.mxu0 0
        %9475 = vmatpush1.bf16.msra.mxu0 0
        %9476 = vmatprep.subr.bf16.mxu0 0
        %9477 = vmatpush1.bf16.msra.mxu0 0
        %9478 = vmatprep.subr.bf16.mxu0 0
        %9479 = vmatpush1.bf16.msra.mxu0 0
        %9480 = vmatprep.subr.bf16.mxu0 0
        %9481 = vmatpush1.bf16.msra.mxu0 0
        %9482 = vmatprep.subr.bf16.mxu0 0
        %9483 = vmatpush1.bf16.msra.mxu0 0
        %9484 = vmatprep.subr.bf16.mxu0 0
        %9485 = vmatpush1.bf16.msra.mxu0 0
        %9486 = vmatprep.subr.bf16.mxu0 0
        %9487 = vmatpush1.bf16.msra.mxu0 0
        %9488 = vmatprep.subr.bf16.mxu0 0
        %9489 = vmatpush1.bf16.msra.mxu0 0
        %9490 = vmatprep.subr.bf16.mxu0 0
        %9491 = vmatpush1.bf16.msra.mxu0 0
        %9492 = vmatprep.subr.bf16.mxu0 0
        %9493 = vmatpush1.bf16.msra.mxu0 0
        %9494 = vmatprep.subr.bf16.mxu0 0
        %9495 = vmatpush1.bf16.msra.mxu0 0
        %9496 = vmatprep.subr.bf16.mxu0 0
        %9497 = vmatpush1.bf16.msra.mxu0 0
        %9498 = vmatprep.subr.bf16.mxu0 0
        %9499 = vmatpush1.bf16.msra.mxu0 0
        %9500 = vmatprep.subr.bf16.mxu0 0
        %9501 = vmatpush1.bf16.msra.mxu0 0
        %9502 = vmatprep.subr.bf16.mxu0 0
        %9503 = vmatpush1.bf16.msra.mxu0 0
        %9504 = vmatprep.mubr.bf16.mxu0 0
        %9505 = vmatmul.mubr.bf16.gmra.mrb[0].mxu0 %v9417
        %v9506 = vpop.f32.mrb[0].mxu0
        %v9507 = vadd.f32 0.0, %v9506
        %v9508 = vpop.f32.mrb[0].mxu0
        %v9509 = vadd.f32 0.0, %v9508
        %v9510 = vpop.f32.mrb[0].mxu0
        %v9511 = vpop.f32.mrb[0].mxu0
        %9512 = vdwg.mxu0
        %v9513 = vld [vmem:[#allocation4] sm:$0xff]
        %v9514 = vld [vmem:[#allocation4 + $0x8] sm:$0xff]
        %v9515 = vld [vmem:[#allocation4 + $0x10] sm:$0xff]
        %v9516 = vld [vmem:[#allocation4 + $0x18] sm:$0xff]
        %v9517 = vadd.f32 %v9513, %v9466
        %v9518 = vadd.f32 %v9514, %v9468
        %v9519 = vadd.f32 %v9515, %v9507
        %v9520 = vadd.f32 %v9516, %v9509
        %9521 = vst [vmem:[#allocation4] sm:$0xff] %v9517
        %9522 = vst [vmem:[#allocation4 + $0x8] sm:$0xff] %v9518
        %9523 = vst [vmem:[#allocation4 + $0x10] sm:$0xff] %v9519
        %9524 = vst [vmem:[#allocation4 + $0x18] sm:$0xff] %v9520
        %v9525 = vld [vmem:[#allocation2 + $0x8] sm:$0xff]
        %v9526 = vld [vmem:[#allocation2 + $0x10] sm:$0xff]
        %v9527 = vld [vmem:[#allocation2 + $0x18] sm:$0xf]
        %v9528 = vunpack.c.l.bf16 %v9525
        %v9529 = vunpack.c.h.bf16 %v9525
        %v9530 = vunpack.c.l.bf16 %v9526
        %v9531 = vunpack.c.h.bf16 %v9526
        %v9532 = vunpack.c.l.bf16 %v9527
        %v9533 = vld [vmem:[#allocation4] sm:$0xff]
        %v9534 = vld [vmem:[#allocation4 + $0x8] sm:$0xff]
        %v9535 = vld [vmem:[#allocation4 + $0x10] sm:$0xff]
        %v9536 = vld [vmem:[#allocation4 + $0x18] sm:$0xff]
        %v9537 = vld [vmem:[%s4] sm:$0xff]
        %9539 = vset.pattern.permute.xlu0 2
        %9540 = vperm.xlu0 %9539, %v9537
        %v9541 = vpop.permute.xlu0 %9540
        %v9543 = vmul.f32 %v9533, %v9541
        %v9544 = vmul.f32 %v9534, %v9541
        %v9545 = vmul.f32 %v9535, %v9541
        %v9546 = vmul.f32 %v9536, %v9541
        %9547 = vset.pattern.permute.xlu0 3
        %9548 = vperm.xlu0 %9547, %v9537
        %v9549 = vpop.permute.xlu0 %9548
        %v9551 = vadd.f32 %v9543, %v9549
        %v9552 = vadd.f32 %v9544, %v9549
        %v9553 = vadd.f32 %v9545, %v9549
        %v9554 = vadd.f32 %v9546, %v9549
        %9560 = vrot.lane.b32.xlu0 %v9528, 118
        %v9561 = vpop.permute.xlu0 %9560
        %9562 = vrot.lane.b32.xlu0 %v9529, 118
        %v9563 = vpop.permute.xlu0 %9562
        %9564 = vrot.lane.b32.xlu0 %v9530, 118
        %v9565 = vpop.permute.xlu0 %9564
        %9566 = vrot.lane.b32.xlu0 %v9531, 118
        %v9567 = vpop.permute.xlu0 %9566
        %9568 = vrot.lane.b32.xlu0 %v9532, 118
        %v9569 = vpop.permute.xlu0 %9568
        %vm9570 = vcmask 965632
        %v9571 = vsel %vm9570, %v9561, %v9563
        %v9572 = vsel %vm9570, %v9563, %v9565
        %v9573 = vsel %vm9570, %v9565, %v9567
        %v9574 = vsel %vm9570, %v9567, %v9569
        %v9579 = vadd.f32 %v9551, %v9571
        %v9580 = vadd.f32 %v9552, %v9572
        %v9581 = vadd.f32 %v9553, %v9573
        %v9582 = vadd.f32 %v9554, %v9574
        %v9583 = vmax.f32 %v9579, 0.0
        %v9584 = vmax.f32 %v9580, 0.0
        %v9585 = vmax.f32 %v9581, 0.0
        %v9586 = vmax.f32 %v9582, 0.0
        %9587 = vst [vmem:[%s313] sm:$0xff] %v9583
        %9588 = vst [vmem:[%s313 + $0x8] sm:$0xff] %v9584
        %9589 = vst [vmem:[%s313 + $0x10] sm:$0xff] %v9585
        %9590 = vst [vmem:[%s313 + $0x18] sm:$0xff] %v9586
        %s9591 = sand.u32 %s189, 1
        %s9592 = scalar_lea.sflag [#allocation6], %s9591
        %s9593 = sand.u32 %s189, 1
        %s9594 = smul.addr %s9593, 32
        %s9595 = scalar_lea.vmem [#allocation5], %s9594
        // Predicated region
        $region45: #{tpu_custom_call.1} parent=43 // pred_check
          %p9596 = pneg %p199
        $region46: #{tpu_custom_call.1} parent=43 // pred_check_branch
          %9598 = sbr.rel (%p9596) target = $region48
        $region47: #{tpu_custom_call.1} parent=43 // pred_region
          %s9599 = smul.u32 4, %s25
          %s9601 = ssub.s32 512, 512
          %9602 = vsyncadd %s9592, %s9601
          %s9603 = smul.addr %s24, 8
          %s9604 = sadd.s32 %s9599, %s9603
          %s9605 = smul.addr %s9604, 128
          %s9606 = scalar_lea.hbm %s6, %s9605
          %s9608 = sshll.u32 %s9595, 4
          %s9609 = int_to_ptr.vmem [resolvable:$true] %s9608
          %9611 = dma.vmem_to_hbm [thread:$0]  %s9609, 512, %s9606, %s9592
        $region48: #{tpu_custom_call.1} parent=43 // pred_fallthru
          _
      $region44: #{tpu_custom_call.1} parent=5 // pred_fallthru
        _
      %p9612 = scmp.le.s32.totalorder 2, %s15
      // Predicated region
      $region49: #{tpu_custom_call.1} parent=5 // pred_check
        %p9613 = pneg %p9612
      $region50: #{tpu_custom_call.1} parent=5 // pred_check_branch
        %9615 = sbr.rel (%p9613) target = $region52
      $region51: #{tpu_custom_call.1} parent=5 // pred_region
        %s9616 = ssub.s32 %s15, 2
        // Predicated region
        $region53: #{tpu_custom_call.1} parent=51 // pred_check
          %p9617 = pneg %p205
        $region54: #{tpu_custom_call.1} parent=51 // pred_check_branch
          %9619 = sbr.rel (%p9617) target = $region56
        $region55: #{tpu_custom_call.1} parent=51 // pred_region
          %s9620 = sand.u32 %s190, 1
          %s9621 = scalar_lea.sflag [#allocation6], %s9620
          %s9622 = sand.u32 %s190, 1
          %s9623 = smul.addr %s9622, 32
          %s9624 = scalar_lea.vmem [#allocation5], %s9623
          %9625 = dma.done %s9621, 512
        $region56: #{tpu_custom_call.1} parent=51 // pred_fallthru
          _
      $region52: #{tpu_custom_call.1} parent=5 // pred_fallthru
        _
    $region6: #{tpu_custom_call.1} parent=1 // loop_footer
      %s19 = sadd.s32 1, %s15
    $region7: #{tpu_custom_call.1} parent=1 // loop_footer_branch
      %14 = sbr.rel target = $region3
    $region8: #{tpu_custom_call.1} parent=1 // loop_exit
      _
    %9626 = vsyncpa [#allocation6], 1
    %s9627 = scalar_lea.sflag [#allocation6], 1
    %9628 = vsyncpa %s9627, 1

</llo_original>
